<compile_context>
chip_gen: v7x
topology: tpu7x:2x2x1
jax: 0.10.0
libtpu: 0.0.40
codegen_flags: <defaults>
</compile_context>

<pallas_src>
import functools

import jax
import jax.numpy as jnp
from jax import lax
from jax.experimental import pallas as pl
from jax.experimental.pallas import tpu as pltpu


def _deconv_taps(parity):
    # For output parity (0 = even, 1 = odd) of a stride-2, pad-1, k=3 transposed
    # conv: the contributing (kernel index kh, input row/col offset d) pairs.
    return [(1, 0)] if parity == 0 else [(0, 1), (2, 0)]


def _fused_upsample_kernel(x_ref, w1_ref, b1_ref, w2_ref, b2_ref, o_ref,
                           xpad, y_scr, *, C, C2, H, W, op_h, op_w):
    """Fused ConvTranspose2d(C,C,3,s=2,p=1)+ReLU -> Conv2d(C,C//2,3,p=1)+ReLU.

    x_ref : (1, C, H, W)       VMEM  unpadded input block
    w1_ref: (C*C*9,)           SMEM  deconv weight, (ci, co, kh, kw) row-major
    b1_ref: (C,)               SMEM  deconv bias
    w2_ref: (C2*C*9,)          SMEM  conv weight, (co, ci, kh, kw) row-major
    b2_ref: (C2,)              SMEM  conv bias
    o_ref : (1, C2, 2H, 2W)    VMEM  NCHW output (wrapper crops to output_size)
    xpad  : (C, H+1, W+1)      VMEM  in-kernel zero-padded copy of x
    y_scr : (4, C, H+2, W+2)   VMEM  ReLU'd deconv phase planes, 1-px zero halo
    """
    f32 = jnp.float32

    # ---- In-kernel zero padding of x (replaces the wrapper-side jnp.pad). ---
    xpad[...] = jnp.zeros_like(xpad)               # pad row H / col W stay zero
    for ci in range(C):
        xpad[ci, :H, :W] = x_ref[0, ci].astype(f32)

    # Zero once: halo ring + (when output_padding == 0) the trailing phase
    # row/col must read as 0 in Stage 2; the interior is overwritten below.
    # (Halo-only zeroing costs MORE masked stores than 3 full stores/plane.)
    y_scr[...] = jnp.zeros_like(y_scr)

    # Hoisted bias planes (JAX does not CSE broadcast_in_dim).
    bias1 = [jnp.zeros((H, W), f32) + b1_ref[co] for co in range(C)]
    bias2 = [jnp.zeros((H, W), f32) + b2_ref[co] for co in range(C2)]

    # ---- Stage 1: transposed conv via sub-pixel phase decomposition --------
    # y[co, 2i+sr, 2j+sc] = b1[co]
    #     + sum_{ci,(kh,dr)∈T(sr),(kw,dc)∈T(sc)} x[ci, i+dr, j+dc] * W1[ci,co,kh,kw]
    acc1 = {(sr, sc, co): bias1[co]
            for sr in range(2) for sc in range(2) for co in range(C)}
    for ci in range(C):
        # Each distinct shifted window is loaded exactly once per ci.
        xw = {(dr, dc): xpad[ci, dr:dr + H, dc:dc + W]
              for dr in range(2) for dc in range(2)}
        for sr in range(2):
            for kh, dr in _deconv_taps(sr):
                for sc in range(2):
                    for kw, dc in _deconv_taps(sc):
                        xs = xw[(dr, dc)]
                        for co in range(C):
                            w = w1_ref[((ci * C + co) * 3 + kh) * 3 + kw]
                            acc1[(sr, sc, co)] = acc1[(sr, sc, co)] + w * xs

    for sr in range(2):
        hv = H if (sr == 0 or op_h == 1) else H - 1    # valid phase rows
        for sc in range(2):
            wv = W if (sc == 0 or op_w == 1) else W - 1  # valid phase cols
            p = 2 * sr + sc
            for co in range(C):
                y_scr[p, co, 1:1 + hv, 1:1 + wv] = jnp.maximum(
                    acc1[(sr, sc, co)][:hv, :wv], 0.0)

    # ---- Stage 2: 3x3 same-padding conv evaluated on the phase planes ------
    # z[co, 2i+pr, 2j+pc] = b2[co]
    #     + sum_{u,v,ci} W2[co,ci,u,v] * Y[ci, 2i+(pr+u-1), 2j+(pc+v-1)]
    # A row offset a = pr+u-1 maps to phase row sr = a % 2 at plane row i+a//2
    # (floor division), and likewise for columns; halo pads give the zero
    # boundary.  Indexing windows by (a, b) loads each distinct window once.
    users = {a: [(par, k) for par in range(2) for k in range(3)
                 if par + k - 1 == a] for a in (-1, 0, 1, 2)}
    acc2 = {(pr, pc, co): bias2[co]
            for pr in range(2) for pc in range(2) for co in range(C2)}
    for ci in range(C):
        for a in (-1, 0, 1, 2):
            qr, sr = a // 2, a % 2
            for b in (-1, 0, 1, 2):
                qc, sc = b // 2, b % 2
                p = 2 * sr + sc
                ys = y_scr[p, ci, 1 + qr:1 + qr + H, 1 + qc:1 + qc + W]
                for pr, u in users[a]:
                    for pc, v in users[b]:
                        for co in range(C2):
                            w = w2_ref[((co * C + ci) * 3 + u) * 3 + v]
                            acc2[(pr, pc, co)] = acc2[(pr, pc, co)] + w * ys

    # ---- Epilogue: interleave the 4 phases into NCHW (2H, 2W) in-kernel. ---
    # The interleave is a permutation, written as matmuls with 0/1 selection
    # matrices on the otherwise-idle MXU.  Each output element has exactly one
    # contribution, and the bf16 hi/lo split of the data operand makes the
    # result exact regardless of the MXU's f32 matmul precision mode.
    jj = lax.broadcasted_iota(jnp.int32, (W, 2 * W), 0)
    ll = lax.broadcasted_iota(jnp.int32, (W, 2 * W), 1)
    f_even = (ll == 2 * jj).astype(f32)          # col j -> col 2j
    f_odd = (ll == 2 * jj + 1).astype(f32)       # col j -> col 2j+1
    rr = lax.broadcasted_iota(jnp.int32, (2 * H, H), 0)
    ii = lax.broadcasted_iota(jnp.int32, (2 * H, H), 1)
    r_even = (rr == 2 * ii).astype(f32)          # row i -> row 2i
    r_odd = (rr == 2 * ii + 1).astype(f32)       # row i -> row 2i+1

    def _split(x):
        hi = x.astype(jnp.bfloat16).astype(f32)
        return hi, x - hi

    def _cols(z, sel):                           # exact z @ sel (sel is 0/1)
        hi, lo = _split(z)
        return (jnp.dot(hi, sel, preferred_element_type=f32) +
                jnp.dot(lo, sel, preferred_element_type=f32))

    def _rows(sel, z):                           # exact sel @ z (sel is 0/1)
        hi, lo = _split(z)
        return (jnp.dot(sel, hi, preferred_element_type=f32) +
                jnp.dot(sel, lo, preferred_element_type=f32))

    for co in range(C2):
        rows = []
        for pr in range(2):
            z_e = jnp.maximum(acc2[(pr, 0, co)], 0.0)
            z_o = jnp.maximum(acc2[(pr, 1, co)], 0.0)
            rows.append(_cols(z_e, f_even) + _cols(z_o, f_odd))   # (H, 2W)
        full = _rows(r_even, rows[0]) + _rows(r_odd, rows[1])     # (2H, 2W)
        o_ref[0, co] = full.astype(o_ref.dtype)


def upsample_forward(x_nchw, params, output_size):
    """x_nchw: (N, C, H, W) float32; output_size: (Ho, Wo) -> (N, C//2, Ho, Wo)."""
    N, C, H, W = x_nchw.shape
    Ho, Wo = output_size
    K, stride, pad = 3, 2, 1
    op_h = Ho - ((H - 1) * stride - 2 * pad + K)
    op_w = Wo - ((W - 1) * stride - 2 * pad + K)
    assert 0 <= op_h < stride and 0 <= op_w < stride, "invalid output_size"
    C2 = C // 2

    if x_nchw.dtype != jnp.float32:
        x_nchw = x_nchw.astype(jnp.float32)

    # Flatten params for cheap scalar reads from SMEM inside the kernel.
    w1 = params["deconv_w"].astype(jnp.float32).reshape(-1)   # (ci, co, kh, kw)
    b1 = params["deconv_b"].astype(jnp.float32)
    w2 = params["conv_w"].astype(jnp.float32).reshape(-1)     # (co, ci, kh, kw)
    b2 = params["conv_b"].astype(jnp.float32)

    kernel = functools.partial(_fused_upsample_kernel, C=C, C2=C2, H=H, W=W,
                               op_h=op_h, op_w=op_w)
    smem = pl.BlockSpec(memory_space=pltpu.MemorySpace.SMEM)
    out = pl.pallas_call(
        kernel,
        out_shape=jax.ShapeDtypeStruct((N, C2, 2 * H, 2 * W), jnp.float32),
        grid_spec=pltpu.PrefetchScalarGridSpec(
            num_scalar_prefetch=0,
            grid=(N,),
            in_specs=[
                pl.BlockSpec((1, C, H, W), lambda n: (n, 0, 0, 0)),
                smem, smem, smem, smem,
            ],
            out_specs=pl.BlockSpec((1, C2, 2 * H, 2 * W),
                                   lambda n: (n, 0, 0, 0)),
            scratch_shapes=[
                pltpu.VMEM((C, H + 1, W + 1), jnp.float32),
                pltpu.VMEM((4, C, H + 2, W + 2), jnp.float32),
            ],
        ),
        compiler_params=pltpu.CompilerParams(
            dimension_semantics=("parallel",)),
    )(x_nchw, w1, b1, w2, b2)

    # Crop to output_size (no-op when output_size == (2H, 2W)).
    if (Ho, Wo) != (2 * H, 2 * W):
        out = out[:, :, :Ho, :Wo]
    return out


def init_params(key, in_channels):
    k1, k2, k3, k4 = jax.random.split(key, 4)
    c = in_channels
    return {
        # nn.ConvTranspose2d(c, c, 3): weight (Cin, Cout, 3, 3), bias (Cout,)
        "deconv_w": 0.1 * jax.random.normal(k1, (c, c, 3, 3), jnp.float32),
        "deconv_b": 0.1 * jax.random.normal(k2, (c,), jnp.float32),
        # nn.Conv2d(c, c//2, 3): weight (Cout, Cin, 3, 3), bias (Cout,)
        "conv_w": 0.1 * jax.random.normal(k3, (c // 2, c, 3, 3), jnp.float32),
        "conv_b": 0.1 * jax.random.normal(k4, (c // 2,), jnp.float32),
    }


def upsample_reference(x, params, output_size):
    """Plain-JAX reference (matches PyTorch semantics) for validation."""
    N, C, H, W = x.shape
    Ho, Wo = output_size
    K, s, p = 3, 2, 1
    oph = Ho - ((H - 1) * s - 2 * p + K)
    opw = Wo - ((W - 1) * s - 2 * p + K)
    w_de = jnp.transpose(params["deconv_w"][:, :, ::-1, ::-1], (1, 0, 2, 3))  # OIHW
    y = jax.lax.conv_general_dilated(
        x, w_de, window_strides=(1, 1),
        padding=((K - 1 - p, K - 1 - p + oph), (K - 1 - p, K - 1 - p + opw)),
        lhs_dilation=(s, s),
        dimension_numbers=("NCHW", "OIHW", "NCHW"))
    y = jax.nn.relu(y + params["deconv_b"].reshape(1, C, 1, 1))
    z = jax.lax.conv_general_dilated(
        y, params["conv_w"], window_strides=(1, 1), padding=((1, 1), (1, 1)),
        dimension_numbers=("NCHW", "OIHW", "NCHW"))
    z = jax.nn.relu(z + params["conv_b"].reshape(1, C // 2, 1, 1))
    return z


if __name__ == "__main__":
    key = jax.random.PRNGKey(0)
    kx, kp = jax.random.split(key)

    N, C, H, W = 2, 4, 16, 16
    x = jax.random.normal(kx, (N, C, H, W), jnp.float32)
    params = init_params(kp, C)

    # Common case: output_size == (2H, 2W)  (output_padding == 1).
    output_size = (2 * H, 2 * W)                            # (32, 32)
    out = jax.block_until_ready(upsample_forward(x, params, output_size))
    ref = jax.block_until_ready(upsample_reference(x, params, output_size))
    assert out.shape == (N, C // 2, output_size[0], output_size[1]), out.shape
    assert bool(jnp.allclose(out, ref, atol=1e-4, rtol=1e-4)), "mismatch (op=1)"

    # Cropped case: output_size == (2H-1, 2W-1)  (output_padding == 0).
    output_size2 = (2 * H - 1, 2 * W - 1)                   # (31, 31)
    out2 = jax.block_until_ready(upsample_forward(x, params, output_size2))
    ref2 = jax.block_until_ready(upsample_reference(x, params, output_size2))
    assert out2.shape == (N, C // 2, output_size2[0], output_size2[1]), out2.shape
    assert bool(jnp.allclose(out2, ref2, atol=1e-4, rtol=1e-4)), "mismatch (op=0)"

    print("KERNEL_OK")
</pallas_src>

<mosaic_0001>
module attributes {stable_mosaic.version = 11 : i64} {
  func.func @_fused_upsample_kernel(%arg0: i32, %arg1: memref<1x4x16x16xf32, #tpu.memory_space<vmem>>, %arg2: memref<144xf32, #tpu.memory_space<smem>>, %arg3: memref<4xf32, #tpu.memory_space<smem>>, %arg4: memref<72xf32, #tpu.memory_space<smem>>, %arg5: memref<2xf32, #tpu.memory_space<smem>>, %arg6: memref<1x2x32x32xf32, #tpu.memory_space<vmem>>, %arg7: memref<4x17x17xf32, #tpu.memory_space<vmem>>, %arg8: memref<4x4x18x18xf32, #tpu.memory_space<vmem>>) attributes {dimension_semantics = [#tpu.dimension_semantics<parallel>], iteration_bounds = array<i64: 2>, scalar_prefetch = 0 : i64, scratch_operands = 2 : i64, tpu.core_type = #tpu.core_type<tc>, window_params = [{transform_indices = @transform_0, window_bounds = array<i64: 1, 4, 16, 16>}, {transform_indices = @transform_1, window_bounds = array<i64: 144>}, {transform_indices = @transform_2, window_bounds = array<i64: 4>}, {transform_indices = @transform_3, window_bounds = array<i64: 72>}, {transform_indices = @transform_4, window_bounds = array<i64: 2>}, {transform_indices = @transform_5, window_bounds = array<i64: 1, 2, 32, 32>}]} {
    %cst = arith.constant 0.000000e+00 : f32
    %0 = vector.broadcast %cst : f32 to vector<4x17x17xf32>
    %c0 = arith.constant 0 : index
    %c0_0 = arith.constant 0 : index
    %c0_1 = arith.constant 0 : index
    %1 = vector.load %arg7[%c0, %c0_0, %c0_1] : memref<4x17x17xf32, #tpu.memory_space<vmem>>, vector<4x17x17xf32>
    tpu.vector_store %arg7[%c0, %c0_0, %c0_1], %0 {strides = array<i32>} : memref<4x17x17xf32, #tpu.memory_space<vmem>>, vector<4x17x17xf32>,
    %c0_2 = arith.constant 0 : index
    %c0_3 = arith.constant 0 : index
    %c0_4 = arith.constant 0 : index
    %c0_5 = arith.constant 0 : index
    %2 = vector.load %arg1[%c0_2, %c0_3, %c0_4, %c0_5] : memref<1x4x16x16xf32, #tpu.memory_space<vmem>>, vector<1x1x16x16xf32>
    %3 = vector.shape_cast %2 : vector<1x1x16x16xf32> to vector<16x16xf32>
    %c0_6 = arith.constant 0 : index
    %c0_7 = arith.constant 0 : index
    %c0_8 = arith.constant 0 : index
    %4 = vector.load %arg7[%c0_6, %c0_7, %c0_8] : memref<4x17x17xf32, #tpu.memory_space<vmem>>, vector<1x16x16xf32>
    %5 = vector.shape_cast %4 : vector<1x16x16xf32> to vector<16x16xf32>
    %6 = vector.shape_cast %3 : vector<16x16xf32> to vector<1x16x16xf32>
    tpu.vector_store %arg7[%c0_6, %c0_7, %c0_8], %6 {strides = array<i32>} : memref<4x17x17xf32, #tpu.memory_space<vmem>>, vector<1x16x16xf32>,
    %c0_9 = arith.constant 0 : index
    %c1 = arith.constant 1 : index
    %c0_10 = arith.constant 0 : index
    %c0_11 = arith.constant 0 : index
    %7 = vector.load %arg1[%c0_9, %c1, %c0_10, %c0_11] : memref<1x4x16x16xf32, #tpu.memory_space<vmem>>, vector<1x1x16x16xf32>
    %8 = vector.shape_cast %7 : vector<1x1x16x16xf32> to vector<16x16xf32>
    %c1_12 = arith.constant 1 : index
    %c0_13 = arith.constant 0 : index
    %c0_14 = arith.constant 0 : index
    %9 = vector.load %arg7[%c1_12, %c0_13, %c0_14] : memref<4x17x17xf32, #tpu.memory_space<vmem>>, vector<1x16x16xf32>
    %10 = vector.shape_cast %9 : vector<1x16x16xf32> to vector<16x16xf32>
    %11 = vector.shape_cast %8 : vector<16x16xf32> to vector<1x16x16xf32>
    tpu.vector_store %arg7[%c1_12, %c0_13, %c0_14], %11 {strides = array<i32>} : memref<4x17x17xf32, #tpu.memory_space<vmem>>, vector<1x16x16xf32>,
    %c0_15 = arith.constant 0 : index
    %c2 = arith.constant 2 : index
    %c0_16 = arith.constant 0 : index
    %c0_17 = arith.constant 0 : index
    %12 = vector.load %arg1[%c0_15, %c2, %c0_16, %c0_17] : memref<1x4x16x16xf32, #tpu.memory_space<vmem>>, vector<1x1x16x16xf32>
    %13 = vector.shape_cast %12 : vector<1x1x16x16xf32> to vector<16x16xf32>
    %c2_18 = arith.constant 2 : index
    %c0_19 = arith.constant 0 : index
    %c0_20 = arith.constant 0 : index
    %14 = vector.load %arg7[%c2_18, %c0_19, %c0_20] : memref<4x17x17xf32, #tpu.memory_space<vmem>>, vector<1x16x16xf32>
    %15 = vector.shape_cast %14 : vector<1x16x16xf32> to vector<16x16xf32>
    %16 = vector.shape_cast %13 : vector<16x16xf32> to vector<1x16x16xf32>
    tpu.vector_store %arg7[%c2_18, %c0_19, %c0_20], %16 {strides = array<i32>} : memref<4x17x17xf32, #tpu.memory_space<vmem>>, vector<1x16x16xf32>,
    %c0_21 = arith.constant 0 : index
    %c3 = arith.constant 3 : index
    %c0_22 = arith.constant 0 : index
    %c0_23 = arith.constant 0 : index
    %17 = vector.load %arg1[%c0_21, %c3, %c0_22, %c0_23] : memref<1x4x16x16xf32, #tpu.memory_space<vmem>>, vector<1x1x16x16xf32>
    %18 = vector.shape_cast %17 : vector<1x1x16x16xf32> to vector<16x16xf32>
    %c3_24 = arith.constant 3 : index
    %c0_25 = arith.constant 0 : index
    %c0_26 = arith.constant 0 : index
    %19 = vector.load %arg7[%c3_24, %c0_25, %c0_26] : memref<4x17x17xf32, #tpu.memory_space<vmem>>, vector<1x16x16xf32>
    %20 = vector.shape_cast %19 : vector<1x16x16xf32> to vector<16x16xf32>
    %21 = vector.shape_cast %18 : vector<16x16xf32> to vector<1x16x16xf32>
    tpu.vector_store %arg7[%c3_24, %c0_25, %c0_26], %21 {strides = array<i32>} : memref<4x17x17xf32, #tpu.memory_space<vmem>>, vector<1x16x16xf32>,
    %cst_27 = arith.constant 0.000000e+00 : f32
    %22 = vector.broadcast %cst_27 : f32 to vector<4x4x18x18xf32>
    %c0_28 = arith.constant 0 : index
    %c0_29 = arith.constant 0 : index
    %c0_30 = arith.constant 0 : index
    %c0_31 = arith.constant 0 : index
    %23 = vector.load %arg8[%c0_28, %c0_29, %c0_30, %c0_31] : memref<4x4x18x18xf32, #tpu.memory_space<vmem>>, vector<4x4x18x18xf32>
    tpu.vector_store %arg8[%c0_28, %c0_29, %c0_30, %c0_31], %22 {strides = array<i32>} : memref<4x4x18x18xf32, #tpu.memory_space<vmem>>, vector<4x4x18x18xf32>,
    %cst_32 = arith.constant 0.000000e+00 : f32
    %24 = vector.broadcast %cst_32 : f32 to vector<16x16xf32>
    %c0_33 = arith.constant 0 : index
    %25 = memref.load %arg3[%c0_33] : memref<4xf32, #tpu.memory_space<smem>>
    %26 = vector.broadcast %25 : f32 to vector<16x16xf32>
    %27 = arith.addf %24, %26 : vector<16x16xf32>
    %cst_34 = arith.constant 0.000000e+00 : f32
    %28 = vector.broadcast %cst_34 : f32 to vector<16x16xf32>
    %c1_35 = arith.constant 1 : index
    %29 = memref.load %arg3[%c1_35] : memref<4xf32, #tpu.memory_space<smem>>
    %30 = vector.broadcast %29 : f32 to vector<16x16xf32>
    %31 = arith.addf %28, %30 : vector<16x16xf32>
    %cst_36 = arith.constant 0.000000e+00 : f32
    %32 = vector.broadcast %cst_36 : f32 to vector<16x16xf32>
    %c2_37 = arith.constant 2 : index
    %33 = memref.load %arg3[%c2_37] : memref<4xf32, #tpu.memory_space<smem>>
    %34 = vector.broadcast %33 : f32 to vector<16x16xf32>
    %35 = arith.addf %32, %34 : vector<16x16xf32>
    %cst_38 = arith.constant 0.000000e+00 : f32
    %36 = vector.broadcast %cst_38 : f32 to vector<16x16xf32>
    %c3_39 = arith.constant 3 : index
    %37 = memref.load %arg3[%c3_39] : memref<4xf32, #tpu.memory_space<smem>>
    %38 = vector.broadcast %37 : f32 to vector<16x16xf32>
    %39 = arith.addf %36, %38 : vector<16x16xf32>
    %cst_40 = arith.constant 0.000000e+00 : f32
    %40 = vector.broadcast %cst_40 : f32 to vector<16x16xf32>
    %c0_41 = arith.constant 0 : index
    %41 = memref.load %arg5[%c0_41] : memref<2xf32, #tpu.memory_space<smem>>
    %42 = vector.broadcast %41 : f32 to vector<16x16xf32>
    %43 = arith.addf %40, %42 : vector<16x16xf32>
    %cst_42 = arith.constant 0.000000e+00 : f32
    %44 = vector.broadcast %cst_42 : f32 to vector<16x16xf32>
    %c1_43 = arith.constant 1 : index
    %45 = memref.load %arg5[%c1_43] : memref<2xf32, #tpu.memory_space<smem>>
    %46 = vector.broadcast %45 : f32 to vector<16x16xf32>
    %47 = arith.addf %44, %46 : vector<16x16xf32>
    %c0_44 = arith.constant 0 : index
    %c0_45 = arith.constant 0 : index
    %c0_46 = arith.constant 0 : index
    %48 = vector.load %arg7[%c0_44, %c0_45, %c0_46] : memref<4x17x17xf32, #tpu.memory_space<vmem>>, vector<1x16x16xf32>
    %49 = vector.shape_cast %48 : vector<1x16x16xf32> to vector<16x16xf32>
    %c0_47 = arith.constant 0 : index
    %c0_48 = arith.constant 0 : index
    %c1_49 = arith.constant 1 : index
    %50 = vector.load %arg7[%c0_47, %c0_48, %c1_49] : memref<4x17x17xf32, #tpu.memory_space<vmem>>, vector<1x16x16xf32>
    %51 = vector.shape_cast %50 : vector<1x16x16xf32> to vector<16x16xf32>
    %c0_50 = arith.constant 0 : index
    %c1_51 = arith.constant 1 : index
    %c0_52 = arith.constant 0 : index
    %52 = vector.load %arg7[%c0_50, %c1_51, %c0_52] : memref<4x17x17xf32, #tpu.memory_space<vmem>>, vector<1x16x16xf32>
    %53 = vector.shape_cast %52 : vector<1x16x16xf32> to vector<16x16xf32>
    %c0_53 = arith.constant 0 : index
    %c1_54 = arith.constant 1 : index
    %c1_55 = arith.constant 1 : index
    %54 = vector.load %arg7[%c0_53, %c1_54, %c1_55] : memref<4x17x17xf32, #tpu.memory_space<vmem>>, vector<1x16x16xf32>
    %55 = vector.shape_cast %54 : vector<1x16x16xf32> to vector<16x16xf32>
    %c4 = arith.constant 4 : index
    %56 = memref.load %arg2[%c4] : memref<144xf32, #tpu.memory_space<smem>>
    %57 = vector.broadcast %56 : f32 to vector<16x16xf32>
    %58 = arith.mulf %57, %49 : vector<16x16xf32>
    %59 = arith.addf %27, %58 : vector<16x16xf32>
    %c13 = arith.constant 13 : index
    %60 = memref.load %arg2[%c13] : memref<144xf32, #tpu.memory_space<smem>>
    %61 = vector.broadcast %60 : f32 to vector<16x16xf32>
    %62 = arith.mulf %61, %49 : vector<16x16xf32>
    %63 = arith.addf %31, %62 : vector<16x16xf32>
    %c22 = arith.constant 22 : index
    %64 = memref.load %arg2[%c22] : memref<144xf32, #tpu.memory_space<smem>>
    %65 = vector.broadcast %64 : f32 to vector<16x16xf32>
    %66 = arith.mulf %65, %49 : vector<16x16xf32>
    %67 = arith.addf %35, %66 : vector<16x16xf32>
    %c31 = arith.constant 31 : index
    %68 = memref.load %arg2[%c31] : memref<144xf32, #tpu.memory_space<smem>>
    %69 = vector.broadcast %68 : f32 to vector<16x16xf32>
    %70 = arith.mulf %69, %49 : vector<16x16xf32>
    %71 = arith.addf %39, %70 : vector<16x16xf32>
    %c3_56 = arith.constant 3 : index
    %72 = memref.load %arg2[%c3_56] : memref<144xf32, #tpu.memory_space<smem>>
    %73 = vector.broadcast %72 : f32 to vector<16x16xf32>
    %74 = arith.mulf %73, %51 : vector<16x16xf32>
    %75 = arith.addf %27, %74 : vector<16x16xf32>
    %c12 = arith.constant 12 : index
    %76 = memref.load %arg2[%c12] : memref<144xf32, #tpu.memory_space<smem>>
    %77 = vector.broadcast %76 : f32 to vector<16x16xf32>
    %78 = arith.mulf %77, %51 : vector<16x16xf32>
    %79 = arith.addf %31, %78 : vector<16x16xf32>
    %c21 = arith.constant 21 : index
    %80 = memref.load %arg2[%c21] : memref<144xf32, #tpu.memory_space<smem>>
    %81 = vector.broadcast %80 : f32 to vector<16x16xf32>
    %82 = arith.mulf %81, %51 : vector<16x16xf32>
    %83 = arith.addf %35, %82 : vector<16x16xf32>
    %c30 = arith.constant 30 : index
    %84 = memref.load %arg2[%c30] : memref<144xf32, #tpu.memory_space<smem>>
    %85 = vector.broadcast %84 : f32 to vector<16x16xf32>
    %86 = arith.mulf %85, %51 : vector<16x16xf32>
    %87 = arith.addf %39, %86 : vector<16x16xf32>
    %c5 = arith.constant 5 : index
    %88 = memref.load %arg2[%c5] : memref<144xf32, #tpu.memory_space<smem>>
    %89 = vector.broadcast %88 : f32 to vector<16x16xf32>
    %90 = arith.mulf %89, %49 : vector<16x16xf32>
    %91 = arith.addf %75, %90 : vector<16x16xf32>
    %c14 = arith.constant 14 : index
    %92 = memref.load %arg2[%c14] : memref<144xf32, #tpu.memory_space<smem>>
    %93 = vector.broadcast %92 : f32 to vector<16x16xf32>
    %94 = arith.mulf %93, %49 : vector<16x16xf32>
    %95 = arith.addf %79, %94 : vector<16x16xf32>
    %c23 = arith.constant 23 : index
    %96 = memref.load %arg2[%c23] : memref<144xf32, #tpu.memory_space<smem>>
    %97 = vector.broadcast %96 : f32 to vector<16x16xf32>
    %98 = arith.mulf %97, %49 : vector<16x16xf32>
    %99 = arith.addf %83, %98 : vector<16x16xf32>
    %c32 = arith.constant 32 : index
    %100 = memref.load %arg2[%c32] : memref<144xf32, #tpu.memory_space<smem>>
    %101 = vector.broadcast %100 : f32 to vector<16x16xf32>
    %102 = arith.mulf %101, %49 : vector<16x16xf32>
    %103 = arith.addf %87, %102 : vector<16x16xf32>
    %c1_57 = arith.constant 1 : index
    %104 = memref.load %arg2[%c1_57] : memref<144xf32, #tpu.memory_space<smem>>
    %105 = vector.broadcast %104 : f32 to vector<16x16xf32>
    %106 = arith.mulf %105, %53 : vector<16x16xf32>
    %107 = arith.addf %27, %106 : vector<16x16xf32>
    %c10 = arith.constant 10 : index
    %108 = memref.load %arg2[%c10] : memref<144xf32, #tpu.memory_space<smem>>
    %109 = vector.broadcast %108 : f32 to vector<16x16xf32>
    %110 = arith.mulf %109, %53 : vector<16x16xf32>
    %111 = arith.addf %31, %110 : vector<16x16xf32>
    %c19 = arith.constant 19 : index
    %112 = memref.load %arg2[%c19] : memref<144xf32, #tpu.memory_space<smem>>
    %113 = vector.broadcast %112 : f32 to vector<16x16xf32>
    %114 = arith.mulf %113, %53 : vector<16x16xf32>
    %115 = arith.addf %35, %114 : vector<16x16xf32>
    %c28 = arith.constant 28 : index
    %116 = memref.load %arg2[%c28] : memref<144xf32, #tpu.memory_space<smem>>
    %117 = vector.broadcast %116 : f32 to vector<16x16xf32>
    %118 = arith.mulf %117, %53 : vector<16x16xf32>
    %119 = arith.addf %39, %118 : vector<16x16xf32>
    %c0_58 = arith.constant 0 : index
    %120 = memref.load %arg2[%c0_58] : memref<144xf32, #tpu.memory_space<smem>>
    %121 = vector.broadcast %120 : f32 to vector<16x16xf32>
    %122 = arith.mulf %121, %55 : vector<16x16xf32>
    %123 = arith.addf %27, %122 : vector<16x16xf32>
    %c9 = arith.constant 9 : index
    %124 = memref.load %arg2[%c9] : memref<144xf32, #tpu.memory_space<smem>>
    %125 = vector.broadcast %124 : f32 to vector<16x16xf32>
    %126 = arith.mulf %125, %55 : vector<16x16xf32>
    %127 = arith.addf %31, %126 : vector<16x16xf32>
    %c18 = arith.constant 18 : index
    %128 = memref.load %arg2[%c18] : memref<144xf32, #tpu.memory_space<smem>>
    %129 = vector.broadcast %128 : f32 to vector<16x16xf32>
    %130 = arith.mulf %129, %55 : vector<16x16xf32>
    %131 = arith.addf %35, %130 : vector<16x16xf32>
    %c27 = arith.constant 27 : index
    %132 = memref.load %arg2[%c27] : memref<144xf32, #tpu.memory_space<smem>>
    %133 = vector.broadcast %132 : f32 to vector<16x16xf32>
    %134 = arith.mulf %133, %55 : vector<16x16xf32>
    %135 = arith.addf %39, %134 : vector<16x16xf32>
    %c2_59 = arith.constant 2 : index
    %136 = memref.load %arg2[%c2_59] : memref<144xf32, #tpu.memory_space<smem>>
    %137 = vector.broadcast %136 : f32 to vector<16x16xf32>
    %138 = arith.mulf %137, %53 : vector<16x16xf32>
    %139 = arith.addf %123, %138 : vector<16x16xf32>
    %c11 = arith.constant 11 : index
    %140 = memref.load %arg2[%c11] : memref<144xf32, #tpu.memory_space<smem>>
    %141 = vector.broadcast %140 : f32 to vector<16x16xf32>
    %142 = arith.mulf %141, %53 : vector<16x16xf32>
    %143 = arith.addf %127, %142 : vector<16x16xf32>
    %c20 = arith.constant 20 : index
    %144 = memref.load %arg2[%c20] : memref<144xf32, #tpu.memory_space<smem>>
    %145 = vector.broadcast %144 : f32 to vector<16x16xf32>
    %146 = arith.mulf %145, %53 : vector<16x16xf32>
    %147 = arith.addf %131, %146 : vector<16x16xf32>
    %c29 = arith.constant 29 : index
    %148 = memref.load %arg2[%c29] : memref<144xf32, #tpu.memory_space<smem>>
    %149 = vector.broadcast %148 : f32 to vector<16x16xf32>
    %150 = arith.mulf %149, %53 : vector<16x16xf32>
    %151 = arith.addf %135, %150 : vector<16x16xf32>
    %c7 = arith.constant 7 : index
    %152 = memref.load %arg2[%c7] : memref<144xf32, #tpu.memory_space<smem>>
    %153 = vector.broadcast %152 : f32 to vector<16x16xf32>
    %154 = arith.mulf %153, %49 : vector<16x16xf32>
    %155 = arith.addf %107, %154 : vector<16x16xf32>
    %c16 = arith.constant 16 : index
    %156 = memref.load %arg2[%c16] : memref<144xf32, #tpu.memory_space<smem>>
    %157 = vector.broadcast %156 : f32 to vector<16x16xf32>
    %158 = arith.mulf %157, %49 : vector<16x16xf32>
    %159 = arith.addf %111, %158 : vector<16x16xf32>
    %c25 = arith.constant 25 : index
    %160 = memref.load %arg2[%c25] : memref<144xf32, #tpu.memory_space<smem>>
    %161 = vector.broadcast %160 : f32 to vector<16x16xf32>
    %162 = arith.mulf %161, %49 : vector<16x16xf32>
    %163 = arith.addf %115, %162 : vector<16x16xf32>
    %c34 = arith.constant 34 : index
    %164 = memref.load %arg2[%c34] : memref<144xf32, #tpu.memory_space<smem>>
    %165 = vector.broadcast %164 : f32 to vector<16x16xf32>
    %166 = arith.mulf %165, %49 : vector<16x16xf32>
    %167 = arith.addf %119, %166 : vector<16x16xf32>
    %c6 = arith.constant 6 : index
    %168 = memref.load %arg2[%c6] : memref<144xf32, #tpu.memory_space<smem>>
    %169 = vector.broadcast %168 : f32 to vector<16x16xf32>
    %170 = arith.mulf %169, %51 : vector<16x16xf32>
    %171 = arith.addf %139, %170 : vector<16x16xf32>
    %c15 = arith.constant 15 : index
    %172 = memref.load %arg2[%c15] : memref<144xf32, #tpu.memory_space<smem>>
    %173 = vector.broadcast %172 : f32 to vector<16x16xf32>
    %174 = arith.mulf %173, %51 : vector<16x16xf32>
    %175 = arith.addf %143, %174 : vector<16x16xf32>
    %c24 = arith.constant 24 : index
    %176 = memref.load %arg2[%c24] : memref<144xf32, #tpu.memory_space<smem>>
    %177 = vector.broadcast %176 : f32 to vector<16x16xf32>
    %178 = arith.mulf %177, %51 : vector<16x16xf32>
    %179 = arith.addf %147, %178 : vector<16x16xf32>
    %c33 = arith.constant 33 : index
    %180 = memref.load %arg2[%c33] : memref<144xf32, #tpu.memory_space<smem>>
    %181 = vector.broadcast %180 : f32 to vector<16x16xf32>
    %182 = arith.mulf %181, %51 : vector<16x16xf32>
    %183 = arith.addf %151, %182 : vector<16x16xf32>
    %c8 = arith.constant 8 : index
    %184 = memref.load %arg2[%c8] : memref<144xf32, #tpu.memory_space<smem>>
    %185 = vector.broadcast %184 : f32 to vector<16x16xf32>
    %186 = arith.mulf %185, %49 : vector<16x16xf32>
    %187 = arith.addf %171, %186 : vector<16x16xf32>
    %c17 = arith.constant 17 : index
    %188 = memref.load %arg2[%c17] : memref<144xf32, #tpu.memory_space<smem>>
    %189 = vector.broadcast %188 : f32 to vector<16x16xf32>
    %190 = arith.mulf %189, %49 : vector<16x16xf32>
    %191 = arith.addf %175, %190 : vector<16x16xf32>
    %c26 = arith.constant 26 : index
    %192 = memref.load %arg2[%c26] : memref<144xf32, #tpu.memory_space<smem>>
    %193 = vector.broadcast %192 : f32 to vector<16x16xf32>
    %194 = arith.mulf %193, %49 : vector<16x16xf32>
    %195 = arith.addf %179, %194 : vector<16x16xf32>
    %c35 = arith.constant 35 : index
    %196 = memref.load %arg2[%c35] : memref<144xf32, #tpu.memory_space<smem>>
    %197 = vector.broadcast %196 : f32 to vector<16x16xf32>
    %198 = arith.mulf %197, %49 : vector<16x16xf32>
    %199 = arith.addf %183, %198 : vector<16x16xf32>
    %c1_60 = arith.constant 1 : index
    %c0_61 = arith.constant 0 : index
    %c0_62 = arith.constant 0 : index
    %200 = vector.load %arg7[%c1_60, %c0_61, %c0_62] : memref<4x17x17xf32, #tpu.memory_space<vmem>>, vector<1x16x16xf32>
    %201 = vector.shape_cast %200 : vector<1x16x16xf32> to vector<16x16xf32>
    %c1_63 = arith.constant 1 : index
    %c0_64 = arith.constant 0 : index
    %c1_65 = arith.constant 1 : index
    %202 = vector.load %arg7[%c1_63, %c0_64, %c1_65] : memref<4x17x17xf32, #tpu.memory_space<vmem>>, vector<1x16x16xf32>
    %203 = vector.shape_cast %202 : vector<1x16x16xf32> to vector<16x16xf32>
    %c1_66 = arith.constant 1 : index
    %c1_67 = arith.constant 1 : index
    %c0_68 = arith.constant 0 : index
    %204 = vector.load %arg7[%c1_66, %c1_67, %c0_68] : memref<4x17x17xf32, #tpu.memory_space<vmem>>, vector<1x16x16xf32>
    %205 = vector.shape_cast %204 : vector<1x16x16xf32> to vector<16x16xf32>
    %c1_69 = arith.constant 1 : index
    %c1_70 = arith.constant 1 : index
    %c1_71 = arith.constant 1 : index
    %206 = vector.load %arg7[%c1_69, %c1_70, %c1_71] : memref<4x17x17xf32, #tpu.memory_space<vmem>>, vector<1x16x16xf32>
    %207 = vector.shape_cast %206 : vector<1x16x16xf32> to vector<16x16xf32>
    %c40 = arith.constant 40 : index
    %208 = memref.load %arg2[%c40] : memref<144xf32, #tpu.memory_space<smem>>
    %209 = vector.broadcast %208 : f32 to vector<16x16xf32>
    %210 = arith.mulf %209, %201 : vector<16x16xf32>
    %211 = arith.addf %59, %210 : vector<16x16xf32>
    %c49 = arith.constant 49 : index
    %212 = memref.load %arg2[%c49] : memref<144xf32, #tpu.memory_space<smem>>
    %213 = vector.broadcast %212 : f32 to vector<16x16xf32>
    %214 = arith.mulf %213, %201 : vector<16x16xf32>
    %215 = arith.addf %63, %214 : vector<16x16xf32>
    %c58 = arith.constant 58 : index
    %216 = memref.load %arg2[%c58] : memref<144xf32, #tpu.memory_space<smem>>
    %217 = vector.broadcast %216 : f32 to vector<16x16xf32>
    %218 = arith.mulf %217, %201 : vector<16x16xf32>
    %219 = arith.addf %67, %218 : vector<16x16xf32>
    %c67 = arith.constant 67 : index
    %220 = memref.load %arg2[%c67] : memref<144xf32, #tpu.memory_space<smem>>
    %221 = vector.broadcast %220 : f32 to vector<16x16xf32>
    %222 = arith.mulf %221, %201 : vector<16x16xf32>
    %223 = arith.addf %71, %222 : vector<16x16xf32>
    %c39 = arith.constant 39 : index
    %224 = memref.load %arg2[%c39] : memref<144xf32, #tpu.memory_space<smem>>
    %225 = vector.broadcast %224 : f32 to vector<16x16xf32>
    %226 = arith.mulf %225, %203 : vector<16x16xf32>
    %227 = arith.addf %91, %226 : vector<16x16xf32>
    %c48 = arith.constant 48 : index
    %228 = memref.load %arg2[%c48] : memref<144xf32, #tpu.memory_space<smem>>
    %229 = vector.broadcast %228 : f32 to vector<16x16xf32>
    %230 = arith.mulf %229, %203 : vector<16x16xf32>
    %231 = arith.addf %95, %230 : vector<16x16xf32>
    %c57 = arith.constant 57 : index
    %232 = memref.load %arg2[%c57] : memref<144xf32, #tpu.memory_space<smem>>
    %233 = vector.broadcast %232 : f32 to vector<16x16xf32>
    %234 = arith.mulf %233, %203 : vector<16x16xf32>
    %235 = arith.addf %99, %234 : vector<16x16xf32>
    %c66 = arith.constant 66 : index
    %236 = memref.load %arg2[%c66] : memref<144xf32, #tpu.memory_space<smem>>
    %237 = vector.broadcast %236 : f32 to vector<16x16xf32>
    %238 = arith.mulf %237, %203 : vector<16x16xf32>
    %239 = arith.addf %103, %238 : vector<16x16xf32>
    %c41 = arith.constant 41 : index
    %240 = memref.load %arg2[%c41] : memref<144xf32, #tpu.memory_space<smem>>
    %241 = vector.broadcast %240 : f32 to vector<16x16xf32>
    %242 = arith.mulf %241, %201 : vector<16x16xf32>
    %243 = arith.addf %227, %242 : vector<16x16xf32>
    %c50 = arith.constant 50 : index
    %244 = memref.load %arg2[%c50] : memref<144xf32, #tpu.memory_space<smem>>
    %245 = vector.broadcast %244 : f32 to vector<16x16xf32>
    %246 = arith.mulf %245, %201 : vector<16x16xf32>
    %247 = arith.addf %231, %246 : vector<16x16xf32>
    %c59 = arith.constant 59 : index
    %248 = memref.load %arg2[%c59] : memref<144xf32, #tpu.memory_space<smem>>
    %249 = vector.broadcast %248 : f32 to vector<16x16xf32>
    %250 = arith.mulf %249, %201 : vector<16x16xf32>
    %251 = arith.addf %235, %250 : vector<16x16xf32>
    %c68 = arith.constant 68 : index
    %252 = memref.load %arg2[%c68] : memref<144xf32, #tpu.memory_space<smem>>
    %253 = vector.broadcast %252 : f32 to vector<16x16xf32>
    %254 = arith.mulf %253, %201 : vector<16x16xf32>
    %255 = arith.addf %239, %254 : vector<16x16xf32>
    %c37 = arith.constant 37 : index
    %256 = memref.load %arg2[%c37] : memref<144xf32, #tpu.memory_space<smem>>
    %257 = vector.broadcast %256 : f32 to vector<16x16xf32>
    %258 = arith.mulf %257, %205 : vector<16x16xf32>
    %259 = arith.addf %155, %258 : vector<16x16xf32>
    %c46 = arith.constant 46 : index
    %260 = memref.load %arg2[%c46] : memref<144xf32, #tpu.memory_space<smem>>
    %261 = vector.broadcast %260 : f32 to vector<16x16xf32>
    %262 = arith.mulf %261, %205 : vector<16x16xf32>
    %263 = arith.addf %159, %262 : vector<16x16xf32>
    %c55 = arith.constant 55 : index
    %264 = memref.load %arg2[%c55] : memref<144xf32, #tpu.memory_space<smem>>
    %265 = vector.broadcast %264 : f32 to vector<16x16xf32>
    %266 = arith.mulf %265, %205 : vector<16x16xf32>
    %267 = arith.addf %163, %266 : vector<16x16xf32>
    %c64 = arith.constant 64 : index
    %268 = memref.load %arg2[%c64] : memref<144xf32, #tpu.memory_space<smem>>
    %269 = vector.broadcast %268 : f32 to vector<16x16xf32>
    %270 = arith.mulf %269, %205 : vector<16x16xf32>
    %271 = arith.addf %167, %270 : vector<16x16xf32>
    %c36 = arith.constant 36 : index
    %272 = memref.load %arg2[%c36] : memref<144xf32, #tpu.memory_space<smem>>
    %273 = vector.broadcast %272 : f32 to vector<16x16xf32>
    %274 = arith.mulf %273, %207 : vector<16x16xf32>
    %275 = arith.addf %187, %274 : vector<16x16xf32>
    %c45 = arith.constant 45 : index
    %276 = memref.load %arg2[%c45] : memref<144xf32, #tpu.memory_space<smem>>
    %277 = vector.broadcast %276 : f32 to vector<16x16xf32>
    %278 = arith.mulf %277, %207 : vector<16x16xf32>
    %279 = arith.addf %191, %278 : vector<16x16xf32>
    %c54 = arith.constant 54 : index
    %280 = memref.load %arg2[%c54] : memref<144xf32, #tpu.memory_space<smem>>
    %281 = vector.broadcast %280 : f32 to vector<16x16xf32>
    %282 = arith.mulf %281, %207 : vector<16x16xf32>
    %283 = arith.addf %195, %282 : vector<16x16xf32>
    %c63 = arith.constant 63 : index
    %284 = memref.load %arg2[%c63] : memref<144xf32, #tpu.memory_space<smem>>
    %285 = vector.broadcast %284 : f32 to vector<16x16xf32>
    %286 = arith.mulf %285, %207 : vector<16x16xf32>
    %287 = arith.addf %199, %286 : vector<16x16xf32>
    %c38 = arith.constant 38 : index
    %288 = memref.load %arg2[%c38] : memref<144xf32, #tpu.memory_space<smem>>
    %289 = vector.broadcast %288 : f32 to vector<16x16xf32>
    %290 = arith.mulf %289, %205 : vector<16x16xf32>
    %291 = arith.addf %275, %290 : vector<16x16xf32>
    %c47 = arith.constant 47 : index
    %292 = memref.load %arg2[%c47] : memref<144xf32, #tpu.memory_space<smem>>
    %293 = vector.broadcast %292 : f32 to vector<16x16xf32>
    %294 = arith.mulf %293, %205 : vector<16x16xf32>
    %295 = arith.addf %279, %294 : vector<16x16xf32>
    %c56 = arith.constant 56 : index
    %296 = memref.load %arg2[%c56] : memref<144xf32, #tpu.memory_space<smem>>
    %297 = vector.broadcast %296 : f32 to vector<16x16xf32>
    %298 = arith.mulf %297, %205 : vector<16x16xf32>
    %299 = arith.addf %283, %298 : vector<16x16xf32>
    %c65 = arith.constant 65 : index
    %300 = memref.load %arg2[%c65] : memref<144xf32, #tpu.memory_space<smem>>
    %301 = vector.broadcast %300 : f32 to vector<16x16xf32>
    %302 = arith.mulf %301, %205 : vector<16x16xf32>
    %303 = arith.addf %287, %302 : vector<16x16xf32>
    %c43 = arith.constant 43 : index
    %304 = memref.load %arg2[%c43] : memref<144xf32, #tpu.memory_space<smem>>
    %305 = vector.broadcast %304 : f32 to vector<16x16xf32>
    %306 = arith.mulf %305, %201 : vector<16x16xf32>
    %307 = arith.addf %259, %306 : vector<16x16xf32>
    %c52 = arith.constant 52 : index
    %308 = memref.load %arg2[%c52] : memref<144xf32, #tpu.memory_space<smem>>
    %309 = vector.broadcast %308 : f32 to vector<16x16xf32>
    %310 = arith.mulf %309, %201 : vector<16x16xf32>
    %311 = arith.addf %263, %310 : vector<16x16xf32>
    %c61 = arith.constant 61 : index
    %312 = memref.load %arg2[%c61] : memref<144xf32, #tpu.memory_space<smem>>
    %313 = vector.broadcast %312 : f32 to vector<16x16xf32>
    %314 = arith.mulf %313, %201 : vector<16x16xf32>
    %315 = arith.addf %267, %314 : vector<16x16xf32>
    %c70 = arith.constant 70 : index
    %316 = memref.load %arg2[%c70] : memref<144xf32, #tpu.memory_space<smem>>
    %317 = vector.broadcast %316 : f32 to vector<16x16xf32>
    %318 = arith.mulf %317, %201 : vector<16x16xf32>
    %319 = arith.addf %271, %318 : vector<16x16xf32>
    %c42 = arith.constant 42 : index
    %320 = memref.load %arg2[%c42] : memref<144xf32, #tpu.memory_space<smem>>
    %321 = vector.broadcast %320 : f32 to vector<16x16xf32>
    %322 = arith.mulf %321, %203 : vector<16x16xf32>
    %323 = arith.addf %291, %322 : vector<16x16xf32>
    %c51 = arith.constant 51 : index
    %324 = memref.load %arg2[%c51] : memref<144xf32, #tpu.memory_space<smem>>
    %325 = vector.broadcast %324 : f32 to vector<16x16xf32>
    %326 = arith.mulf %325, %203 : vector<16x16xf32>
    %327 = arith.addf %295, %326 : vector<16x16xf32>
    %c60 = arith.constant 60 : index
    %328 = memref.load %arg2[%c60] : memref<144xf32, #tpu.memory_space<smem>>
    %329 = vector.broadcast %328 : f32 to vector<16x16xf32>
    %330 = arith.mulf %329, %203 : vector<16x16xf32>
    %331 = arith.addf %299, %330 : vector<16x16xf32>
    %c69 = arith.constant 69 : index
    %332 = memref.load %arg2[%c69] : memref<144xf32, #tpu.memory_space<smem>>
    %333 = vector.broadcast %332 : f32 to vector<16x16xf32>
    %334 = arith.mulf %333, %203 : vector<16x16xf32>
    %335 = arith.addf %303, %334 : vector<16x16xf32>
    %c44 = arith.constant 44 : index
    %336 = memref.load %arg2[%c44] : memref<144xf32, #tpu.memory_space<smem>>
    %337 = vector.broadcast %336 : f32 to vector<16x16xf32>
    %338 = arith.mulf %337, %201 : vector<16x16xf32>
    %339 = arith.addf %323, %338 : vector<16x16xf32>
    %c53 = arith.constant 53 : index
    %340 = memref.load %arg2[%c53] : memref<144xf32, #tpu.memory_space<smem>>
    %341 = vector.broadcast %340 : f32 to vector<16x16xf32>
    %342 = arith.mulf %341, %201 : vector<16x16xf32>
    %343 = arith.addf %327, %342 : vector<16x16xf32>
    %c62 = arith.constant 62 : index
    %344 = memref.load %arg2[%c62] : memref<144xf32, #tpu.memory_space<smem>>
    %345 = vector.broadcast %344 : f32 to vector<16x16xf32>
    %346 = arith.mulf %345, %201 : vector<16x16xf32>
    %347 = arith.addf %331, %346 : vector<16x16xf32>
    %c71 = arith.constant 71 : index
    %348 = memref.load %arg2[%c71] : memref<144xf32, #tpu.memory_space<smem>>
    %349 = vector.broadcast %348 : f32 to vector<16x16xf32>
    %350 = arith.mulf %349, %201 : vector<16x16xf32>
    %351 = arith.addf %335, %350 : vector<16x16xf32>
    %c2_72 = arith.constant 2 : index
    %c0_73 = arith.constant 0 : index
    %c0_74 = arith.constant 0 : index
    %352 = vector.load %arg7[%c2_72, %c0_73, %c0_74] : memref<4x17x17xf32, #tpu.memory_space<vmem>>, vector<1x16x16xf32>
    %353 = vector.shape_cast %352 : vector<1x16x16xf32> to vector<16x16xf32>
    %c2_75 = arith.constant 2 : index
    %c0_76 = arith.constant 0 : index
    %c1_77 = arith.constant 1 : index
    %354 = vector.load %arg7[%c2_75, %c0_76, %c1_77] : memref<4x17x17xf32, #tpu.memory_space<vmem>>, vector<1x16x16xf32>
    %355 = vector.shape_cast %354 : vector<1x16x16xf32> to vector<16x16xf32>
    %c2_78 = arith.constant 2 : index
    %c1_79 = arith.constant 1 : index
    %c0_80 = arith.constant 0 : index
    %356 = vector.load %arg7[%c2_78, %c1_79, %c0_80] : memref<4x17x17xf32, #tpu.memory_space<vmem>>, vector<1x16x16xf32>
    %357 = vector.shape_cast %356 : vector<1x16x16xf32> to vector<16x16xf32>
    %c2_81 = arith.constant 2 : index
    %c1_82 = arith.constant 1 : index
    %c1_83 = arith.constant 1 : index
    %358 = vector.load %arg7[%c2_81, %c1_82, %c1_83] : memref<4x17x17xf32, #tpu.memory_space<vmem>>, vector<1x16x16xf32>
    %359 = vector.shape_cast %358 : vector<1x16x16xf32> to vector<16x16xf32>
    %c76 = arith.constant 76 : index
    %360 = memref.load %arg2[%c76] : memref<144xf32, #tpu.memory_space<smem>>
    %361 = vector.broadcast %360 : f32 to vector<16x16xf32>
    %362 = arith.mulf %361, %353 : vector<16x16xf32>
    %363 = arith.addf %211, %362 : vector<16x16xf32>
    %c85 = arith.constant 85 : index
    %364 = memref.load %arg2[%c85] : memref<144xf32, #tpu.memory_space<smem>>
    %365 = vector.broadcast %364 : f32 to vector<16x16xf32>
    %366 = arith.mulf %365, %353 : vector<16x16xf32>
    %367 = arith.addf %215, %366 : vector<16x16xf32>
    %c94 = arith.constant 94 : index
    %368 = memref.load %arg2[%c94] : memref<144xf32, #tpu.memory_space<smem>>
    %369 = vector.broadcast %368 : f32 to vector<16x16xf32>
    %370 = arith.mulf %369, %353 : vector<16x16xf32>
    %371 = arith.addf %219, %370 : vector<16x16xf32>
    %c103 = arith.constant 103 : index
    %372 = memref.load %arg2[%c103] : memref<144xf32, #tpu.memory_space<smem>>
    %373 = vector.broadcast %372 : f32 to vector<16x16xf32>
    %374 = arith.mulf %373, %353 : vector<16x16xf32>
    %375 = arith.addf %223, %374 : vector<16x16xf32>
    %c75 = arith.constant 75 : index
    %376 = memref.load %arg2[%c75] : memref<144xf32, #tpu.memory_space<smem>>
    %377 = vector.broadcast %376 : f32 to vector<16x16xf32>
    %378 = arith.mulf %377, %355 : vector<16x16xf32>
    %379 = arith.addf %243, %378 : vector<16x16xf32>
    %c84 = arith.constant 84 : index
    %380 = memref.load %arg2[%c84] : memref<144xf32, #tpu.memory_space<smem>>
    %381 = vector.broadcast %380 : f32 to vector<16x16xf32>
    %382 = arith.mulf %381, %355 : vector<16x16xf32>
    %383 = arith.addf %247, %382 : vector<16x16xf32>
    %c93 = arith.constant 93 : index
    %384 = memref.load %arg2[%c93] : memref<144xf32, #tpu.memory_space<smem>>
    %385 = vector.broadcast %384 : f32 to vector<16x16xf32>
    %386 = arith.mulf %385, %355 : vector<16x16xf32>
    %387 = arith.addf %251, %386 : vector<16x16xf32>
    %c102 = arith.constant 102 : index
    %388 = memref.load %arg2[%c102] : memref<144xf32, #tpu.memory_space<smem>>
    %389 = vector.broadcast %388 : f32 to vector<16x16xf32>
    %390 = arith.mulf %389, %355 : vector<16x16xf32>
    %391 = arith.addf %255, %390 : vector<16x16xf32>
    %c77 = arith.constant 77 : index
    %392 = memref.load %arg2[%c77] : memref<144xf32, #tpu.memory_space<smem>>
    %393 = vector.broadcast %392 : f32 to vector<16x16xf32>
    %394 = arith.mulf %393, %353 : vector<16x16xf32>
    %395 = arith.addf %379, %394 : vector<16x16xf32>
    %c86 = arith.constant 86 : index
    %396 = memref.load %arg2[%c86] : memref<144xf32, #tpu.memory_space<smem>>
    %397 = vector.broadcast %396 : f32 to vector<16x16xf32>
    %398 = arith.mulf %397, %353 : vector<16x16xf32>
    %399 = arith.addf %383, %398 : vector<16x16xf32>
    %c95 = arith.constant 95 : index
    %400 = memref.load %arg2[%c95] : memref<144xf32, #tpu.memory_space<smem>>
    %401 = vector.broadcast %400 : f32 to vector<16x16xf32>
    %402 = arith.mulf %401, %353 : vector<16x16xf32>
    %403 = arith.addf %387, %402 : vector<16x16xf32>
    %c104 = arith.constant 104 : index
    %404 = memref.load %arg2[%c104] : memref<144xf32, #tpu.memory_space<smem>>
    %405 = vector.broadcast %404 : f32 to vector<16x16xf32>
    %406 = arith.mulf %405, %353 : vector<16x16xf32>
    %407 = arith.addf %391, %406 : vector<16x16xf32>
    %c73 = arith.constant 73 : index
    %408 = memref.load %arg2[%c73] : memref<144xf32, #tpu.memory_space<smem>>
    %409 = vector.broadcast %408 : f32 to vector<16x16xf32>
    %410 = arith.mulf %409, %357 : vector<16x16xf32>
    %411 = arith.addf %307, %410 : vector<16x16xf32>
    %c82 = arith.constant 82 : index
    %412 = memref.load %arg2[%c82] : memref<144xf32, #tpu.memory_space<smem>>
    %413 = vector.broadcast %412 : f32 to vector<16x16xf32>
    %414 = arith.mulf %413, %357 : vector<16x16xf32>
    %415 = arith.addf %311, %414 : vector<16x16xf32>
    %c91 = arith.constant 91 : index
    %416 = memref.load %arg2[%c91] : memref<144xf32, #tpu.memory_space<smem>>
    %417 = vector.broadcast %416 : f32 to vector<16x16xf32>
    %418 = arith.mulf %417, %357 : vector<16x16xf32>
    %419 = arith.addf %315, %418 : vector<16x16xf32>
    %c100 = arith.constant 100 : index
    %420 = memref.load %arg2[%c100] : memref<144xf32, #tpu.memory_space<smem>>
    %421 = vector.broadcast %420 : f32 to vector<16x16xf32>
    %422 = arith.mulf %421, %357 : vector<16x16xf32>
    %423 = arith.addf %319, %422 : vector<16x16xf32>
    %c72 = arith.constant 72 : index
    %424 = memref.load %arg2[%c72] : memref<144xf32, #tpu.memory_space<smem>>
    %425 = vector.broadcast %424 : f32 to vector<16x16xf32>
    %426 = arith.mulf %425, %359 : vector<16x16xf32>
    %427 = arith.addf %339, %426 : vector<16x16xf32>
    %c81 = arith.constant 81 : index
    %428 = memref.load %arg2[%c81] : memref<144xf32, #tpu.memory_space<smem>>
    %429 = vector.broadcast %428 : f32 to vector<16x16xf32>
    %430 = arith.mulf %429, %359 : vector<16x16xf32>
    %431 = arith.addf %343, %430 : vector<16x16xf32>
    %c90 = arith.constant 90 : index
    %432 = memref.load %arg2[%c90] : memref<144xf32, #tpu.memory_space<smem>>
    %433 = vector.broadcast %432 : f32 to vector<16x16xf32>
    %434 = arith.mulf %433, %359 : vector<16x16xf32>
    %435 = arith.addf %347, %434 : vector<16x16xf32>
    %c99 = arith.constant 99 : index
    %436 = memref.load %arg2[%c99] : memref<144xf32, #tpu.memory_space<smem>>
    %437 = vector.broadcast %436 : f32 to vector<16x16xf32>
    %438 = arith.mulf %437, %359 : vector<16x16xf32>
    %439 = arith.addf %351, %438 : vector<16x16xf32>
    %c74 = arith.constant 74 : index
    %440 = memref.load %arg2[%c74] : memref<144xf32, #tpu.memory_space<smem>>
    %441 = vector.broadcast %440 : f32 to vector<16x16xf32>
    %442 = arith.mulf %441, %357 : vector<16x16xf32>
    %443 = arith.addf %427, %442 : vector<16x16xf32>
    %c83 = arith.constant 83 : index
    %444 = memref.load %arg2[%c83] : memref<144xf32, #tpu.memory_space<smem>>
    %445 = vector.broadcast %444 : f32 to vector<16x16xf32>
    %446 = arith.mulf %445, %357 : vector<16x16xf32>
    %447 = arith.addf %431, %446 : vector<16x16xf32>
    %c92 = arith.constant 92 : index
    %448 = memref.load %arg2[%c92] : memref<144xf32, #tpu.memory_space<smem>>
    %449 = vector.broadcast %448 : f32 to vector<16x16xf32>
    %450 = arith.mulf %449, %357 : vector<16x16xf32>
    %451 = arith.addf %435, %450 : vector<16x16xf32>
    %c101 = arith.constant 101 : index
    %452 = memref.load %arg2[%c101] : memref<144xf32, #tpu.memory_space<smem>>
    %453 = vector.broadcast %452 : f32 to vector<16x16xf32>
    %454 = arith.mulf %453, %357 : vector<16x16xf32>
    %455 = arith.addf %439, %454 : vector<16x16xf32>
    %c79 = arith.constant 79 : index
    %456 = memref.load %arg2[%c79] : memref<144xf32, #tpu.memory_space<smem>>
    %457 = vector.broadcast %456 : f32 to vector<16x16xf32>
    %458 = arith.mulf %457, %353 : vector<16x16xf32>
    %459 = arith.addf %411, %458 : vector<16x16xf32>
    %c88 = arith.constant 88 : index
    %460 = memref.load %arg2[%c88] : memref<144xf32, #tpu.memory_space<smem>>
    %461 = vector.broadcast %460 : f32 to vector<16x16xf32>
    %462 = arith.mulf %461, %353 : vector<16x16xf32>
    %463 = arith.addf %415, %462 : vector<16x16xf32>
    %c97 = arith.constant 97 : index
    %464 = memref.load %arg2[%c97] : memref<144xf32, #tpu.memory_space<smem>>
    %465 = vector.broadcast %464 : f32 to vector<16x16xf32>
    %466 = arith.mulf %465, %353 : vector<16x16xf32>
    %467 = arith.addf %419, %466 : vector<16x16xf32>
    %c106 = arith.constant 106 : index
    %468 = memref.load %arg2[%c106] : memref<144xf32, #tpu.memory_space<smem>>
    %469 = vector.broadcast %468 : f32 to vector<16x16xf32>
    %470 = arith.mulf %469, %353 : vector<16x16xf32>
    %471 = arith.addf %423, %470 : vector<16x16xf32>
    %c78 = arith.constant 78 : index
    %472 = memref.load %arg2[%c78] : memref<144xf32, #tpu.memory_space<smem>>
    %473 = vector.broadcast %472 : f32 to vector<16x16xf32>
    %474 = arith.mulf %473, %355 : vector<16x16xf32>
    %475 = arith.addf %443, %474 : vector<16x16xf32>
    %c87 = arith.constant 87 : index
    %476 = memref.load %arg2[%c87] : memref<144xf32, #tpu.memory_space<smem>>
    %477 = vector.broadcast %476 : f32 to vector<16x16xf32>
    %478 = arith.mulf %477, %355 : vector<16x16xf32>
    %479 = arith.addf %447, %478 : vector<16x16xf32>
    %c96 = arith.constant 96 : index
    %480 = memref.load %arg2[%c96] : memref<144xf32, #tpu.memory_space<smem>>
    %481 = vector.broadcast %480 : f32 to vector<16x16xf32>
    %482 = arith.mulf %481, %355 : vector<16x16xf32>
    %483 = arith.addf %451, %482 : vector<16x16xf32>
    %c105 = arith.constant 105 : index
    %484 = memref.load %arg2[%c105] : memref<144xf32, #tpu.memory_space<smem>>
    %485 = vector.broadcast %484 : f32 to vector<16x16xf32>
    %486 = arith.mulf %485, %355 : vector<16x16xf32>
    %487 = arith.addf %455, %486 : vector<16x16xf32>
    %c80 = arith.constant 80 : index
    %488 = memref.load %arg2[%c80] : memref<144xf32, #tpu.memory_space<smem>>
    %489 = vector.broadcast %488 : f32 to vector<16x16xf32>
    %490 = arith.mulf %489, %353 : vector<16x16xf32>
    %491 = arith.addf %475, %490 : vector<16x16xf32>
    %c89 = arith.constant 89 : index
    %492 = memref.load %arg2[%c89] : memref<144xf32, #tpu.memory_space<smem>>
    %493 = vector.broadcast %492 : f32 to vector<16x16xf32>
    %494 = arith.mulf %493, %353 : vector<16x16xf32>
    %495 = arith.addf %479, %494 : vector<16x16xf32>
    %c98 = arith.constant 98 : index
    %496 = memref.load %arg2[%c98] : memref<144xf32, #tpu.memory_space<smem>>
    %497 = vector.broadcast %496 : f32 to vector<16x16xf32>
    %498 = arith.mulf %497, %353 : vector<16x16xf32>
    %499 = arith.addf %483, %498 : vector<16x16xf32>
    %c107 = arith.constant 107 : index
    %500 = memref.load %arg2[%c107] : memref<144xf32, #tpu.memory_space<smem>>
    %501 = vector.broadcast %500 : f32 to vector<16x16xf32>
    %502 = arith.mulf %501, %353 : vector<16x16xf32>
    %503 = arith.addf %487, %502 : vector<16x16xf32>
    %c3_84 = arith.constant 3 : index
    %c0_85 = arith.constant 0 : index
    %c0_86 = arith.constant 0 : index
    %504 = vector.load %arg7[%c3_84, %c0_85, %c0_86] : memref<4x17x17xf32, #tpu.memory_space<vmem>>, vector<1x16x16xf32>
    %505 = vector.shape_cast %504 : vector<1x16x16xf32> to vector<16x16xf32>
    %c3_87 = arith.constant 3 : index
    %c0_88 = arith.constant 0 : index
    %c1_89 = arith.constant 1 : index
    %506 = vector.load %arg7[%c3_87, %c0_88, %c1_89] : memref<4x17x17xf32, #tpu.memory_space<vmem>>, vector<1x16x16xf32>
    %507 = vector.shape_cast %506 : vector<1x16x16xf32> to vector<16x16xf32>
    %c3_90 = arith.constant 3 : index
    %c1_91 = arith.constant 1 : index
    %c0_92 = arith.constant 0 : index
    %508 = vector.load %arg7[%c3_90, %c1_91, %c0_92] : memref<4x17x17xf32, #tpu.memory_space<vmem>>, vector<1x16x16xf32>
    %509 = vector.shape_cast %508 : vector<1x16x16xf32> to vector<16x16xf32>
    %c3_93 = arith.constant 3 : index
    %c1_94 = arith.constant 1 : index
    %c1_95 = arith.constant 1 : index
    %510 = vector.load %arg7[%c3_93, %c1_94, %c1_95] : memref<4x17x17xf32, #tpu.memory_space<vmem>>, vector<1x16x16xf32>
    %511 = vector.shape_cast %510 : vector<1x16x16xf32> to vector<16x16xf32>
    %c112 = arith.constant 112 : index
    %512 = memref.load %arg2[%c112] : memref<144xf32, #tpu.memory_space<smem>>
    %513 = vector.broadcast %512 : f32 to vector<16x16xf32>
    %514 = arith.mulf %513, %505 : vector<16x16xf32>
    %515 = arith.addf %363, %514 : vector<16x16xf32>
    %c121 = arith.constant 121 : index
    %516 = memref.load %arg2[%c121] : memref<144xf32, #tpu.memory_space<smem>>
    %517 = vector.broadcast %516 : f32 to vector<16x16xf32>
    %518 = arith.mulf %517, %505 : vector<16x16xf32>
    %519 = arith.addf %367, %518 : vector<16x16xf32>
    %c130 = arith.constant 130 : index
    %520 = memref.load %arg2[%c130] : memref<144xf32, #tpu.memory_space<smem>>
    %521 = vector.broadcast %520 : f32 to vector<16x16xf32>
    %522 = arith.mulf %521, %505 : vector<16x16xf32>
    %523 = arith.addf %371, %522 : vector<16x16xf32>
    %c139 = arith.constant 139 : index
    %524 = memref.load %arg2[%c139] : memref<144xf32, #tpu.memory_space<smem>>
    %525 = vector.broadcast %524 : f32 to vector<16x16xf32>
    %526 = arith.mulf %525, %505 : vector<16x16xf32>
    %527 = arith.addf %375, %526 : vector<16x16xf32>
    %c111 = arith.constant 111 : index
    %528 = memref.load %arg2[%c111] : memref<144xf32, #tpu.memory_space<smem>>
    %529 = vector.broadcast %528 : f32 to vector<16x16xf32>
    %530 = arith.mulf %529, %507 : vector<16x16xf32>
    %531 = arith.addf %395, %530 : vector<16x16xf32>
    %c120 = arith.constant 120 : index
    %532 = memref.load %arg2[%c120] : memref<144xf32, #tpu.memory_space<smem>>
    %533 = vector.broadcast %532 : f32 to vector<16x16xf32>
    %534 = arith.mulf %533, %507 : vector<16x16xf32>
    %535 = arith.addf %399, %534 : vector<16x16xf32>
    %c129 = arith.constant 129 : index
    %536 = memref.load %arg2[%c129] : memref<144xf32, #tpu.memory_space<smem>>
    %537 = vector.broadcast %536 : f32 to vector<16x16xf32>
    %538 = arith.mulf %537, %507 : vector<16x16xf32>
    %539 = arith.addf %403, %538 : vector<16x16xf32>
    %c138 = arith.constant 138 : index
    %540 = memref.load %arg2[%c138] : memref<144xf32, #tpu.memory_space<smem>>
    %541 = vector.broadcast %540 : f32 to vector<16x16xf32>
    %542 = arith.mulf %541, %507 : vector<16x16xf32>
    %543 = arith.addf %407, %542 : vector<16x16xf32>
    %c113 = arith.constant 113 : index
    %544 = memref.load %arg2[%c113] : memref<144xf32, #tpu.memory_space<smem>>
    %545 = vector.broadcast %544 : f32 to vector<16x16xf32>
    %546 = arith.mulf %545, %505 : vector<16x16xf32>
    %547 = arith.addf %531, %546 : vector<16x16xf32>
    %c122 = arith.constant 122 : index
    %548 = memref.load %arg2[%c122] : memref<144xf32, #tpu.memory_space<smem>>
    %549 = vector.broadcast %548 : f32 to vector<16x16xf32>
    %550 = arith.mulf %549, %505 : vector<16x16xf32>
    %551 = arith.addf %535, %550 : vector<16x16xf32>
    %c131 = arith.constant 131 : index
    %552 = memref.load %arg2[%c131] : memref<144xf32, #tpu.memory_space<smem>>
    %553 = vector.broadcast %552 : f32 to vector<16x16xf32>
    %554 = arith.mulf %553, %505 : vector<16x16xf32>
    %555 = arith.addf %539, %554 : vector<16x16xf32>
    %c140 = arith.constant 140 : index
    %556 = memref.load %arg2[%c140] : memref<144xf32, #tpu.memory_space<smem>>
    %557 = vector.broadcast %556 : f32 to vector<16x16xf32>
    %558 = arith.mulf %557, %505 : vector<16x16xf32>
    %559 = arith.addf %543, %558 : vector<16x16xf32>
    %c109 = arith.constant 109 : index
    %560 = memref.load %arg2[%c109] : memref<144xf32, #tpu.memory_space<smem>>
    %561 = vector.broadcast %560 : f32 to vector<16x16xf32>
    %562 = arith.mulf %561, %509 : vector<16x16xf32>
    %563 = arith.addf %459, %562 : vector<16x16xf32>
    %c118 = arith.constant 118 : index
    %564 = memref.load %arg2[%c118] : memref<144xf32, #tpu.memory_space<smem>>
    %565 = vector.broadcast %564 : f32 to vector<16x16xf32>
    %566 = arith.mulf %565, %509 : vector<16x16xf32>
    %567 = arith.addf %463, %566 : vector<16x16xf32>
    %c127 = arith.constant 127 : index
    %568 = memref.load %arg2[%c127] : memref<144xf32, #tpu.memory_space<smem>>
    %569 = vector.broadcast %568 : f32 to vector<16x16xf32>
    %570 = arith.mulf %569, %509 : vector<16x16xf32>
    %571 = arith.addf %467, %570 : vector<16x16xf32>
    %c136 = arith.constant 136 : index
    %572 = memref.load %arg2[%c136] : memref<144xf32, #tpu.memory_space<smem>>
    %573 = vector.broadcast %572 : f32 to vector<16x16xf32>
    %574 = arith.mulf %573, %509 : vector<16x16xf32>
    %575 = arith.addf %471, %574 : vector<16x16xf32>
    %c108 = arith.constant 108 : index
    %576 = memref.load %arg2[%c108] : memref<144xf32, #tpu.memory_space<smem>>
    %577 = vector.broadcast %576 : f32 to vector<16x16xf32>
    %578 = arith.mulf %577, %511 : vector<16x16xf32>
    %579 = arith.addf %491, %578 : vector<16x16xf32>
    %c117 = arith.constant 117 : index
    %580 = memref.load %arg2[%c117] : memref<144xf32, #tpu.memory_space<smem>>
    %581 = vector.broadcast %580 : f32 to vector<16x16xf32>
    %582 = arith.mulf %581, %511 : vector<16x16xf32>
    %583 = arith.addf %495, %582 : vector<16x16xf32>
    %c126 = arith.constant 126 : index
    %584 = memref.load %arg2[%c126] : memref<144xf32, #tpu.memory_space<smem>>
    %585 = vector.broadcast %584 : f32 to vector<16x16xf32>
    %586 = arith.mulf %585, %511 : vector<16x16xf32>
    %587 = arith.addf %499, %586 : vector<16x16xf32>
    %c135 = arith.constant 135 : index
    %588 = memref.load %arg2[%c135] : memref<144xf32, #tpu.memory_space<smem>>
    %589 = vector.broadcast %588 : f32 to vector<16x16xf32>
    %590 = arith.mulf %589, %511 : vector<16x16xf32>
    %591 = arith.addf %503, %590 : vector<16x16xf32>
    %c110 = arith.constant 110 : index
    %592 = memref.load %arg2[%c110] : memref<144xf32, #tpu.memory_space<smem>>
    %593 = vector.broadcast %592 : f32 to vector<16x16xf32>
    %594 = arith.mulf %593, %509 : vector<16x16xf32>
    %595 = arith.addf %579, %594 : vector<16x16xf32>
    %c119 = arith.constant 119 : index
    %596 = memref.load %arg2[%c119] : memref<144xf32, #tpu.memory_space<smem>>
    %597 = vector.broadcast %596 : f32 to vector<16x16xf32>
    %598 = arith.mulf %597, %509 : vector<16x16xf32>
    %599 = arith.addf %583, %598 : vector<16x16xf32>
    %c128 = arith.constant 128 : index
    %600 = memref.load %arg2[%c128] : memref<144xf32, #tpu.memory_space<smem>>
    %601 = vector.broadcast %600 : f32 to vector<16x16xf32>
    %602 = arith.mulf %601, %509 : vector<16x16xf32>
    %603 = arith.addf %587, %602 : vector<16x16xf32>
    %c137 = arith.constant 137 : index
    %604 = memref.load %arg2[%c137] : memref<144xf32, #tpu.memory_space<smem>>
    %605 = vector.broadcast %604 : f32 to vector<16x16xf32>
    %606 = arith.mulf %605, %509 : vector<16x16xf32>
    %607 = arith.addf %591, %606 : vector<16x16xf32>
    %c115 = arith.constant 115 : index
    %608 = memref.load %arg2[%c115] : memref<144xf32, #tpu.memory_space<smem>>
    %609 = vector.broadcast %608 : f32 to vector<16x16xf32>
    %610 = arith.mulf %609, %505 : vector<16x16xf32>
    %611 = arith.addf %563, %610 : vector<16x16xf32>
    %c124 = arith.constant 124 : index
    %612 = memref.load %arg2[%c124] : memref<144xf32, #tpu.memory_space<smem>>
    %613 = vector.broadcast %612 : f32 to vector<16x16xf32>
    %614 = arith.mulf %613, %505 : vector<16x16xf32>
    %615 = arith.addf %567, %614 : vector<16x16xf32>
    %c133 = arith.constant 133 : index
    %616 = memref.load %arg2[%c133] : memref<144xf32, #tpu.memory_space<smem>>
    %617 = vector.broadcast %616 : f32 to vector<16x16xf32>
    %618 = arith.mulf %617, %505 : vector<16x16xf32>
    %619 = arith.addf %571, %618 : vector<16x16xf32>
    %c142 = arith.constant 142 : index
    %620 = memref.load %arg2[%c142] : memref<144xf32, #tpu.memory_space<smem>>
    %621 = vector.broadcast %620 : f32 to vector<16x16xf32>
    %622 = arith.mulf %621, %505 : vector<16x16xf32>
    %623 = arith.addf %575, %622 : vector<16x16xf32>
    %c114 = arith.constant 114 : index
    %624 = memref.load %arg2[%c114] : memref<144xf32, #tpu.memory_space<smem>>
    %625 = vector.broadcast %624 : f32 to vector<16x16xf32>
    %626 = arith.mulf %625, %507 : vector<16x16xf32>
    %627 = arith.addf %595, %626 : vector<16x16xf32>
    %c123 = arith.constant 123 : index
    %628 = memref.load %arg2[%c123] : memref<144xf32, #tpu.memory_space<smem>>
    %629 = vector.broadcast %628 : f32 to vector<16x16xf32>
    %630 = arith.mulf %629, %507 : vector<16x16xf32>
    %631 = arith.addf %599, %630 : vector<16x16xf32>
    %c132 = arith.constant 132 : index
    %632 = memref.load %arg2[%c132] : memref<144xf32, #tpu.memory_space<smem>>
    %633 = vector.broadcast %632 : f32 to vector<16x16xf32>
    %634 = arith.mulf %633, %507 : vector<16x16xf32>
    %635 = arith.addf %603, %634 : vector<16x16xf32>
    %c141 = arith.constant 141 : index
    %636 = memref.load %arg2[%c141] : memref<144xf32, #tpu.memory_space<smem>>
    %637 = vector.broadcast %636 : f32 to vector<16x16xf32>
    %638 = arith.mulf %637, %507 : vector<16x16xf32>
    %639 = arith.addf %607, %638 : vector<16x16xf32>
    %c116 = arith.constant 116 : index
    %640 = memref.load %arg2[%c116] : memref<144xf32, #tpu.memory_space<smem>>
    %641 = vector.broadcast %640 : f32 to vector<16x16xf32>
    %642 = arith.mulf %641, %505 : vector<16x16xf32>
    %643 = arith.addf %627, %642 : vector<16x16xf32>
    %c125 = arith.constant 125 : index
    %644 = memref.load %arg2[%c125] : memref<144xf32, #tpu.memory_space<smem>>
    %645 = vector.broadcast %644 : f32 to vector<16x16xf32>
    %646 = arith.mulf %645, %505 : vector<16x16xf32>
    %647 = arith.addf %631, %646 : vector<16x16xf32>
    %c134 = arith.constant 134 : index
    %648 = memref.load %arg2[%c134] : memref<144xf32, #tpu.memory_space<smem>>
    %649 = vector.broadcast %648 : f32 to vector<16x16xf32>
    %650 = arith.mulf %649, %505 : vector<16x16xf32>
    %651 = arith.addf %635, %650 : vector<16x16xf32>
    %c143 = arith.constant 143 : index
    %652 = memref.load %arg2[%c143] : memref<144xf32, #tpu.memory_space<smem>>
    %653 = vector.broadcast %652 : f32 to vector<16x16xf32>
    %654 = arith.mulf %653, %505 : vector<16x16xf32>
    %655 = arith.addf %639, %654 : vector<16x16xf32>
    %cst_96 = arith.constant 0.000000e+00 : f32
    %656 = vector.broadcast %cst_96 : f32 to vector<16x16xf32>
    %657 = arith.maximumf %515, %656 : vector<16x16xf32>
    %c0_97 = arith.constant 0 : index
    %c0_98 = arith.constant 0 : index
    %c1_99 = arith.constant 1 : index
    %c1_100 = arith.constant 1 : index
    %658 = vector.load %arg8[%c0_97, %c0_98, %c1_99, %c1_100] : memref<4x4x18x18xf32, #tpu.memory_space<vmem>>, vector<1x1x16x16xf32>
    %659 = vector.shape_cast %658 : vector<1x1x16x16xf32> to vector<16x16xf32>
    %660 = vector.shape_cast %657 : vector<16x16xf32> to vector<1x1x16x16xf32>
    tpu.vector_store %arg8[%c0_97, %c0_98, %c1_99, %c1_100], %660 {strides = array<i32>} : memref<4x4x18x18xf32, #tpu.memory_space<vmem>>, vector<1x1x16x16xf32>,
    %cst_101 = arith.constant 0.000000e+00 : f32
    %661 = vector.broadcast %cst_101 : f32 to vector<16x16xf32>
    %662 = arith.maximumf %519, %661 : vector<16x16xf32>
    %c0_102 = arith.constant 0 : index
    %c1_103 = arith.constant 1 : index
    %c1_104 = arith.constant 1 : index
    %c1_105 = arith.constant 1 : index
    %663 = vector.load %arg8[%c0_102, %c1_103, %c1_104, %c1_105] : memref<4x4x18x18xf32, #tpu.memory_space<vmem>>, vector<1x1x16x16xf32>
    %664 = vector.shape_cast %663 : vector<1x1x16x16xf32> to vector<16x16xf32>
    %665 = vector.shape_cast %662 : vector<16x16xf32> to vector<1x1x16x16xf32>
    tpu.vector_store %arg8[%c0_102, %c1_103, %c1_104, %c1_105], %665 {strides = array<i32>} : memref<4x4x18x18xf32, #tpu.memory_space<vmem>>, vector<1x1x16x16xf32>,
    %cst_106 = arith.constant 0.000000e+00 : f32
    %666 = vector.broadcast %cst_106 : f32 to vector<16x16xf32>
    %667 = arith.maximumf %523, %666 : vector<16x16xf32>
    %c0_107 = arith.constant 0 : index
    %c2_108 = arith.constant 2 : index
    %c1_109 = arith.constant 1 : index
    %c1_110 = arith.constant 1 : index
    %668 = vector.load %arg8[%c0_107, %c2_108, %c1_109, %c1_110] : memref<4x4x18x18xf32, #tpu.memory_space<vmem>>, vector<1x1x16x16xf32>
    %669 = vector.shape_cast %668 : vector<1x1x16x16xf32> to vector<16x16xf32>
    %670 = vector.shape_cast %667 : vector<16x16xf32> to vector<1x1x16x16xf32>
    tpu.vector_store %arg8[%c0_107, %c2_108, %c1_109, %c1_110], %670 {strides = array<i32>} : memref<4x4x18x18xf32, #tpu.memory_space<vmem>>, vector<1x1x16x16xf32>,
    %cst_111 = arith.constant 0.000000e+00 : f32
    %671 = vector.broadcast %cst_111 : f32 to vector<16x16xf32>
    %672 = arith.maximumf %527, %671 : vector<16x16xf32>
    %c0_112 = arith.constant 0 : index
    %c3_113 = arith.constant 3 : index
    %c1_114 = arith.constant 1 : index
    %c1_115 = arith.constant 1 : index
    %673 = vector.load %arg8[%c0_112, %c3_113, %c1_114, %c1_115] : memref<4x4x18x18xf32, #tpu.memory_space<vmem>>, vector<1x1x16x16xf32>
    %674 = vector.shape_cast %673 : vector<1x1x16x16xf32> to vector<16x16xf32>
    %675 = vector.shape_cast %672 : vector<16x16xf32> to vector<1x1x16x16xf32>
    tpu.vector_store %arg8[%c0_112, %c3_113, %c1_114, %c1_115], %675 {strides = array<i32>} : memref<4x4x18x18xf32, #tpu.memory_space<vmem>>, vector<1x1x16x16xf32>,
    %cst_116 = arith.constant 0.000000e+00 : f32
    %676 = vector.broadcast %cst_116 : f32 to vector<16x16xf32>
    %677 = arith.maximumf %547, %676 : vector<16x16xf32>
    %c1_117 = arith.constant 1 : index
    %c0_118 = arith.constant 0 : index
    %c1_119 = arith.constant 1 : index
    %c1_120 = arith.constant 1 : index
    %678 = vector.load %arg8[%c1_117, %c0_118, %c1_119, %c1_120] : memref<4x4x18x18xf32, #tpu.memory_space<vmem>>, vector<1x1x16x16xf32>
    %679 = vector.shape_cast %678 : vector<1x1x16x16xf32> to vector<16x16xf32>
    %680 = vector.shape_cast %677 : vector<16x16xf32> to vector<1x1x16x16xf32>
    tpu.vector_store %arg8[%c1_117, %c0_118, %c1_119, %c1_120], %680 {strides = array<i32>} : memref<4x4x18x18xf32, #tpu.memory_space<vmem>>, vector<1x1x16x16xf32>,
    %cst_121 = arith.constant 0.000000e+00 : f32
    %681 = vector.broadcast %cst_121 : f32 to vector<16x16xf32>
    %682 = arith.maximumf %551, %681 : vector<16x16xf32>
    %c1_122 = arith.constant 1 : index
    %c1_123 = arith.constant 1 : index
    %c1_124 = arith.constant 1 : index
    %c1_125 = arith.constant 1 : index
    %683 = vector.load %arg8[%c1_122, %c1_123, %c1_124, %c1_125] : memref<4x4x18x18xf32, #tpu.memory_space<vmem>>, vector<1x1x16x16xf32>
    %684 = vector.shape_cast %683 : vector<1x1x16x16xf32> to vector<16x16xf32>
    %685 = vector.shape_cast %682 : vector<16x16xf32> to vector<1x1x16x16xf32>
    tpu.vector_store %arg8[%c1_122, %c1_123, %c1_124, %c1_125], %685 {strides = array<i32>} : memref<4x4x18x18xf32, #tpu.memory_space<vmem>>, vector<1x1x16x16xf32>,
    %cst_126 = arith.constant 0.000000e+00 : f32
    %686 = vector.broadcast %cst_126 : f32 to vector<16x16xf32>
    %687 = arith.maximumf %555, %686 : vector<16x16xf32>
    %c1_127 = arith.constant 1 : index
    %c2_128 = arith.constant 2 : index
    %c1_129 = arith.constant 1 : index
    %c1_130 = arith.constant 1 : index
    %688 = vector.load %arg8[%c1_127, %c2_128, %c1_129, %c1_130] : memref<4x4x18x18xf32, #tpu.memory_space<vmem>>, vector<1x1x16x16xf32>
    %689 = vector.shape_cast %688 : vector<1x1x16x16xf32> to vector<16x16xf32>
    %690 = vector.shape_cast %687 : vector<16x16xf32> to vector<1x1x16x16xf32>
    tpu.vector_store %arg8[%c1_127, %c2_128, %c1_129, %c1_130], %690 {strides = array<i32>} : memref<4x4x18x18xf32, #tpu.memory_space<vmem>>, vector<1x1x16x16xf32>,
    %cst_131 = arith.constant 0.000000e+00 : f32
    %691 = vector.broadcast %cst_131 : f32 to vector<16x16xf32>
    %692 = arith.maximumf %559, %691 : vector<16x16xf32>
    %c1_132 = arith.constant 1 : index
    %c3_133 = arith.constant 3 : index
    %c1_134 = arith.constant 1 : index
    %c1_135 = arith.constant 1 : index
    %693 = vector.load %arg8[%c1_132, %c3_133, %c1_134, %c1_135] : memref<4x4x18x18xf32, #tpu.memory_space<vmem>>, vector<1x1x16x16xf32>
    %694 = vector.shape_cast %693 : vector<1x1x16x16xf32> to vector<16x16xf32>
    %695 = vector.shape_cast %692 : vector<16x16xf32> to vector<1x1x16x16xf32>
    tpu.vector_store %arg8[%c1_132, %c3_133, %c1_134, %c1_135], %695 {strides = array<i32>} : memref<4x4x18x18xf32, #tpu.memory_space<vmem>>, vector<1x1x16x16xf32>,
    %cst_136 = arith.constant 0.000000e+00 : f32
    %696 = vector.broadcast %cst_136 : f32 to vector<16x16xf32>
    %697 = arith.maximumf %611, %696 : vector<16x16xf32>
    %c2_137 = arith.constant 2 : index
    %c0_138 = arith.constant 0 : index
    %c1_139 = arith.constant 1 : index
    %c1_140 = arith.constant 1 : index
    %698 = vector.load %arg8[%c2_137, %c0_138, %c1_139, %c1_140] : memref<4x4x18x18xf32, #tpu.memory_space<vmem>>, vector<1x1x16x16xf32>
    %699 = vector.shape_cast %698 : vector<1x1x16x16xf32> to vector<16x16xf32>
    %700 = vector.shape_cast %697 : vector<16x16xf32> to vector<1x1x16x16xf32>
    tpu.vector_store %arg8[%c2_137, %c0_138, %c1_139, %c1_140], %700 {strides = array<i32>} : memref<4x4x18x18xf32, #tpu.memory_space<vmem>>, vector<1x1x16x16xf32>,
    %cst_141 = arith.constant 0.000000e+00 : f32
    %701 = vector.broadcast %cst_141 : f32 to vector<16x16xf32>
    %702 = arith.maximumf %615, %701 : vector<16x16xf32>
    %c2_142 = arith.constant 2 : index
    %c1_143 = arith.constant 1 : index
    %c1_144 = arith.constant 1 : index
    %c1_145 = arith.constant 1 : index
    %703 = vector.load %arg8[%c2_142, %c1_143, %c1_144, %c1_145] : memref<4x4x18x18xf32, #tpu.memory_space<vmem>>, vector<1x1x16x16xf32>
    %704 = vector.shape_cast %703 : vector<1x1x16x16xf32> to vector<16x16xf32>
    %705 = vector.shape_cast %702 : vector<16x16xf32> to vector<1x1x16x16xf32>
    tpu.vector_store %arg8[%c2_142, %c1_143, %c1_144, %c1_145], %705 {strides = array<i32>} : memref<4x4x18x18xf32, #tpu.memory_space<vmem>>, vector<1x1x16x16xf32>,
    %cst_146 = arith.constant 0.000000e+00 : f32
    %706 = vector.broadcast %cst_146 : f32 to vector<16x16xf32>
    %707 = arith.maximumf %619, %706 : vector<16x16xf32>
    %c2_147 = arith.constant 2 : index
    %c2_148 = arith.constant 2 : index
    %c1_149 = arith.constant 1 : index
    %c1_150 = arith.constant 1 : index
    %708 = vector.load %arg8[%c2_147, %c2_148, %c1_149, %c1_150] : memref<4x4x18x18xf32, #tpu.memory_space<vmem>>, vector<1x1x16x16xf32>
    %709 = vector.shape_cast %708 : vector<1x1x16x16xf32> to vector<16x16xf32>
    %710 = vector.shape_cast %707 : vector<16x16xf32> to vector<1x1x16x16xf32>
    tpu.vector_store %arg8[%c2_147, %c2_148, %c1_149, %c1_150], %710 {strides = array<i32>} : memref<4x4x18x18xf32, #tpu.memory_space<vmem>>, vector<1x1x16x16xf32>,
    %cst_151 = arith.constant 0.000000e+00 : f32
    %711 = vector.broadcast %cst_151 : f32 to vector<16x16xf32>
    %712 = arith.maximumf %623, %711 : vector<16x16xf32>
    %c2_152 = arith.constant 2 : index
    %c3_153 = arith.constant 3 : index
    %c1_154 = arith.constant 1 : index
    %c1_155 = arith.constant 1 : index
    %713 = vector.load %arg8[%c2_152, %c3_153, %c1_154, %c1_155] : memref<4x4x18x18xf32, #tpu.memory_space<vmem>>, vector<1x1x16x16xf32>
    %714 = vector.shape_cast %713 : vector<1x1x16x16xf32> to vector<16x16xf32>
    %715 = vector.shape_cast %712 : vector<16x16xf32> to vector<1x1x16x16xf32>
    tpu.vector_store %arg8[%c2_152, %c3_153, %c1_154, %c1_155], %715 {strides = array<i32>} : memref<4x4x18x18xf32, #tpu.memory_space<vmem>>, vector<1x1x16x16xf32>,
    %cst_156 = arith.constant 0.000000e+00 : f32
    %716 = vector.broadcast %cst_156 : f32 to vector<16x16xf32>
    %717 = arith.maximumf %643, %716 : vector<16x16xf32>
    %c3_157 = arith.constant 3 : index
    %c0_158 = arith.constant 0 : index
    %c1_159 = arith.constant 1 : index
    %c1_160 = arith.constant 1 : index
    %718 = vector.load %arg8[%c3_157, %c0_158, %c1_159, %c1_160] : memref<4x4x18x18xf32, #tpu.memory_space<vmem>>, vector<1x1x16x16xf32>
    %719 = vector.shape_cast %718 : vector<1x1x16x16xf32> to vector<16x16xf32>
    %720 = vector.shape_cast %717 : vector<16x16xf32> to vector<1x1x16x16xf32>
    tpu.vector_store %arg8[%c3_157, %c0_158, %c1_159, %c1_160], %720 {strides = array<i32>} : memref<4x4x18x18xf32, #tpu.memory_space<vmem>>, vector<1x1x16x16xf32>,
    %cst_161 = arith.constant 0.000000e+00 : f32
    %721 = vector.broadcast %cst_161 : f32 to vector<16x16xf32>
    %722 = arith.maximumf %647, %721 : vector<16x16xf32>
    %c3_162 = arith.constant 3 : index
    %c1_163 = arith.constant 1 : index
    %c1_164 = arith.constant 1 : index
    %c1_165 = arith.constant 1 : index
    %723 = vector.load %arg8[%c3_162, %c1_163, %c1_164, %c1_165] : memref<4x4x18x18xf32, #tpu.memory_space<vmem>>, vector<1x1x16x16xf32>
    %724 = vector.shape_cast %723 : vector<1x1x16x16xf32> to vector<16x16xf32>
    %725 = vector.shape_cast %722 : vector<16x16xf32> to vector<1x1x16x16xf32>
    tpu.vector_store %arg8[%c3_162, %c1_163, %c1_164, %c1_165], %725 {strides = array<i32>} : memref<4x4x18x18xf32, #tpu.memory_space<vmem>>, vector<1x1x16x16xf32>,
    %cst_166 = arith.constant 0.000000e+00 : f32
    %726 = vector.broadcast %cst_166 : f32 to vector<16x16xf32>
    %727 = arith.maximumf %651, %726 : vector<16x16xf32>
    %c3_167 = arith.constant 3 : index
    %c2_168 = arith.constant 2 : index
    %c1_169 = arith.constant 1 : index
    %c1_170 = arith.constant 1 : index
    %728 = vector.load %arg8[%c3_167, %c2_168, %c1_169, %c1_170] : memref<4x4x18x18xf32, #tpu.memory_space<vmem>>, vector<1x1x16x16xf32>
    %729 = vector.shape_cast %728 : vector<1x1x16x16xf32> to vector<16x16xf32>
    %730 = vector.shape_cast %727 : vector<16x16xf32> to vector<1x1x16x16xf32>
    tpu.vector_store %arg8[%c3_167, %c2_168, %c1_169, %c1_170], %730 {strides = array<i32>} : memref<4x4x18x18xf32, #tpu.memory_space<vmem>>, vector<1x1x16x16xf32>,
    %cst_171 = arith.constant 0.000000e+00 : f32
    %731 = vector.broadcast %cst_171 : f32 to vector<16x16xf32>
    %732 = arith.maximumf %655, %731 : vector<16x16xf32>
    %c3_172 = arith.constant 3 : index
    %c3_173 = arith.constant 3 : index
    %c1_174 = arith.constant 1 : index
    %c1_175 = arith.constant 1 : index
    %733 = vector.load %arg8[%c3_172, %c3_173, %c1_174, %c1_175] : memref<4x4x18x18xf32, #tpu.memory_space<vmem>>, vector<1x1x16x16xf32>
    %734 = vector.shape_cast %733 : vector<1x1x16x16xf32> to vector<16x16xf32>
    %735 = vector.shape_cast %732 : vector<16x16xf32> to vector<1x1x16x16xf32>
    tpu.vector_store %arg8[%c3_172, %c3_173, %c1_174, %c1_175], %735 {strides = array<i32>} : memref<4x4x18x18xf32, #tpu.memory_space<vmem>>, vector<1x1x16x16xf32>,
    %c3_176 = arith.constant 3 : index
    %c0_177 = arith.constant 0 : index
    %c0_178 = arith.constant 0 : index
    %c0_179 = arith.constant 0 : index
    %736 = vector.load %arg8[%c3_176, %c0_177, %c0_178, %c0_179] : memref<4x4x18x18xf32, #tpu.memory_space<vmem>>, vector<1x1x16x16xf32>
    %737 = vector.shape_cast %736 : vector<1x1x16x16xf32> to vector<16x16xf32>
    %c0_180 = arith.constant 0 : index
    %738 = memref.load %arg4[%c0_180] : memref<72xf32, #tpu.memory_space<smem>>
    %739 = vector.broadcast %738 : f32 to vector<16x16xf32>
    %740 = arith.mulf %739, %737 : vector<16x16xf32>
    %741 = arith.addf %43, %740 : vector<16x16xf32>
    %c36_181 = arith.constant 36 : index
    %742 = memref.load %arg4[%c36_181] : memref<72xf32, #tpu.memory_space<smem>>
    %743 = vector.broadcast %742 : f32 to vector<16x16xf32>
    %744 = arith.mulf %743, %737 : vector<16x16xf32>
    %745 = arith.addf %47, %744 : vector<16x16xf32>
    %c2_182 = arith.constant 2 : index
    %c0_183 = arith.constant 0 : index
    %c0_184 = arith.constant 0 : index
    %c1_185 = arith.constant 1 : index
    %746 = vector.load %arg8[%c2_182, %c0_183, %c0_184, %c1_185] : memref<4x4x18x18xf32, #tpu.memory_space<vmem>>, vector<1x1x16x16xf32>
    %747 = vector.shape_cast %746 : vector<1x1x16x16xf32> to vector<16x16xf32>
    %c1_186 = arith.constant 1 : index
    %748 = memref.load %arg4[%c1_186] : memref<72xf32, #tpu.memory_space<smem>>
    %749 = vector.broadcast %748 : f32 to vector<16x16xf32>
    %750 = arith.mulf %749, %747 : vector<16x16xf32>
    %751 = arith.addf %741, %750 : vector<16x16xf32>
    %c37_187 = arith.constant 37 : index
    %752 = memref.load %arg4[%c37_187] : memref<72xf32, #tpu.memory_space<smem>>
    %753 = vector.broadcast %752 : f32 to vector<16x16xf32>
    %754 = arith.mulf %753, %747 : vector<16x16xf32>
    %755 = arith.addf %745, %754 : vector<16x16xf32>
    %c0_188 = arith.constant 0 : index
    %756 = memref.load %arg4[%c0_188] : memref<72xf32, #tpu.memory_space<smem>>
    %757 = vector.broadcast %756 : f32 to vector<16x16xf32>
    %758 = arith.mulf %757, %747 : vector<16x16xf32>
    %759 = arith.addf %43, %758 : vector<16x16xf32>
    %c36_189 = arith.constant 36 : index
    %760 = memref.load %arg4[%c36_189] : memref<72xf32, #tpu.memory_space<smem>>
    %761 = vector.broadcast %760 : f32 to vector<16x16xf32>
    %762 = arith.mulf %761, %747 : vector<16x16xf32>
    %763 = arith.addf %47, %762 : vector<16x16xf32>
    %c3_190 = arith.constant 3 : index
    %c0_191 = arith.constant 0 : index
    %c0_192 = arith.constant 0 : index
    %c1_193 = arith.constant 1 : index
    %764 = vector.load %arg8[%c3_190, %c0_191, %c0_192, %c1_193] : memref<4x4x18x18xf32, #tpu.memory_space<vmem>>, vector<1x1x16x16xf32>
    %765 = vector.shape_cast %764 : vector<1x1x16x16xf32> to vector<16x16xf32>
    %c2_194 = arith.constant 2 : index
    %766 = memref.load %arg4[%c2_194] : memref<72xf32, #tpu.memory_space<smem>>
    %767 = vector.broadcast %766 : f32 to vector<16x16xf32>
    %768 = arith.mulf %767, %765 : vector<16x16xf32>
    %769 = arith.addf %751, %768 : vector<16x16xf32>
    %c38_195 = arith.constant 38 : index
    %770 = memref.load %arg4[%c38_195] : memref<72xf32, #tpu.memory_space<smem>>
    %771 = vector.broadcast %770 : f32 to vector<16x16xf32>
    %772 = arith.mulf %771, %765 : vector<16x16xf32>
    %773 = arith.addf %755, %772 : vector<16x16xf32>
    %c1_196 = arith.constant 1 : index
    %774 = memref.load %arg4[%c1_196] : memref<72xf32, #tpu.memory_space<smem>>
    %775 = vector.broadcast %774 : f32 to vector<16x16xf32>
    %776 = arith.mulf %775, %765 : vector<16x16xf32>
    %777 = arith.addf %759, %776 : vector<16x16xf32>
    %c37_197 = arith.constant 37 : index
    %778 = memref.load %arg4[%c37_197] : memref<72xf32, #tpu.memory_space<smem>>
    %779 = vector.broadcast %778 : f32 to vector<16x16xf32>
    %780 = arith.mulf %779, %765 : vector<16x16xf32>
    %781 = arith.addf %763, %780 : vector<16x16xf32>
    %c2_198 = arith.constant 2 : index
    %c0_199 = arith.constant 0 : index
    %c0_200 = arith.constant 0 : index
    %c2_201 = arith.constant 2 : index
    %782 = vector.load %arg8[%c2_198, %c0_199, %c0_200, %c2_201] : memref<4x4x18x18xf32, #tpu.memory_space<vmem>>, vector<1x1x16x16xf32>
    %783 = vector.shape_cast %782 : vector<1x1x16x16xf32> to vector<16x16xf32>
    %c2_202 = arith.constant 2 : index
    %784 = memref.load %arg4[%c2_202] : memref<72xf32, #tpu.memory_space<smem>>
    %785 = vector.broadcast %784 : f32 to vector<16x16xf32>
    %786 = arith.mulf %785, %783 : vector<16x16xf32>
    %787 = arith.addf %777, %786 : vector<16x16xf32>
    %c38_203 = arith.constant 38 : index
    %788 = memref.load %arg4[%c38_203] : memref<72xf32, #tpu.memory_space<smem>>
    %789 = vector.broadcast %788 : f32 to vector<16x16xf32>
    %790 = arith.mulf %789, %783 : vector<16x16xf32>
    %791 = arith.addf %781, %790 : vector<16x16xf32>
    %c1_204 = arith.constant 1 : index
    %c0_205 = arith.constant 0 : index
    %c1_206 = arith.constant 1 : index
    %c0_207 = arith.constant 0 : index
    %792 = vector.load %arg8[%c1_204, %c0_205, %c1_206, %c0_207] : memref<4x4x18x18xf32, #tpu.memory_space<vmem>>, vector<1x1x16x16xf32>
    %793 = vector.shape_cast %792 : vector<1x1x16x16xf32> to vector<16x16xf32>
    %c3_208 = arith.constant 3 : index
    %794 = memref.load %arg4[%c3_208] : memref<72xf32, #tpu.memory_space<smem>>
    %795 = vector.broadcast %794 : f32 to vector<16x16xf32>
    %796 = arith.mulf %795, %793 : vector<16x16xf32>
    %797 = arith.addf %769, %796 : vector<16x16xf32>
    %c39_209 = arith.constant 39 : index
    %798 = memref.load %arg4[%c39_209] : memref<72xf32, #tpu.memory_space<smem>>
    %799 = vector.broadcast %798 : f32 to vector<16x16xf32>
    %800 = arith.mulf %799, %793 : vector<16x16xf32>
    %801 = arith.addf %773, %800 : vector<16x16xf32>
    %c0_210 = arith.constant 0 : index
    %802 = memref.load %arg4[%c0_210] : memref<72xf32, #tpu.memory_space<smem>>
    %803 = vector.broadcast %802 : f32 to vector<16x16xf32>
    %804 = arith.mulf %803, %793 : vector<16x16xf32>
    %805 = arith.addf %43, %804 : vector<16x16xf32>
    %c36_211 = arith.constant 36 : index
    %806 = memref.load %arg4[%c36_211] : memref<72xf32, #tpu.memory_space<smem>>
    %807 = vector.broadcast %806 : f32 to vector<16x16xf32>
    %808 = arith.mulf %807, %793 : vector<16x16xf32>
    %809 = arith.addf %47, %808 : vector<16x16xf32>
    %c0_212 = arith.constant 0 : index
    %c0_213 = arith.constant 0 : index
    %c1_214 = arith.constant 1 : index
    %c1_215 = arith.constant 1 : index
    %810 = vector.load %arg8[%c0_212, %c0_213, %c1_214, %c1_215] : memref<4x4x18x18xf32, #tpu.memory_space<vmem>>, vector<1x1x16x16xf32>
    %811 = vector.shape_cast %810 : vector<1x1x16x16xf32> to vector<16x16xf32>
    %c4_216 = arith.constant 4 : index
    %812 = memref.load %arg4[%c4_216] : memref<72xf32, #tpu.memory_space<smem>>
    %813 = vector.broadcast %812 : f32 to vector<16x16xf32>
    %814 = arith.mulf %813, %811 : vector<16x16xf32>
    %815 = arith.addf %797, %814 : vector<16x16xf32>
    %c40_217 = arith.constant 40 : index
    %816 = memref.load %arg4[%c40_217] : memref<72xf32, #tpu.memory_space<smem>>
    %817 = vector.broadcast %816 : f32 to vector<16x16xf32>
    %818 = arith.mulf %817, %811 : vector<16x16xf32>
    %819 = arith.addf %801, %818 : vector<16x16xf32>
    %c3_218 = arith.constant 3 : index
    %820 = memref.load %arg4[%c3_218] : memref<72xf32, #tpu.memory_space<smem>>
    %821 = vector.broadcast %820 : f32 to vector<16x16xf32>
    %822 = arith.mulf %821, %811 : vector<16x16xf32>
    %823 = arith.addf %787, %822 : vector<16x16xf32>
    %c39_219 = arith.constant 39 : index
    %824 = memref.load %arg4[%c39_219] : memref<72xf32, #tpu.memory_space<smem>>
    %825 = vector.broadcast %824 : f32 to vector<16x16xf32>
    %826 = arith.mulf %825, %811 : vector<16x16xf32>
    %827 = arith.addf %791, %826 : vector<16x16xf32>
    %c1_220 = arith.constant 1 : index
    %828 = memref.load %arg4[%c1_220] : memref<72xf32, #tpu.memory_space<smem>>
    %829 = vector.broadcast %828 : f32 to vector<16x16xf32>
    %830 = arith.mulf %829, %811 : vector<16x16xf32>
    %831 = arith.addf %805, %830 : vector<16x16xf32>
    %c37_221 = arith.constant 37 : index
    %832 = memref.load %arg4[%c37_221] : memref<72xf32, #tpu.memory_space<smem>>
    %833 = vector.broadcast %832 : f32 to vector<16x16xf32>
    %834 = arith.mulf %833, %811 : vector<16x16xf32>
    %835 = arith.addf %809, %834 : vector<16x16xf32>
    %c0_222 = arith.constant 0 : index
    %836 = memref.load %arg4[%c0_222] : memref<72xf32, #tpu.memory_space<smem>>
    %837 = vector.broadcast %836 : f32 to vector<16x16xf32>
    %838 = arith.mulf %837, %811 : vector<16x16xf32>
    %839 = arith.addf %43, %838 : vector<16x16xf32>
    %c36_223 = arith.constant 36 : index
    %840 = memref.load %arg4[%c36_223] : memref<72xf32, #tpu.memory_space<smem>>
    %841 = vector.broadcast %840 : f32 to vector<16x16xf32>
    %842 = arith.mulf %841, %811 : vector<16x16xf32>
    %843 = arith.addf %47, %842 : vector<16x16xf32>
    %c1_224 = arith.constant 1 : index
    %c0_225 = arith.constant 0 : index
    %c1_226 = arith.constant 1 : index
    %c1_227 = arith.constant 1 : index
    %844 = vector.load %arg8[%c1_224, %c0_225, %c1_226, %c1_227] : memref<4x4x18x18xf32, #tpu.memory_space<vmem>>, vector<1x1x16x16xf32>
    %845 = vector.shape_cast %844 : vector<1x1x16x16xf32> to vector<16x16xf32>
    %c5_228 = arith.constant 5 : index
    %846 = memref.load %arg4[%c5_228] : memref<72xf32, #tpu.memory_space<smem>>
    %847 = vector.broadcast %846 : f32 to vector<16x16xf32>
    %848 = arith.mulf %847, %845 : vector<16x16xf32>
    %849 = arith.addf %815, %848 : vector<16x16xf32>
    %c41_229 = arith.constant 41 : index
    %850 = memref.load %arg4[%c41_229] : memref<72xf32, #tpu.memory_space<smem>>
    %851 = vector.broadcast %850 : f32 to vector<16x16xf32>
    %852 = arith.mulf %851, %845 : vector<16x16xf32>
    %853 = arith.addf %819, %852 : vector<16x16xf32>
    %c4_230 = arith.constant 4 : index
    %854 = memref.load %arg4[%c4_230] : memref<72xf32, #tpu.memory_space<smem>>
    %855 = vector.broadcast %854 : f32 to vector<16x16xf32>
    %856 = arith.mulf %855, %845 : vector<16x16xf32>
    %857 = arith.addf %823, %856 : vector<16x16xf32>
    %c40_231 = arith.constant 40 : index
    %858 = memref.load %arg4[%c40_231] : memref<72xf32, #tpu.memory_space<smem>>
    %859 = vector.broadcast %858 : f32 to vector<16x16xf32>
    %860 = arith.mulf %859, %845 : vector<16x16xf32>
    %861 = arith.addf %827, %860 : vector<16x16xf32>
    %c2_232 = arith.constant 2 : index
    %862 = memref.load %arg4[%c2_232] : memref<72xf32, #tpu.memory_space<smem>>
    %863 = vector.broadcast %862 : f32 to vector<16x16xf32>
    %864 = arith.mulf %863, %845 : vector<16x16xf32>
    %865 = arith.addf %831, %864 : vector<16x16xf32>
    %c38_233 = arith.constant 38 : index
    %866 = memref.load %arg4[%c38_233] : memref<72xf32, #tpu.memory_space<smem>>
    %867 = vector.broadcast %866 : f32 to vector<16x16xf32>
    %868 = arith.mulf %867, %845 : vector<16x16xf32>
    %869 = arith.addf %835, %868 : vector<16x16xf32>
    %c1_234 = arith.constant 1 : index
    %870 = memref.load %arg4[%c1_234] : memref<72xf32, #tpu.memory_space<smem>>
    %871 = vector.broadcast %870 : f32 to vector<16x16xf32>
    %872 = arith.mulf %871, %845 : vector<16x16xf32>
    %873 = arith.addf %839, %872 : vector<16x16xf32>
    %c37_235 = arith.constant 37 : index
    %874 = memref.load %arg4[%c37_235] : memref<72xf32, #tpu.memory_space<smem>>
    %875 = vector.broadcast %874 : f32 to vector<16x16xf32>
    %876 = arith.mulf %875, %845 : vector<16x16xf32>
    %877 = arith.addf %843, %876 : vector<16x16xf32>
    %c0_236 = arith.constant 0 : index
    %c0_237 = arith.constant 0 : index
    %c1_238 = arith.constant 1 : index
    %c2_239 = arith.constant 2 : index
    %878 = vector.load %arg8[%c0_236, %c0_237, %c1_238, %c2_239] : memref<4x4x18x18xf32, #tpu.memory_space<vmem>>, vector<1x1x16x16xf32>
    %879 = vector.shape_cast %878 : vector<1x1x16x16xf32> to vector<16x16xf32>
    %c5_240 = arith.constant 5 : index
    %880 = memref.load %arg4[%c5_240] : memref<72xf32, #tpu.memory_space<smem>>
    %881 = vector.broadcast %880 : f32 to vector<16x16xf32>
    %882 = arith.mulf %881, %879 : vector<16x16xf32>
    %883 = arith.addf %857, %882 : vector<16x16xf32>
    %c41_241 = arith.constant 41 : index
    %884 = memref.load %arg4[%c41_241] : memref<72xf32, #tpu.memory_space<smem>>
    %885 = vector.broadcast %884 : f32 to vector<16x16xf32>
    %886 = arith.mulf %885, %879 : vector<16x16xf32>
    %887 = arith.addf %861, %886 : vector<16x16xf32>
    %c2_242 = arith.constant 2 : index
    %888 = memref.load %arg4[%c2_242] : memref<72xf32, #tpu.memory_space<smem>>
    %889 = vector.broadcast %888 : f32 to vector<16x16xf32>
    %890 = arith.mulf %889, %879 : vector<16x16xf32>
    %891 = arith.addf %873, %890 : vector<16x16xf32>
    %c38_243 = arith.constant 38 : index
    %892 = memref.load %arg4[%c38_243] : memref<72xf32, #tpu.memory_space<smem>>
    %893 = vector.broadcast %892 : f32 to vector<16x16xf32>
    %894 = arith.mulf %893, %879 : vector<16x16xf32>
    %895 = arith.addf %877, %894 : vector<16x16xf32>
    %c3_244 = arith.constant 3 : index
    %c0_245 = arith.constant 0 : index
    %c1_246 = arith.constant 1 : index
    %c0_247 = arith.constant 0 : index
    %896 = vector.load %arg8[%c3_244, %c0_245, %c1_246, %c0_247] : memref<4x4x18x18xf32, #tpu.memory_space<vmem>>, vector<1x1x16x16xf32>
    %897 = vector.shape_cast %896 : vector<1x1x16x16xf32> to vector<16x16xf32>
    %c6_248 = arith.constant 6 : index
    %898 = memref.load %arg4[%c6_248] : memref<72xf32, #tpu.memory_space<smem>>
    %899 = vector.broadcast %898 : f32 to vector<16x16xf32>
    %900 = arith.mulf %899, %897 : vector<16x16xf32>
    %901 = arith.addf %849, %900 : vector<16x16xf32>
    %c42_249 = arith.constant 42 : index
    %902 = memref.load %arg4[%c42_249] : memref<72xf32, #tpu.memory_space<smem>>
    %903 = vector.broadcast %902 : f32 to vector<16x16xf32>
    %904 = arith.mulf %903, %897 : vector<16x16xf32>
    %905 = arith.addf %853, %904 : vector<16x16xf32>
    %c3_250 = arith.constant 3 : index
    %906 = memref.load %arg4[%c3_250] : memref<72xf32, #tpu.memory_space<smem>>
    %907 = vector.broadcast %906 : f32 to vector<16x16xf32>
    %908 = arith.mulf %907, %897 : vector<16x16xf32>
    %909 = arith.addf %865, %908 : vector<16x16xf32>
    %c39_251 = arith.constant 39 : index
    %910 = memref.load %arg4[%c39_251] : memref<72xf32, #tpu.memory_space<smem>>
    %911 = vector.broadcast %910 : f32 to vector<16x16xf32>
    %912 = arith.mulf %911, %897 : vector<16x16xf32>
    %913 = arith.addf %869, %912 : vector<16x16xf32>
    %c2_252 = arith.constant 2 : index
    %c0_253 = arith.constant 0 : index
    %c1_254 = arith.constant 1 : index
    %c1_255 = arith.constant 1 : index
    %914 = vector.load %arg8[%c2_252, %c0_253, %c1_254, %c1_255] : memref<4x4x18x18xf32, #tpu.memory_space<vmem>>, vector<1x1x16x16xf32>
    %915 = vector.shape_cast %914 : vector<1x1x16x16xf32> to vector<16x16xf32>
    %c7_256 = arith.constant 7 : index
    %916 = memref.load %arg4[%c7_256] : memref<72xf32, #tpu.memory_space<smem>>
    %917 = vector.broadcast %916 : f32 to vector<16x16xf32>
    %918 = arith.mulf %917, %915 : vector<16x16xf32>
    %919 = arith.addf %901, %918 : vector<16x16xf32>
    %c43_257 = arith.constant 43 : index
    %920 = memref.load %arg4[%c43_257] : memref<72xf32, #tpu.memory_space<smem>>
    %921 = vector.broadcast %920 : f32 to vector<16x16xf32>
    %922 = arith.mulf %921, %915 : vector<16x16xf32>
    %923 = arith.addf %905, %922 : vector<16x16xf32>
    %c6_258 = arith.constant 6 : index
    %924 = memref.load %arg4[%c6_258] : memref<72xf32, #tpu.memory_space<smem>>
    %925 = vector.broadcast %924 : f32 to vector<16x16xf32>
    %926 = arith.mulf %925, %915 : vector<16x16xf32>
    %927 = arith.addf %883, %926 : vector<16x16xf32>
    %c42_259 = arith.constant 42 : index
    %928 = memref.load %arg4[%c42_259] : memref<72xf32, #tpu.memory_space<smem>>
    %929 = vector.broadcast %928 : f32 to vector<16x16xf32>
    %930 = arith.mulf %929, %915 : vector<16x16xf32>
    %931 = arith.addf %887, %930 : vector<16x16xf32>
    %c4_260 = arith.constant 4 : index
    %932 = memref.load %arg4[%c4_260] : memref<72xf32, #tpu.memory_space<smem>>
    %933 = vector.broadcast %932 : f32 to vector<16x16xf32>
    %934 = arith.mulf %933, %915 : vector<16x16xf32>
    %935 = arith.addf %909, %934 : vector<16x16xf32>
    %c40_261 = arith.constant 40 : index
    %936 = memref.load %arg4[%c40_261] : memref<72xf32, #tpu.memory_space<smem>>
    %937 = vector.broadcast %936 : f32 to vector<16x16xf32>
    %938 = arith.mulf %937, %915 : vector<16x16xf32>
    %939 = arith.addf %913, %938 : vector<16x16xf32>
    %c3_262 = arith.constant 3 : index
    %940 = memref.load %arg4[%c3_262] : memref<72xf32, #tpu.memory_space<smem>>
    %941 = vector.broadcast %940 : f32 to vector<16x16xf32>
    %942 = arith.mulf %941, %915 : vector<16x16xf32>
    %943 = arith.addf %891, %942 : vector<16x16xf32>
    %c39_263 = arith.constant 39 : index
    %944 = memref.load %arg4[%c39_263] : memref<72xf32, #tpu.memory_space<smem>>
    %945 = vector.broadcast %944 : f32 to vector<16x16xf32>
    %946 = arith.mulf %945, %915 : vector<16x16xf32>
    %947 = arith.addf %895, %946 : vector<16x16xf32>
    %c3_264 = arith.constant 3 : index
    %c0_265 = arith.constant 0 : index
    %c1_266 = arith.constant 1 : index
    %c1_267 = arith.constant 1 : index
    %948 = vector.load %arg8[%c3_264, %c0_265, %c1_266, %c1_267] : memref<4x4x18x18xf32, #tpu.memory_space<vmem>>, vector<1x1x16x16xf32>
    %949 = vector.shape_cast %948 : vector<1x1x16x16xf32> to vector<16x16xf32>
    %c8_268 = arith.constant 8 : index
    %950 = memref.load %arg4[%c8_268] : memref<72xf32, #tpu.memory_space<smem>>
    %951 = vector.broadcast %950 : f32 to vector<16x16xf32>
    %952 = arith.mulf %951, %949 : vector<16x16xf32>
    %953 = arith.addf %919, %952 : vector<16x16xf32>
    %c44_269 = arith.constant 44 : index
    %954 = memref.load %arg4[%c44_269] : memref<72xf32, #tpu.memory_space<smem>>
    %955 = vector.broadcast %954 : f32 to vector<16x16xf32>
    %956 = arith.mulf %955, %949 : vector<16x16xf32>
    %957 = arith.addf %923, %956 : vector<16x16xf32>
    %c7_270 = arith.constant 7 : index
    %958 = memref.load %arg4[%c7_270] : memref<72xf32, #tpu.memory_space<smem>>
    %959 = vector.broadcast %958 : f32 to vector<16x16xf32>
    %960 = arith.mulf %959, %949 : vector<16x16xf32>
    %961 = arith.addf %927, %960 : vector<16x16xf32>
    %c43_271 = arith.constant 43 : index
    %962 = memref.load %arg4[%c43_271] : memref<72xf32, #tpu.memory_space<smem>>
    %963 = vector.broadcast %962 : f32 to vector<16x16xf32>
    %964 = arith.mulf %963, %949 : vector<16x16xf32>
    %965 = arith.addf %931, %964 : vector<16x16xf32>
    %c5_272 = arith.constant 5 : index
    %966 = memref.load %arg4[%c5_272] : memref<72xf32, #tpu.memory_space<smem>>
    %967 = vector.broadcast %966 : f32 to vector<16x16xf32>
    %968 = arith.mulf %967, %949 : vector<16x16xf32>
    %969 = arith.addf %935, %968 : vector<16x16xf32>
    %c41_273 = arith.constant 41 : index
    %970 = memref.load %arg4[%c41_273] : memref<72xf32, #tpu.memory_space<smem>>
    %971 = vector.broadcast %970 : f32 to vector<16x16xf32>
    %972 = arith.mulf %971, %949 : vector<16x16xf32>
    %973 = arith.addf %939, %972 : vector<16x16xf32>
    %c4_274 = arith.constant 4 : index
    %974 = memref.load %arg4[%c4_274] : memref<72xf32, #tpu.memory_space<smem>>
    %975 = vector.broadcast %974 : f32 to vector<16x16xf32>
    %976 = arith.mulf %975, %949 : vector<16x16xf32>
    %977 = arith.addf %943, %976 : vector<16x16xf32>
    %c40_275 = arith.constant 40 : index
    %978 = memref.load %arg4[%c40_275] : memref<72xf32, #tpu.memory_space<smem>>
    %979 = vector.broadcast %978 : f32 to vector<16x16xf32>
    %980 = arith.mulf %979, %949 : vector<16x16xf32>
    %981 = arith.addf %947, %980 : vector<16x16xf32>
    %c2_276 = arith.constant 2 : index
    %c0_277 = arith.constant 0 : index
    %c1_278 = arith.constant 1 : index
    %c2_279 = arith.constant 2 : index
    %982 = vector.load %arg8[%c2_276, %c0_277, %c1_278, %c2_279] : memref<4x4x18x18xf32, #tpu.memory_space<vmem>>, vector<1x1x16x16xf32>
    %983 = vector.shape_cast %982 : vector<1x1x16x16xf32> to vector<16x16xf32>
    %c8_280 = arith.constant 8 : index
    %984 = memref.load %arg4[%c8_280] : memref<72xf32, #tpu.memory_space<smem>>
    %985 = vector.broadcast %984 : f32 to vector<16x16xf32>
    %986 = arith.mulf %985, %983 : vector<16x16xf32>
    %987 = arith.addf %961, %986 : vector<16x16xf32>
    %c44_281 = arith.constant 44 : index
    %988 = memref.load %arg4[%c44_281] : memref<72xf32, #tpu.memory_space<smem>>
    %989 = vector.broadcast %988 : f32 to vector<16x16xf32>
    %990 = arith.mulf %989, %983 : vector<16x16xf32>
    %991 = arith.addf %965, %990 : vector<16x16xf32>
    %c5_282 = arith.constant 5 : index
    %992 = memref.load %arg4[%c5_282] : memref<72xf32, #tpu.memory_space<smem>>
    %993 = vector.broadcast %992 : f32 to vector<16x16xf32>
    %994 = arith.mulf %993, %983 : vector<16x16xf32>
    %995 = arith.addf %977, %994 : vector<16x16xf32>
    %c41_283 = arith.constant 41 : index
    %996 = memref.load %arg4[%c41_283] : memref<72xf32, #tpu.memory_space<smem>>
    %997 = vector.broadcast %996 : f32 to vector<16x16xf32>
    %998 = arith.mulf %997, %983 : vector<16x16xf32>
    %999 = arith.addf %981, %998 : vector<16x16xf32>
    %c1_284 = arith.constant 1 : index
    %c0_285 = arith.constant 0 : index
    %c2_286 = arith.constant 2 : index
    %c0_287 = arith.constant 0 : index
    %1000 = vector.load %arg8[%c1_284, %c0_285, %c2_286, %c0_287] : memref<4x4x18x18xf32, #tpu.memory_space<vmem>>, vector<1x1x16x16xf32>
    %1001 = vector.shape_cast %1000 : vector<1x1x16x16xf32> to vector<16x16xf32>
    %c6_288 = arith.constant 6 : index
    %1002 = memref.load %arg4[%c6_288] : memref<72xf32, #tpu.memory_space<smem>>
    %1003 = vector.broadcast %1002 : f32 to vector<16x16xf32>
    %1004 = arith.mulf %1003, %1001 : vector<16x16xf32>
    %1005 = arith.addf %969, %1004 : vector<16x16xf32>
    %c42_289 = arith.constant 42 : index
    %1006 = memref.load %arg4[%c42_289] : memref<72xf32, #tpu.memory_space<smem>>
    %1007 = vector.broadcast %1006 : f32 to vector<16x16xf32>
    %1008 = arith.mulf %1007, %1001 : vector<16x16xf32>
    %1009 = arith.addf %973, %1008 : vector<16x16xf32>
    %c0_290 = arith.constant 0 : index
    %c0_291 = arith.constant 0 : index
    %c2_292 = arith.constant 2 : index
    %c1_293 = arith.constant 1 : index
    %1010 = vector.load %arg8[%c0_290, %c0_291, %c2_292, %c1_293] : memref<4x4x18x18xf32, #tpu.memory_space<vmem>>, vector<1x1x16x16xf32>
    %1011 = vector.shape_cast %1010 : vector<1x1x16x16xf32> to vector<16x16xf32>
    %c7_294 = arith.constant 7 : index
    %1012 = memref.load %arg4[%c7_294] : memref<72xf32, #tpu.memory_space<smem>>
    %1013 = vector.broadcast %1012 : f32 to vector<16x16xf32>
    %1014 = arith.mulf %1013, %1011 : vector<16x16xf32>
    %1015 = arith.addf %1005, %1014 : vector<16x16xf32>
    %c43_295 = arith.constant 43 : index
    %1016 = memref.load %arg4[%c43_295] : memref<72xf32, #tpu.memory_space<smem>>
    %1017 = vector.broadcast %1016 : f32 to vector<16x16xf32>
    %1018 = arith.mulf %1017, %1011 : vector<16x16xf32>
    %1019 = arith.addf %1009, %1018 : vector<16x16xf32>
    %c6_296 = arith.constant 6 : index
    %1020 = memref.load %arg4[%c6_296] : memref<72xf32, #tpu.memory_space<smem>>
    %1021 = vector.broadcast %1020 : f32 to vector<16x16xf32>
    %1022 = arith.mulf %1021, %1011 : vector<16x16xf32>
    %1023 = arith.addf %995, %1022 : vector<16x16xf32>
    %c42_297 = arith.constant 42 : index
    %1024 = memref.load %arg4[%c42_297] : memref<72xf32, #tpu.memory_space<smem>>
    %1025 = vector.broadcast %1024 : f32 to vector<16x16xf32>
    %1026 = arith.mulf %1025, %1011 : vector<16x16xf32>
    %1027 = arith.addf %999, %1026 : vector<16x16xf32>
    %c1_298 = arith.constant 1 : index
    %c0_299 = arith.constant 0 : index
    %c2_300 = arith.constant 2 : index
    %c1_301 = arith.constant 1 : index
    %1028 = vector.load %arg8[%c1_298, %c0_299, %c2_300, %c1_301] : memref<4x4x18x18xf32, #tpu.memory_space<vmem>>, vector<1x1x16x16xf32>
    %1029 = vector.shape_cast %1028 : vector<1x1x16x16xf32> to vector<16x16xf32>
    %c8_302 = arith.constant 8 : index
    %1030 = memref.load %arg4[%c8_302] : memref<72xf32, #tpu.memory_space<smem>>
    %1031 = vector.broadcast %1030 : f32 to vector<16x16xf32>
    %1032 = arith.mulf %1031, %1029 : vector<16x16xf32>
    %1033 = arith.addf %1015, %1032 : vector<16x16xf32>
    %c44_303 = arith.constant 44 : index
    %1034 = memref.load %arg4[%c44_303] : memref<72xf32, #tpu.memory_space<smem>>
    %1035 = vector.broadcast %1034 : f32 to vector<16x16xf32>
    %1036 = arith.mulf %1035, %1029 : vector<16x16xf32>
    %1037 = arith.addf %1019, %1036 : vector<16x16xf32>
    %c7_304 = arith.constant 7 : index
    %1038 = memref.load %arg4[%c7_304] : memref<72xf32, #tpu.memory_space<smem>>
    %1039 = vector.broadcast %1038 : f32 to vector<16x16xf32>
    %1040 = arith.mulf %1039, %1029 : vector<16x16xf32>
    %1041 = arith.addf %1023, %1040 : vector<16x16xf32>
    %c43_305 = arith.constant 43 : index
    %1042 = memref.load %arg4[%c43_305] : memref<72xf32, #tpu.memory_space<smem>>
    %1043 = vector.broadcast %1042 : f32 to vector<16x16xf32>
    %1044 = arith.mulf %1043, %1029 : vector<16x16xf32>
    %1045 = arith.addf %1027, %1044 : vector<16x16xf32>
    %c0_306 = arith.constant 0 : index
    %c0_307 = arith.constant 0 : index
    %c2_308 = arith.constant 2 : index
    %c2_309 = arith.constant 2 : index
    %1046 = vector.load %arg8[%c0_306, %c0_307, %c2_308, %c2_309] : memref<4x4x18x18xf32, #tpu.memory_space<vmem>>, vector<1x1x16x16xf32>
    %1047 = vector.shape_cast %1046 : vector<1x1x16x16xf32> to vector<16x16xf32>
    %c8_310 = arith.constant 8 : index
    %1048 = memref.load %arg4[%c8_310] : memref<72xf32, #tpu.memory_space<smem>>
    %1049 = vector.broadcast %1048 : f32 to vector<16x16xf32>
    %1050 = arith.mulf %1049, %1047 : vector<16x16xf32>
    %1051 = arith.addf %1041, %1050 : vector<16x16xf32>
    %c44_311 = arith.constant 44 : index
    %1052 = memref.load %arg4[%c44_311] : memref<72xf32, #tpu.memory_space<smem>>
    %1053 = vector.broadcast %1052 : f32 to vector<16x16xf32>
    %1054 = arith.mulf %1053, %1047 : vector<16x16xf32>
    %1055 = arith.addf %1045, %1054 : vector<16x16xf32>
    %c3_312 = arith.constant 3 : index
    %c1_313 = arith.constant 1 : index
    %c0_314 = arith.constant 0 : index
    %c0_315 = arith.constant 0 : index
    %1056 = vector.load %arg8[%c3_312, %c1_313, %c0_314, %c0_315] : memref<4x4x18x18xf32, #tpu.memory_space<vmem>>, vector<1x1x16x16xf32>
    %1057 = vector.shape_cast %1056 : vector<1x1x16x16xf32> to vector<16x16xf32>
    %c9_316 = arith.constant 9 : index
    %1058 = memref.load %arg4[%c9_316] : memref<72xf32, #tpu.memory_space<smem>>
    %1059 = vector.broadcast %1058 : f32 to vector<16x16xf32>
    %1060 = arith.mulf %1059, %1057 : vector<16x16xf32>
    %1061 = arith.addf %953, %1060 : vector<16x16xf32>
    %c45_317 = arith.constant 45 : index
    %1062 = memref.load %arg4[%c45_317] : memref<72xf32, #tpu.memory_space<smem>>
    %1063 = vector.broadcast %1062 : f32 to vector<16x16xf32>
    %1064 = arith.mulf %1063, %1057 : vector<16x16xf32>
    %1065 = arith.addf %957, %1064 : vector<16x16xf32>
    %c2_318 = arith.constant 2 : index
    %c1_319 = arith.constant 1 : index
    %c0_320 = arith.constant 0 : index
    %c1_321 = arith.constant 1 : index
    %1066 = vector.load %arg8[%c2_318, %c1_319, %c0_320, %c1_321] : memref<4x4x18x18xf32, #tpu.memory_space<vmem>>, vector<1x1x16x16xf32>
    %1067 = vector.shape_cast %1066 : vector<1x1x16x16xf32> to vector<16x16xf32>
    %c10_322 = arith.constant 10 : index
    %1068 = memref.load %arg4[%c10_322] : memref<72xf32, #tpu.memory_space<smem>>
    %1069 = vector.broadcast %1068 : f32 to vector<16x16xf32>
    %1070 = arith.mulf %1069, %1067 : vector<16x16xf32>
    %1071 = arith.addf %1061, %1070 : vector<16x16xf32>
    %c46_323 = arith.constant 46 : index
    %1072 = memref.load %arg4[%c46_323] : memref<72xf32, #tpu.memory_space<smem>>
    %1073 = vector.broadcast %1072 : f32 to vector<16x16xf32>
    %1074 = arith.mulf %1073, %1067 : vector<16x16xf32>
    %1075 = arith.addf %1065, %1074 : vector<16x16xf32>
    %c9_324 = arith.constant 9 : index
    %1076 = memref.load %arg4[%c9_324] : memref<72xf32, #tpu.memory_space<smem>>
    %1077 = vector.broadcast %1076 : f32 to vector<16x16xf32>
    %1078 = arith.mulf %1077, %1067 : vector<16x16xf32>
    %1079 = arith.addf %987, %1078 : vector<16x16xf32>
    %c45_325 = arith.constant 45 : index
    %1080 = memref.load %arg4[%c45_325] : memref<72xf32, #tpu.memory_space<smem>>
    %1081 = vector.broadcast %1080 : f32 to vector<16x16xf32>
    %1082 = arith.mulf %1081, %1067 : vector<16x16xf32>
    %1083 = arith.addf %991, %1082 : vector<16x16xf32>
    %c3_326 = arith.constant 3 : index
    %c1_327 = arith.constant 1 : index
    %c0_328 = arith.constant 0 : index
    %c1_329 = arith.constant 1 : index
    %1084 = vector.load %arg8[%c3_326, %c1_327, %c0_328, %c1_329] : memref<4x4x18x18xf32, #tpu.memory_space<vmem>>, vector<1x1x16x16xf32>
    %1085 = vector.shape_cast %1084 : vector<1x1x16x16xf32> to vector<16x16xf32>
    %c11_330 = arith.constant 11 : index
    %1086 = memref.load %arg4[%c11_330] : memref<72xf32, #tpu.memory_space<smem>>
    %1087 = vector.broadcast %1086 : f32 to vector<16x16xf32>
    %1088 = arith.mulf %1087, %1085 : vector<16x16xf32>
    %1089 = arith.addf %1071, %1088 : vector<16x16xf32>
    %c47_331 = arith.constant 47 : index
    %1090 = memref.load %arg4[%c47_331] : memref<72xf32, #tpu.memory_space<smem>>
    %1091 = vector.broadcast %1090 : f32 to vector<16x16xf32>
    %1092 = arith.mulf %1091, %1085 : vector<16x16xf32>
    %1093 = arith.addf %1075, %1092 : vector<16x16xf32>
    %c10_332 = arith.constant 10 : index
    %1094 = memref.load %arg4[%c10_332] : memref<72xf32, #tpu.memory_space<smem>>
    %1095 = vector.broadcast %1094 : f32 to vector<16x16xf32>
    %1096 = arith.mulf %1095, %1085 : vector<16x16xf32>
    %1097 = arith.addf %1079, %1096 : vector<16x16xf32>
    %c46_333 = arith.constant 46 : index
    %1098 = memref.load %arg4[%c46_333] : memref<72xf32, #tpu.memory_space<smem>>
    %1099 = vector.broadcast %1098 : f32 to vector<16x16xf32>
    %1100 = arith.mulf %1099, %1085 : vector<16x16xf32>
    %1101 = arith.addf %1083, %1100 : vector<16x16xf32>
    %c2_334 = arith.constant 2 : index
    %c1_335 = arith.constant 1 : index
    %c0_336 = arith.constant 0 : index
    %c2_337 = arith.constant 2 : index
    %1102 = vector.load %arg8[%c2_334, %c1_335, %c0_336, %c2_337] : memref<4x4x18x18xf32, #tpu.memory_space<vmem>>, vector<1x1x16x16xf32>
    %1103 = vector.shape_cast %1102 : vector<1x1x16x16xf32> to vector<16x16xf32>
    %c11_338 = arith.constant 11 : index
    %1104 = memref.load %arg4[%c11_338] : memref<72xf32, #tpu.memory_space<smem>>
    %1105 = vector.broadcast %1104 : f32 to vector<16x16xf32>
    %1106 = arith.mulf %1105, %1103 : vector<16x16xf32>
    %1107 = arith.addf %1097, %1106 : vector<16x16xf32>
    %c47_339 = arith.constant 47 : index
    %1108 = memref.load %arg4[%c47_339] : memref<72xf32, #tpu.memory_space<smem>>
    %1109 = vector.broadcast %1108 : f32 to vector<16x16xf32>
    %1110 = arith.mulf %1109, %1103 : vector<16x16xf32>
    %1111 = arith.addf %1101, %1110 : vector<16x16xf32>
    %c1_340 = arith.constant 1 : index
    %c1_341 = arith.constant 1 : index
    %c1_342 = arith.constant 1 : index
    %c0_343 = arith.constant 0 : index
    %1112 = vector.load %arg8[%c1_340, %c1_341, %c1_342, %c0_343] : memref<4x4x18x18xf32, #tpu.memory_space<vmem>>, vector<1x1x16x16xf32>
    %1113 = vector.shape_cast %1112 : vector<1x1x16x16xf32> to vector<16x16xf32>
    %c12_344 = arith.constant 12 : index
    %1114 = memref.load %arg4[%c12_344] : memref<72xf32, #tpu.memory_space<smem>>
    %1115 = vector.broadcast %1114 : f32 to vector<16x16xf32>
    %1116 = arith.mulf %1115, %1113 : vector<16x16xf32>
    %1117 = arith.addf %1089, %1116 : vector<16x16xf32>
    %c48_345 = arith.constant 48 : index
    %1118 = memref.load %arg4[%c48_345] : memref<72xf32, #tpu.memory_space<smem>>
    %1119 = vector.broadcast %1118 : f32 to vector<16x16xf32>
    %1120 = arith.mulf %1119, %1113 : vector<16x16xf32>
    %1121 = arith.addf %1093, %1120 : vector<16x16xf32>
    %c9_346 = arith.constant 9 : index
    %1122 = memref.load %arg4[%c9_346] : memref<72xf32, #tpu.memory_space<smem>>
    %1123 = vector.broadcast %1122 : f32 to vector<16x16xf32>
    %1124 = arith.mulf %1123, %1113 : vector<16x16xf32>
    %1125 = arith.addf %1033, %1124 : vector<16x16xf32>
    %c45_347 = arith.constant 45 : index
    %1126 = memref.load %arg4[%c45_347] : memref<72xf32, #tpu.memory_space<smem>>
    %1127 = vector.broadcast %1126 : f32 to vector<16x16xf32>
    %1128 = arith.mulf %1127, %1113 : vector<16x16xf32>
    %1129 = arith.addf %1037, %1128 : vector<16x16xf32>
    %c0_348 = arith.constant 0 : index
    %c1_349 = arith.constant 1 : index
    %c1_350 = arith.constant 1 : index
    %c1_351 = arith.constant 1 : index
    %1130 = vector.load %arg8[%c0_348, %c1_349, %c1_350, %c1_351] : memref<4x4x18x18xf32, #tpu.memory_space<vmem>>, vector<1x1x16x16xf32>
    %1131 = vector.shape_cast %1130 : vector<1x1x16x16xf32> to vector<16x16xf32>
    %c13_352 = arith.constant 13 : index
    %1132 = memref.load %arg4[%c13_352] : memref<72xf32, #tpu.memory_space<smem>>
    %1133 = vector.broadcast %1132 : f32 to vector<16x16xf32>
    %1134 = arith.mulf %1133, %1131 : vector<16x16xf32>
    %1135 = arith.addf %1117, %1134 : vector<16x16xf32>
    %c49_353 = arith.constant 49 : index
    %1136 = memref.load %arg4[%c49_353] : memref<72xf32, #tpu.memory_space<smem>>
    %1137 = vector.broadcast %1136 : f32 to vector<16x16xf32>
    %1138 = arith.mulf %1137, %1131 : vector<16x16xf32>
    %1139 = arith.addf %1121, %1138 : vector<16x16xf32>
    %c12_354 = arith.constant 12 : index
    %1140 = memref.load %arg4[%c12_354] : memref<72xf32, #tpu.memory_space<smem>>
    %1141 = vector.broadcast %1140 : f32 to vector<16x16xf32>
    %1142 = arith.mulf %1141, %1131 : vector<16x16xf32>
    %1143 = arith.addf %1107, %1142 : vector<16x16xf32>
    %c48_355 = arith.constant 48 : index
    %1144 = memref.load %arg4[%c48_355] : memref<72xf32, #tpu.memory_space<smem>>
    %1145 = vector.broadcast %1144 : f32 to vector<16x16xf32>
    %1146 = arith.mulf %1145, %1131 : vector<16x16xf32>
    %1147 = arith.addf %1111, %1146 : vector<16x16xf32>
    %c10_356 = arith.constant 10 : index
    %1148 = memref.load %arg4[%c10_356] : memref<72xf32, #tpu.memory_space<smem>>
    %1149 = vector.broadcast %1148 : f32 to vector<16x16xf32>
    %1150 = arith.mulf %1149, %1131 : vector<16x16xf32>
    %1151 = arith.addf %1125, %1150 : vector<16x16xf32>
    %c46_357 = arith.constant 46 : index
    %1152 = memref.load %arg4[%c46_357] : memref<72xf32, #tpu.memory_space<smem>>
    %1153 = vector.broadcast %1152 : f32 to vector<16x16xf32>
    %1154 = arith.mulf %1153, %1131 : vector<16x16xf32>
    %1155 = arith.addf %1129, %1154 : vector<16x16xf32>
    %c9_358 = arith.constant 9 : index
    %1156 = memref.load %arg4[%c9_358] : memref<72xf32, #tpu.memory_space<smem>>
    %1157 = vector.broadcast %1156 : f32 to vector<16x16xf32>
    %1158 = arith.mulf %1157, %1131 : vector<16x16xf32>
    %1159 = arith.addf %1051, %1158 : vector<16x16xf32>
    %c45_359 = arith.constant 45 : index
    %1160 = memref.load %arg4[%c45_359] : memref<72xf32, #tpu.memory_space<smem>>
    %1161 = vector.broadcast %1160 : f32 to vector<16x16xf32>
    %1162 = arith.mulf %1161, %1131 : vector<16x16xf32>
    %1163 = arith.addf %1055, %1162 : vector<16x16xf32>
    %c1_360 = arith.constant 1 : index
    %c1_361 = arith.constant 1 : index
    %c1_362 = arith.constant 1 : index
    %c1_363 = arith.constant 1 : index
    %1164 = vector.load %arg8[%c1_360, %c1_361, %c1_362, %c1_363] : memref<4x4x18x18xf32, #tpu.memory_space<vmem>>, vector<1x1x16x16xf32>
    %1165 = vector.shape_cast %1164 : vector<1x1x16x16xf32> to vector<16x16xf32>
    %c14_364 = arith.constant 14 : index
    %1166 = memref.load %arg4[%c14_364] : memref<72xf32, #tpu.memory_space<smem>>
    %1167 = vector.broadcast %1166 : f32 to vector<16x16xf32>
    %1168 = arith.mulf %1167, %1165 : vector<16x16xf32>
    %1169 = arith.addf %1135, %1168 : vector<16x16xf32>
    %c50_365 = arith.constant 50 : index
    %1170 = memref.load %arg4[%c50_365] : memref<72xf32, #tpu.memory_space<smem>>
    %1171 = vector.broadcast %1170 : f32 to vector<16x16xf32>
    %1172 = arith.mulf %1171, %1165 : vector<16x16xf32>
    %1173 = arith.addf %1139, %1172 : vector<16x16xf32>
    %c13_366 = arith.constant 13 : index
    %1174 = memref.load %arg4[%c13_366] : memref<72xf32, #tpu.memory_space<smem>>
    %1175 = vector.broadcast %1174 : f32 to vector<16x16xf32>
    %1176 = arith.mulf %1175, %1165 : vector<16x16xf32>
    %1177 = arith.addf %1143, %1176 : vector<16x16xf32>
    %c49_367 = arith.constant 49 : index
    %1178 = memref.load %arg4[%c49_367] : memref<72xf32, #tpu.memory_space<smem>>
    %1179 = vector.broadcast %1178 : f32 to vector<16x16xf32>
    %1180 = arith.mulf %1179, %1165 : vector<16x16xf32>
    %1181 = arith.addf %1147, %1180 : vector<16x16xf32>
    %c11_368 = arith.constant 11 : index
    %1182 = memref.load %arg4[%c11_368] : memref<72xf32, #tpu.memory_space<smem>>
    %1183 = vector.broadcast %1182 : f32 to vector<16x16xf32>
    %1184 = arith.mulf %1183, %1165 : vector<16x16xf32>
    %1185 = arith.addf %1151, %1184 : vector<16x16xf32>
    %c47_369 = arith.constant 47 : index
    %1186 = memref.load %arg4[%c47_369] : memref<72xf32, #tpu.memory_space<smem>>
    %1187 = vector.broadcast %1186 : f32 to vector<16x16xf32>
    %1188 = arith.mulf %1187, %1165 : vector<16x16xf32>
    %1189 = arith.addf %1155, %1188 : vector<16x16xf32>
    %c10_370 = arith.constant 10 : index
    %1190 = memref.load %arg4[%c10_370] : memref<72xf32, #tpu.memory_space<smem>>
    %1191 = vector.broadcast %1190 : f32 to vector<16x16xf32>
    %1192 = arith.mulf %1191, %1165 : vector<16x16xf32>
    %1193 = arith.addf %1159, %1192 : vector<16x16xf32>
    %c46_371 = arith.constant 46 : index
    %1194 = memref.load %arg4[%c46_371] : memref<72xf32, #tpu.memory_space<smem>>
    %1195 = vector.broadcast %1194 : f32 to vector<16x16xf32>
    %1196 = arith.mulf %1195, %1165 : vector<16x16xf32>
    %1197 = arith.addf %1163, %1196 : vector<16x16xf32>
    %c0_372 = arith.constant 0 : index
    %c1_373 = arith.constant 1 : index
    %c1_374 = arith.constant 1 : index
    %c2_375 = arith.constant 2 : index
    %1198 = vector.load %arg8[%c0_372, %c1_373, %c1_374, %c2_375] : memref<4x4x18x18xf32, #tpu.memory_space<vmem>>, vector<1x1x16x16xf32>
    %1199 = vector.shape_cast %1198 : vector<1x1x16x16xf32> to vector<16x16xf32>
    %c14_376 = arith.constant 14 : index
    %1200 = memref.load %arg4[%c14_376] : memref<72xf32, #tpu.memory_space<smem>>
    %1201 = vector.broadcast %1200 : f32 to vector<16x16xf32>
    %1202 = arith.mulf %1201, %1199 : vector<16x16xf32>
    %1203 = arith.addf %1177, %1202 : vector<16x16xf32>
    %c50_377 = arith.constant 50 : index
    %1204 = memref.load %arg4[%c50_377] : memref<72xf32, #tpu.memory_space<smem>>
    %1205 = vector.broadcast %1204 : f32 to vector<16x16xf32>
    %1206 = arith.mulf %1205, %1199 : vector<16x16xf32>
    %1207 = arith.addf %1181, %1206 : vector<16x16xf32>
    %c11_378 = arith.constant 11 : index
    %1208 = memref.load %arg4[%c11_378] : memref<72xf32, #tpu.memory_space<smem>>
    %1209 = vector.broadcast %1208 : f32 to vector<16x16xf32>
    %1210 = arith.mulf %1209, %1199 : vector<16x16xf32>
    %1211 = arith.addf %1193, %1210 : vector<16x16xf32>
    %c47_379 = arith.constant 47 : index
    %1212 = memref.load %arg4[%c47_379] : memref<72xf32, #tpu.memory_space<smem>>
    %1213 = vector.broadcast %1212 : f32 to vector<16x16xf32>
    %1214 = arith.mulf %1213, %1199 : vector<16x16xf32>
    %1215 = arith.addf %1197, %1214 : vector<16x16xf32>
    %c3_380 = arith.constant 3 : index
    %c1_381 = arith.constant 1 : index
    %c1_382 = arith.constant 1 : index
    %c0_383 = arith.constant 0 : index
    %1216 = vector.load %arg8[%c3_380, %c1_381, %c1_382, %c0_383] : memref<4x4x18x18xf32, #tpu.memory_space<vmem>>, vector<1x1x16x16xf32>
    %1217 = vector.shape_cast %1216 : vector<1x1x16x16xf32> to vector<16x16xf32>
    %c15_384 = arith.constant 15 : index
    %1218 = memref.load %arg4[%c15_384] : memref<72xf32, #tpu.memory_space<smem>>
    %1219 = vector.broadcast %1218 : f32 to vector<16x16xf32>
    %1220 = arith.mulf %1219, %1217 : vector<16x16xf32>
    %1221 = arith.addf %1169, %1220 : vector<16x16xf32>
    %c51_385 = arith.constant 51 : index
    %1222 = memref.load %arg4[%c51_385] : memref<72xf32, #tpu.memory_space<smem>>
    %1223 = vector.broadcast %1222 : f32 to vector<16x16xf32>
    %1224 = arith.mulf %1223, %1217 : vector<16x16xf32>
    %1225 = arith.addf %1173, %1224 : vector<16x16xf32>
    %c12_386 = arith.constant 12 : index
    %1226 = memref.load %arg4[%c12_386] : memref<72xf32, #tpu.memory_space<smem>>
    %1227 = vector.broadcast %1226 : f32 to vector<16x16xf32>
    %1228 = arith.mulf %1227, %1217 : vector<16x16xf32>
    %1229 = arith.addf %1185, %1228 : vector<16x16xf32>
    %c48_387 = arith.constant 48 : index
    %1230 = memref.load %arg4[%c48_387] : memref<72xf32, #tpu.memory_space<smem>>
    %1231 = vector.broadcast %1230 : f32 to vector<16x16xf32>
    %1232 = arith.mulf %1231, %1217 : vector<16x16xf32>
    %1233 = arith.addf %1189, %1232 : vector<16x16xf32>
    %c2_388 = arith.constant 2 : index
    %c1_389 = arith.constant 1 : index
    %c1_390 = arith.constant 1 : index
    %c1_391 = arith.constant 1 : index
    %1234 = vector.load %arg8[%c2_388, %c1_389, %c1_390, %c1_391] : memref<4x4x18x18xf32, #tpu.memory_space<vmem>>, vector<1x1x16x16xf32>
    %1235 = vector.shape_cast %1234 : vector<1x1x16x16xf32> to vector<16x16xf32>
    %c16_392 = arith.constant 16 : index
    %1236 = memref.load %arg4[%c16_392] : memref<72xf32, #tpu.memory_space<smem>>
    %1237 = vector.broadcast %1236 : f32 to vector<16x16xf32>
    %1238 = arith.mulf %1237, %1235 : vector<16x16xf32>
    %1239 = arith.addf %1221, %1238 : vector<16x16xf32>
    %c52_393 = arith.constant 52 : index
    %1240 = memref.load %arg4[%c52_393] : memref<72xf32, #tpu.memory_space<smem>>
    %1241 = vector.broadcast %1240 : f32 to vector<16x16xf32>
    %1242 = arith.mulf %1241, %1235 : vector<16x16xf32>
    %1243 = arith.addf %1225, %1242 : vector<16x16xf32>
    %c15_394 = arith.constant 15 : index
    %1244 = memref.load %arg4[%c15_394] : memref<72xf32, #tpu.memory_space<smem>>
    %1245 = vector.broadcast %1244 : f32 to vector<16x16xf32>
    %1246 = arith.mulf %1245, %1235 : vector<16x16xf32>
    %1247 = arith.addf %1203, %1246 : vector<16x16xf32>
    %c51_395 = arith.constant 51 : index
    %1248 = memref.load %arg4[%c51_395] : memref<72xf32, #tpu.memory_space<smem>>
    %1249 = vector.broadcast %1248 : f32 to vector<16x16xf32>
    %1250 = arith.mulf %1249, %1235 : vector<16x16xf32>
    %1251 = arith.addf %1207, %1250 : vector<16x16xf32>
    %c13_396 = arith.constant 13 : index
    %1252 = memref.load %arg4[%c13_396] : memref<72xf32, #tpu.memory_space<smem>>
    %1253 = vector.broadcast %1252 : f32 to vector<16x16xf32>
    %1254 = arith.mulf %1253, %1235 : vector<16x16xf32>
    %1255 = arith.addf %1229, %1254 : vector<16x16xf32>
    %c49_397 = arith.constant 49 : index
    %1256 = memref.load %arg4[%c49_397] : memref<72xf32, #tpu.memory_space<smem>>
    %1257 = vector.broadcast %1256 : f32 to vector<16x16xf32>
    %1258 = arith.mulf %1257, %1235 : vector<16x16xf32>
    %1259 = arith.addf %1233, %1258 : vector<16x16xf32>
    %c12_398 = arith.constant 12 : index
    %1260 = memref.load %arg4[%c12_398] : memref<72xf32, #tpu.memory_space<smem>>
    %1261 = vector.broadcast %1260 : f32 to vector<16x16xf32>
    %1262 = arith.mulf %1261, %1235 : vector<16x16xf32>
    %1263 = arith.addf %1211, %1262 : vector<16x16xf32>
    %c48_399 = arith.constant 48 : index
    %1264 = memref.load %arg4[%c48_399] : memref<72xf32, #tpu.memory_space<smem>>
    %1265 = vector.broadcast %1264 : f32 to vector<16x16xf32>
    %1266 = arith.mulf %1265, %1235 : vector<16x16xf32>
    %1267 = arith.addf %1215, %1266 : vector<16x16xf32>
    %c3_400 = arith.constant 3 : index
    %c1_401 = arith.constant 1 : index
    %c1_402 = arith.constant 1 : index
    %c1_403 = arith.constant 1 : index
    %1268 = vector.load %arg8[%c3_400, %c1_401, %c1_402, %c1_403] : memref<4x4x18x18xf32, #tpu.memory_space<vmem>>, vector<1x1x16x16xf32>
    %1269 = vector.shape_cast %1268 : vector<1x1x16x16xf32> to vector<16x16xf32>
    %c17_404 = arith.constant 17 : index
    %1270 = memref.load %arg4[%c17_404] : memref<72xf32, #tpu.memory_space<smem>>
    %1271 = vector.broadcast %1270 : f32 to vector<16x16xf32>
    %1272 = arith.mulf %1271, %1269 : vector<16x16xf32>
    %1273 = arith.addf %1239, %1272 : vector<16x16xf32>
    %c53_405 = arith.constant 53 : index
    %1274 = memref.load %arg4[%c53_405] : memref<72xf32, #tpu.memory_space<smem>>
    %1275 = vector.broadcast %1274 : f32 to vector<16x16xf32>
    %1276 = arith.mulf %1275, %1269 : vector<16x16xf32>
    %1277 = arith.addf %1243, %1276 : vector<16x16xf32>
    %c16_406 = arith.constant 16 : index
    %1278 = memref.load %arg4[%c16_406] : memref<72xf32, #tpu.memory_space<smem>>
    %1279 = vector.broadcast %1278 : f32 to vector<16x16xf32>
    %1280 = arith.mulf %1279, %1269 : vector<16x16xf32>
    %1281 = arith.addf %1247, %1280 : vector<16x16xf32>
    %c52_407 = arith.constant 52 : index
    %1282 = memref.load %arg4[%c52_407] : memref<72xf32, #tpu.memory_space<smem>>
    %1283 = vector.broadcast %1282 : f32 to vector<16x16xf32>
    %1284 = arith.mulf %1283, %1269 : vector<16x16xf32>
    %1285 = arith.addf %1251, %1284 : vector<16x16xf32>
    %c14_408 = arith.constant 14 : index
    %1286 = memref.load %arg4[%c14_408] : memref<72xf32, #tpu.memory_space<smem>>
    %1287 = vector.broadcast %1286 : f32 to vector<16x16xf32>
    %1288 = arith.mulf %1287, %1269 : vector<16x16xf32>
    %1289 = arith.addf %1255, %1288 : vector<16x16xf32>
    %c50_409 = arith.constant 50 : index
    %1290 = memref.load %arg4[%c50_409] : memref<72xf32, #tpu.memory_space<smem>>
    %1291 = vector.broadcast %1290 : f32 to vector<16x16xf32>
    %1292 = arith.mulf %1291, %1269 : vector<16x16xf32>
    %1293 = arith.addf %1259, %1292 : vector<16x16xf32>
    %c13_410 = arith.constant 13 : index
    %1294 = memref.load %arg4[%c13_410] : memref<72xf32, #tpu.memory_space<smem>>
    %1295 = vector.broadcast %1294 : f32 to vector<16x16xf32>
    %1296 = arith.mulf %1295, %1269 : vector<16x16xf32>
    %1297 = arith.addf %1263, %1296 : vector<16x16xf32>
    %c49_411 = arith.constant 49 : index
    %1298 = memref.load %arg4[%c49_411] : memref<72xf32, #tpu.memory_space<smem>>
    %1299 = vector.broadcast %1298 : f32 to vector<16x16xf32>
    %1300 = arith.mulf %1299, %1269 : vector<16x16xf32>
    %1301 = arith.addf %1267, %1300 : vector<16x16xf32>
    %c2_412 = arith.constant 2 : index
    %c1_413 = arith.constant 1 : index
    %c1_414 = arith.constant 1 : index
    %c2_415 = arith.constant 2 : index
    %1302 = vector.load %arg8[%c2_412, %c1_413, %c1_414, %c2_415] : memref<4x4x18x18xf32, #tpu.memory_space<vmem>>, vector<1x1x16x16xf32>
    %1303 = vector.shape_cast %1302 : vector<1x1x16x16xf32> to vector<16x16xf32>
    %c17_416 = arith.constant 17 : index
    %1304 = memref.load %arg4[%c17_416] : memref<72xf32, #tpu.memory_space<smem>>
    %1305 = vector.broadcast %1304 : f32 to vector<16x16xf32>
    %1306 = arith.mulf %1305, %1303 : vector<16x16xf32>
    %1307 = arith.addf %1281, %1306 : vector<16x16xf32>
    %c53_417 = arith.constant 53 : index
    %1308 = memref.load %arg4[%c53_417] : memref<72xf32, #tpu.memory_space<smem>>
    %1309 = vector.broadcast %1308 : f32 to vector<16x16xf32>
    %1310 = arith.mulf %1309, %1303 : vector<16x16xf32>
    %1311 = arith.addf %1285, %1310 : vector<16x16xf32>
    %c14_418 = arith.constant 14 : index
    %1312 = memref.load %arg4[%c14_418] : memref<72xf32, #tpu.memory_space<smem>>
    %1313 = vector.broadcast %1312 : f32 to vector<16x16xf32>
    %1314 = arith.mulf %1313, %1303 : vector<16x16xf32>
    %1315 = arith.addf %1297, %1314 : vector<16x16xf32>
    %c50_419 = arith.constant 50 : index
    %1316 = memref.load %arg4[%c50_419] : memref<72xf32, #tpu.memory_space<smem>>
    %1317 = vector.broadcast %1316 : f32 to vector<16x16xf32>
    %1318 = arith.mulf %1317, %1303 : vector<16x16xf32>
    %1319 = arith.addf %1301, %1318 : vector<16x16xf32>
    %c1_420 = arith.constant 1 : index
    %c1_421 = arith.constant 1 : index
    %c2_422 = arith.constant 2 : index
    %c0_423 = arith.constant 0 : index
    %1320 = vector.load %arg8[%c1_420, %c1_421, %c2_422, %c0_423] : memref<4x4x18x18xf32, #tpu.memory_space<vmem>>, vector<1x1x16x16xf32>
    %1321 = vector.shape_cast %1320 : vector<1x1x16x16xf32> to vector<16x16xf32>
    %c15_424 = arith.constant 15 : index
    %1322 = memref.load %arg4[%c15_424] : memref<72xf32, #tpu.memory_space<smem>>
    %1323 = vector.broadcast %1322 : f32 to vector<16x16xf32>
    %1324 = arith.mulf %1323, %1321 : vector<16x16xf32>
    %1325 = arith.addf %1289, %1324 : vector<16x16xf32>
    %c51_425 = arith.constant 51 : index
    %1326 = memref.load %arg4[%c51_425] : memref<72xf32, #tpu.memory_space<smem>>
    %1327 = vector.broadcast %1326 : f32 to vector<16x16xf32>
    %1328 = arith.mulf %1327, %1321 : vector<16x16xf32>
    %1329 = arith.addf %1293, %1328 : vector<16x16xf32>
    %c0_426 = arith.constant 0 : index
    %c1_427 = arith.constant 1 : index
    %c2_428 = arith.constant 2 : index
    %c1_429 = arith.constant 1 : index
    %1330 = vector.load %arg8[%c0_426, %c1_427, %c2_428, %c1_429] : memref<4x4x18x18xf32, #tpu.memory_space<vmem>>, vector<1x1x16x16xf32>
    %1331 = vector.shape_cast %1330 : vector<1x1x16x16xf32> to vector<16x16xf32>
    %c16_430 = arith.constant 16 : index
    %1332 = memref.load %arg4[%c16_430] : memref<72xf32, #tpu.memory_space<smem>>
    %1333 = vector.broadcast %1332 : f32 to vector<16x16xf32>
    %1334 = arith.mulf %1333, %1331 : vector<16x16xf32>
    %1335 = arith.addf %1325, %1334 : vector<16x16xf32>
    %c52_431 = arith.constant 52 : index
    %1336 = memref.load %arg4[%c52_431] : memref<72xf32, #tpu.memory_space<smem>>
    %1337 = vector.broadcast %1336 : f32 to vector<16x16xf32>
    %1338 = arith.mulf %1337, %1331 : vector<16x16xf32>
    %1339 = arith.addf %1329, %1338 : vector<16x16xf32>
    %c15_432 = arith.constant 15 : index
    %1340 = memref.load %arg4[%c15_432] : memref<72xf32, #tpu.memory_space<smem>>
    %1341 = vector.broadcast %1340 : f32 to vector<16x16xf32>
    %1342 = arith.mulf %1341, %1331 : vector<16x16xf32>
    %1343 = arith.addf %1315, %1342 : vector<16x16xf32>
    %c51_433 = arith.constant 51 : index
    %1344 = memref.load %arg4[%c51_433] : memref<72xf32, #tpu.memory_space<smem>>
    %1345 = vector.broadcast %1344 : f32 to vector<16x16xf32>
    %1346 = arith.mulf %1345, %1331 : vector<16x16xf32>
    %1347 = arith.addf %1319, %1346 : vector<16x16xf32>
    %c1_434 = arith.constant 1 : index
    %c1_435 = arith.constant 1 : index
    %c2_436 = arith.constant 2 : index
    %c1_437 = arith.constant 1 : index
    %1348 = vector.load %arg8[%c1_434, %c1_435, %c2_436, %c1_437] : memref<4x4x18x18xf32, #tpu.memory_space<vmem>>, vector<1x1x16x16xf32>
    %1349 = vector.shape_cast %1348 : vector<1x1x16x16xf32> to vector<16x16xf32>
    %c17_438 = arith.constant 17 : index
    %1350 = memref.load %arg4[%c17_438] : memref<72xf32, #tpu.memory_space<smem>>
    %1351 = vector.broadcast %1350 : f32 to vector<16x16xf32>
    %1352 = arith.mulf %1351, %1349 : vector<16x16xf32>
    %1353 = arith.addf %1335, %1352 : vector<16x16xf32>
    %c53_439 = arith.constant 53 : index
    %1354 = memref.load %arg4[%c53_439] : memref<72xf32, #tpu.memory_space<smem>>
    %1355 = vector.broadcast %1354 : f32 to vector<16x16xf32>
    %1356 = arith.mulf %1355, %1349 : vector<16x16xf32>
    %1357 = arith.addf %1339, %1356 : vector<16x16xf32>
    %c16_440 = arith.constant 16 : index
    %1358 = memref.load %arg4[%c16_440] : memref<72xf32, #tpu.memory_space<smem>>
    %1359 = vector.broadcast %1358 : f32 to vector<16x16xf32>
    %1360 = arith.mulf %1359, %1349 : vector<16x16xf32>
    %1361 = arith.addf %1343, %1360 : vector<16x16xf32>
    %c52_441 = arith.constant 52 : index
    %1362 = memref.load %arg4[%c52_441] : memref<72xf32, #tpu.memory_space<smem>>
    %1363 = vector.broadcast %1362 : f32 to vector<16x16xf32>
    %1364 = arith.mulf %1363, %1349 : vector<16x16xf32>
    %1365 = arith.addf %1347, %1364 : vector<16x16xf32>
    %c0_442 = arith.constant 0 : index
    %c1_443 = arith.constant 1 : index
    %c2_444 = arith.constant 2 : index
    %c2_445 = arith.constant 2 : index
    %1366 = vector.load %arg8[%c0_442, %c1_443, %c2_444, %c2_445] : memref<4x4x18x18xf32, #tpu.memory_space<vmem>>, vector<1x1x16x16xf32>
    %1367 = vector.shape_cast %1366 : vector<1x1x16x16xf32> to vector<16x16xf32>
    %c17_446 = arith.constant 17 : index
    %1368 = memref.load %arg4[%c17_446] : memref<72xf32, #tpu.memory_space<smem>>
    %1369 = vector.broadcast %1368 : f32 to vector<16x16xf32>
    %1370 = arith.mulf %1369, %1367 : vector<16x16xf32>
    %1371 = arith.addf %1361, %1370 : vector<16x16xf32>
    %c53_447 = arith.constant 53 : index
    %1372 = memref.load %arg4[%c53_447] : memref<72xf32, #tpu.memory_space<smem>>
    %1373 = vector.broadcast %1372 : f32 to vector<16x16xf32>
    %1374 = arith.mulf %1373, %1367 : vector<16x16xf32>
    %1375 = arith.addf %1365, %1374 : vector<16x16xf32>
    %c3_448 = arith.constant 3 : index
    %c2_449 = arith.constant 2 : index
    %c0_450 = arith.constant 0 : index
    %c0_451 = arith.constant 0 : index
    %1376 = vector.load %arg8[%c3_448, %c2_449, %c0_450, %c0_451] : memref<4x4x18x18xf32, #tpu.memory_space<vmem>>, vector<1x1x16x16xf32>
    %1377 = vector.shape_cast %1376 : vector<1x1x16x16xf32> to vector<16x16xf32>
    %c18_452 = arith.constant 18 : index
    %1378 = memref.load %arg4[%c18_452] : memref<72xf32, #tpu.memory_space<smem>>
    %1379 = vector.broadcast %1378 : f32 to vector<16x16xf32>
    %1380 = arith.mulf %1379, %1377 : vector<16x16xf32>
    %1381 = arith.addf %1273, %1380 : vector<16x16xf32>
    %c54_453 = arith.constant 54 : index
    %1382 = memref.load %arg4[%c54_453] : memref<72xf32, #tpu.memory_space<smem>>
    %1383 = vector.broadcast %1382 : f32 to vector<16x16xf32>
    %1384 = arith.mulf %1383, %1377 : vector<16x16xf32>
    %1385 = arith.addf %1277, %1384 : vector<16x16xf32>
    %c2_454 = arith.constant 2 : index
    %c2_455 = arith.constant 2 : index
    %c0_456 = arith.constant 0 : index
    %c1_457 = arith.constant 1 : index
    %1386 = vector.load %arg8[%c2_454, %c2_455, %c0_456, %c1_457] : memref<4x4x18x18xf32, #tpu.memory_space<vmem>>, vector<1x1x16x16xf32>
    %1387 = vector.shape_cast %1386 : vector<1x1x16x16xf32> to vector<16x16xf32>
    %c19_458 = arith.constant 19 : index
    %1388 = memref.load %arg4[%c19_458] : memref<72xf32, #tpu.memory_space<smem>>
    %1389 = vector.broadcast %1388 : f32 to vector<16x16xf32>
    %1390 = arith.mulf %1389, %1387 : vector<16x16xf32>
    %1391 = arith.addf %1381, %1390 : vector<16x16xf32>
    %c55_459 = arith.constant 55 : index
    %1392 = memref.load %arg4[%c55_459] : memref<72xf32, #tpu.memory_space<smem>>
    %1393 = vector.broadcast %1392 : f32 to vector<16x16xf32>
    %1394 = arith.mulf %1393, %1387 : vector<16x16xf32>
    %1395 = arith.addf %1385, %1394 : vector<16x16xf32>
    %c18_460 = arith.constant 18 : index
    %1396 = memref.load %arg4[%c18_460] : memref<72xf32, #tpu.memory_space<smem>>
    %1397 = vector.broadcast %1396 : f32 to vector<16x16xf32>
    %1398 = arith.mulf %1397, %1387 : vector<16x16xf32>
    %1399 = arith.addf %1307, %1398 : vector<16x16xf32>
    %c54_461 = arith.constant 54 : index
    %1400 = memref.load %arg4[%c54_461] : memref<72xf32, #tpu.memory_space<smem>>
    %1401 = vector.broadcast %1400 : f32 to vector<16x16xf32>
    %1402 = arith.mulf %1401, %1387 : vector<16x16xf32>
    %1403 = arith.addf %1311, %1402 : vector<16x16xf32>
    %c3_462 = arith.constant 3 : index
    %c2_463 = arith.constant 2 : index
    %c0_464 = arith.constant 0 : index
    %c1_465 = arith.constant 1 : index
    %1404 = vector.load %arg8[%c3_462, %c2_463, %c0_464, %c1_465] : memref<4x4x18x18xf32, #tpu.memory_space<vmem>>, vector<1x1x16x16xf32>
    %1405 = vector.shape_cast %1404 : vector<1x1x16x16xf32> to vector<16x16xf32>
    %c20_466 = arith.constant 20 : index
    %1406 = memref.load %arg4[%c20_466] : memref<72xf32, #tpu.memory_space<smem>>
    %1407 = vector.broadcast %1406 : f32 to vector<16x16xf32>
    %1408 = arith.mulf %1407, %1405 : vector<16x16xf32>
    %1409 = arith.addf %1391, %1408 : vector<16x16xf32>
    %c56_467 = arith.constant 56 : index
    %1410 = memref.load %arg4[%c56_467] : memref<72xf32, #tpu.memory_space<smem>>
    %1411 = vector.broadcast %1410 : f32 to vector<16x16xf32>
    %1412 = arith.mulf %1411, %1405 : vector<16x16xf32>
    %1413 = arith.addf %1395, %1412 : vector<16x16xf32>
    %c19_468 = arith.constant 19 : index
    %1414 = memref.load %arg4[%c19_468] : memref<72xf32, #tpu.memory_space<smem>>
    %1415 = vector.broadcast %1414 : f32 to vector<16x16xf32>
    %1416 = arith.mulf %1415, %1405 : vector<16x16xf32>
    %1417 = arith.addf %1399, %1416 : vector<16x16xf32>
    %c55_469 = arith.constant 55 : index
    %1418 = memref.load %arg4[%c55_469] : memref<72xf32, #tpu.memory_space<smem>>
    %1419 = vector.broadcast %1418 : f32 to vector<16x16xf32>
    %1420 = arith.mulf %1419, %1405 : vector<16x16xf32>
    %1421 = arith.addf %1403, %1420 : vector<16x16xf32>
    %c2_470 = arith.constant 2 : index
    %c2_471 = arith.constant 2 : index
    %c0_472 = arith.constant 0 : index
    %c2_473 = arith.constant 2 : index
    %1422 = vector.load %arg8[%c2_470, %c2_471, %c0_472, %c2_473] : memref<4x4x18x18xf32, #tpu.memory_space<vmem>>, vector<1x1x16x16xf32>
    %1423 = vector.shape_cast %1422 : vector<1x1x16x16xf32> to vector<16x16xf32>
    %c20_474 = arith.constant 20 : index
    %1424 = memref.load %arg4[%c20_474] : memref<72xf32, #tpu.memory_space<smem>>
    %1425 = vector.broadcast %1424 : f32 to vector<16x16xf32>
    %1426 = arith.mulf %1425, %1423 : vector<16x16xf32>
    %1427 = arith.addf %1417, %1426 : vector<16x16xf32>
    %c56_475 = arith.constant 56 : index
    %1428 = memref.load %arg4[%c56_475] : memref<72xf32, #tpu.memory_space<smem>>
    %1429 = vector.broadcast %1428 : f32 to vector<16x16xf32>
    %1430 = arith.mulf %1429, %1423 : vector<16x16xf32>
    %1431 = arith.addf %1421, %1430 : vector<16x16xf32>
    %c1_476 = arith.constant 1 : index
    %c2_477 = arith.constant 2 : index
    %c1_478 = arith.constant 1 : index
    %c0_479 = arith.constant 0 : index
    %1432 = vector.load %arg8[%c1_476, %c2_477, %c1_478, %c0_479] : memref<4x4x18x18xf32, #tpu.memory_space<vmem>>, vector<1x1x16x16xf32>
    %1433 = vector.shape_cast %1432 : vector<1x1x16x16xf32> to vector<16x16xf32>
    %c21_480 = arith.constant 21 : index
    %1434 = memref.load %arg4[%c21_480] : memref<72xf32, #tpu.memory_space<smem>>
    %1435 = vector.broadcast %1434 : f32 to vector<16x16xf32>
    %1436 = arith.mulf %1435, %1433 : vector<16x16xf32>
    %1437 = arith.addf %1409, %1436 : vector<16x16xf32>
    %c57_481 = arith.constant 57 : index
    %1438 = memref.load %arg4[%c57_481] : memref<72xf32, #tpu.memory_space<smem>>
    %1439 = vector.broadcast %1438 : f32 to vector<16x16xf32>
    %1440 = arith.mulf %1439, %1433 : vector<16x16xf32>
    %1441 = arith.addf %1413, %1440 : vector<16x16xf32>
    %c18_482 = arith.constant 18 : index
    %1442 = memref.load %arg4[%c18_482] : memref<72xf32, #tpu.memory_space<smem>>
    %1443 = vector.broadcast %1442 : f32 to vector<16x16xf32>
    %1444 = arith.mulf %1443, %1433 : vector<16x16xf32>
    %1445 = arith.addf %1353, %1444 : vector<16x16xf32>
    %c54_483 = arith.constant 54 : index
    %1446 = memref.load %arg4[%c54_483] : memref<72xf32, #tpu.memory_space<smem>>
    %1447 = vector.broadcast %1446 : f32 to vector<16x16xf32>
    %1448 = arith.mulf %1447, %1433 : vector<16x16xf32>
    %1449 = arith.addf %1357, %1448 : vector<16x16xf32>
    %c0_484 = arith.constant 0 : index
    %c2_485 = arith.constant 2 : index
    %c1_486 = arith.constant 1 : index
    %c1_487 = arith.constant 1 : index
    %1450 = vector.load %arg8[%c0_484, %c2_485, %c1_486, %c1_487] : memref<4x4x18x18xf32, #tpu.memory_space<vmem>>, vector<1x1x16x16xf32>
    %1451 = vector.shape_cast %1450 : vector<1x1x16x16xf32> to vector<16x16xf32>
    %c22_488 = arith.constant 22 : index
    %1452 = memref.load %arg4[%c22_488] : memref<72xf32, #tpu.memory_space<smem>>
    %1453 = vector.broadcast %1452 : f32 to vector<16x16xf32>
    %1454 = arith.mulf %1453, %1451 : vector<16x16xf32>
    %1455 = arith.addf %1437, %1454 : vector<16x16xf32>
    %c58_489 = arith.constant 58 : index
    %1456 = memref.load %arg4[%c58_489] : memref<72xf32, #tpu.memory_space<smem>>
    %1457 = vector.broadcast %1456 : f32 to vector<16x16xf32>
    %1458 = arith.mulf %1457, %1451 : vector<16x16xf32>
    %1459 = arith.addf %1441, %1458 : vector<16x16xf32>
    %c21_490 = arith.constant 21 : index
    %1460 = memref.load %arg4[%c21_490] : memref<72xf32, #tpu.memory_space<smem>>
    %1461 = vector.broadcast %1460 : f32 to vector<16x16xf32>
    %1462 = arith.mulf %1461, %1451 : vector<16x16xf32>
    %1463 = arith.addf %1427, %1462 : vector<16x16xf32>
    %c57_491 = arith.constant 57 : index
    %1464 = memref.load %arg4[%c57_491] : memref<72xf32, #tpu.memory_space<smem>>
    %1465 = vector.broadcast %1464 : f32 to vector<16x16xf32>
    %1466 = arith.mulf %1465, %1451 : vector<16x16xf32>
    %1467 = arith.addf %1431, %1466 : vector<16x16xf32>
    %c19_492 = arith.constant 19 : index
    %1468 = memref.load %arg4[%c19_492] : memref<72xf32, #tpu.memory_space<smem>>
    %1469 = vector.broadcast %1468 : f32 to vector<16x16xf32>
    %1470 = arith.mulf %1469, %1451 : vector<16x16xf32>
    %1471 = arith.addf %1445, %1470 : vector<16x16xf32>
    %c55_493 = arith.constant 55 : index
    %1472 = memref.load %arg4[%c55_493] : memref<72xf32, #tpu.memory_space<smem>>
    %1473 = vector.broadcast %1472 : f32 to vector<16x16xf32>
    %1474 = arith.mulf %1473, %1451 : vector<16x16xf32>
    %1475 = arith.addf %1449, %1474 : vector<16x16xf32>
    %c18_494 = arith.constant 18 : index
    %1476 = memref.load %arg4[%c18_494] : memref<72xf32, #tpu.memory_space<smem>>
    %1477 = vector.broadcast %1476 : f32 to vector<16x16xf32>
    %1478 = arith.mulf %1477, %1451 : vector<16x16xf32>
    %1479 = arith.addf %1371, %1478 : vector<16x16xf32>
    %c54_495 = arith.constant 54 : index
    %1480 = memref.load %arg4[%c54_495] : memref<72xf32, #tpu.memory_space<smem>>
    %1481 = vector.broadcast %1480 : f32 to vector<16x16xf32>
    %1482 = arith.mulf %1481, %1451 : vector<16x16xf32>
    %1483 = arith.addf %1375, %1482 : vector<16x16xf32>
    %c1_496 = arith.constant 1 : index
    %c2_497 = arith.constant 2 : index
    %c1_498 = arith.constant 1 : index
    %c1_499 = arith.constant 1 : index
    %1484 = vector.load %arg8[%c1_496, %c2_497, %c1_498, %c1_499] : memref<4x4x18x18xf32, #tpu.memory_space<vmem>>, vector<1x1x16x16xf32>
    %1485 = vector.shape_cast %1484 : vector<1x1x16x16xf32> to vector<16x16xf32>
    %c23_500 = arith.constant 23 : index
    %1486 = memref.load %arg4[%c23_500] : memref<72xf32, #tpu.memory_space<smem>>
    %1487 = vector.broadcast %1486 : f32 to vector<16x16xf32>
    %1488 = arith.mulf %1487, %1485 : vector<16x16xf32>
    %1489 = arith.addf %1455, %1488 : vector<16x16xf32>
    %c59_501 = arith.constant 59 : index
    %1490 = memref.load %arg4[%c59_501] : memref<72xf32, #tpu.memory_space<smem>>
    %1491 = vector.broadcast %1490 : f32 to vector<16x16xf32>
    %1492 = arith.mulf %1491, %1485 : vector<16x16xf32>
    %1493 = arith.addf %1459, %1492 : vector<16x16xf32>
    %c22_502 = arith.constant 22 : index
    %1494 = memref.load %arg4[%c22_502] : memref<72xf32, #tpu.memory_space<smem>>
    %1495 = vector.broadcast %1494 : f32 to vector<16x16xf32>
    %1496 = arith.mulf %1495, %1485 : vector<16x16xf32>
    %1497 = arith.addf %1463, %1496 : vector<16x16xf32>
    %c58_503 = arith.constant 58 : index
    %1498 = memref.load %arg4[%c58_503] : memref<72xf32, #tpu.memory_space<smem>>
    %1499 = vector.broadcast %1498 : f32 to vector<16x16xf32>
    %1500 = arith.mulf %1499, %1485 : vector<16x16xf32>
    %1501 = arith.addf %1467, %1500 : vector<16x16xf32>
    %c20_504 = arith.constant 20 : index
    %1502 = memref.load %arg4[%c20_504] : memref<72xf32, #tpu.memory_space<smem>>
    %1503 = vector.broadcast %1502 : f32 to vector<16x16xf32>
    %1504 = arith.mulf %1503, %1485 : vector<16x16xf32>
    %1505 = arith.addf %1471, %1504 : vector<16x16xf32>
    %c56_505 = arith.constant 56 : index
    %1506 = memref.load %arg4[%c56_505] : memref<72xf32, #tpu.memory_space<smem>>
    %1507 = vector.broadcast %1506 : f32 to vector<16x16xf32>
    %1508 = arith.mulf %1507, %1485 : vector<16x16xf32>
    %1509 = arith.addf %1475, %1508 : vector<16x16xf32>
    %c19_506 = arith.constant 19 : index
    %1510 = memref.load %arg4[%c19_506] : memref<72xf32, #tpu.memory_space<smem>>
    %1511 = vector.broadcast %1510 : f32 to vector<16x16xf32>
    %1512 = arith.mulf %1511, %1485 : vector<16x16xf32>
    %1513 = arith.addf %1479, %1512 : vector<16x16xf32>
    %c55_507 = arith.constant 55 : index
    %1514 = memref.load %arg4[%c55_507] : memref<72xf32, #tpu.memory_space<smem>>
    %1515 = vector.broadcast %1514 : f32 to vector<16x16xf32>
    %1516 = arith.mulf %1515, %1485 : vector<16x16xf32>
    %1517 = arith.addf %1483, %1516 : vector<16x16xf32>
    %c0_508 = arith.constant 0 : index
    %c2_509 = arith.constant 2 : index
    %c1_510 = arith.constant 1 : index
    %c2_511 = arith.constant 2 : index
    %1518 = vector.load %arg8[%c0_508, %c2_509, %c1_510, %c2_511] : memref<4x4x18x18xf32, #tpu.memory_space<vmem>>, vector<1x1x16x16xf32>
    %1519 = vector.shape_cast %1518 : vector<1x1x16x16xf32> to vector<16x16xf32>
    %c23_512 = arith.constant 23 : index
    %1520 = memref.load %arg4[%c23_512] : memref<72xf32, #tpu.memory_space<smem>>
    %1521 = vector.broadcast %1520 : f32 to vector<16x16xf32>
    %1522 = arith.mulf %1521, %1519 : vector<16x16xf32>
    %1523 = arith.addf %1497, %1522 : vector<16x16xf32>
    %c59_513 = arith.constant 59 : index
    %1524 = memref.load %arg4[%c59_513] : memref<72xf32, #tpu.memory_space<smem>>
    %1525 = vector.broadcast %1524 : f32 to vector<16x16xf32>
    %1526 = arith.mulf %1525, %1519 : vector<16x16xf32>
    %1527 = arith.addf %1501, %1526 : vector<16x16xf32>
    %c20_514 = arith.constant 20 : index
    %1528 = memref.load %arg4[%c20_514] : memref<72xf32, #tpu.memory_space<smem>>
    %1529 = vector.broadcast %1528 : f32 to vector<16x16xf32>
    %1530 = arith.mulf %1529, %1519 : vector<16x16xf32>
    %1531 = arith.addf %1513, %1530 : vector<16x16xf32>
    %c56_515 = arith.constant 56 : index
    %1532 = memref.load %arg4[%c56_515] : memref<72xf32, #tpu.memory_space<smem>>
    %1533 = vector.broadcast %1532 : f32 to vector<16x16xf32>
    %1534 = arith.mulf %1533, %1519 : vector<16x16xf32>
    %1535 = arith.addf %1517, %1534 : vector<16x16xf32>
    %c3_516 = arith.constant 3 : index
    %c2_517 = arith.constant 2 : index
    %c1_518 = arith.constant 1 : index
    %c0_519 = arith.constant 0 : index
    %1536 = vector.load %arg8[%c3_516, %c2_517, %c1_518, %c0_519] : memref<4x4x18x18xf32, #tpu.memory_space<vmem>>, vector<1x1x16x16xf32>
    %1537 = vector.shape_cast %1536 : vector<1x1x16x16xf32> to vector<16x16xf32>
    %c24_520 = arith.constant 24 : index
    %1538 = memref.load %arg4[%c24_520] : memref<72xf32, #tpu.memory_space<smem>>
    %1539 = vector.broadcast %1538 : f32 to vector<16x16xf32>
    %1540 = arith.mulf %1539, %1537 : vector<16x16xf32>
    %1541 = arith.addf %1489, %1540 : vector<16x16xf32>
    %c60_521 = arith.constant 60 : index
    %1542 = memref.load %arg4[%c60_521] : memref<72xf32, #tpu.memory_space<smem>>
    %1543 = vector.broadcast %1542 : f32 to vector<16x16xf32>
    %1544 = arith.mulf %1543, %1537 : vector<16x16xf32>
    %1545 = arith.addf %1493, %1544 : vector<16x16xf32>
    %c21_522 = arith.constant 21 : index
    %1546 = memref.load %arg4[%c21_522] : memref<72xf32, #tpu.memory_space<smem>>
    %1547 = vector.broadcast %1546 : f32 to vector<16x16xf32>
    %1548 = arith.mulf %1547, %1537 : vector<16x16xf32>
    %1549 = arith.addf %1505, %1548 : vector<16x16xf32>
    %c57_523 = arith.constant 57 : index
    %1550 = memref.load %arg4[%c57_523] : memref<72xf32, #tpu.memory_space<smem>>
    %1551 = vector.broadcast %1550 : f32 to vector<16x16xf32>
    %1552 = arith.mulf %1551, %1537 : vector<16x16xf32>
    %1553 = arith.addf %1509, %1552 : vector<16x16xf32>
    %c2_524 = arith.constant 2 : index
    %c2_525 = arith.constant 2 : index
    %c1_526 = arith.constant 1 : index
    %c1_527 = arith.constant 1 : index
    %1554 = vector.load %arg8[%c2_524, %c2_525, %c1_526, %c1_527] : memref<4x4x18x18xf32, #tpu.memory_space<vmem>>, vector<1x1x16x16xf32>
    %1555 = vector.shape_cast %1554 : vector<1x1x16x16xf32> to vector<16x16xf32>
    %c25_528 = arith.constant 25 : index
    %1556 = memref.load %arg4[%c25_528] : memref<72xf32, #tpu.memory_space<smem>>
    %1557 = vector.broadcast %1556 : f32 to vector<16x16xf32>
    %1558 = arith.mulf %1557, %1555 : vector<16x16xf32>
    %1559 = arith.addf %1541, %1558 : vector<16x16xf32>
    %c61_529 = arith.constant 61 : index
    %1560 = memref.load %arg4[%c61_529] : memref<72xf32, #tpu.memory_space<smem>>
    %1561 = vector.broadcast %1560 : f32 to vector<16x16xf32>
    %1562 = arith.mulf %1561, %1555 : vector<16x16xf32>
    %1563 = arith.addf %1545, %1562 : vector<16x16xf32>
    %c24_530 = arith.constant 24 : index
    %1564 = memref.load %arg4[%c24_530] : memref<72xf32, #tpu.memory_space<smem>>
    %1565 = vector.broadcast %1564 : f32 to vector<16x16xf32>
    %1566 = arith.mulf %1565, %1555 : vector<16x16xf32>
    %1567 = arith.addf %1523, %1566 : vector<16x16xf32>
    %c60_531 = arith.constant 60 : index
    %1568 = memref.load %arg4[%c60_531] : memref<72xf32, #tpu.memory_space<smem>>
    %1569 = vector.broadcast %1568 : f32 to vector<16x16xf32>
    %1570 = arith.mulf %1569, %1555 : vector<16x16xf32>
    %1571 = arith.addf %1527, %1570 : vector<16x16xf32>
    %c22_532 = arith.constant 22 : index
    %1572 = memref.load %arg4[%c22_532] : memref<72xf32, #tpu.memory_space<smem>>
    %1573 = vector.broadcast %1572 : f32 to vector<16x16xf32>
    %1574 = arith.mulf %1573, %1555 : vector<16x16xf32>
    %1575 = arith.addf %1549, %1574 : vector<16x16xf32>
    %c58_533 = arith.constant 58 : index
    %1576 = memref.load %arg4[%c58_533] : memref<72xf32, #tpu.memory_space<smem>>
    %1577 = vector.broadcast %1576 : f32 to vector<16x16xf32>
    %1578 = arith.mulf %1577, %1555 : vector<16x16xf32>
    %1579 = arith.addf %1553, %1578 : vector<16x16xf32>
    %c21_534 = arith.constant 21 : index
    %1580 = memref.load %arg4[%c21_534] : memref<72xf32, #tpu.memory_space<smem>>
    %1581 = vector.broadcast %1580 : f32 to vector<16x16xf32>
    %1582 = arith.mulf %1581, %1555 : vector<16x16xf32>
    %1583 = arith.addf %1531, %1582 : vector<16x16xf32>
    %c57_535 = arith.constant 57 : index
    %1584 = memref.load %arg4[%c57_535] : memref<72xf32, #tpu.memory_space<smem>>
    %1585 = vector.broadcast %1584 : f32 to vector<16x16xf32>
    %1586 = arith.mulf %1585, %1555 : vector<16x16xf32>
    %1587 = arith.addf %1535, %1586 : vector<16x16xf32>
    %c3_536 = arith.constant 3 : index
    %c2_537 = arith.constant 2 : index
    %c1_538 = arith.constant 1 : index
    %c1_539 = arith.constant 1 : index
    %1588 = vector.load %arg8[%c3_536, %c2_537, %c1_538, %c1_539] : memref<4x4x18x18xf32, #tpu.memory_space<vmem>>, vector<1x1x16x16xf32>
    %1589 = vector.shape_cast %1588 : vector<1x1x16x16xf32> to vector<16x16xf32>
    %c26_540 = arith.constant 26 : index
    %1590 = memref.load %arg4[%c26_540] : memref<72xf32, #tpu.memory_space<smem>>
    %1591 = vector.broadcast %1590 : f32 to vector<16x16xf32>
    %1592 = arith.mulf %1591, %1589 : vector<16x16xf32>
    %1593 = arith.addf %1559, %1592 : vector<16x16xf32>
    %c62_541 = arith.constant 62 : index
    %1594 = memref.load %arg4[%c62_541] : memref<72xf32, #tpu.memory_space<smem>>
    %1595 = vector.broadcast %1594 : f32 to vector<16x16xf32>
    %1596 = arith.mulf %1595, %1589 : vector<16x16xf32>
    %1597 = arith.addf %1563, %1596 : vector<16x16xf32>
    %c25_542 = arith.constant 25 : index
    %1598 = memref.load %arg4[%c25_542] : memref<72xf32, #tpu.memory_space<smem>>
    %1599 = vector.broadcast %1598 : f32 to vector<16x16xf32>
    %1600 = arith.mulf %1599, %1589 : vector<16x16xf32>
    %1601 = arith.addf %1567, %1600 : vector<16x16xf32>
    %c61_543 = arith.constant 61 : index
    %1602 = memref.load %arg4[%c61_543] : memref<72xf32, #tpu.memory_space<smem>>
    %1603 = vector.broadcast %1602 : f32 to vector<16x16xf32>
    %1604 = arith.mulf %1603, %1589 : vector<16x16xf32>
    %1605 = arith.addf %1571, %1604 : vector<16x16xf32>
    %c23_544 = arith.constant 23 : index
    %1606 = memref.load %arg4[%c23_544] : memref<72xf32, #tpu.memory_space<smem>>
    %1607 = vector.broadcast %1606 : f32 to vector<16x16xf32>
    %1608 = arith.mulf %1607, %1589 : vector<16x16xf32>
    %1609 = arith.addf %1575, %1608 : vector<16x16xf32>
    %c59_545 = arith.constant 59 : index
    %1610 = memref.load %arg4[%c59_545] : memref<72xf32, #tpu.memory_space<smem>>
    %1611 = vector.broadcast %1610 : f32 to vector<16x16xf32>
    %1612 = arith.mulf %1611, %1589 : vector<16x16xf32>
    %1613 = arith.addf %1579, %1612 : vector<16x16xf32>
    %c22_546 = arith.constant 22 : index
    %1614 = memref.load %arg4[%c22_546] : memref<72xf32, #tpu.memory_space<smem>>
    %1615 = vector.broadcast %1614 : f32 to vector<16x16xf32>
    %1616 = arith.mulf %1615, %1589 : vector<16x16xf32>
    %1617 = arith.addf %1583, %1616 : vector<16x16xf32>
    %c58_547 = arith.constant 58 : index
    %1618 = memref.load %arg4[%c58_547] : memref<72xf32, #tpu.memory_space<smem>>
    %1619 = vector.broadcast %1618 : f32 to vector<16x16xf32>
    %1620 = arith.mulf %1619, %1589 : vector<16x16xf32>
    %1621 = arith.addf %1587, %1620 : vector<16x16xf32>
    %c2_548 = arith.constant 2 : index
    %c2_549 = arith.constant 2 : index
    %c1_550 = arith.constant 1 : index
    %c2_551 = arith.constant 2 : index
    %1622 = vector.load %arg8[%c2_548, %c2_549, %c1_550, %c2_551] : memref<4x4x18x18xf32, #tpu.memory_space<vmem>>, vector<1x1x16x16xf32>
    %1623 = vector.shape_cast %1622 : vector<1x1x16x16xf32> to vector<16x16xf32>
    %c26_552 = arith.constant 26 : index
    %1624 = memref.load %arg4[%c26_552] : memref<72xf32, #tpu.memory_space<smem>>
    %1625 = vector.broadcast %1624 : f32 to vector<16x16xf32>
    %1626 = arith.mulf %1625, %1623 : vector<16x16xf32>
    %1627 = arith.addf %1601, %1626 : vector<16x16xf32>
    %c62_553 = arith.constant 62 : index
    %1628 = memref.load %arg4[%c62_553] : memref<72xf32, #tpu.memory_space<smem>>
    %1629 = vector.broadcast %1628 : f32 to vector<16x16xf32>
    %1630 = arith.mulf %1629, %1623 : vector<16x16xf32>
    %1631 = arith.addf %1605, %1630 : vector<16x16xf32>
    %c23_554 = arith.constant 23 : index
    %1632 = memref.load %arg4[%c23_554] : memref<72xf32, #tpu.memory_space<smem>>
    %1633 = vector.broadcast %1632 : f32 to vector<16x16xf32>
    %1634 = arith.mulf %1633, %1623 : vector<16x16xf32>
    %1635 = arith.addf %1617, %1634 : vector<16x16xf32>
    %c59_555 = arith.constant 59 : index
    %1636 = memref.load %arg4[%c59_555] : memref<72xf32, #tpu.memory_space<smem>>
    %1637 = vector.broadcast %1636 : f32 to vector<16x16xf32>
    %1638 = arith.mulf %1637, %1623 : vector<16x16xf32>
    %1639 = arith.addf %1621, %1638 : vector<16x16xf32>
    %c1_556 = arith.constant 1 : index
    %c2_557 = arith.constant 2 : index
    %c2_558 = arith.constant 2 : index
    %c0_559 = arith.constant 0 : index
    %1640 = vector.load %arg8[%c1_556, %c2_557, %c2_558, %c0_559] : memref<4x4x18x18xf32, #tpu.memory_space<vmem>>, vector<1x1x16x16xf32>
    %1641 = vector.shape_cast %1640 : vector<1x1x16x16xf32> to vector<16x16xf32>
    %c24_560 = arith.constant 24 : index
    %1642 = memref.load %arg4[%c24_560] : memref<72xf32, #tpu.memory_space<smem>>
    %1643 = vector.broadcast %1642 : f32 to vector<16x16xf32>
    %1644 = arith.mulf %1643, %1641 : vector<16x16xf32>
    %1645 = arith.addf %1609, %1644 : vector<16x16xf32>
    %c60_561 = arith.constant 60 : index
    %1646 = memref.load %arg4[%c60_561] : memref<72xf32, #tpu.memory_space<smem>>
    %1647 = vector.broadcast %1646 : f32 to vector<16x16xf32>
    %1648 = arith.mulf %1647, %1641 : vector<16x16xf32>
    %1649 = arith.addf %1613, %1648 : vector<16x16xf32>
    %c0_562 = arith.constant 0 : index
    %c2_563 = arith.constant 2 : index
    %c2_564 = arith.constant 2 : index
    %c1_565 = arith.constant 1 : index
    %1650 = vector.load %arg8[%c0_562, %c2_563, %c2_564, %c1_565] : memref<4x4x18x18xf32, #tpu.memory_space<vmem>>, vector<1x1x16x16xf32>
    %1651 = vector.shape_cast %1650 : vector<1x1x16x16xf32> to vector<16x16xf32>
    %c25_566 = arith.constant 25 : index
    %1652 = memref.load %arg4[%c25_566] : memref<72xf32, #tpu.memory_space<smem>>
    %1653 = vector.broadcast %1652 : f32 to vector<16x16xf32>
    %1654 = arith.mulf %1653, %1651 : vector<16x16xf32>
    %1655 = arith.addf %1645, %1654 : vector<16x16xf32>
    %c61_567 = arith.constant 61 : index
    %1656 = memref.load %arg4[%c61_567] : memref<72xf32, #tpu.memory_space<smem>>
    %1657 = vector.broadcast %1656 : f32 to vector<16x16xf32>
    %1658 = arith.mulf %1657, %1651 : vector<16x16xf32>
    %1659 = arith.addf %1649, %1658 : vector<16x16xf32>
    %c24_568 = arith.constant 24 : index
    %1660 = memref.load %arg4[%c24_568] : memref<72xf32, #tpu.memory_space<smem>>
    %1661 = vector.broadcast %1660 : f32 to vector<16x16xf32>
    %1662 = arith.mulf %1661, %1651 : vector<16x16xf32>
    %1663 = arith.addf %1635, %1662 : vector<16x16xf32>
    %c60_569 = arith.constant 60 : index
    %1664 = memref.load %arg4[%c60_569] : memref<72xf32, #tpu.memory_space<smem>>
    %1665 = vector.broadcast %1664 : f32 to vector<16x16xf32>
    %1666 = arith.mulf %1665, %1651 : vector<16x16xf32>
    %1667 = arith.addf %1639, %1666 : vector<16x16xf32>
    %c1_570 = arith.constant 1 : index
    %c2_571 = arith.constant 2 : index
    %c2_572 = arith.constant 2 : index
    %c1_573 = arith.constant 1 : index
    %1668 = vector.load %arg8[%c1_570, %c2_571, %c2_572, %c1_573] : memref<4x4x18x18xf32, #tpu.memory_space<vmem>>, vector<1x1x16x16xf32>
    %1669 = vector.shape_cast %1668 : vector<1x1x16x16xf32> to vector<16x16xf32>
    %c26_574 = arith.constant 26 : index
    %1670 = memref.load %arg4[%c26_574] : memref<72xf32, #tpu.memory_space<smem>>
    %1671 = vector.broadcast %1670 : f32 to vector<16x16xf32>
    %1672 = arith.mulf %1671, %1669 : vector<16x16xf32>
    %1673 = arith.addf %1655, %1672 : vector<16x16xf32>
    %c62_575 = arith.constant 62 : index
    %1674 = memref.load %arg4[%c62_575] : memref<72xf32, #tpu.memory_space<smem>>
    %1675 = vector.broadcast %1674 : f32 to vector<16x16xf32>
    %1676 = arith.mulf %1675, %1669 : vector<16x16xf32>
    %1677 = arith.addf %1659, %1676 : vector<16x16xf32>
    %c25_576 = arith.constant 25 : index
    %1678 = memref.load %arg4[%c25_576] : memref<72xf32, #tpu.memory_space<smem>>
    %1679 = vector.broadcast %1678 : f32 to vector<16x16xf32>
    %1680 = arith.mulf %1679, %1669 : vector<16x16xf32>
    %1681 = arith.addf %1663, %1680 : vector<16x16xf32>
    %c61_577 = arith.constant 61 : index
    %1682 = memref.load %arg4[%c61_577] : memref<72xf32, #tpu.memory_space<smem>>
    %1683 = vector.broadcast %1682 : f32 to vector<16x16xf32>
    %1684 = arith.mulf %1683, %1669 : vector<16x16xf32>
    %1685 = arith.addf %1667, %1684 : vector<16x16xf32>
    %c0_578 = arith.constant 0 : index
    %c2_579 = arith.constant 2 : index
    %c2_580 = arith.constant 2 : index
    %c2_581 = arith.constant 2 : index
    %1686 = vector.load %arg8[%c0_578, %c2_579, %c2_580, %c2_581] : memref<4x4x18x18xf32, #tpu.memory_space<vmem>>, vector<1x1x16x16xf32>
    %1687 = vector.shape_cast %1686 : vector<1x1x16x16xf32> to vector<16x16xf32>
    %c26_582 = arith.constant 26 : index
    %1688 = memref.load %arg4[%c26_582] : memref<72xf32, #tpu.memory_space<smem>>
    %1689 = vector.broadcast %1688 : f32 to vector<16x16xf32>
    %1690 = arith.mulf %1689, %1687 : vector<16x16xf32>
    %1691 = arith.addf %1681, %1690 : vector<16x16xf32>
    %c62_583 = arith.constant 62 : index
    %1692 = memref.load %arg4[%c62_583] : memref<72xf32, #tpu.memory_space<smem>>
    %1693 = vector.broadcast %1692 : f32 to vector<16x16xf32>
    %1694 = arith.mulf %1693, %1687 : vector<16x16xf32>
    %1695 = arith.addf %1685, %1694 : vector<16x16xf32>
    %c3_584 = arith.constant 3 : index
    %c3_585 = arith.constant 3 : index
    %c0_586 = arith.constant 0 : index
    %c0_587 = arith.constant 0 : index
    %1696 = vector.load %arg8[%c3_584, %c3_585, %c0_586, %c0_587] : memref<4x4x18x18xf32, #tpu.memory_space<vmem>>, vector<1x1x16x16xf32>
    %1697 = vector.shape_cast %1696 : vector<1x1x16x16xf32> to vector<16x16xf32>
    %c27_588 = arith.constant 27 : index
    %1698 = memref.load %arg4[%c27_588] : memref<72xf32, #tpu.memory_space<smem>>
    %1699 = vector.broadcast %1698 : f32 to vector<16x16xf32>
    %1700 = arith.mulf %1699, %1697 : vector<16x16xf32>
    %1701 = arith.addf %1593, %1700 : vector<16x16xf32>
    %c63_589 = arith.constant 63 : index
    %1702 = memref.load %arg4[%c63_589] : memref<72xf32, #tpu.memory_space<smem>>
    %1703 = vector.broadcast %1702 : f32 to vector<16x16xf32>
    %1704 = arith.mulf %1703, %1697 : vector<16x16xf32>
    %1705 = arith.addf %1597, %1704 : vector<16x16xf32>
    %c2_590 = arith.constant 2 : index
    %c3_591 = arith.constant 3 : index
    %c0_592 = arith.constant 0 : index
    %c1_593 = arith.constant 1 : index
    %1706 = vector.load %arg8[%c2_590, %c3_591, %c0_592, %c1_593] : memref<4x4x18x18xf32, #tpu.memory_space<vmem>>, vector<1x1x16x16xf32>
    %1707 = vector.shape_cast %1706 : vector<1x1x16x16xf32> to vector<16x16xf32>
    %c28_594 = arith.constant 28 : index
    %1708 = memref.load %arg4[%c28_594] : memref<72xf32, #tpu.memory_space<smem>>
    %1709 = vector.broadcast %1708 : f32 to vector<16x16xf32>
    %1710 = arith.mulf %1709, %1707 : vector<16x16xf32>
    %1711 = arith.addf %1701, %1710 : vector<16x16xf32>
    %c64_595 = arith.constant 64 : index
    %1712 = memref.load %arg4[%c64_595] : memref<72xf32, #tpu.memory_space<smem>>
    %1713 = vector.broadcast %1712 : f32 to vector<16x16xf32>
    %1714 = arith.mulf %1713, %1707 : vector<16x16xf32>
    %1715 = arith.addf %1705, %1714 : vector<16x16xf32>
    %c27_596 = arith.constant 27 : index
    %1716 = memref.load %arg4[%c27_596] : memref<72xf32, #tpu.memory_space<smem>>
    %1717 = vector.broadcast %1716 : f32 to vector<16x16xf32>
    %1718 = arith.mulf %1717, %1707 : vector<16x16xf32>
    %1719 = arith.addf %1627, %1718 : vector<16x16xf32>
    %c63_597 = arith.constant 63 : index
    %1720 = memref.load %arg4[%c63_597] : memref<72xf32, #tpu.memory_space<smem>>
    %1721 = vector.broadcast %1720 : f32 to vector<16x16xf32>
    %1722 = arith.mulf %1721, %1707 : vector<16x16xf32>
    %1723 = arith.addf %1631, %1722 : vector<16x16xf32>
    %c3_598 = arith.constant 3 : index
    %c3_599 = arith.constant 3 : index
    %c0_600 = arith.constant 0 : index
    %c1_601 = arith.constant 1 : index
    %1724 = vector.load %arg8[%c3_598, %c3_599, %c0_600, %c1_601] : memref<4x4x18x18xf32, #tpu.memory_space<vmem>>, vector<1x1x16x16xf32>
    %1725 = vector.shape_cast %1724 : vector<1x1x16x16xf32> to vector<16x16xf32>
    %c29_602 = arith.constant 29 : index
    %1726 = memref.load %arg4[%c29_602] : memref<72xf32, #tpu.memory_space<smem>>
    %1727 = vector.broadcast %1726 : f32 to vector<16x16xf32>
    %1728 = arith.mulf %1727, %1725 : vector<16x16xf32>
    %1729 = arith.addf %1711, %1728 : vector<16x16xf32>
    %c65_603 = arith.constant 65 : index
    %1730 = memref.load %arg4[%c65_603] : memref<72xf32, #tpu.memory_space<smem>>
    %1731 = vector.broadcast %1730 : f32 to vector<16x16xf32>
    %1732 = arith.mulf %1731, %1725 : vector<16x16xf32>
    %1733 = arith.addf %1715, %1732 : vector<16x16xf32>
    %c28_604 = arith.constant 28 : index
    %1734 = memref.load %arg4[%c28_604] : memref<72xf32, #tpu.memory_space<smem>>
    %1735 = vector.broadcast %1734 : f32 to vector<16x16xf32>
    %1736 = arith.mulf %1735, %1725 : vector<16x16xf32>
    %1737 = arith.addf %1719, %1736 : vector<16x16xf32>
    %c64_605 = arith.constant 64 : index
    %1738 = memref.load %arg4[%c64_605] : memref<72xf32, #tpu.memory_space<smem>>
    %1739 = vector.broadcast %1738 : f32 to vector<16x16xf32>
    %1740 = arith.mulf %1739, %1725 : vector<16x16xf32>
    %1741 = arith.addf %1723, %1740 : vector<16x16xf32>
    %c2_606 = arith.constant 2 : index
    %c3_607 = arith.constant 3 : index
    %c0_608 = arith.constant 0 : index
    %c2_609 = arith.constant 2 : index
    %1742 = vector.load %arg8[%c2_606, %c3_607, %c0_608, %c2_609] : memref<4x4x18x18xf32, #tpu.memory_space<vmem>>, vector<1x1x16x16xf32>
    %1743 = vector.shape_cast %1742 : vector<1x1x16x16xf32> to vector<16x16xf32>
    %c29_610 = arith.constant 29 : index
    %1744 = memref.load %arg4[%c29_610] : memref<72xf32, #tpu.memory_space<smem>>
    %1745 = vector.broadcast %1744 : f32 to vector<16x16xf32>
    %1746 = arith.mulf %1745, %1743 : vector<16x16xf32>
    %1747 = arith.addf %1737, %1746 : vector<16x16xf32>
    %c65_611 = arith.constant 65 : index
    %1748 = memref.load %arg4[%c65_611] : memref<72xf32, #tpu.memory_space<smem>>
    %1749 = vector.broadcast %1748 : f32 to vector<16x16xf32>
    %1750 = arith.mulf %1749, %1743 : vector<16x16xf32>
    %1751 = arith.addf %1741, %1750 : vector<16x16xf32>
    %c1_612 = arith.constant 1 : index
    %c3_613 = arith.constant 3 : index
    %c1_614 = arith.constant 1 : index
    %c0_615 = arith.constant 0 : index
    %1752 = vector.load %arg8[%c1_612, %c3_613, %c1_614, %c0_615] : memref<4x4x18x18xf32, #tpu.memory_space<vmem>>, vector<1x1x16x16xf32>
    %1753 = vector.shape_cast %1752 : vector<1x1x16x16xf32> to vector<16x16xf32>
    %c30_616 = arith.constant 30 : index
    %1754 = memref.load %arg4[%c30_616] : memref<72xf32, #tpu.memory_space<smem>>
    %1755 = vector.broadcast %1754 : f32 to vector<16x16xf32>
    %1756 = arith.mulf %1755, %1753 : vector<16x16xf32>
    %1757 = arith.addf %1729, %1756 : vector<16x16xf32>
    %c66_617 = arith.constant 66 : index
    %1758 = memref.load %arg4[%c66_617] : memref<72xf32, #tpu.memory_space<smem>>
    %1759 = vector.broadcast %1758 : f32 to vector<16x16xf32>
    %1760 = arith.mulf %1759, %1753 : vector<16x16xf32>
    %1761 = arith.addf %1733, %1760 : vector<16x16xf32>
    %c27_618 = arith.constant 27 : index
    %1762 = memref.load %arg4[%c27_618] : memref<72xf32, #tpu.memory_space<smem>>
    %1763 = vector.broadcast %1762 : f32 to vector<16x16xf32>
    %1764 = arith.mulf %1763, %1753 : vector<16x16xf32>
    %1765 = arith.addf %1673, %1764 : vector<16x16xf32>
    %c63_619 = arith.constant 63 : index
    %1766 = memref.load %arg4[%c63_619] : memref<72xf32, #tpu.memory_space<smem>>
    %1767 = vector.broadcast %1766 : f32 to vector<16x16xf32>
    %1768 = arith.mulf %1767, %1753 : vector<16x16xf32>
    %1769 = arith.addf %1677, %1768 : vector<16x16xf32>
    %c0_620 = arith.constant 0 : index
    %c3_621 = arith.constant 3 : index
    %c1_622 = arith.constant 1 : index
    %c1_623 = arith.constant 1 : index
    %1770 = vector.load %arg8[%c0_620, %c3_621, %c1_622, %c1_623] : memref<4x4x18x18xf32, #tpu.memory_space<vmem>>, vector<1x1x16x16xf32>
    %1771 = vector.shape_cast %1770 : vector<1x1x16x16xf32> to vector<16x16xf32>
    %c31_624 = arith.constant 31 : index
    %1772 = memref.load %arg4[%c31_624] : memref<72xf32, #tpu.memory_space<smem>>
    %1773 = vector.broadcast %1772 : f32 to vector<16x16xf32>
    %1774 = arith.mulf %1773, %1771 : vector<16x16xf32>
    %1775 = arith.addf %1757, %1774 : vector<16x16xf32>
    %c67_625 = arith.constant 67 : index
    %1776 = memref.load %arg4[%c67_625] : memref<72xf32, #tpu.memory_space<smem>>
    %1777 = vector.broadcast %1776 : f32 to vector<16x16xf32>
    %1778 = arith.mulf %1777, %1771 : vector<16x16xf32>
    %1779 = arith.addf %1761, %1778 : vector<16x16xf32>
    %c30_626 = arith.constant 30 : index
    %1780 = memref.load %arg4[%c30_626] : memref<72xf32, #tpu.memory_space<smem>>
    %1781 = vector.broadcast %1780 : f32 to vector<16x16xf32>
    %1782 = arith.mulf %1781, %1771 : vector<16x16xf32>
    %1783 = arith.addf %1747, %1782 : vector<16x16xf32>
    %c66_627 = arith.constant 66 : index
    %1784 = memref.load %arg4[%c66_627] : memref<72xf32, #tpu.memory_space<smem>>
    %1785 = vector.broadcast %1784 : f32 to vector<16x16xf32>
    %1786 = arith.mulf %1785, %1771 : vector<16x16xf32>
    %1787 = arith.addf %1751, %1786 : vector<16x16xf32>
    %c28_628 = arith.constant 28 : index
    %1788 = memref.load %arg4[%c28_628] : memref<72xf32, #tpu.memory_space<smem>>
    %1789 = vector.broadcast %1788 : f32 to vector<16x16xf32>
    %1790 = arith.mulf %1789, %1771 : vector<16x16xf32>
    %1791 = arith.addf %1765, %1790 : vector<16x16xf32>
    %c64_629 = arith.constant 64 : index
    %1792 = memref.load %arg4[%c64_629] : memref<72xf32, #tpu.memory_space<smem>>
    %1793 = vector.broadcast %1792 : f32 to vector<16x16xf32>
    %1794 = arith.mulf %1793, %1771 : vector<16x16xf32>
    %1795 = arith.addf %1769, %1794 : vector<16x16xf32>
    %c27_630 = arith.constant 27 : index
    %1796 = memref.load %arg4[%c27_630] : memref<72xf32, #tpu.memory_space<smem>>
    %1797 = vector.broadcast %1796 : f32 to vector<16x16xf32>
    %1798 = arith.mulf %1797, %1771 : vector<16x16xf32>
    %1799 = arith.addf %1691, %1798 : vector<16x16xf32>
    %c63_631 = arith.constant 63 : index
    %1800 = memref.load %arg4[%c63_631] : memref<72xf32, #tpu.memory_space<smem>>
    %1801 = vector.broadcast %1800 : f32 to vector<16x16xf32>
    %1802 = arith.mulf %1801, %1771 : vector<16x16xf32>
    %1803 = arith.addf %1695, %1802 : vector<16x16xf32>
    %c1_632 = arith.constant 1 : index
    %c3_633 = arith.constant 3 : index
    %c1_634 = arith.constant 1 : index
    %c1_635 = arith.constant 1 : index
    %1804 = vector.load %arg8[%c1_632, %c3_633, %c1_634, %c1_635] : memref<4x4x18x18xf32, #tpu.memory_space<vmem>>, vector<1x1x16x16xf32>
    %1805 = vector.shape_cast %1804 : vector<1x1x16x16xf32> to vector<16x16xf32>
    %c32_636 = arith.constant 32 : index
    %1806 = memref.load %arg4[%c32_636] : memref<72xf32, #tpu.memory_space<smem>>
    %1807 = vector.broadcast %1806 : f32 to vector<16x16xf32>
    %1808 = arith.mulf %1807, %1805 : vector<16x16xf32>
    %1809 = arith.addf %1775, %1808 : vector<16x16xf32>
    %c68_637 = arith.constant 68 : index
    %1810 = memref.load %arg4[%c68_637] : memref<72xf32, #tpu.memory_space<smem>>
    %1811 = vector.broadcast %1810 : f32 to vector<16x16xf32>
    %1812 = arith.mulf %1811, %1805 : vector<16x16xf32>
    %1813 = arith.addf %1779, %1812 : vector<16x16xf32>
    %c31_638 = arith.constant 31 : index
    %1814 = memref.load %arg4[%c31_638] : memref<72xf32, #tpu.memory_space<smem>>
    %1815 = vector.broadcast %1814 : f32 to vector<16x16xf32>
    %1816 = arith.mulf %1815, %1805 : vector<16x16xf32>
    %1817 = arith.addf %1783, %1816 : vector<16x16xf32>
    %c67_639 = arith.constant 67 : index
    %1818 = memref.load %arg4[%c67_639] : memref<72xf32, #tpu.memory_space<smem>>
    %1819 = vector.broadcast %1818 : f32 to vector<16x16xf32>
    %1820 = arith.mulf %1819, %1805 : vector<16x16xf32>
    %1821 = arith.addf %1787, %1820 : vector<16x16xf32>
    %c29_640 = arith.constant 29 : index
    %1822 = memref.load %arg4[%c29_640] : memref<72xf32, #tpu.memory_space<smem>>
    %1823 = vector.broadcast %1822 : f32 to vector<16x16xf32>
    %1824 = arith.mulf %1823, %1805 : vector<16x16xf32>
    %1825 = arith.addf %1791, %1824 : vector<16x16xf32>
    %c65_641 = arith.constant 65 : index
    %1826 = memref.load %arg4[%c65_641] : memref<72xf32, #tpu.memory_space<smem>>
    %1827 = vector.broadcast %1826 : f32 to vector<16x16xf32>
    %1828 = arith.mulf %1827, %1805 : vector<16x16xf32>
    %1829 = arith.addf %1795, %1828 : vector<16x16xf32>
    %c28_642 = arith.constant 28 : index
    %1830 = memref.load %arg4[%c28_642] : memref<72xf32, #tpu.memory_space<smem>>
    %1831 = vector.broadcast %1830 : f32 to vector<16x16xf32>
    %1832 = arith.mulf %1831, %1805 : vector<16x16xf32>
    %1833 = arith.addf %1799, %1832 : vector<16x16xf32>
    %c64_643 = arith.constant 64 : index
    %1834 = memref.load %arg4[%c64_643] : memref<72xf32, #tpu.memory_space<smem>>
    %1835 = vector.broadcast %1834 : f32 to vector<16x16xf32>
    %1836 = arith.mulf %1835, %1805 : vector<16x16xf32>
    %1837 = arith.addf %1803, %1836 : vector<16x16xf32>
    %c0_644 = arith.constant 0 : index
    %c3_645 = arith.constant 3 : index
    %c1_646 = arith.constant 1 : index
    %c2_647 = arith.constant 2 : index
    %1838 = vector.load %arg8[%c0_644, %c3_645, %c1_646, %c2_647] : memref<4x4x18x18xf32, #tpu.memory_space<vmem>>, vector<1x1x16x16xf32>
    %1839 = vector.shape_cast %1838 : vector<1x1x16x16xf32> to vector<16x16xf32>
    %c32_648 = arith.constant 32 : index
    %1840 = memref.load %arg4[%c32_648] : memref<72xf32, #tpu.memory_space<smem>>
    %1841 = vector.broadcast %1840 : f32 to vector<16x16xf32>
    %1842 = arith.mulf %1841, %1839 : vector<16x16xf32>
    %1843 = arith.addf %1817, %1842 : vector<16x16xf32>
    %c68_649 = arith.constant 68 : index
    %1844 = memref.load %arg4[%c68_649] : memref<72xf32, #tpu.memory_space<smem>>
    %1845 = vector.broadcast %1844 : f32 to vector<16x16xf32>
    %1846 = arith.mulf %1845, %1839 : vector<16x16xf32>
    %1847 = arith.addf %1821, %1846 : vector<16x16xf32>
    %c29_650 = arith.constant 29 : index
    %1848 = memref.load %arg4[%c29_650] : memref<72xf32, #tpu.memory_space<smem>>
    %1849 = vector.broadcast %1848 : f32 to vector<16x16xf32>
    %1850 = arith.mulf %1849, %1839 : vector<16x16xf32>
    %1851 = arith.addf %1833, %1850 : vector<16x16xf32>
    %c65_651 = arith.constant 65 : index
    %1852 = memref.load %arg4[%c65_651] : memref<72xf32, #tpu.memory_space<smem>>
    %1853 = vector.broadcast %1852 : f32 to vector<16x16xf32>
    %1854 = arith.mulf %1853, %1839 : vector<16x16xf32>
    %1855 = arith.addf %1837, %1854 : vector<16x16xf32>
    %c3_652 = arith.constant 3 : index
    %c3_653 = arith.constant 3 : index
    %c1_654 = arith.constant 1 : index
    %c0_655 = arith.constant 0 : index
    %1856 = vector.load %arg8[%c3_652, %c3_653, %c1_654, %c0_655] : memref<4x4x18x18xf32, #tpu.memory_space<vmem>>, vector<1x1x16x16xf32>
    %1857 = vector.shape_cast %1856 : vector<1x1x16x16xf32> to vector<16x16xf32>
    %c33_656 = arith.constant 33 : index
    %1858 = memref.load %arg4[%c33_656] : memref<72xf32, #tpu.memory_space<smem>>
    %1859 = vector.broadcast %1858 : f32 to vector<16x16xf32>
    %1860 = arith.mulf %1859, %1857 : vector<16x16xf32>
    %1861 = arith.addf %1809, %1860 : vector<16x16xf32>
    %c69_657 = arith.constant 69 : index
    %1862 = memref.load %arg4[%c69_657] : memref<72xf32, #tpu.memory_space<smem>>
    %1863 = vector.broadcast %1862 : f32 to vector<16x16xf32>
    %1864 = arith.mulf %1863, %1857 : vector<16x16xf32>
    %1865 = arith.addf %1813, %1864 : vector<16x16xf32>
    %c30_658 = arith.constant 30 : index
    %1866 = memref.load %arg4[%c30_658] : memref<72xf32, #tpu.memory_space<smem>>
    %1867 = vector.broadcast %1866 : f32 to vector<16x16xf32>
    %1868 = arith.mulf %1867, %1857 : vector<16x16xf32>
    %1869 = arith.addf %1825, %1868 : vector<16x16xf32>
    %c66_659 = arith.constant 66 : index
    %1870 = memref.load %arg4[%c66_659] : memref<72xf32, #tpu.memory_space<smem>>
    %1871 = vector.broadcast %1870 : f32 to vector<16x16xf32>
    %1872 = arith.mulf %1871, %1857 : vector<16x16xf32>
    %1873 = arith.addf %1829, %1872 : vector<16x16xf32>
    %c2_660 = arith.constant 2 : index
    %c3_661 = arith.constant 3 : index
    %c1_662 = arith.constant 1 : index
    %c1_663 = arith.constant 1 : index
    %1874 = vector.load %arg8[%c2_660, %c3_661, %c1_662, %c1_663] : memref<4x4x18x18xf32, #tpu.memory_space<vmem>>, vector<1x1x16x16xf32>
    %1875 = vector.shape_cast %1874 : vector<1x1x16x16xf32> to vector<16x16xf32>
    %c34_664 = arith.constant 34 : index
    %1876 = memref.load %arg4[%c34_664] : memref<72xf32, #tpu.memory_space<smem>>
    %1877 = vector.broadcast %1876 : f32 to vector<16x16xf32>
    %1878 = arith.mulf %1877, %1875 : vector<16x16xf32>
    %1879 = arith.addf %1861, %1878 : vector<16x16xf32>
    %c70_665 = arith.constant 70 : index
    %1880 = memref.load %arg4[%c70_665] : memref<72xf32, #tpu.memory_space<smem>>
    %1881 = vector.broadcast %1880 : f32 to vector<16x16xf32>
    %1882 = arith.mulf %1881, %1875 : vector<16x16xf32>
    %1883 = arith.addf %1865, %1882 : vector<16x16xf32>
    %c33_666 = arith.constant 33 : index
    %1884 = memref.load %arg4[%c33_666] : memref<72xf32, #tpu.memory_space<smem>>
    %1885 = vector.broadcast %1884 : f32 to vector<16x16xf32>
    %1886 = arith.mulf %1885, %1875 : vector<16x16xf32>
    %1887 = arith.addf %1843, %1886 : vector<16x16xf32>
    %c69_667 = arith.constant 69 : index
    %1888 = memref.load %arg4[%c69_667] : memref<72xf32, #tpu.memory_space<smem>>
    %1889 = vector.broadcast %1888 : f32 to vector<16x16xf32>
    %1890 = arith.mulf %1889, %1875 : vector<16x16xf32>
    %1891 = arith.addf %1847, %1890 : vector<16x16xf32>
    %c31_668 = arith.constant 31 : index
    %1892 = memref.load %arg4[%c31_668] : memref<72xf32, #tpu.memory_space<smem>>
    %1893 = vector.broadcast %1892 : f32 to vector<16x16xf32>
    %1894 = arith.mulf %1893, %1875 : vector<16x16xf32>
    %1895 = arith.addf %1869, %1894 : vector<16x16xf32>
    %c67_669 = arith.constant 67 : index
    %1896 = memref.load %arg4[%c67_669] : memref<72xf32, #tpu.memory_space<smem>>
    %1897 = vector.broadcast %1896 : f32 to vector<16x16xf32>
    %1898 = arith.mulf %1897, %1875 : vector<16x16xf32>
    %1899 = arith.addf %1873, %1898 : vector<16x16xf32>
    %c30_670 = arith.constant 30 : index
    %1900 = memref.load %arg4[%c30_670] : memref<72xf32, #tpu.memory_space<smem>>
    %1901 = vector.broadcast %1900 : f32 to vector<16x16xf32>
    %1902 = arith.mulf %1901, %1875 : vector<16x16xf32>
    %1903 = arith.addf %1851, %1902 : vector<16x16xf32>
    %c66_671 = arith.constant 66 : index
    %1904 = memref.load %arg4[%c66_671] : memref<72xf32, #tpu.memory_space<smem>>
    %1905 = vector.broadcast %1904 : f32 to vector<16x16xf32>
    %1906 = arith.mulf %1905, %1875 : vector<16x16xf32>
    %1907 = arith.addf %1855, %1906 : vector<16x16xf32>
    %c3_672 = arith.constant 3 : index
    %c3_673 = arith.constant 3 : index
    %c1_674 = arith.constant 1 : index
    %c1_675 = arith.constant 1 : index
    %1908 = vector.load %arg8[%c3_672, %c3_673, %c1_674, %c1_675] : memref<4x4x18x18xf32, #tpu.memory_space<vmem>>, vector<1x1x16x16xf32>
    %1909 = vector.shape_cast %1908 : vector<1x1x16x16xf32> to vector<16x16xf32>
    %c35_676 = arith.constant 35 : index
    %1910 = memref.load %arg4[%c35_676] : memref<72xf32, #tpu.memory_space<smem>>
    %1911 = vector.broadcast %1910 : f32 to vector<16x16xf32>
    %1912 = arith.mulf %1911, %1909 : vector<16x16xf32>
    %1913 = arith.addf %1879, %1912 : vector<16x16xf32>
    %c71_677 = arith.constant 71 : index
    %1914 = memref.load %arg4[%c71_677] : memref<72xf32, #tpu.memory_space<smem>>
    %1915 = vector.broadcast %1914 : f32 to vector<16x16xf32>
    %1916 = arith.mulf %1915, %1909 : vector<16x16xf32>
    %1917 = arith.addf %1883, %1916 : vector<16x16xf32>
    %c34_678 = arith.constant 34 : index
    %1918 = memref.load %arg4[%c34_678] : memref<72xf32, #tpu.memory_space<smem>>
    %1919 = vector.broadcast %1918 : f32 to vector<16x16xf32>
    %1920 = arith.mulf %1919, %1909 : vector<16x16xf32>
    %1921 = arith.addf %1887, %1920 : vector<16x16xf32>
    %c70_679 = arith.constant 70 : index
    %1922 = memref.load %arg4[%c70_679] : memref<72xf32, #tpu.memory_space<smem>>
    %1923 = vector.broadcast %1922 : f32 to vector<16x16xf32>
    %1924 = arith.mulf %1923, %1909 : vector<16x16xf32>
    %1925 = arith.addf %1891, %1924 : vector<16x16xf32>
    %c32_680 = arith.constant 32 : index
    %1926 = memref.load %arg4[%c32_680] : memref<72xf32, #tpu.memory_space<smem>>
    %1927 = vector.broadcast %1926 : f32 to vector<16x16xf32>
    %1928 = arith.mulf %1927, %1909 : vector<16x16xf32>
    %1929 = arith.addf %1895, %1928 : vector<16x16xf32>
    %c68_681 = arith.constant 68 : index
    %1930 = memref.load %arg4[%c68_681] : memref<72xf32, #tpu.memory_space<smem>>
    %1931 = vector.broadcast %1930 : f32 to vector<16x16xf32>
    %1932 = arith.mulf %1931, %1909 : vector<16x16xf32>
    %1933 = arith.addf %1899, %1932 : vector<16x16xf32>
    %c31_682 = arith.constant 31 : index
    %1934 = memref.load %arg4[%c31_682] : memref<72xf32, #tpu.memory_space<smem>>
    %1935 = vector.broadcast %1934 : f32 to vector<16x16xf32>
    %1936 = arith.mulf %1935, %1909 : vector<16x16xf32>
    %1937 = arith.addf %1903, %1936 : vector<16x16xf32>
    %c67_683 = arith.constant 67 : index
    %1938 = memref.load %arg4[%c67_683] : memref<72xf32, #tpu.memory_space<smem>>
    %1939 = vector.broadcast %1938 : f32 to vector<16x16xf32>
    %1940 = arith.mulf %1939, %1909 : vector<16x16xf32>
    %1941 = arith.addf %1907, %1940 : vector<16x16xf32>
    %c2_684 = arith.constant 2 : index
    %c3_685 = arith.constant 3 : index
    %c1_686 = arith.constant 1 : index
    %c2_687 = arith.constant 2 : index
    %1942 = vector.load %arg8[%c2_684, %c3_685, %c1_686, %c2_687] : memref<4x4x18x18xf32, #tpu.memory_space<vmem>>, vector<1x1x16x16xf32>
    %1943 = vector.shape_cast %1942 : vector<1x1x16x16xf32> to vector<16x16xf32>
    %c35_688 = arith.constant 35 : index
    %1944 = memref.load %arg4[%c35_688] : memref<72xf32, #tpu.memory_space<smem>>
    %1945 = vector.broadcast %1944 : f32 to vector<16x16xf32>
    %1946 = arith.mulf %1945, %1943 : vector<16x16xf32>
    %1947 = arith.addf %1921, %1946 : vector<16x16xf32>
    %c71_689 = arith.constant 71 : index
    %1948 = memref.load %arg4[%c71_689] : memref<72xf32, #tpu.memory_space<smem>>
    %1949 = vector.broadcast %1948 : f32 to vector<16x16xf32>
    %1950 = arith.mulf %1949, %1943 : vector<16x16xf32>
    %1951 = arith.addf %1925, %1950 : vector<16x16xf32>
    %c32_690 = arith.constant 32 : index
    %1952 = memref.load %arg4[%c32_690] : memref<72xf32, #tpu.memory_space<smem>>
    %1953 = vector.broadcast %1952 : f32 to vector<16x16xf32>
    %1954 = arith.mulf %1953, %1943 : vector<16x16xf32>
    %1955 = arith.addf %1937, %1954 : vector<16x16xf32>
    %c68_691 = arith.constant 68 : index
    %1956 = memref.load %arg4[%c68_691] : memref<72xf32, #tpu.memory_space<smem>>
    %1957 = vector.broadcast %1956 : f32 to vector<16x16xf32>
    %1958 = arith.mulf %1957, %1943 : vector<16x16xf32>
    %1959 = arith.addf %1941, %1958 : vector<16x16xf32>
    %c1_692 = arith.constant 1 : index
    %c3_693 = arith.constant 3 : index
    %c2_694 = arith.constant 2 : index
    %c0_695 = arith.constant 0 : index
    %1960 = vector.load %arg8[%c1_692, %c3_693, %c2_694, %c0_695] : memref<4x4x18x18xf32, #tpu.memory_space<vmem>>, vector<1x1x16x16xf32>
    %1961 = vector.shape_cast %1960 : vector<1x1x16x16xf32> to vector<16x16xf32>
    %c33_696 = arith.constant 33 : index
    %1962 = memref.load %arg4[%c33_696] : memref<72xf32, #tpu.memory_space<smem>>
    %1963 = vector.broadcast %1962 : f32 to vector<16x16xf32>
    %1964 = arith.mulf %1963, %1961 : vector<16x16xf32>
    %1965 = arith.addf %1929, %1964 : vector<16x16xf32>
    %c69_697 = arith.constant 69 : index
    %1966 = memref.load %arg4[%c69_697] : memref<72xf32, #tpu.memory_space<smem>>
    %1967 = vector.broadcast %1966 : f32 to vector<16x16xf32>
    %1968 = arith.mulf %1967, %1961 : vector<16x16xf32>
    %1969 = arith.addf %1933, %1968 : vector<16x16xf32>
    %c0_698 = arith.constant 0 : index
    %c3_699 = arith.constant 3 : index
    %c2_700 = arith.constant 2 : index
    %c1_701 = arith.constant 1 : index
    %1970 = vector.load %arg8[%c0_698, %c3_699, %c2_700, %c1_701] : memref<4x4x18x18xf32, #tpu.memory_space<vmem>>, vector<1x1x16x16xf32>
    %1971 = vector.shape_cast %1970 : vector<1x1x16x16xf32> to vector<16x16xf32>
    %c34_702 = arith.constant 34 : index
    %1972 = memref.load %arg4[%c34_702] : memref<72xf32, #tpu.memory_space<smem>>
    %1973 = vector.broadcast %1972 : f32 to vector<16x16xf32>
    %1974 = arith.mulf %1973, %1971 : vector<16x16xf32>
    %1975 = arith.addf %1965, %1974 : vector<16x16xf32>
    %c70_703 = arith.constant 70 : index
    %1976 = memref.load %arg4[%c70_703] : memref<72xf32, #tpu.memory_space<smem>>
    %1977 = vector.broadcast %1976 : f32 to vector<16x16xf32>
    %1978 = arith.mulf %1977, %1971 : vector<16x16xf32>
    %1979 = arith.addf %1969, %1978 : vector<16x16xf32>
    %c33_704 = arith.constant 33 : index
    %1980 = memref.load %arg4[%c33_704] : memref<72xf32, #tpu.memory_space<smem>>
    %1981 = vector.broadcast %1980 : f32 to vector<16x16xf32>
    %1982 = arith.mulf %1981, %1971 : vector<16x16xf32>
    %1983 = arith.addf %1955, %1982 : vector<16x16xf32>
    %c69_705 = arith.constant 69 : index
    %1984 = memref.load %arg4[%c69_705] : memref<72xf32, #tpu.memory_space<smem>>
    %1985 = vector.broadcast %1984 : f32 to vector<16x16xf32>
    %1986 = arith.mulf %1985, %1971 : vector<16x16xf32>
    %1987 = arith.addf %1959, %1986 : vector<16x16xf32>
    %c1_706 = arith.constant 1 : index
    %c3_707 = arith.constant 3 : index
    %c2_708 = arith.constant 2 : index
    %c1_709 = arith.constant 1 : index
    %1988 = vector.load %arg8[%c1_706, %c3_707, %c2_708, %c1_709] : memref<4x4x18x18xf32, #tpu.memory_space<vmem>>, vector<1x1x16x16xf32>
    %1989 = vector.shape_cast %1988 : vector<1x1x16x16xf32> to vector<16x16xf32>
    %c35_710 = arith.constant 35 : index
    %1990 = memref.load %arg4[%c35_710] : memref<72xf32, #tpu.memory_space<smem>>
    %1991 = vector.broadcast %1990 : f32 to vector<16x16xf32>
    %1992 = arith.mulf %1991, %1989 : vector<16x16xf32>
    %1993 = arith.addf %1975, %1992 : vector<16x16xf32>
    %c71_711 = arith.constant 71 : index
    %1994 = memref.load %arg4[%c71_711] : memref<72xf32, #tpu.memory_space<smem>>
    %1995 = vector.broadcast %1994 : f32 to vector<16x16xf32>
    %1996 = arith.mulf %1995, %1989 : vector<16x16xf32>
    %1997 = arith.addf %1979, %1996 : vector<16x16xf32>
    %c34_712 = arith.constant 34 : index
    %1998 = memref.load %arg4[%c34_712] : memref<72xf32, #tpu.memory_space<smem>>
    %1999 = vector.broadcast %1998 : f32 to vector<16x16xf32>
    %2000 = arith.mulf %1999, %1989 : vector<16x16xf32>
    %2001 = arith.addf %1983, %2000 : vector<16x16xf32>
    %c70_713 = arith.constant 70 : index
    %2002 = memref.load %arg4[%c70_713] : memref<72xf32, #tpu.memory_space<smem>>
    %2003 = vector.broadcast %2002 : f32 to vector<16x16xf32>
    %2004 = arith.mulf %2003, %1989 : vector<16x16xf32>
    %2005 = arith.addf %1987, %2004 : vector<16x16xf32>
    %c0_714 = arith.constant 0 : index
    %c3_715 = arith.constant 3 : index
    %c2_716 = arith.constant 2 : index
    %c2_717 = arith.constant 2 : index
    %2006 = vector.load %arg8[%c0_714, %c3_715, %c2_716, %c2_717] : memref<4x4x18x18xf32, #tpu.memory_space<vmem>>, vector<1x1x16x16xf32>
    %2007 = vector.shape_cast %2006 : vector<1x1x16x16xf32> to vector<16x16xf32>
    %c35_718 = arith.constant 35 : index
    %2008 = memref.load %arg4[%c35_718] : memref<72xf32, #tpu.memory_space<smem>>
    %2009 = vector.broadcast %2008 : f32 to vector<16x16xf32>
    %2010 = arith.mulf %2009, %2007 : vector<16x16xf32>
    %2011 = arith.addf %2001, %2010 : vector<16x16xf32>
    %c71_719 = arith.constant 71 : index
    %2012 = memref.load %arg4[%c71_719] : memref<72xf32, #tpu.memory_space<smem>>
    %2013 = vector.broadcast %2012 : f32 to vector<16x16xf32>
    %2014 = arith.mulf %2013, %2007 : vector<16x16xf32>
    %2015 = arith.addf %2005, %2014 : vector<16x16xf32>
    %2016 = tpu.iota {dimensions = array<i32: 0>} : vector<16x32xi32>
    %2017 = tpu.iota {dimensions = array<i32: 1>} : vector<16x32xi32>
    %c2_i32 = arith.constant 2 : i32
    %2018 = vector.broadcast %c2_i32 : i32 to vector<16x32xi32>
    %2019 = arith.muli %2018, %2016 : vector<16x32xi32>
    %2020 = arith.cmpi eq, %2017, %2019 : vector<16x32xi32>
    %2021 = arith.extui %2020 : vector<16x32xi1> to vector<16x32xi32>
    %2022 = arith.sitofp %2021 : vector<16x32xi32> to vector<16x32xf32>
    %c2_i32_720 = arith.constant 2 : i32
    %2023 = vector.broadcast %c2_i32_720 : i32 to vector<16x32xi32>
    %2024 = arith.muli %2023, %2016 : vector<16x32xi32>
    %c1_i32 = arith.constant 1 : i32
    %2025 = vector.broadcast %c1_i32 : i32 to vector<16x32xi32>
    %2026 = arith.addi %2024, %2025 : vector<16x32xi32>
    %2027 = arith.cmpi eq, %2017, %2026 : vector<16x32xi32>
    %2028 = arith.extui %2027 : vector<16x32xi1> to vector<16x32xi32>
    %2029 = arith.sitofp %2028 : vector<16x32xi32> to vector<16x32xf32>
    %2030 = tpu.iota {dimensions = array<i32: 0>} : vector<32x16xi32>
    %2031 = tpu.iota {dimensions = array<i32: 1>} : vector<32x16xi32>
    %c2_i32_721 = arith.constant 2 : i32
    %2032 = vector.broadcast %c2_i32_721 : i32 to vector<32x16xi32>
    %2033 = arith.muli %2032, %2031 : vector<32x16xi32>
    %2034 = arith.cmpi eq, %2030, %2033 : vector<32x16xi32>
    %2035 = arith.extui %2034 : vector<32x16xi1> to vector<32x16xi32>
    %2036 = arith.sitofp %2035 : vector<32x16xi32> to vector<32x16xf32>
    %c2_i32_722 = arith.constant 2 : i32
    %2037 = vector.broadcast %c2_i32_722 : i32 to vector<32x16xi32>
    %2038 = arith.muli %2037, %2031 : vector<32x16xi32>
    %c1_i32_723 = arith.constant 1 : i32
    %2039 = vector.broadcast %c1_i32_723 : i32 to vector<32x16xi32>
    %2040 = arith.addi %2038, %2039 : vector<32x16xi32>
    %2041 = arith.cmpi eq, %2030, %2040 : vector<32x16xi32>
    %2042 = arith.extui %2041 : vector<32x16xi1> to vector<32x16xi32>
    %2043 = arith.sitofp %2042 : vector<32x16xi32> to vector<32x16xf32>
    %cst_724 = arith.constant 0.000000e+00 : f32
    %2044 = vector.broadcast %cst_724 : f32 to vector<16x16xf32>
    %2045 = arith.maximumf %1913, %2044 : vector<16x16xf32>
    %cst_725 = arith.constant 0.000000e+00 : f32
    %2046 = vector.broadcast %cst_725 : f32 to vector<16x16xf32>
    %2047 = arith.maximumf %1947, %2046 : vector<16x16xf32>
    %2048 = arith.truncf %2045 : vector<16x16xf32> to vector<16x16xbf16>
    %2049 = arith.extf %2048 : vector<16x16xbf16> to vector<16x16xf32>
    %2050 = arith.subf %2045, %2049 : vector<16x16xf32>
    %cst_726 = arith.constant dense<0.000000e+00> : vector<16x32xf32>
    %2051 = tpu.matmul %2049, %2022, %cst_726 {dimension_numbers = #tpu.dot_dimension_numbers<[1], [0], [0], [1], [0, 0, 1, 1], [], []>} : vector<16x16xf32>, vector<16x32xf32>, vector<16x32xf32> -> vector<16x32xf32>
    %cst_727 = arith.constant dense<0.000000e+00> : vector<16x32xf32>
    %2052 = tpu.matmul %2050, %2022, %cst_727 {dimension_numbers = #tpu.dot_dimension_numbers<[1], [0], [0], [1], [0, 0, 1, 1], [], []>} : vector<16x16xf32>, vector<16x32xf32>, vector<16x32xf32> -> vector<16x32xf32>
    %2053 = arith.addf %2051, %2052 : vector<16x32xf32>
    %2054 = arith.truncf %2047 : vector<16x16xf32> to vector<16x16xbf16>
    %2055 = arith.extf %2054 : vector<16x16xbf16> to vector<16x16xf32>
    %2056 = arith.subf %2047, %2055 : vector<16x16xf32>
    %cst_728 = arith.constant dense<0.000000e+00> : vector<16x32xf32>
    %2057 = tpu.matmul %2055, %2029, %cst_728 {dimension_numbers = #tpu.dot_dimension_numbers<[1], [0], [0], [1], [0, 0, 1, 1], [], []>} : vector<16x16xf32>, vector<16x32xf32>, vector<16x32xf32> -> vector<16x32xf32>
    %cst_729 = arith.constant dense<0.000000e+00> : vector<16x32xf32>
    %2058 = tpu.matmul %2056, %2029, %cst_729 {dimension_numbers = #tpu.dot_dimension_numbers<[1], [0], [0], [1], [0, 0, 1, 1], [], []>} : vector<16x16xf32>, vector<16x32xf32>, vector<16x32xf32> -> vector<16x32xf32>
    %2059 = arith.addf %2057, %2058 : vector<16x32xf32>
    %2060 = arith.addf %2053, %2059 : vector<16x32xf32>
    %cst_730 = arith.constant 0.000000e+00 : f32
    %2061 = vector.broadcast %cst_730 : f32 to vector<16x16xf32>
    %2062 = arith.maximumf %1993, %2061 : vector<16x16xf32>
    %cst_731 = arith.constant 0.000000e+00 : f32
    %2063 = vector.broadcast %cst_731 : f32 to vector<16x16xf32>
    %2064 = arith.maximumf %2011, %2063 : vector<16x16xf32>
    %2065 = arith.truncf %2062 : vector<16x16xf32> to vector<16x16xbf16>
    %2066 = arith.extf %2065 : vector<16x16xbf16> to vector<16x16xf32>
    %2067 = arith.subf %2062, %2066 : vector<16x16xf32>
    %cst_732 = arith.constant dense<0.000000e+00> : vector<16x32xf32>
    %2068 = tpu.matmul %2066, %2022, %cst_732 {dimension_numbers = #tpu.dot_dimension_numbers<[1], [0], [0], [1], [0, 0, 1, 1], [], []>} : vector<16x16xf32>, vector<16x32xf32>, vector<16x32xf32> -> vector<16x32xf32>
    %cst_733 = arith.constant dense<0.000000e+00> : vector<16x32xf32>
    %2069 = tpu.matmul %2067, %2022, %cst_733 {dimension_numbers = #tpu.dot_dimension_numbers<[1], [0], [0], [1], [0, 0, 1, 1], [], []>} : vector<16x16xf32>, vector<16x32xf32>, vector<16x32xf32> -> vector<16x32xf32>
    %2070 = arith.addf %2068, %2069 : vector<16x32xf32>
    %2071 = arith.truncf %2064 : vector<16x16xf32> to vector<16x16xbf16>
    %2072 = arith.extf %2071 : vector<16x16xbf16> to vector<16x16xf32>
    %2073 = arith.subf %2064, %2072 : vector<16x16xf32>
    %cst_734 = arith.constant dense<0.000000e+00> : vector<16x32xf32>
    %2074 = tpu.matmul %2072, %2029, %cst_734 {dimension_numbers = #tpu.dot_dimension_numbers<[1], [0], [0], [1], [0, 0, 1, 1], [], []>} : vector<16x16xf32>, vector<16x32xf32>, vector<16x32xf32> -> vector<16x32xf32>
    %cst_735 = arith.constant dense<0.000000e+00> : vector<16x32xf32>
    %2075 = tpu.matmul %2073, %2029, %cst_735 {dimension_numbers = #tpu.dot_dimension_numbers<[1], [0], [0], [1], [0, 0, 1, 1], [], []>} : vector<16x16xf32>, vector<16x32xf32>, vector<16x32xf32> -> vector<16x32xf32>
    %2076 = arith.addf %2074, %2075 : vector<16x32xf32>
    %2077 = arith.addf %2070, %2076 : vector<16x32xf32>
    %2078 = arith.truncf %2060 : vector<16x32xf32> to vector<16x32xbf16>
    %2079 = arith.extf %2078 : vector<16x32xbf16> to vector<16x32xf32>
    %2080 = arith.subf %2060, %2079 : vector<16x32xf32>
    %cst_736 = arith.constant dense<0.000000e+00> : vector<32x32xf32>
    %2081 = tpu.matmul %2036, %2079, %cst_736 {dimension_numbers = #tpu.dot_dimension_numbers<[1], [0], [0], [1], [0, 0, 1, 1], [], []>} : vector<32x16xf32>, vector<16x32xf32>, vector<32x32xf32> -> vector<32x32xf32>
    %cst_737 = arith.constant dense<0.000000e+00> : vector<32x32xf32>
    %2082 = tpu.matmul %2036, %2080, %cst_737 {dimension_numbers = #tpu.dot_dimension_numbers<[1], [0], [0], [1], [0, 0, 1, 1], [], []>} : vector<32x16xf32>, vector<16x32xf32>, vector<32x32xf32> -> vector<32x32xf32>
    %2083 = arith.addf %2081, %2082 : vector<32x32xf32>
    %2084 = arith.truncf %2077 : vector<16x32xf32> to vector<16x32xbf16>
    %2085 = arith.extf %2084 : vector<16x32xbf16> to vector<16x32xf32>
    %2086 = arith.subf %2077, %2085 : vector<16x32xf32>
    %cst_738 = arith.constant dense<0.000000e+00> : vector<32x32xf32>
    %2087 = tpu.matmul %2043, %2085, %cst_738 {dimension_numbers = #tpu.dot_dimension_numbers<[1], [0], [0], [1], [0, 0, 1, 1], [], []>} : vector<32x16xf32>, vector<16x32xf32>, vector<32x32xf32> -> vector<32x32xf32>
    %cst_739 = arith.constant dense<0.000000e+00> : vector<32x32xf32>
    %2088 = tpu.matmul %2043, %2086, %cst_739 {dimension_numbers = #tpu.dot_dimension_numbers<[1], [0], [0], [1], [0, 0, 1, 1], [], []>} : vector<32x16xf32>, vector<16x32xf32>, vector<32x32xf32> -> vector<32x32xf32>
    %2089 = arith.addf %2087, %2088 : vector<32x32xf32>
    %2090 = arith.addf %2083, %2089 : vector<32x32xf32>
    %c0_740 = arith.constant 0 : index
    %c0_741 = arith.constant 0 : index
    %c0_742 = arith.constant 0 : index
    %c0_743 = arith.constant 0 : index
    %2091 = vector.load %arg6[%c0_740, %c0_741, %c0_742, %c0_743] : memref<1x2x32x32xf32, #tpu.memory_space<vmem>>, vector<1x1x32x32xf32>
    %2092 = vector.shape_cast %2091 : vector<1x1x32x32xf32> to vector<32x32xf32>
    %2093 = vector.shape_cast %2090 : vector<32x32xf32> to vector<1x1x32x32xf32>
    tpu.vector_store %arg6[%c0_740, %c0_741, %c0_742, %c0_743], %2093 {strides = array<i32>} : memref<1x2x32x32xf32, #tpu.memory_space<vmem>>, vector<1x1x32x32xf32>,
    %cst_744 = arith.constant 0.000000e+00 : f32
    %2094 = vector.broadcast %cst_744 : f32 to vector<16x16xf32>
    %2095 = arith.maximumf %1917, %2094 : vector<16x16xf32>
    %cst_745 = arith.constant 0.000000e+00 : f32
    %2096 = vector.broadcast %cst_745 : f32 to vector<16x16xf32>
    %2097 = arith.maximumf %1951, %2096 : vector<16x16xf32>
    %2098 = arith.truncf %2095 : vector<16x16xf32> to vector<16x16xbf16>
    %2099 = arith.extf %2098 : vector<16x16xbf16> to vector<16x16xf32>
    %2100 = arith.subf %2095, %2099 : vector<16x16xf32>
    %cst_746 = arith.constant dense<0.000000e+00> : vector<16x32xf32>
    %2101 = tpu.matmul %2099, %2022, %cst_746 {dimension_numbers = #tpu.dot_dimension_numbers<[1], [0], [0], [1], [0, 0, 1, 1], [], []>} : vector<16x16xf32>, vector<16x32xf32>, vector<16x32xf32> -> vector<16x32xf32>
    %cst_747 = arith.constant dense<0.000000e+00> : vector<16x32xf32>
    %2102 = tpu.matmul %2100, %2022, %cst_747 {dimension_numbers = #tpu.dot_dimension_numbers<[1], [0], [0], [1], [0, 0, 1, 1], [], []>} : vector<16x16xf32>, vector<16x32xf32>, vector<16x32xf32> -> vector<16x32xf32>
    %2103 = arith.addf %2101, %2102 : vector<16x32xf32>
    %2104 = arith.truncf %2097 : vector<16x16xf32> to vector<16x16xbf16>
    %2105 = arith.extf %2104 : vector<16x16xbf16> to vector<16x16xf32>
    %2106 = arith.subf %2097, %2105 : vector<16x16xf32>
    %cst_748 = arith.constant dense<0.000000e+00> : vector<16x32xf32>
    %2107 = tpu.matmul %2105, %2029, %cst_748 {dimension_numbers = #tpu.dot_dimension_numbers<[1], [0], [0], [1], [0, 0, 1, 1], [], []>} : vector<16x16xf32>, vector<16x32xf32>, vector<16x32xf32> -> vector<16x32xf32>
    %cst_749 = arith.constant dense<0.000000e+00> : vector<16x32xf32>
    %2108 = tpu.matmul %2106, %2029, %cst_749 {dimension_numbers = #tpu.dot_dimension_numbers<[1], [0], [0], [1], [0, 0, 1, 1], [], []>} : vector<16x16xf32>, vector<16x32xf32>, vector<16x32xf32> -> vector<16x32xf32>
    %2109 = arith.addf %2107, %2108 : vector<16x32xf32>
    %2110 = arith.addf %2103, %2109 : vector<16x32xf32>
    %cst_750 = arith.constant 0.000000e+00 : f32
    %2111 = vector.broadcast %cst_750 : f32 to vector<16x16xf32>
    %2112 = arith.maximumf %1997, %2111 : vector<16x16xf32>
    %cst_751 = arith.constant 0.000000e+00 : f32
    %2113 = vector.broadcast %cst_751 : f32 to vector<16x16xf32>
    %2114 = arith.maximumf %2015, %2113 : vector<16x16xf32>
    %2115 = arith.truncf %2112 : vector<16x16xf32> to vector<16x16xbf16>
    %2116 = arith.extf %2115 : vector<16x16xbf16> to vector<16x16xf32>
    %2117 = arith.subf %2112, %2116 : vector<16x16xf32>
    %cst_752 = arith.constant dense<0.000000e+00> : vector<16x32xf32>
    %2118 = tpu.matmul %2116, %2022, %cst_752 {dimension_numbers = #tpu.dot_dimension_numbers<[1], [0], [0], [1], [0, 0, 1, 1], [], []>} : vector<16x16xf32>, vector<16x32xf32>, vector<16x32xf32> -> vector<16x32xf32>
    %cst_753 = arith.constant dense<0.000000e+00> : vector<16x32xf32>
    %2119 = tpu.matmul %2117, %2022, %cst_753 {dimension_numbers = #tpu.dot_dimension_numbers<[1], [0], [0], [1], [0, 0, 1, 1], [], []>} : vector<16x16xf32>, vector<16x32xf32>, vector<16x32xf32> -> vector<16x32xf32>
    %2120 = arith.addf %2118, %2119 : vector<16x32xf32>
    %2121 = arith.truncf %2114 : vector<16x16xf32> to vector<16x16xbf16>
    %2122 = arith.extf %2121 : vector<16x16xbf16> to vector<16x16xf32>
    %2123 = arith.subf %2114, %2122 : vector<16x16xf32>
    %cst_754 = arith.constant dense<0.000000e+00> : vector<16x32xf32>
    %2124 = tpu.matmul %2122, %2029, %cst_754 {dimension_numbers = #tpu.dot_dimension_numbers<[1], [0], [0], [1], [0, 0, 1, 1], [], []>} : vector<16x16xf32>, vector<16x32xf32>, vector<16x32xf32> -> vector<16x32xf32>
    %cst_755 = arith.constant dense<0.000000e+00> : vector<16x32xf32>
    %2125 = tpu.matmul %2123, %2029, %cst_755 {dimension_numbers = #tpu.dot_dimension_numbers<[1], [0], [0], [1], [0, 0, 1, 1], [], []>} : vector<16x16xf32>, vector<16x32xf32>, vector<16x32xf32> -> vector<16x32xf32>
    %2126 = arith.addf %2124, %2125 : vector<16x32xf32>
    %2127 = arith.addf %2120, %2126 : vector<16x32xf32>
    %2128 = arith.truncf %2110 : vector<16x32xf32> to vector<16x32xbf16>
    %2129 = arith.extf %2128 : vector<16x32xbf16> to vector<16x32xf32>
    %2130 = arith.subf %2110, %2129 : vector<16x32xf32>
    %cst_756 = arith.constant dense<0.000000e+00> : vector<32x32xf32>
    %2131 = tpu.matmul %2036, %2129, %cst_756 {dimension_numbers = #tpu.dot_dimension_numbers<[1], [0], [0], [1], [0, 0, 1, 1], [], []>} : vector<32x16xf32>, vector<16x32xf32>, vector<32x32xf32> -> vector<32x32xf32>
    %cst_757 = arith.constant dense<0.000000e+00> : vector<32x32xf32>
    %2132 = tpu.matmul %2036, %2130, %cst_757 {dimension_numbers = #tpu.dot_dimension_numbers<[1], [0], [0], [1], [0, 0, 1, 1], [], []>} : vector<32x16xf32>, vector<16x32xf32>, vector<32x32xf32> -> vector<32x32xf32>
    %2133 = arith.addf %2131, %2132 : vector<32x32xf32>
    %2134 = arith.truncf %2127 : vector<16x32xf32> to vector<16x32xbf16>
    %2135 = arith.extf %2134 : vector<16x32xbf16> to vector<16x32xf32>
    %2136 = arith.subf %2127, %2135 : vector<16x32xf32>
    %cst_758 = arith.constant dense<0.000000e+00> : vector<32x32xf32>
    %2137 = tpu.matmul %2043, %2135, %cst_758 {dimension_numbers = #tpu.dot_dimension_numbers<[1], [0], [0], [1], [0, 0, 1, 1], [], []>} : vector<32x16xf32>, vector<16x32xf32>, vector<32x32xf32> -> vector<32x32xf32>
    %cst_759 = arith.constant dense<0.000000e+00> : vector<32x32xf32>
    %2138 = tpu.matmul %2043, %2136, %cst_759 {dimension_numbers = #tpu.dot_dimension_numbers<[1], [0], [0], [1], [0, 0, 1, 1], [], []>} : vector<32x16xf32>, vector<16x32xf32>, vector<32x32xf32> -> vector<32x32xf32>
    %2139 = arith.addf %2137, %2138 : vector<32x32xf32>
    %2140 = arith.addf %2133, %2139 : vector<32x32xf32>
    %c0_760 = arith.constant 0 : index
    %c1_761 = arith.constant 1 : index
    %c0_762 = arith.constant 0 : index
    %c0_763 = arith.constant 0 : index
    %2141 = vector.load %arg6[%c0_760, %c1_761, %c0_762, %c0_763] : memref<1x2x32x32xf32, #tpu.memory_space<vmem>>, vector<1x1x32x32xf32>
    %2142 = vector.shape_cast %2141 : vector<1x1x32x32xf32> to vector<32x32xf32>
    %2143 = vector.shape_cast %2140 : vector<32x32xf32> to vector<1x1x32x32xf32>
    tpu.vector_store %arg6[%c0_760, %c1_761, %c0_762, %c0_763], %2143 {strides = array<i32>} : memref<1x2x32x32xf32, #tpu.memory_space<vmem>>, vector<1x1x32x32xf32>,
    return
  }
  func.func @transform_0(%arg0: i32) -> (i32, i32, i32, i32) {
    %c0_i32 = arith.constant 0 : i32
    %c0_i32_0 = arith.constant 0 : i32
    %c0_i32_1 = arith.constant 0 : i32
    %c0_i32_2 = arith.constant 0 : i32
    return %arg0, %c0_i32, %c0_i32_0, %c0_i32_1 : i32, i32, i32, i32
  }
  func.func @transform_1(%arg0: i32) -> i32 {
    %c0_i32 = arith.constant 0 : i32
    %c0_i32_0 = arith.constant 0 : i32
    return %c0_i32 : i32
  }
  func.func @transform_2(%arg0: i32) -> i32 {
    %c0_i32 = arith.constant 0 : i32
    %c0_i32_0 = arith.constant 0 : i32
    return %c0_i32 : i32
  }
  func.func @transform_3(%arg0: i32) -> i32 {
    %c0_i32 = arith.constant 0 : i32
    %c0_i32_0 = arith.constant 0 : i32
    return %c0_i32 : i32
  }
  func.func @transform_4(%arg0: i32) -> i32 {
    %c0_i32 = arith.constant 0 : i32
    %c0_i32_0 = arith.constant 0 : i32
    return %c0_i32 : i32
  }
  func.func @transform_5(%arg0: i32) -> (i32, i32, i32, i32) {
    %c0_i32 = arith.constant 0 : i32
    %c0_i32_0 = arith.constant 0 : i32
    %c0_i32_1 = arith.constant 0 : i32
    %c0_i32_2 = arith.constant 0 : i32
    return %arg0, %c0_i32, %c0_i32_0, %c0_i32_1 : i32, i32, i32, i32
  }
}

</mosaic_0001>

<llo_original>
// kernel: tpu_custom_call.1
$region0: #{tpu_custom_call.1}
  #allocation0 [shape = 'u32[]', space=smem, size = 0x4, offset = 0x4, fixed_abs, tag = 'smem constant byte address 0x4 - core index']
  #allocation1 [shape = 'u32[144,128]{1,0:T(1,128)}', space=vmem, size = 0x12000, scoped, tag = 'internal scratch']
  #allocation2 [shape = 'f32[4,17,17]{2,1,0:T(8,128)}', space=vmem, size = 0xc000, scoped, tag = 'scratch operand']
  #allocation3 [shape = 'f32[4,4,18,18]{3,2,1,0:T(8,128)}', space=vmem, size = 0x30000, scoped, tag = 'scratch operand']
  %s0 = inlined_call_operand.hbm [shape: f32[2,4,16,16], index: 0, kind: input, shape index: {}]
  %s1 = inlined_call_operand.vmem [shape: f32[144], index: 1, kind: input, shape index: {}]
  %s2 = inlined_call_operand.vmem [shape: f32[4], index: 2, kind: input, shape index: {}]
  %s3 = inlined_call_operand.vmem [shape: f32[72], index: 3, kind: input, shape index: {}]
  %s4 = inlined_call_operand.vmem [shape: f32[2], index: 4, kind: input, shape index: {}]
  %s5 = inlined_call_operand.hbm [shape: f32[2,2,32,32], index: 5, kind: output, shape index: {}]
  %s6 = sld [smem:[#allocation0]]
  $region73: #{tpu_custom_call.1} parent=0
    _
  %s8 = ssub.s32 1, %s6
  %s9 = scalar_select 0, %s8, %s6
  $region1: #{tpu_custom_call.1} parent=0
    #allocation4 [shape = 'u8[65536]{0}', space=vmem, size = 0x10000, scoped, tag = 'input window, operand 0']
    #allocation5 [shape = 's32[2]{0}', space=sflag, size = 0x8, scoped, tag = 'scoped memory for tpu_custom_call.1']
    #allocation6 [shape = 's32[2]{0}', space=sflag, size = 0x8, scoped, tag = 'scoped memory for tpu_custom_call.1']
    #allocation7 [shape = 's32[2]{0}', space=sflag, size = 0x8, scoped, tag = 'scoped memory for tpu_custom_call.1']
    #allocation8 [shape = 'u8[1024]{0}', space=smem, size = 0x400, scoped, tag = 'input window, operand 1, single buffered']
    #allocation9 [shape = 'u8[512]{0}', space=smem, size = 0x200, scoped, tag = 'input window, operand 2, single buffered']
    #allocation10 [shape = 's32[1]{0}', space=sflag, size = 0x4, scoped, tag = 'scoped memory for tpu_custom_call.1']
    #allocation11 [shape = 'u8[512]{0}', space=smem, size = 0x200, scoped, tag = 'input window, operand 3, single buffered']
    #allocation12 [shape = 'u8[512]{0}', space=smem, size = 0x200, scoped, tag = 'input window, operand 4, single buffered']
    #allocation13 [shape = 's32[1]{0}', space=sflag, size = 0x4, scoped, tag = 'scoped memory for tpu_custom_call.1']
    #allocation14 [shape = 'u8[65536]{0}', space=vmem, size = 0x10000, scoped, tag = 'output window, operand 0']
    %10 = vsyncpa [#allocation5], 0
    %s11 = scalar_lea.sflag [#allocation5], 1
    %12 = vsyncpa %s11, 0
    %13 = vsyncpa [#allocation7], 0
    %14 = vsyncpa [#allocation10], 0
    %15 = vsyncpa [#allocation13], 0
    %16 = vsyncpa [#allocation6], 0
    %s17 = scalar_lea.sflag [#allocation6], 1
    %18 = vsyncpa %s17, 0
    loop: start=0, step=1, limit=4
    $region2: #{tpu_custom_call.1} parent=1 // loop_pre_header
      _
    $region3: #{tpu_custom_call.1} parent=1 // loop_header
      %s20 = sphi 0, %s24
      %p21 = scmp.ge.s32.totalorder %s20, 4
      %s30 = sphi 0, %s32
      %s33 = sphi 0, %s30
      %s34 = sphi 0, %s33
      %s50 = sphi 0, %s34
      %s54 = sphi 0, %s54
      %s56 = sphi 0, %s54
      %s57 = sphi 0, %s56
      %s71 = sphi 0, %s57
      %s75 = sphi 0, %s75
      %s77 = sphi 0, %s75
      %s78 = sphi 0, %s77
      %s92 = sphi 0, %s78
      %s96 = sphi 0, %s96
      %s98 = sphi 0, %s96
      %s99 = sphi 0, %s98
      %s113 = sphi 0, %s99
      %s117 = sphi 0, %s117
      %s119 = sphi 0, %s117
      %s120 = sphi 0, %s119
      %s134 = sphi 0, %s120
      %s140 = sphi 0, %s142
      %s143 = sphi 0, %s140
      %s144 = sphi 0, %s143
      %s160 = sphi 0, %s144
    $region4: #{tpu_custom_call.1} parent=1 // loop_header_branch
      %23 = sbr.rel (%p21) target = $region8
    $region5: #{tpu_custom_call.1} parent=1 // loop_body
      %s25 = ssub.s32 %s20, 1
      %s26 = ssub.s32 %s20, 2
      %s27 = sadd.s32 %s20, 1
      %s28 = ssub.s32 %s20, %s27
      %p29 = scmp.eq.s32.totalorder %s28, 0
      %s31 = sadd.s32 %s30, 1
      %s32 = scalar_select %p29, %s30, %s31
      %p35 = pneg %p29
      %p36 = scmp.eq.s32.totalorder %s20, 1
      %p37 = por %p35, %p36
      %p38 = scmp.ne.s32.totalorder %s30, %s33
      %p39 = scmp.eq.s32.totalorder %s20, 0
      %p40 = por %p38, %p39
      %p41 = scmp.ne.s32.totalorder %s30, %s33
      %p42 = scmp.eq.s32.totalorder %s25, 1
      %p43 = por %p41, %p42
      %p44 = scmp.ne.s32.totalorder %s33, %s34
      %p45 = scmp.eq.s32.totalorder %s25, 0
      %p46 = por %p44, %p45
      %p47 = scmp.ne.s32.totalorder %s33, %s34
      %p48 = scmp.eq.s32.totalorder %s26, 1
      %p49 = por %p47, %p48
      %p51 = scmp.ne.s32.totalorder %s34, %s50
      %p52 = scmp.eq.s32.totalorder %s26, 0
      %p53 = por %p51, %p52
      %s55 = sadd.s32 %s54, 1
      %p58 = scmp.eq.s32.totalorder %s20, 1
      %p59 = scmp.ne.s32.totalorder %s54, %s56
      %p60 = scmp.eq.s32.totalorder %s20, 0
      %p61 = por %p59, %p60
      %p62 = scmp.ne.s32.totalorder %s54, %s56
      %p63 = scmp.eq.s32.totalorder %s25, 1
      %p64 = por %p62, %p63
      %p65 = scmp.ne.s32.totalorder %s56, %s57
      %p66 = scmp.eq.s32.totalorder %s25, 0
      %p67 = por %p65, %p66
      %p68 = scmp.ne.s32.totalorder %s56, %s57
      %p69 = scmp.eq.s32.totalorder %s26, 1
      %p70 = por %p68, %p69
      %p72 = scmp.ne.s32.totalorder %s57, %s71
      %p73 = scmp.eq.s32.totalorder %s26, 0
      %p74 = por %p72, %p73
      %s76 = sadd.s32 %s75, 1
      %p79 = scmp.eq.s32.totalorder %s20, 1
      %p80 = scmp.ne.s32.totalorder %s75, %s77
      %p81 = scmp.eq.s32.totalorder %s20, 0
      %p82 = por %p80, %p81
      %p83 = scmp.ne.s32.totalorder %s75, %s77
      %p84 = scmp.eq.s32.totalorder %s25, 1
      %p85 = por %p83, %p84
      %p86 = scmp.ne.s32.totalorder %s77, %s78
      %p87 = scmp.eq.s32.totalorder %s25, 0
      %p88 = por %p86, %p87
      %p89 = scmp.ne.s32.totalorder %s77, %s78
      %p90 = scmp.eq.s32.totalorder %s26, 1
      %p91 = por %p89, %p90
      %p93 = scmp.ne.s32.totalorder %s78, %s92
      %p94 = scmp.eq.s32.totalorder %s26, 0
      %p95 = por %p93, %p94
      %s97 = sadd.s32 %s96, 1
      %p100 = scmp.eq.s32.totalorder %s20, 1
      %p101 = scmp.ne.s32.totalorder %s96, %s98
      %p102 = scmp.eq.s32.totalorder %s20, 0
      %p103 = por %p101, %p102
      %p104 = scmp.ne.s32.totalorder %s96, %s98
      %p105 = scmp.eq.s32.totalorder %s25, 1
      %p106 = por %p104, %p105
      %p107 = scmp.ne.s32.totalorder %s98, %s99
      %p108 = scmp.eq.s32.totalorder %s25, 0
      %p109 = por %p107, %p108
      %p110 = scmp.ne.s32.totalorder %s98, %s99
      %p111 = scmp.eq.s32.totalorder %s26, 1
      %p112 = por %p110, %p111
      %p114 = scmp.ne.s32.totalorder %s99, %s113
      %p115 = scmp.eq.s32.totalorder %s26, 0
      %p116 = por %p114, %p115
      %s118 = sadd.s32 %s117, 1
      %p121 = scmp.eq.s32.totalorder %s20, 1
      %p122 = scmp.ne.s32.totalorder %s117, %s119
      %p123 = scmp.eq.s32.totalorder %s20, 0
      %p124 = por %p122, %p123
      %p125 = scmp.ne.s32.totalorder %s117, %s119
      %p126 = scmp.eq.s32.totalorder %s25, 1
      %p127 = por %p125, %p126
      %p128 = scmp.ne.s32.totalorder %s119, %s120
      %p129 = scmp.eq.s32.totalorder %s25, 0
      %p130 = por %p128, %p129
      %p131 = scmp.ne.s32.totalorder %s119, %s120
      %p132 = scmp.eq.s32.totalorder %s26, 1
      %p133 = por %p131, %p132
      %p135 = scmp.ne.s32.totalorder %s120, %s134
      %p136 = scmp.eq.s32.totalorder %s26, 0
      %p137 = por %p135, %p136
      %s138 = ssub.s32 %s20, %s27
      %p139 = scmp.eq.s32.totalorder %s138, 0
      %s141 = sadd.s32 %s140, 1
      %s142 = scalar_select %p139, %s140, %s141
      %p145 = pneg %p139
      %p146 = scmp.eq.s32.totalorder %s20, 1
      %p147 = por %p145, %p146
      %p148 = scmp.ne.s32.totalorder %s140, %s143
      %p149 = scmp.eq.s32.totalorder %s20, 0
      %p150 = por %p148, %p149
      %p151 = scmp.ne.s32.totalorder %s140, %s143
      %p152 = scmp.eq.s32.totalorder %s25, 1
      %p153 = por %p151, %p152
      %p154 = scmp.ne.s32.totalorder %s143, %s144
      %p155 = scmp.eq.s32.totalorder %s25, 0
      %p156 = por %p154, %p155
      %p157 = scmp.ne.s32.totalorder %s143, %s144
      %p158 = scmp.eq.s32.totalorder %s26, 1
      %p159 = por %p157, %p158
      %p161 = scmp.ne.s32.totalorder %s144, %s160
      %p162 = scmp.eq.s32.totalorder %s26, 0
      %p163 = por %p161, %p162
      %p164 = scmp.le.s32.totalorder 1, %s20
      %p165 = scmp.lt.s32.totalorder %s20, 3
      %p166 = pnand %p164, %p165
      %p167 = pneg %p166
      // Predicated region
      $region9: #{tpu_custom_call.1} parent=5 // pred_check
        _
      $region10: #{tpu_custom_call.1} parent=5 // pred_check_branch
        %169 = sbr.rel (%p166) target = $region12
      $region11: #{tpu_custom_call.1} parent=5 // pred_region
        %s170 = ssub.s32 %s20, 1
        // Predicated region
        $region13: #{tpu_custom_call.1} parent=11 // pred_check
          %p171 = pneg %p67
        $region14: #{tpu_custom_call.1} parent=11 // pred_check_branch
          %173 = sbr.rel (%p171) target = $region16
        $region15: #{tpu_custom_call.1} parent=11 // pred_region
          %s175 = ssub.s32 32, 32
          %176 = vsyncadd [#allocation7], %s175
          %s178 = sshll.u32 %s1, 4
          %s179 = int_to_ptr.vmem [resolvable:$true] %s178
          %181 = dma.vmem_to_smem %s179, 32, [#allocation8], [#allocation7]
        $region16: #{tpu_custom_call.1} parent=11 // pred_fallthru
          _
        // Predicated region
        $region17: #{tpu_custom_call.1} parent=11 // pred_check
          %p182 = pneg %p88
        $region18: #{tpu_custom_call.1} parent=11 // pred_check_branch
          %184 = sbr.rel (%p182) target = $region20
        $region19: #{tpu_custom_call.1} parent=11 // pred_region
          %s186 = ssub.s32 16, 16
          %187 = vsyncadd [#allocation10], %s186
          %s189 = sshll.u32 %s2, 4
          %s190 = int_to_ptr.vmem [resolvable:$true] %s189
          %192 = dma.vmem_to_smem %s190, 16, [#allocation9], [#allocation10]
        $region20: #{tpu_custom_call.1} parent=11 // pred_fallthru
          _
        // Predicated region
        $region21: #{tpu_custom_call.1} parent=11 // pred_check
          %p193 = pneg %p109
        $region22: #{tpu_custom_call.1} parent=11 // pred_check_branch
          %195 = sbr.rel (%p193) target = $region24
        $region23: #{tpu_custom_call.1} parent=11 // pred_region
          %s197 = ssub.s32 16, 16
          %198 = vsyncadd [#allocation10], %s197
          %s200 = sshll.u32 %s3, 4
          %s201 = int_to_ptr.vmem [resolvable:$true] %s200
          %203 = dma.vmem_to_smem %s201, 16, [#allocation11], [#allocation10]
        $region24: #{tpu_custom_call.1} parent=11 // pred_fallthru
          _
        // Predicated region
        $region25: #{tpu_custom_call.1} parent=11 // pred_check
          %p204 = pneg %p130
        $region26: #{tpu_custom_call.1} parent=11 // pred_check_branch
          %206 = sbr.rel (%p204) target = $region28
        $region27: #{tpu_custom_call.1} parent=11 // pred_region
          %s208 = ssub.s32 16, 16
          %209 = vsyncadd [#allocation13], %s208
          %s211 = sshll.u32 %s4, 4
          %s212 = int_to_ptr.vmem [resolvable:$true] %s211
          %214 = dma.vmem_to_smem %s212, 16, [#allocation12], [#allocation13]
        $region28: #{tpu_custom_call.1} parent=11 // pred_fallthru
          _
      $region12: #{tpu_custom_call.1} parent=5 // pred_fallthru
        _
      %p215 = scmp.lt.s32.totalorder %s20, 2
      // Predicated region
      $region29: #{tpu_custom_call.1} parent=5 // pred_check
        %p216 = pneg %p215
      $region30: #{tpu_custom_call.1} parent=5 // pred_check_branch
        %218 = sbr.rel (%p216) target = $region32
      $region31: #{tpu_custom_call.1} parent=5 // pred_region
        // Predicated region
        $region33: #{tpu_custom_call.1} parent=31 // pred_check
          %p219 = pneg %p40
        $region34: #{tpu_custom_call.1} parent=31 // pred_check_branch
          %221 = sbr.rel (%p219) target = $region36
        $region35: #{tpu_custom_call.1} parent=31 // pred_region
          %s222 = sand.u32 %s30, 1
          %s223 = scalar_lea.sflag [#allocation5], %s222
          %s224 = sand.u32 %s30, 1
          %s225 = smul.addr %s224, 64
          %s226 = scalar_lea.vmem [#allocation4], %s225
          %s228 = ssub.s32 1024, 1024
          %229 = vsyncadd %s223, %s228
          %s230 = smul.addr %s20, 8
          %s231 = smul.addr %s230, 128
          %s232 = scalar_lea.hbm %s0, %s231
          %s233 = sshll.u32 %s226, 4
          %s234 = int_to_ptr.vmem [resolvable:$true] %s233
          %239 = dma.hbm_to_vmem [thread:$0]  %s232, 1024, %s234, %s223, 128, 128, 8
        $region36: #{tpu_custom_call.1} parent=31 // pred_fallthru
          _
      $region32: #{tpu_custom_call.1} parent=5 // pred_fallthru
        _
      %p240 = scmp.le.s32.totalorder 1, %s20
      %p241 = scmp.lt.s32.totalorder %s20, 3
      %p242 = pnand %p240, %p241
      %p243 = pneg %p242
      // Predicated region
      $region37: #{tpu_custom_call.1} parent=5 // pred_check
        _
      $region38: #{tpu_custom_call.1} parent=5 // pred_check_branch
        %245 = sbr.rel (%p242) target = $region40
      $region39: #{tpu_custom_call.1} parent=5 // pred_region
        %s246 = ssub.s32 %s20, 1
        %s247 = sand.u32 %s33, 1
        %s248 = scalar_lea.sflag [#allocation5], %s247
        %s249 = sand.u32 %s33, 1
        %s250 = smul.addr %s249, 64
        %s251 = scalar_lea.vmem [#allocation4], %s250
        // Predicated region
        $region41: #{tpu_custom_call.1} parent=39 // pred_check
          %p252 = pneg %p46
        $region42: #{tpu_custom_call.1} parent=39 // pred_check_branch
          %254 = sbr.rel (%p252) target = $region44
        $region43: #{tpu_custom_call.1} parent=39 // pred_region
          %255 = dma.done %s248, 1024
        $region44: #{tpu_custom_call.1} parent=39 // pred_fallthru
          _
        // Predicated region
        $region45: #{tpu_custom_call.1} parent=39 // pred_check
          %p256 = pneg %p67
        $region46: #{tpu_custom_call.1} parent=39 // pred_check_branch
          %258 = sbr.rel (%p256) target = $region48
        $region47: #{tpu_custom_call.1} parent=39 // pred_region
          %259 = dma.done [#allocation7], 32
        $region48: #{tpu_custom_call.1} parent=39 // pred_fallthru
          _
        // Predicated region
        $region49: #{tpu_custom_call.1} parent=39 // pred_check
          %p260 = pneg %p88
        $region50: #{tpu_custom_call.1} parent=39 // pred_check_branch
          %262 = sbr.rel (%p260) target = $region52
        $region51: #{tpu_custom_call.1} parent=39 // pred_region
          %263 = dma.done [#allocation10], 16
        $region52: #{tpu_custom_call.1} parent=39 // pred_fallthru
          _
        // Predicated region
        $region53: #{tpu_custom_call.1} parent=39 // pred_check
          %p264 = pneg %p109
        $region54: #{tpu_custom_call.1} parent=39 // pred_check_branch
          %266 = sbr.rel (%p264) target = $region56
        $region55: #{tpu_custom_call.1} parent=39 // pred_region
          %267 = dma.done [#allocation10], 16
        $region56: #{tpu_custom_call.1} parent=39 // pred_fallthru
          _
        // Predicated region
        $region57: #{tpu_custom_call.1} parent=39 // pred_check
          %p268 = pneg %p130
        $region58: #{tpu_custom_call.1} parent=39 // pred_check_branch
          %270 = sbr.rel (%p268) target = $region60
        $region59: #{tpu_custom_call.1} parent=39 // pred_region
          %271 = dma.done [#allocation13], 16
        $region60: #{tpu_custom_call.1} parent=39 // pred_fallthru
          _
        %272 = sfence
        %s273 = sand.u32 %s33, 1
        %s274 = scalar_lea.sflag [#allocation5], %s273
        %s275 = sand.u32 %s33, 1
        %s276 = smul.addr %s275, 64
        %s277 = scalar_lea.vmem [#allocation4], %s276
        %p278 = pneg %p46
        %p279 = pneg %p43
        %p280 = pneg %p67
        %p281 = pneg %p64
        %p282 = pneg %p88
        %p283 = pneg %p85
        %p284 = pneg %p109
        %p285 = pneg %p106
        %p286 = pneg %p130
        %p287 = pneg %p127
        %p288 = pneg %p156
        %p289 = pneg %p153
        %s290 = sand.u32 %s143, 1
        %s291 = scalar_lea.sflag [#allocation6], %s290
        %s292 = sand.u32 %s143, 1
        %s293 = smul.addr %s292, 64
        %s294 = scalar_lea.vmem [#allocation14], %s293
        %vm295 = vcmask 138240
        %296 = vst.msk [vmem:[#allocation2] sm:$0xff] %vm295, 0.0
        %297 = vst.msk [vmem:[#allocation2 + $0x8] sm:$0xff] %vm295, 0.0
        %vm298 = vcmask 131072
        %299 = vst.msk [vmem:[#allocation2 + $0x10] sm:$0x1] %vm298, 0.0
        %300 = vst.msk [vmem:[#allocation2 + $0x18] sm:$0xff] %vm295, 0.0
        %301 = vst.msk [vmem:[#allocation2 + $0x20] sm:$0xff] %vm295, 0.0
        %302 = vst.msk [vmem:[#allocation2 + $0x28] sm:$0x1] %vm298, 0.0
        %303 = vst.msk [vmem:[#allocation2 + $0x30] sm:$0xff] %vm295, 0.0
        %304 = vst.msk [vmem:[#allocation2 + $0x38] sm:$0xff] %vm295, 0.0
        %305 = vst.msk [vmem:[#allocation2 + $0x40] sm:$0x1] %vm298, 0.0
        %306 = vst.msk [vmem:[#allocation2 + $0x48] sm:$0xff] %vm295, 0.0
        %307 = vst.msk [vmem:[#allocation2 + $0x50] sm:$0xff] %vm295, 0.0
        %308 = vst.msk [vmem:[#allocation2 + $0x58] sm:$0x1] %vm298, 0.0
        %v309 = vld [vmem:[%s251] sm:$0xff]
        %v310 = vld [vmem:[%s251 + $0x8] sm:$0xff]
        %vm311 = vcmask 130048
        %312 = vst.msk [vmem:[#allocation2] sm:$0xff] %vm311, %v309
        %313 = vst.msk [vmem:[#allocation2 + $0x8] sm:$0xff] %vm311, %v310
        %s314 = scalar_lea.vmem %s251, 16 [#allocation4]
        %v315 = vld [vmem:[%s314] sm:$0xff]
        %v316 = vld [vmem:[%s314 + $0x8] sm:$0xff]
        %s317 = scalar_lea.vmem [#allocation2], 24
        %318 = vst.msk [vmem:[%s317] sm:$0xff] %vm311, %v315
        %319 = vst.msk [vmem:[%s317 + $0x8] sm:$0xff] %vm311, %v316
        %s320 = scalar_lea.vmem %s251, 32 [#allocation4]
        %v321 = vld [vmem:[%s320] sm:$0xff]
        %v322 = vld [vmem:[%s320 + $0x8] sm:$0xff]
        %s323 = scalar_lea.vmem [#allocation2], 48
        %324 = vst.msk [vmem:[%s323] sm:$0xff] %vm311, %v321
        %325 = vst.msk [vmem:[%s323 + $0x8] sm:$0xff] %vm311, %v322
        %s326 = scalar_lea.vmem %s251, 48 [#allocation4]
        %v327 = vld [vmem:[%s326] sm:$0xff]
        %v328 = vld [vmem:[%s326 + $0x8] sm:$0xff]
        %s329 = scalar_lea.vmem [#allocation2], 72
        %330 = vst.msk [vmem:[%s329] sm:$0xff] %vm311, %v327
        %331 = vst.msk [vmem:[%s329 + $0x8] sm:$0xff] %vm311, %v328
        %vm332 = vcmask 146432
        %333 = vst.msk [vmem:[#allocation3] sm:$0xff] %vm332, 0.0
        %334 = vst.msk [vmem:[#allocation3 + $0x8] sm:$0xff] %vm332, 0.0
        %vm335 = vcmask 140288
        %336 = vst.msk [vmem:[#allocation3 + $0x10] sm:$0x3] %vm335, 0.0
        %337 = vst.msk [vmem:[#allocation3 + $0x18] sm:$0xff] %vm332, 0.0
        %338 = vst.msk [vmem:[#allocation3 + $0x20] sm:$0xff] %vm332, 0.0
        %339 = vst.msk [vmem:[#allocation3 + $0x28] sm:$0x3] %vm335, 0.0
        %340 = vst.msk [vmem:[#allocation3 + $0x30] sm:$0xff] %vm332, 0.0
        %341 = vst.msk [vmem:[#allocation3 + $0x38] sm:$0xff] %vm332, 0.0
        %342 = vst.msk [vmem:[#allocation3 + $0x40] sm:$0x3] %vm335, 0.0
        %343 = vst.msk [vmem:[#allocation3 + $0x48] sm:$0xff] %vm332, 0.0
        %344 = vst.msk [vmem:[#allocation3 + $0x50] sm:$0xff] %vm332, 0.0
        %345 = vst.msk [vmem:[#allocation3 + $0x58] sm:$0x3] %vm335, 0.0
        %346 = vst.msk [vmem:[#allocation3 + $0x60] sm:$0xff] %vm332, 0.0
        %347 = vst.msk [vmem:[#allocation3 + $0x68] sm:$0xff] %vm332, 0.0
        %348 = vst.msk [vmem:[#allocation3 + $0x70] sm:$0x3] %vm335, 0.0
        %349 = vst.msk [vmem:[#allocation3 + $0x78] sm:$0xff] %vm332, 0.0
        %350 = vst.msk [vmem:[#allocation3 + $0x80] sm:$0xff] %vm332, 0.0
        %351 = vst.msk [vmem:[#allocation3 + $0x88] sm:$0x3] %vm335, 0.0
        %352 = vst.msk [vmem:[#allocation3 + $0x90] sm:$0xff] %vm332, 0.0
        %353 = vst.msk [vmem:[#allocation3 + $0x98] sm:$0xff] %vm332, 0.0
        %354 = vst.msk [vmem:[#allocation3 + $0xa0] sm:$0x3] %vm335, 0.0
        %355 = vst.msk [vmem:[#allocation3 + $0xa8] sm:$0xff] %vm332, 0.0
        %356 = vst.msk [vmem:[#allocation3 + $0xb0] sm:$0xff] %vm332, 0.0
        %357 = vst.msk [vmem:[#allocation3 + $0xb8] sm:$0x3] %vm335, 0.0
        %358 = vst.msk [vmem:[#allocation3 + $0xc0] sm:$0xff] %vm332, 0.0
        %359 = vst.msk [vmem:[#allocation3 + $0xc8] sm:$0xff] %vm332, 0.0
        %360 = vst.msk [vmem:[#allocation3 + $0xd0] sm:$0x3] %vm335, 0.0
        %361 = vst.msk [vmem:[#allocation3 + $0xd8] sm:$0xff] %vm332, 0.0
        %362 = vst.msk [vmem:[#allocation3 + $0xe0] sm:$0xff] %vm332, 0.0
        %363 = vst.msk [vmem:[#allocation3 + $0xe8] sm:$0x3] %vm335, 0.0
        %364 = vst.msk [vmem:[#allocation3 + $0xf0] sm:$0xff] %vm332, 0.0
        %365 = vst.msk [vmem:[#allocation3 + $0xf8] sm:$0xff] %vm332, 0.0
        %366 = vst.msk [vmem:[#allocation3 + $0x100] sm:$0x3] %vm335, 0.0
        %367 = vst.msk [vmem:[#allocation3 + $0x108] sm:$0xff] %vm332, 0.0
        %368 = vst.msk [vmem:[#allocation3 + $0x110] sm:$0xff] %vm332, 0.0
        %369 = vst.msk [vmem:[#allocation3 + $0x118] sm:$0x3] %vm335, 0.0
        %370 = vst.msk [vmem:[#allocation3 + $0x120] sm:$0xff] %vm332, 0.0
        %371 = vst.msk [vmem:[#allocation3 + $0x128] sm:$0xff] %vm332, 0.0
        %372 = vst.msk [vmem:[#allocation3 + $0x130] sm:$0x3] %vm335, 0.0
        %373 = vst.msk [vmem:[#allocation3 + $0x138] sm:$0xff] %vm332, 0.0
        %374 = vst.msk [vmem:[#allocation3 + $0x140] sm:$0xff] %vm332, 0.0
        %375 = vst.msk [vmem:[#allocation3 + $0x148] sm:$0x3] %vm335, 0.0
        %376 = vst.msk [vmem:[#allocation3 + $0x150] sm:$0xff] %vm332, 0.0
        %377 = vst.msk [vmem:[#allocation3 + $0x158] sm:$0xff] %vm332, 0.0
        %378 = vst.msk [vmem:[#allocation3 + $0x160] sm:$0x3] %vm335, 0.0
        %379 = vst.msk [vmem:[#allocation3 + $0x168] sm:$0xff] %vm332, 0.0
        %380 = vst.msk [vmem:[#allocation3 + $0x170] sm:$0xff] %vm332, 0.0
        %381 = vst.msk [vmem:[#allocation3 + $0x178] sm:$0x3] %vm335, 0.0
        %s382 = sld [smem:[#allocation9]]
        %v383 = vstv %s382
        %v384 = vadd.f32 %v383, 0.0
        %s385 = sld [smem:[#allocation9 + $0x1]]
        %v386 = vstv %s385
        %v387 = vadd.f32 %v386, 0.0
        %s388 = sld [smem:[#allocation9 + $0x2]]
        %v389 = vstv %s388
        %v390 = vadd.f32 %v389, 0.0
        %s391 = sld [smem:[#allocation9 + $0x3]]
        %v392 = vstv %s391
        %v393 = vadd.f32 %v392, 0.0
        %s394 = sld [smem:[#allocation12]]
        %v395 = vstv %s394
        %v396 = vadd.f32 %v395, 0.0
        %s397 = sld [smem:[#allocation12 + $0x1]]
        %v398 = vstv %s397
        %v399 = vadd.f32 %v398, 0.0
        %v400 = vld [vmem:[#allocation2] sm:$0xff]
        %v401 = vld [vmem:[#allocation2 + $0x8] sm:$0xff]
        %v402 = vld [vmem:[#allocation2 + $0x1] sm:$0xff]
        %v403 = vld [vmem:[#allocation2 + $0x9] sm:$0xff]
        %s404 = sld [smem:[#allocation8 + $0x4]]
        %v405 = vstv %s404
        %v406 = vmul.f32 %v405, %v400
        %v407 = vmul.f32 %v405, %v401
        %v408 = vadd.f32 %v384, %v406
        %v409 = vadd.f32 %v384, %v407
        %s410 = sld [smem:[#allocation8 + $0xd]]
        %v411 = vstv %s410
        %v412 = vmul.f32 %v411, %v400
        %v413 = vmul.f32 %v411, %v401
        %v414 = vadd.f32 %v387, %v412
        %v415 = vadd.f32 %v387, %v413
        %s416 = sld [smem:[#allocation8 + $0x16]]
        %v417 = vstv %s416
        %v418 = vmul.f32 %v417, %v400
        %v419 = vmul.f32 %v417, %v401
        %v420 = vadd.f32 %v390, %v418
        %v421 = vadd.f32 %v390, %v419
        %s422 = sld [smem:[#allocation8 + $0x1f]]
        %v423 = vstv %s422
        %v424 = vmul.f32 %v423, %v400
        %v425 = vmul.f32 %v423, %v401
        %v426 = vadd.f32 %v393, %v424
        %v427 = vadd.f32 %v393, %v425
        %s428 = sld [smem:[#allocation8 + $0x3]]
        %v429 = vstv %s428
        %v430 = vmul.f32 %v429, %v400
        %v431 = vmul.f32 %v429, %v401
        %v432 = vadd.f32 %v384, %v430
        %v433 = vadd.f32 %v384, %v431
        %s434 = sld [smem:[#allocation8 + $0xc]]
        %v435 = vstv %s434
        %v436 = vmul.f32 %v435, %v400
        %v437 = vmul.f32 %v435, %v401
        %v438 = vadd.f32 %v387, %v436
        %v439 = vadd.f32 %v387, %v437
        %s440 = sld [smem:[#allocation8 + $0x15]]
        %v441 = vstv %s440
        %v442 = vmul.f32 %v441, %v400
        %v443 = vmul.f32 %v441, %v401
        %v444 = vadd.f32 %v390, %v442
        %v445 = vadd.f32 %v390, %v443
        %s446 = sld [smem:[#allocation8 + $0x1e]]
        %v447 = vstv %s446
        %v448 = vmul.f32 %v447, %v400
        %v449 = vmul.f32 %v447, %v401
        %v450 = vadd.f32 %v393, %v448
        %v451 = vadd.f32 %v393, %v449
        %s452 = sld [smem:[#allocation8 + $0x5]]
        %v453 = vstv %s452
        %v454 = vmul.f32 %v453, %v400
        %v455 = vmul.f32 %v453, %v401
        %458 = vrot.lane.b32.xlu0 %v454, 1
        %v459 = vpop.permute.xlu0 %458
        %460 = vrot.lane.b32.xlu0 %v455, 1
        %v461 = vpop.permute.xlu0 %460
        %v464 = vadd.f32 %v432, %v459
        %v465 = vadd.f32 %v433, %v461
        %s466 = sld [smem:[#allocation8 + $0xe]]
        %v467 = vstv %s466
        %v468 = vmul.f32 %v467, %v400
        %v469 = vmul.f32 %v467, %v401
        %472 = vrot.lane.b32.xlu0 %v468, 1
        %v473 = vpop.permute.xlu0 %472
        %474 = vrot.lane.b32.xlu0 %v469, 1
        %v475 = vpop.permute.xlu0 %474
        %v478 = vadd.f32 %v438, %v473
        %v479 = vadd.f32 %v439, %v475
        %s480 = sld [smem:[#allocation8 + $0x17]]
        %v481 = vstv %s480
        %v482 = vmul.f32 %v481, %v400
        %v483 = vmul.f32 %v481, %v401
        %486 = vrot.lane.b32.xlu0 %v482, 1
        %v487 = vpop.permute.xlu0 %486
        %488 = vrot.lane.b32.xlu0 %v483, 1
        %v489 = vpop.permute.xlu0 %488
        %v492 = vadd.f32 %v444, %v487
        %v493 = vadd.f32 %v445, %v489
        %s494 = sld [smem:[#allocation8 + $0x20]]
        %v495 = vstv %s494
        %v496 = vmul.f32 %v495, %v400
        %v497 = vmul.f32 %v495, %v401
        %500 = vrot.lane.b32.xlu0 %v496, 1
        %v501 = vpop.permute.xlu0 %500
        %502 = vrot.lane.b32.xlu0 %v497, 1
        %v503 = vpop.permute.xlu0 %502
        %v506 = vadd.f32 %v450, %v501
        %v507 = vadd.f32 %v451, %v503
        %s508 = sld [smem:[#allocation8 + $0x1]]
        %v509 = vstv %s508
        %v510 = vmul.f32 %v509, %v402
        %v511 = vmul.f32 %v509, %v403
        %v512 = vadd.f32 %v384, %v510
        %v513 = vadd.f32 %v384, %v511
        %s514 = sld [smem:[#allocation8 + $0xa]]
        %v515 = vstv %s514
        %v516 = vmul.f32 %v515, %v402
        %v517 = vmul.f32 %v515, %v403
        %v518 = vadd.f32 %v387, %v516
        %v519 = vadd.f32 %v387, %v517
        %s520 = sld [smem:[#allocation8 + $0x13]]
        %v521 = vstv %s520
        %v522 = vmul.f32 %v521, %v402
        %v523 = vmul.f32 %v521, %v403
        %v524 = vadd.f32 %v390, %v522
        %v525 = vadd.f32 %v390, %v523
        %s526 = sld [smem:[#allocation8 + $0x1c]]
        %v527 = vstv %s526
        %v528 = vmul.f32 %v527, %v402
        %v529 = vmul.f32 %v527, %v403
        %v530 = vadd.f32 %v393, %v528
        %v531 = vadd.f32 %v393, %v529
        %s532 = sld [smem:[#allocation8]]
        %v533 = vstv %s532
        %v534 = vmul.f32 %v533, %v402
        %v535 = vmul.f32 %v533, %v403
        %v536 = vadd.f32 %v384, %v534
        %v537 = vadd.f32 %v384, %v535
        %s538 = sld [smem:[#allocation8 + $0x9]]
        %v539 = vstv %s538
        %v540 = vmul.f32 %v539, %v402
        %v541 = vmul.f32 %v539, %v403
        %v542 = vadd.f32 %v387, %v540
        %v543 = vadd.f32 %v387, %v541
        %s544 = sld [smem:[#allocation8 + $0x12]]
        %v545 = vstv %s544
        %v546 = vmul.f32 %v545, %v402
        %v547 = vmul.f32 %v545, %v403
        %v548 = vadd.f32 %v390, %v546
        %v549 = vadd.f32 %v390, %v547
        %s550 = sld [smem:[#allocation8 + $0x1b]]
        %v551 = vstv %s550
        %v552 = vmul.f32 %v551, %v402
        %v553 = vmul.f32 %v551, %v403
        %v554 = vadd.f32 %v393, %v552
        %v555 = vadd.f32 %v393, %v553
        %s556 = sld [smem:[#allocation8 + $0x2]]
        %v557 = vstv %s556
        %v558 = vmul.f32 %v557, %v402
        %v559 = vmul.f32 %v557, %v403
        %562 = vrot.lane.b32.xlu0 %v558, 1
        %v563 = vpop.permute.xlu0 %562
        %564 = vrot.lane.b32.xlu0 %v559, 1
        %v565 = vpop.permute.xlu0 %564
        %v568 = vadd.f32 %v536, %v563
        %v569 = vadd.f32 %v537, %v565
        %s570 = sld [smem:[#allocation8 + $0xb]]
        %v571 = vstv %s570
        %v572 = vmul.f32 %v571, %v402
        %v573 = vmul.f32 %v571, %v403
        %576 = vrot.lane.b32.xlu0 %v572, 1
        %v577 = vpop.permute.xlu0 %576
        %578 = vrot.lane.b32.xlu0 %v573, 1
        %v579 = vpop.permute.xlu0 %578
        %v582 = vadd.f32 %v542, %v577
        %v583 = vadd.f32 %v543, %v579
        %s584 = sld [smem:[#allocation8 + $0x14]]
        %v585 = vstv %s584
        %v586 = vmul.f32 %v585, %v402
        %v587 = vmul.f32 %v585, %v403
        %590 = vrot.lane.b32.xlu0 %v586, 1
        %v591 = vpop.permute.xlu0 %590
        %592 = vrot.lane.b32.xlu0 %v587, 1
        %v593 = vpop.permute.xlu0 %592
        %v596 = vadd.f32 %v548, %v591
        %v597 = vadd.f32 %v549, %v593
        %s598 = sld [smem:[#allocation8 + $0x1d]]
        %v599 = vstv %s598
        %v600 = vmul.f32 %v599, %v402
        %v601 = vmul.f32 %v599, %v403
        %604 = vrot.lane.b32.xlu0 %v600, 1
        %v605 = vpop.permute.xlu0 %604
        %606 = vrot.lane.b32.xlu0 %v601, 1
        %v607 = vpop.permute.xlu0 %606
        %v610 = vadd.f32 %v554, %v605
        %v611 = vadd.f32 %v555, %v607
        %s612 = sld [smem:[#allocation8 + $0x7]]
        %v613 = vstv %s612
        %v614 = vmul.f32 %v613, %v400
        %v615 = vmul.f32 %v613, %v401
        %v616 = vadd.f32 %v512, %v614
        %v617 = vadd.f32 %v513, %v615
        %s618 = sld [smem:[#allocation8 + $0x10]]
        %v619 = vstv %s618
        %v620 = vmul.f32 %v619, %v400
        %v621 = vmul.f32 %v619, %v401
        %v622 = vadd.f32 %v518, %v620
        %v623 = vadd.f32 %v519, %v621
        %s624 = sld [smem:[#allocation8 + $0x19]]
        %v625 = vstv %s624
        %v626 = vmul.f32 %v625, %v400
        %v627 = vmul.f32 %v625, %v401
        %v628 = vadd.f32 %v524, %v626
        %v629 = vadd.f32 %v525, %v627
        %s630 = sld [smem:[#allocation8 + $0x22]]
        %v631 = vstv %s630
        %v632 = vmul.f32 %v631, %v400
        %v633 = vmul.f32 %v631, %v401
        %v634 = vadd.f32 %v530, %v632
        %v635 = vadd.f32 %v531, %v633
        %s636 = sld [smem:[#allocation8 + $0x6]]
        %v637 = vstv %s636
        %v638 = vmul.f32 %v637, %v400
        %v639 = vmul.f32 %v637, %v401
        %v640 = vadd.f32 %v568, %v638
        %v641 = vadd.f32 %v569, %v639
        %s642 = sld [smem:[#allocation8 + $0xf]]
        %v643 = vstv %s642
        %v644 = vmul.f32 %v643, %v400
        %v645 = vmul.f32 %v643, %v401
        %v646 = vadd.f32 %v582, %v644
        %v647 = vadd.f32 %v583, %v645
        %s648 = sld [smem:[#allocation8 + $0x18]]
        %v649 = vstv %s648
        %v650 = vmul.f32 %v649, %v400
        %v651 = vmul.f32 %v649, %v401
        %v652 = vadd.f32 %v596, %v650
        %v653 = vadd.f32 %v597, %v651
        %s654 = sld [smem:[#allocation8 + $0x21]]
        %v655 = vstv %s654
        %v656 = vmul.f32 %v655, %v400
        %v657 = vmul.f32 %v655, %v401
        %v658 = vadd.f32 %v610, %v656
        %v659 = vadd.f32 %v611, %v657
        %s660 = sld [smem:[#allocation8 + $0x8]]
        %v661 = vstv %s660
        %v662 = vmul.f32 %v661, %v400
        %v663 = vmul.f32 %v661, %v401
        %666 = vrot.lane.b32.xlu0 %v662, 1
        %v667 = vpop.permute.xlu0 %666
        %668 = vrot.lane.b32.xlu0 %v663, 1
        %v669 = vpop.permute.xlu0 %668
        %v672 = vadd.f32 %v640, %v667
        %v673 = vadd.f32 %v641, %v669
        %s674 = sld [smem:[#allocation8 + $0x11]]
        %v675 = vstv %s674
        %v676 = vmul.f32 %v675, %v400
        %v677 = vmul.f32 %v675, %v401
        %680 = vrot.lane.b32.xlu0 %v676, 1
        %v681 = vpop.permute.xlu0 %680
        %682 = vrot.lane.b32.xlu0 %v677, 1
        %v683 = vpop.permute.xlu0 %682
        %v686 = vadd.f32 %v646, %v681
        %v687 = vadd.f32 %v647, %v683
        %s688 = sld [smem:[#allocation8 + $0x1a]]
        %v689 = vstv %s688
        %v690 = vmul.f32 %v689, %v400
        %v691 = vmul.f32 %v689, %v401
        %694 = vrot.lane.b32.xlu0 %v690, 1
        %v695 = vpop.permute.xlu0 %694
        %696 = vrot.lane.b32.xlu0 %v691, 1
        %v697 = vpop.permute.xlu0 %696
        %v700 = vadd.f32 %v652, %v695
        %v701 = vadd.f32 %v653, %v697
        %s702 = sld [smem:[#allocation8 + $0x23]]
        %v703 = vstv %s702
        %v704 = vmul.f32 %v703, %v400
        %v705 = vmul.f32 %v703, %v401
        %708 = vrot.lane.b32.xlu0 %v704, 1
        %v709 = vpop.permute.xlu0 %708
        %710 = vrot.lane.b32.xlu0 %v705, 1
        %v711 = vpop.permute.xlu0 %710
        %v714 = vadd.f32 %v658, %v709
        %v715 = vadd.f32 %v659, %v711
        %v716 = vld [vmem:[%s317] sm:$0xff]
        %v717 = vld [vmem:[%s317 + $0x8] sm:$0xff]
        %v718 = vld [vmem:[%s317 + $0x1] sm:$0xff]
        %v719 = vld [vmem:[%s317 + $0x9] sm:$0xff]
        %s720 = sld [smem:[#allocation8 + $0x28]]
        %v721 = vstv %s720
        %v722 = vmul.f32 %v721, %v716
        %v723 = vmul.f32 %v721, %v717
        %v724 = vadd.f32 %v408, %v722
        %v725 = vadd.f32 %v409, %v723
        %s726 = sld [smem:[#allocation8 + $0x31]]
        %v727 = vstv %s726
        %v728 = vmul.f32 %v727, %v716
        %v729 = vmul.f32 %v727, %v717
        %v730 = vadd.f32 %v414, %v728
        %v731 = vadd.f32 %v415, %v729
        %s732 = sld [smem:[#allocation8 + $0x3a]]
        %v733 = vstv %s732
        %v734 = vmul.f32 %v733, %v716
        %v735 = vmul.f32 %v733, %v717
        %v736 = vadd.f32 %v420, %v734
        %v737 = vadd.f32 %v421, %v735
        %s738 = sld [smem:[#allocation8 + $0x43]]
        %v739 = vstv %s738
        %v740 = vmul.f32 %v739, %v716
        %v741 = vmul.f32 %v739, %v717
        %v742 = vadd.f32 %v426, %v740
        %v743 = vadd.f32 %v427, %v741
        %s744 = sld [smem:[#allocation8 + $0x27]]
        %v745 = vstv %s744
        %v746 = vmul.f32 %v745, %v716
        %v747 = vmul.f32 %v745, %v717
        %v748 = vadd.f32 %v464, %v746
        %v749 = vadd.f32 %v465, %v747
        %s750 = sld [smem:[#allocation8 + $0x30]]
        %v751 = vstv %s750
        %v752 = vmul.f32 %v751, %v716
        %v753 = vmul.f32 %v751, %v717
        %v754 = vadd.f32 %v478, %v752
        %v755 = vadd.f32 %v479, %v753
        %s756 = sld [smem:[#allocation8 + $0x39]]
        %v757 = vstv %s756
        %v758 = vmul.f32 %v757, %v716
        %v759 = vmul.f32 %v757, %v717
        %v760 = vadd.f32 %v492, %v758
        %v761 = vadd.f32 %v493, %v759
        %s762 = sld [smem:[#allocation8 + $0x42]]
        %v763 = vstv %s762
        %v764 = vmul.f32 %v763, %v716
        %v765 = vmul.f32 %v763, %v717
        %v766 = vadd.f32 %v506, %v764
        %v767 = vadd.f32 %v507, %v765
        %s768 = sld [smem:[#allocation8 + $0x29]]
        %v769 = vstv %s768
        %v770 = vmul.f32 %v769, %v716
        %v771 = vmul.f32 %v769, %v717
        %774 = vrot.lane.b32.xlu0 %v770, 1
        %v775 = vpop.permute.xlu0 %774
        %776 = vrot.lane.b32.xlu0 %v771, 1
        %v777 = vpop.permute.xlu0 %776
        %v780 = vadd.f32 %v748, %v775
        %v781 = vadd.f32 %v749, %v777
        %s782 = sld [smem:[#allocation8 + $0x32]]
        %v783 = vstv %s782
        %v784 = vmul.f32 %v783, %v716
        %v785 = vmul.f32 %v783, %v717
        %788 = vrot.lane.b32.xlu0 %v784, 1
        %v789 = vpop.permute.xlu0 %788
        %790 = vrot.lane.b32.xlu0 %v785, 1
        %v791 = vpop.permute.xlu0 %790
        %v794 = vadd.f32 %v754, %v789
        %v795 = vadd.f32 %v755, %v791
        %s796 = sld [smem:[#allocation8 + $0x3b]]
        %v797 = vstv %s796
        %v798 = vmul.f32 %v797, %v716
        %v799 = vmul.f32 %v797, %v717
        %802 = vrot.lane.b32.xlu0 %v798, 1
        %v803 = vpop.permute.xlu0 %802
        %804 = vrot.lane.b32.xlu0 %v799, 1
        %v805 = vpop.permute.xlu0 %804
        %v808 = vadd.f32 %v760, %v803
        %v809 = vadd.f32 %v761, %v805
        %s810 = sld [smem:[#allocation8 + $0x44]]
        %v811 = vstv %s810
        %v812 = vmul.f32 %v811, %v716
        %v813 = vmul.f32 %v811, %v717
        %816 = vrot.lane.b32.xlu0 %v812, 1
        %v817 = vpop.permute.xlu0 %816
        %818 = vrot.lane.b32.xlu0 %v813, 1
        %v819 = vpop.permute.xlu0 %818
        %v822 = vadd.f32 %v766, %v817
        %v823 = vadd.f32 %v767, %v819
        %s824 = sld [smem:[#allocation8 + $0x25]]
        %v825 = vstv %s824
        %v826 = vmul.f32 %v825, %v718
        %v827 = vmul.f32 %v825, %v719
        %v828 = vadd.f32 %v616, %v826
        %v829 = vadd.f32 %v617, %v827
        %s830 = sld [smem:[#allocation8 + $0x2e]]
        %v831 = vstv %s830
        %v832 = vmul.f32 %v831, %v718
        %v833 = vmul.f32 %v831, %v719
        %v834 = vadd.f32 %v622, %v832
        %v835 = vadd.f32 %v623, %v833
        %s836 = sld [smem:[#allocation8 + $0x37]]
        %v837 = vstv %s836
        %v838 = vmul.f32 %v837, %v718
        %v839 = vmul.f32 %v837, %v719
        %v840 = vadd.f32 %v628, %v838
        %v841 = vadd.f32 %v629, %v839
        %s842 = sld [smem:[#allocation8 + $0x40]]
        %v843 = vstv %s842
        %v844 = vmul.f32 %v843, %v718
        %v845 = vmul.f32 %v843, %v719
        %v846 = vadd.f32 %v634, %v844
        %v847 = vadd.f32 %v635, %v845
        %s848 = sld [smem:[#allocation8 + $0x24]]
        %v849 = vstv %s848
        %v850 = vmul.f32 %v849, %v718
        %v851 = vmul.f32 %v849, %v719
        %v852 = vadd.f32 %v672, %v850
        %v853 = vadd.f32 %v673, %v851
        %s854 = sld [smem:[#allocation8 + $0x2d]]
        %v855 = vstv %s854
        %v856 = vmul.f32 %v855, %v718
        %v857 = vmul.f32 %v855, %v719
        %v858 = vadd.f32 %v686, %v856
        %v859 = vadd.f32 %v687, %v857
        %s860 = sld [smem:[#allocation8 + $0x36]]
        %v861 = vstv %s860
        %v862 = vmul.f32 %v861, %v718
        %v863 = vmul.f32 %v861, %v719
        %v864 = vadd.f32 %v700, %v862
        %v865 = vadd.f32 %v701, %v863
        %s866 = sld [smem:[#allocation8 + $0x3f]]
        %v867 = vstv %s866
        %v868 = vmul.f32 %v867, %v718
        %v869 = vmul.f32 %v867, %v719
        %v870 = vadd.f32 %v714, %v868
        %v871 = vadd.f32 %v715, %v869
        %s872 = sld [smem:[#allocation8 + $0x26]]
        %v873 = vstv %s872
        %v874 = vmul.f32 %v873, %v718
        %v875 = vmul.f32 %v873, %v719
        %878 = vrot.lane.b32.xlu0 %v874, 1
        %v879 = vpop.permute.xlu0 %878
        %880 = vrot.lane.b32.xlu0 %v875, 1
        %v881 = vpop.permute.xlu0 %880
        %v884 = vadd.f32 %v852, %v879
        %v885 = vadd.f32 %v853, %v881
        %s886 = sld [smem:[#allocation8 + $0x2f]]
        %v887 = vstv %s886
        %v888 = vmul.f32 %v887, %v718
        %v889 = vmul.f32 %v887, %v719
        %892 = vrot.lane.b32.xlu0 %v888, 1
        %v893 = vpop.permute.xlu0 %892
        %894 = vrot.lane.b32.xlu0 %v889, 1
        %v895 = vpop.permute.xlu0 %894
        %v898 = vadd.f32 %v858, %v893
        %v899 = vadd.f32 %v859, %v895
        %s900 = sld [smem:[#allocation8 + $0x38]]
        %v901 = vstv %s900
        %v902 = vmul.f32 %v901, %v718
        %v903 = vmul.f32 %v901, %v719
        %906 = vrot.lane.b32.xlu0 %v902, 1
        %v907 = vpop.permute.xlu0 %906
        %908 = vrot.lane.b32.xlu0 %v903, 1
        %v909 = vpop.permute.xlu0 %908
        %v912 = vadd.f32 %v864, %v907
        %v913 = vadd.f32 %v865, %v909
        %s914 = sld [smem:[#allocation8 + $0x41]]
        %v915 = vstv %s914
        %v916 = vmul.f32 %v915, %v718
        %v917 = vmul.f32 %v915, %v719
        %920 = vrot.lane.b32.xlu0 %v916, 1
        %v921 = vpop.permute.xlu0 %920
        %922 = vrot.lane.b32.xlu0 %v917, 1
        %v923 = vpop.permute.xlu0 %922
        %v926 = vadd.f32 %v870, %v921
        %v927 = vadd.f32 %v871, %v923
        %s928 = sld [smem:[#allocation8 + $0x2b]]
        %v929 = vstv %s928
        %v930 = vmul.f32 %v929, %v716
        %v931 = vmul.f32 %v929, %v717
        %v932 = vadd.f32 %v828, %v930
        %v933 = vadd.f32 %v829, %v931
        %s934 = sld [smem:[#allocation8 + $0x34]]
        %v935 = vstv %s934
        %v936 = vmul.f32 %v935, %v716
        %v937 = vmul.f32 %v935, %v717
        %v938 = vadd.f32 %v834, %v936
        %v939 = vadd.f32 %v835, %v937
        %s940 = sld [smem:[#allocation8 + $0x3d]]
        %v941 = vstv %s940
        %v942 = vmul.f32 %v941, %v716
        %v943 = vmul.f32 %v941, %v717
        %v944 = vadd.f32 %v840, %v942
        %v945 = vadd.f32 %v841, %v943
        %s946 = sld [smem:[#allocation8 + $0x46]]
        %v947 = vstv %s946
        %v948 = vmul.f32 %v947, %v716
        %v949 = vmul.f32 %v947, %v717
        %v950 = vadd.f32 %v846, %v948
        %v951 = vadd.f32 %v847, %v949
        %s952 = sld [smem:[#allocation8 + $0x2a]]
        %v953 = vstv %s952
        %v954 = vmul.f32 %v953, %v716
        %v955 = vmul.f32 %v953, %v717
        %v956 = vadd.f32 %v884, %v954
        %v957 = vadd.f32 %v885, %v955
        %s958 = sld [smem:[#allocation8 + $0x33]]
        %v959 = vstv %s958
        %v960 = vmul.f32 %v959, %v716
        %v961 = vmul.f32 %v959, %v717
        %v962 = vadd.f32 %v898, %v960
        %v963 = vadd.f32 %v899, %v961
        %s964 = sld [smem:[#allocation8 + $0x3c]]
        %v965 = vstv %s964
        %v966 = vmul.f32 %v965, %v716
        %v967 = vmul.f32 %v965, %v717
        %v968 = vadd.f32 %v912, %v966
        %v969 = vadd.f32 %v913, %v967
        %s970 = sld [smem:[#allocation8 + $0x45]]
        %v971 = vstv %s970
        %v972 = vmul.f32 %v971, %v716
        %v973 = vmul.f32 %v971, %v717
        %v974 = vadd.f32 %v926, %v972
        %v975 = vadd.f32 %v927, %v973
        %s976 = sld [smem:[#allocation8 + $0x2c]]
        %v977 = vstv %s976
        %v978 = vmul.f32 %v977, %v716
        %v979 = vmul.f32 %v977, %v717
        %982 = vrot.lane.b32.xlu0 %v978, 1
        %v983 = vpop.permute.xlu0 %982
        %984 = vrot.lane.b32.xlu0 %v979, 1
        %v985 = vpop.permute.xlu0 %984
        %v988 = vadd.f32 %v956, %v983
        %v989 = vadd.f32 %v957, %v985
        %s990 = sld [smem:[#allocation8 + $0x35]]
        %v991 = vstv %s990
        %v992 = vmul.f32 %v991, %v716
        %v993 = vmul.f32 %v991, %v717
        %996 = vrot.lane.b32.xlu0 %v992, 1
        %v997 = vpop.permute.xlu0 %996
        %998 = vrot.lane.b32.xlu0 %v993, 1
        %v999 = vpop.permute.xlu0 %998
        %v1002 = vadd.f32 %v962, %v997
        %v1003 = vadd.f32 %v963, %v999
        %s1004 = sld [smem:[#allocation8 + $0x3e]]
        %v1005 = vstv %s1004
        %v1006 = vmul.f32 %v1005, %v716
        %v1007 = vmul.f32 %v1005, %v717
        %1010 = vrot.lane.b32.xlu0 %v1006, 1
        %v1011 = vpop.permute.xlu0 %1010
        %1012 = vrot.lane.b32.xlu0 %v1007, 1
        %v1013 = vpop.permute.xlu0 %1012
        %v1016 = vadd.f32 %v968, %v1011
        %v1017 = vadd.f32 %v969, %v1013
        %s1018 = sld [smem:[#allocation8 + $0x47]]
        %v1019 = vstv %s1018
        %v1020 = vmul.f32 %v1019, %v716
        %v1021 = vmul.f32 %v1019, %v717
        %1024 = vrot.lane.b32.xlu0 %v1020, 1
        %v1025 = vpop.permute.xlu0 %1024
        %1026 = vrot.lane.b32.xlu0 %v1021, 1
        %v1027 = vpop.permute.xlu0 %1026
        %v1030 = vadd.f32 %v974, %v1025
        %v1031 = vadd.f32 %v975, %v1027
        %v1032 = vld [vmem:[%s323] sm:$0xff]
        %v1033 = vld [vmem:[%s323 + $0x8] sm:$0xff]
        %v1034 = vld [vmem:[%s323 + $0x1] sm:$0xff]
        %v1035 = vld [vmem:[%s323 + $0x9] sm:$0xff]
        %s1036 = sld [smem:[#allocation8 + $0x4c]]
        %v1037 = vstv %s1036
        %v1038 = vmul.f32 %v1037, %v1032
        %v1039 = vmul.f32 %v1037, %v1033
        %v1040 = vadd.f32 %v724, %v1038
        %v1041 = vadd.f32 %v725, %v1039
        %s1042 = sld [smem:[#allocation8 + $0x55]]
        %v1043 = vstv %s1042
        %v1044 = vmul.f32 %v1043, %v1032
        %v1045 = vmul.f32 %v1043, %v1033
        %v1046 = vadd.f32 %v730, %v1044
        %v1047 = vadd.f32 %v731, %v1045
        %s1048 = sld [smem:[#allocation8 + $0x5e]]
        %v1049 = vstv %s1048
        %v1050 = vmul.f32 %v1049, %v1032
        %v1051 = vmul.f32 %v1049, %v1033
        %v1052 = vadd.f32 %v736, %v1050
        %v1053 = vadd.f32 %v737, %v1051
        %s1054 = sld [smem:[#allocation8 + $0x67]]
        %v1055 = vstv %s1054
        %v1056 = vmul.f32 %v1055, %v1032
        %v1057 = vmul.f32 %v1055, %v1033
        %v1058 = vadd.f32 %v742, %v1056
        %v1059 = vadd.f32 %v743, %v1057
        %s1060 = sld [smem:[#allocation8 + $0x4b]]
        %v1061 = vstv %s1060
        %v1062 = vmul.f32 %v1061, %v1032
        %v1063 = vmul.f32 %v1061, %v1033
        %v1064 = vadd.f32 %v780, %v1062
        %v1065 = vadd.f32 %v781, %v1063
        %s1066 = sld [smem:[#allocation8 + $0x54]]
        %v1067 = vstv %s1066
        %v1068 = vmul.f32 %v1067, %v1032
        %v1069 = vmul.f32 %v1067, %v1033
        %v1070 = vadd.f32 %v794, %v1068
        %v1071 = vadd.f32 %v795, %v1069
        %s1072 = sld [smem:[#allocation8 + $0x5d]]
        %v1073 = vstv %s1072
        %v1074 = vmul.f32 %v1073, %v1032
        %v1075 = vmul.f32 %v1073, %v1033
        %v1076 = vadd.f32 %v808, %v1074
        %v1077 = vadd.f32 %v809, %v1075
        %s1078 = sld [smem:[#allocation8 + $0x66]]
        %v1079 = vstv %s1078
        %v1080 = vmul.f32 %v1079, %v1032
        %v1081 = vmul.f32 %v1079, %v1033
        %v1082 = vadd.f32 %v822, %v1080
        %v1083 = vadd.f32 %v823, %v1081
        %s1084 = sld [smem:[#allocation8 + $0x4d]]
        %v1085 = vstv %s1084
        %v1086 = vmul.f32 %v1085, %v1032
        %v1087 = vmul.f32 %v1085, %v1033
        %1090 = vrot.lane.b32.xlu0 %v1086, 1
        %v1091 = vpop.permute.xlu0 %1090
        %1092 = vrot.lane.b32.xlu0 %v1087, 1
        %v1093 = vpop.permute.xlu0 %1092
        %v1096 = vadd.f32 %v1064, %v1091
        %v1097 = vadd.f32 %v1065, %v1093
        %s1098 = sld [smem:[#allocation8 + $0x56]]
        %v1099 = vstv %s1098
        %v1100 = vmul.f32 %v1099, %v1032
        %v1101 = vmul.f32 %v1099, %v1033
        %1104 = vrot.lane.b32.xlu0 %v1100, 1
        %v1105 = vpop.permute.xlu0 %1104
        %1106 = vrot.lane.b32.xlu0 %v1101, 1
        %v1107 = vpop.permute.xlu0 %1106
        %v1110 = vadd.f32 %v1070, %v1105
        %v1111 = vadd.f32 %v1071, %v1107
        %s1112 = sld [smem:[#allocation8 + $0x5f]]
        %v1113 = vstv %s1112
        %v1114 = vmul.f32 %v1113, %v1032
        %v1115 = vmul.f32 %v1113, %v1033
        %1118 = vrot.lane.b32.xlu0 %v1114, 1
        %v1119 = vpop.permute.xlu0 %1118
        %1120 = vrot.lane.b32.xlu0 %v1115, 1
        %v1121 = vpop.permute.xlu0 %1120
        %v1124 = vadd.f32 %v1076, %v1119
        %v1125 = vadd.f32 %v1077, %v1121
        %s1126 = sld [smem:[#allocation8 + $0x68]]
        %v1127 = vstv %s1126
        %v1128 = vmul.f32 %v1127, %v1032
        %v1129 = vmul.f32 %v1127, %v1033
        %1132 = vrot.lane.b32.xlu0 %v1128, 1
        %v1133 = vpop.permute.xlu0 %1132
        %1134 = vrot.lane.b32.xlu0 %v1129, 1
        %v1135 = vpop.permute.xlu0 %1134
        %v1138 = vadd.f32 %v1082, %v1133
        %v1139 = vadd.f32 %v1083, %v1135
        %s1140 = sld [smem:[#allocation8 + $0x49]]
        %v1141 = vstv %s1140
        %v1142 = vmul.f32 %v1141, %v1034
        %v1143 = vmul.f32 %v1141, %v1035
        %v1144 = vadd.f32 %v932, %v1142
        %v1145 = vadd.f32 %v933, %v1143
        %s1146 = sld [smem:[#allocation8 + $0x52]]
        %v1147 = vstv %s1146
        %v1148 = vmul.f32 %v1147, %v1034
        %v1149 = vmul.f32 %v1147, %v1035
        %v1150 = vadd.f32 %v938, %v1148
        %v1151 = vadd.f32 %v939, %v1149
        %s1152 = sld [smem:[#allocation8 + $0x5b]]
        %v1153 = vstv %s1152
        %v1154 = vmul.f32 %v1153, %v1034
        %v1155 = vmul.f32 %v1153, %v1035
        %v1156 = vadd.f32 %v944, %v1154
        %v1157 = vadd.f32 %v945, %v1155
        %s1158 = sld [smem:[#allocation8 + $0x64]]
        %v1159 = vstv %s1158
        %v1160 = vmul.f32 %v1159, %v1034
        %v1161 = vmul.f32 %v1159, %v1035
        %v1162 = vadd.f32 %v950, %v1160
        %v1163 = vadd.f32 %v951, %v1161
        %s1164 = sld [smem:[#allocation8 + $0x48]]
        %v1165 = vstv %s1164
        %v1166 = vmul.f32 %v1165, %v1034
        %v1167 = vmul.f32 %v1165, %v1035
        %v1168 = vadd.f32 %v988, %v1166
        %v1169 = vadd.f32 %v989, %v1167
        %s1170 = sld [smem:[#allocation8 + $0x51]]
        %v1171 = vstv %s1170
        %v1172 = vmul.f32 %v1171, %v1034
        %v1173 = vmul.f32 %v1171, %v1035
        %v1174 = vadd.f32 %v1002, %v1172
        %v1175 = vadd.f32 %v1003, %v1173
        %s1176 = sld [smem:[#allocation8 + $0x5a]]
        %v1177 = vstv %s1176
        %v1178 = vmul.f32 %v1177, %v1034
        %v1179 = vmul.f32 %v1177, %v1035
        %v1180 = vadd.f32 %v1016, %v1178
        %v1181 = vadd.f32 %v1017, %v1179
        %s1182 = sld [smem:[#allocation8 + $0x63]]
        %v1183 = vstv %s1182
        %v1184 = vmul.f32 %v1183, %v1034
        %v1185 = vmul.f32 %v1183, %v1035
        %v1186 = vadd.f32 %v1030, %v1184
        %v1187 = vadd.f32 %v1031, %v1185
        %s1188 = sld [smem:[#allocation8 + $0x4a]]
        %v1189 = vstv %s1188
        %v1190 = vmul.f32 %v1189, %v1034
        %v1191 = vmul.f32 %v1189, %v1035
        %1194 = vrot.lane.b32.xlu0 %v1190, 1
        %v1195 = vpop.permute.xlu0 %1194
        %1196 = vrot.lane.b32.xlu0 %v1191, 1
        %v1197 = vpop.permute.xlu0 %1196
        %v1200 = vadd.f32 %v1168, %v1195
        %v1201 = vadd.f32 %v1169, %v1197
        %s1202 = sld [smem:[#allocation8 + $0x53]]
        %v1203 = vstv %s1202
        %v1204 = vmul.f32 %v1203, %v1034
        %v1205 = vmul.f32 %v1203, %v1035
        %1208 = vrot.lane.b32.xlu0 %v1204, 1
        %v1209 = vpop.permute.xlu0 %1208
        %1210 = vrot.lane.b32.xlu0 %v1205, 1
        %v1211 = vpop.permute.xlu0 %1210
        %v1214 = vadd.f32 %v1174, %v1209
        %v1215 = vadd.f32 %v1175, %v1211
        %s1216 = sld [smem:[#allocation8 + $0x5c]]
        %v1217 = vstv %s1216
        %v1218 = vmul.f32 %v1217, %v1034
        %v1219 = vmul.f32 %v1217, %v1035
        %1222 = vrot.lane.b32.xlu0 %v1218, 1
        %v1223 = vpop.permute.xlu0 %1222
        %1224 = vrot.lane.b32.xlu0 %v1219, 1
        %v1225 = vpop.permute.xlu0 %1224
        %v1228 = vadd.f32 %v1180, %v1223
        %v1229 = vadd.f32 %v1181, %v1225
        %s1230 = sld [smem:[#allocation8 + $0x65]]
        %v1231 = vstv %s1230
        %v1232 = vmul.f32 %v1231, %v1034
        %v1233 = vmul.f32 %v1231, %v1035
        %1236 = vrot.lane.b32.xlu0 %v1232, 1
        %v1237 = vpop.permute.xlu0 %1236
        %1238 = vrot.lane.b32.xlu0 %v1233, 1
        %v1239 = vpop.permute.xlu0 %1238
        %v1242 = vadd.f32 %v1186, %v1237
        %v1243 = vadd.f32 %v1187, %v1239
        %s1244 = sld [smem:[#allocation8 + $0x4f]]
        %v1245 = vstv %s1244
        %v1246 = vmul.f32 %v1245, %v1032
        %v1247 = vmul.f32 %v1245, %v1033
        %v1248 = vadd.f32 %v1144, %v1246
        %v1249 = vadd.f32 %v1145, %v1247
        %s1250 = sld [smem:[#allocation8 + $0x58]]
        %v1251 = vstv %s1250
        %v1252 = vmul.f32 %v1251, %v1032
        %v1253 = vmul.f32 %v1251, %v1033
        %v1254 = vadd.f32 %v1150, %v1252
        %v1255 = vadd.f32 %v1151, %v1253
        %s1256 = sld [smem:[#allocation8 + $0x61]]
        %v1257 = vstv %s1256
        %v1258 = vmul.f32 %v1257, %v1032
        %v1259 = vmul.f32 %v1257, %v1033
        %v1260 = vadd.f32 %v1156, %v1258
        %v1261 = vadd.f32 %v1157, %v1259
        %s1262 = sld [smem:[#allocation8 + $0x6a]]
        %v1263 = vstv %s1262
        %v1264 = vmul.f32 %v1263, %v1032
        %v1265 = vmul.f32 %v1263, %v1033
        %v1266 = vadd.f32 %v1162, %v1264
        %v1267 = vadd.f32 %v1163, %v1265
        %s1268 = sld [smem:[#allocation8 + $0x4e]]
        %v1269 = vstv %s1268
        %v1270 = vmul.f32 %v1269, %v1032
        %v1271 = vmul.f32 %v1269, %v1033
        %v1272 = vadd.f32 %v1200, %v1270
        %v1273 = vadd.f32 %v1201, %v1271
        %s1274 = sld [smem:[#allocation8 + $0x57]]
        %v1275 = vstv %s1274
        %v1276 = vmul.f32 %v1275, %v1032
        %v1277 = vmul.f32 %v1275, %v1033
        %v1278 = vadd.f32 %v1214, %v1276
        %v1279 = vadd.f32 %v1215, %v1277
        %s1280 = sld [smem:[#allocation8 + $0x60]]
        %v1281 = vstv %s1280
        %v1282 = vmul.f32 %v1281, %v1032
        %v1283 = vmul.f32 %v1281, %v1033
        %v1284 = vadd.f32 %v1228, %v1282
        %v1285 = vadd.f32 %v1229, %v1283
        %s1286 = sld [smem:[#allocation8 + $0x69]]
        %v1287 = vstv %s1286
        %v1288 = vmul.f32 %v1287, %v1032
        %v1289 = vmul.f32 %v1287, %v1033
        %v1290 = vadd.f32 %v1242, %v1288
        %v1291 = vadd.f32 %v1243, %v1289
        %s1292 = sld [smem:[#allocation8 + $0x50]]
        %v1293 = vstv %s1292
        %v1294 = vmul.f32 %v1293, %v1032
        %v1295 = vmul.f32 %v1293, %v1033
        %1298 = vrot.lane.b32.xlu0 %v1294, 1
        %v1299 = vpop.permute.xlu0 %1298
        %1300 = vrot.lane.b32.xlu0 %v1295, 1
        %v1301 = vpop.permute.xlu0 %1300
        %v1304 = vadd.f32 %v1272, %v1299
        %v1305 = vadd.f32 %v1273, %v1301
        %s1306 = sld [smem:[#allocation8 + $0x59]]
        %v1307 = vstv %s1306
        %v1308 = vmul.f32 %v1307, %v1032
        %v1309 = vmul.f32 %v1307, %v1033
        %1312 = vrot.lane.b32.xlu0 %v1308, 1
        %v1313 = vpop.permute.xlu0 %1312
        %1314 = vrot.lane.b32.xlu0 %v1309, 1
        %v1315 = vpop.permute.xlu0 %1314
        %v1318 = vadd.f32 %v1278, %v1313
        %v1319 = vadd.f32 %v1279, %v1315
        %s1320 = sld [smem:[#allocation8 + $0x62]]
        %v1321 = vstv %s1320
        %v1322 = vmul.f32 %v1321, %v1032
        %v1323 = vmul.f32 %v1321, %v1033
        %1326 = vrot.lane.b32.xlu0 %v1322, 1
        %v1327 = vpop.permute.xlu0 %1326
        %1328 = vrot.lane.b32.xlu0 %v1323, 1
        %v1329 = vpop.permute.xlu0 %1328
        %v1332 = vadd.f32 %v1284, %v1327
        %v1333 = vadd.f32 %v1285, %v1329
        %s1334 = sld [smem:[#allocation8 + $0x6b]]
        %v1335 = vstv %s1334
        %v1336 = vmul.f32 %v1335, %v1032
        %v1337 = vmul.f32 %v1335, %v1033
        %1340 = vrot.lane.b32.xlu0 %v1336, 1
        %v1341 = vpop.permute.xlu0 %1340
        %1342 = vrot.lane.b32.xlu0 %v1337, 1
        %v1343 = vpop.permute.xlu0 %1342
        %v1346 = vadd.f32 %v1290, %v1341
        %v1347 = vadd.f32 %v1291, %v1343
        %v1348 = vld [vmem:[%s329] sm:$0xff]
        %v1349 = vld [vmem:[%s329 + $0x8] sm:$0xff]
        %v1350 = vld [vmem:[%s329 + $0x1] sm:$0xff]
        %v1351 = vld [vmem:[%s329 + $0x9] sm:$0xff]
        %s1352 = sld [smem:[#allocation8 + $0x70]]
        %v1353 = vstv %s1352
        %v1354 = vmul.f32 %v1353, %v1348
        %v1355 = vmul.f32 %v1353, %v1349
        %v1356 = vadd.f32 %v1040, %v1354
        %v1357 = vadd.f32 %v1041, %v1355
        %s1358 = sld [smem:[#allocation8 + $0x79]]
        %v1359 = vstv %s1358
        %v1360 = vmul.f32 %v1359, %v1348
        %v1361 = vmul.f32 %v1359, %v1349
        %v1362 = vadd.f32 %v1046, %v1360
        %v1363 = vadd.f32 %v1047, %v1361
        %s1364 = sld [smem:[#allocation8 + $0x82]]
        %v1365 = vstv %s1364
        %v1366 = vmul.f32 %v1365, %v1348
        %v1367 = vmul.f32 %v1365, %v1349
        %v1368 = vadd.f32 %v1052, %v1366
        %v1369 = vadd.f32 %v1053, %v1367
        %s1370 = sld [smem:[#allocation8 + $0x8b]]
        %v1371 = vstv %s1370
        %v1372 = vmul.f32 %v1371, %v1348
        %v1373 = vmul.f32 %v1371, %v1349
        %v1374 = vadd.f32 %v1058, %v1372
        %v1375 = vadd.f32 %v1059, %v1373
        %s1376 = sld [smem:[#allocation8 + $0x6f]]
        %v1377 = vstv %s1376
        %v1378 = vmul.f32 %v1377, %v1348
        %v1379 = vmul.f32 %v1377, %v1349
        %v1380 = vadd.f32 %v1096, %v1378
        %v1381 = vadd.f32 %v1097, %v1379
        %s1382 = sld [smem:[#allocation8 + $0x78]]
        %v1383 = vstv %s1382
        %v1384 = vmul.f32 %v1383, %v1348
        %v1385 = vmul.f32 %v1383, %v1349
        %v1386 = vadd.f32 %v1110, %v1384
        %v1387 = vadd.f32 %v1111, %v1385
        %s1388 = sld [smem:[#allocation8 + $0x81]]
        %v1389 = vstv %s1388
        %v1390 = vmul.f32 %v1389, %v1348
        %v1391 = vmul.f32 %v1389, %v1349
        %v1392 = vadd.f32 %v1124, %v1390
        %v1393 = vadd.f32 %v1125, %v1391
        %s1394 = sld [smem:[#allocation8 + $0x8a]]
        %v1395 = vstv %s1394
        %v1396 = vmul.f32 %v1395, %v1348
        %v1397 = vmul.f32 %v1395, %v1349
        %v1398 = vadd.f32 %v1138, %v1396
        %v1399 = vadd.f32 %v1139, %v1397
        %s1400 = sld [smem:[#allocation8 + $0x71]]
        %v1401 = vstv %s1400
        %v1402 = vmul.f32 %v1401, %v1348
        %v1403 = vmul.f32 %v1401, %v1349
        %1406 = vrot.lane.b32.xlu0 %v1402, 1
        %v1407 = vpop.permute.xlu0 %1406
        %1408 = vrot.lane.b32.xlu0 %v1403, 1
        %v1409 = vpop.permute.xlu0 %1408
        %v1412 = vadd.f32 %v1380, %v1407
        %v1413 = vadd.f32 %v1381, %v1409
        %s1414 = sld [smem:[#allocation8 + $0x7a]]
        %v1415 = vstv %s1414
        %v1416 = vmul.f32 %v1415, %v1348
        %v1417 = vmul.f32 %v1415, %v1349
        %1420 = vrot.lane.b32.xlu0 %v1416, 1
        %v1421 = vpop.permute.xlu0 %1420
        %1422 = vrot.lane.b32.xlu0 %v1417, 1
        %v1423 = vpop.permute.xlu0 %1422
        %v1426 = vadd.f32 %v1386, %v1421
        %v1427 = vadd.f32 %v1387, %v1423
        %s1428 = sld [smem:[#allocation8 + $0x83]]
        %v1429 = vstv %s1428
        %v1430 = vmul.f32 %v1429, %v1348
        %v1431 = vmul.f32 %v1429, %v1349
        %1434 = vrot.lane.b32.xlu0 %v1430, 1
        %v1435 = vpop.permute.xlu0 %1434
        %1436 = vrot.lane.b32.xlu0 %v1431, 1
        %v1437 = vpop.permute.xlu0 %1436
        %v1440 = vadd.f32 %v1392, %v1435
        %v1441 = vadd.f32 %v1393, %v1437
        %s1442 = sld [smem:[#allocation8 + $0x8c]]
        %v1443 = vstv %s1442
        %v1444 = vmul.f32 %v1443, %v1348
        %v1445 = vmul.f32 %v1443, %v1349
        %1448 = vrot.lane.b32.xlu0 %v1444, 1
        %v1449 = vpop.permute.xlu0 %1448
        %1450 = vrot.lane.b32.xlu0 %v1445, 1
        %v1451 = vpop.permute.xlu0 %1450
        %v1454 = vadd.f32 %v1398, %v1449
        %v1455 = vadd.f32 %v1399, %v1451
        %s1456 = sld [smem:[#allocation8 + $0x6d]]
        %v1457 = vstv %s1456
        %v1458 = vmul.f32 %v1457, %v1350
        %v1459 = vmul.f32 %v1457, %v1351
        %v1460 = vadd.f32 %v1248, %v1458
        %v1461 = vadd.f32 %v1249, %v1459
        %s1462 = sld [smem:[#allocation8 + $0x76]]
        %v1463 = vstv %s1462
        %v1464 = vmul.f32 %v1463, %v1350
        %v1465 = vmul.f32 %v1463, %v1351
        %v1466 = vadd.f32 %v1254, %v1464
        %v1467 = vadd.f32 %v1255, %v1465
        %s1468 = sld [smem:[#allocation8 + $0x7f]]
        %v1469 = vstv %s1468
        %v1470 = vmul.f32 %v1469, %v1350
        %v1471 = vmul.f32 %v1469, %v1351
        %v1472 = vadd.f32 %v1260, %v1470
        %v1473 = vadd.f32 %v1261, %v1471
        %s1474 = sld [smem:[#allocation8 + $0x88]]
        %v1475 = vstv %s1474
        %v1476 = vmul.f32 %v1475, %v1350
        %v1477 = vmul.f32 %v1475, %v1351
        %v1478 = vadd.f32 %v1266, %v1476
        %v1479 = vadd.f32 %v1267, %v1477
        %s1480 = sld [smem:[#allocation8 + $0x6c]]
        %v1481 = vstv %s1480
        %v1482 = vmul.f32 %v1481, %v1350
        %v1483 = vmul.f32 %v1481, %v1351
        %v1484 = vadd.f32 %v1304, %v1482
        %v1485 = vadd.f32 %v1305, %v1483
        %s1486 = sld [smem:[#allocation8 + $0x75]]
        %v1487 = vstv %s1486
        %v1488 = vmul.f32 %v1487, %v1350
        %v1489 = vmul.f32 %v1487, %v1351
        %v1490 = vadd.f32 %v1318, %v1488
        %v1491 = vadd.f32 %v1319, %v1489
        %s1492 = sld [smem:[#allocation8 + $0x7e]]
        %v1493 = vstv %s1492
        %v1494 = vmul.f32 %v1493, %v1350
        %v1495 = vmul.f32 %v1493, %v1351
        %v1496 = vadd.f32 %v1332, %v1494
        %v1497 = vadd.f32 %v1333, %v1495
        %s1498 = sld [smem:[#allocation8 + $0x87]]
        %v1499 = vstv %s1498
        %v1500 = vmul.f32 %v1499, %v1350
        %v1501 = vmul.f32 %v1499, %v1351
        %v1502 = vadd.f32 %v1346, %v1500
        %v1503 = vadd.f32 %v1347, %v1501
        %s1504 = sld [smem:[#allocation8 + $0x6e]]
        %v1505 = vstv %s1504
        %v1506 = vmul.f32 %v1505, %v1350
        %v1507 = vmul.f32 %v1505, %v1351
        %1510 = vrot.lane.b32.xlu0 %v1506, 1
        %v1511 = vpop.permute.xlu0 %1510
        %1512 = vrot.lane.b32.xlu0 %v1507, 1
        %v1513 = vpop.permute.xlu0 %1512
        %v1516 = vadd.f32 %v1484, %v1511
        %v1517 = vadd.f32 %v1485, %v1513
        %s1518 = sld [smem:[#allocation8 + $0x77]]
        %v1519 = vstv %s1518
        %v1520 = vmul.f32 %v1519, %v1350
        %v1521 = vmul.f32 %v1519, %v1351
        %1524 = vrot.lane.b32.xlu0 %v1520, 1
        %v1525 = vpop.permute.xlu0 %1524
        %1526 = vrot.lane.b32.xlu0 %v1521, 1
        %v1527 = vpop.permute.xlu0 %1526
        %v1530 = vadd.f32 %v1490, %v1525
        %v1531 = vadd.f32 %v1491, %v1527
        %s1532 = sld [smem:[#allocation8 + $0x80]]
        %v1533 = vstv %s1532
        %v1534 = vmul.f32 %v1533, %v1350
        %v1535 = vmul.f32 %v1533, %v1351
        %1538 = vrot.lane.b32.xlu0 %v1534, 1
        %v1539 = vpop.permute.xlu0 %1538
        %1540 = vrot.lane.b32.xlu0 %v1535, 1
        %v1541 = vpop.permute.xlu0 %1540
        %v1544 = vadd.f32 %v1496, %v1539
        %v1545 = vadd.f32 %v1497, %v1541
        %s1546 = sld [smem:[#allocation8 + $0x89]]
        %v1547 = vstv %s1546
        %v1548 = vmul.f32 %v1547, %v1350
        %v1549 = vmul.f32 %v1547, %v1351
        %1552 = vrot.lane.b32.xlu0 %v1548, 1
        %v1553 = vpop.permute.xlu0 %1552
        %1554 = vrot.lane.b32.xlu0 %v1549, 1
        %v1555 = vpop.permute.xlu0 %1554
        %v1558 = vadd.f32 %v1502, %v1553
        %v1559 = vadd.f32 %v1503, %v1555
        %s1560 = sld [smem:[#allocation8 + $0x73]]
        %v1561 = vstv %s1560
        %v1562 = vmul.f32 %v1561, %v1348
        %v1563 = vmul.f32 %v1561, %v1349
        %v1564 = vadd.f32 %v1460, %v1562
        %v1565 = vadd.f32 %v1461, %v1563
        %s1566 = sld [smem:[#allocation8 + $0x7c]]
        %v1567 = vstv %s1566
        %v1568 = vmul.f32 %v1567, %v1348
        %v1569 = vmul.f32 %v1567, %v1349
        %v1570 = vadd.f32 %v1466, %v1568
        %v1571 = vadd.f32 %v1467, %v1569
        %s1572 = sld [smem:[#allocation8 + $0x85]]
        %v1573 = vstv %s1572
        %v1574 = vmul.f32 %v1573, %v1348
        %v1575 = vmul.f32 %v1573, %v1349
        %v1576 = vadd.f32 %v1472, %v1574
        %v1577 = vadd.f32 %v1473, %v1575
        %s1578 = sld [smem:[#allocation8 + $0x8e]]
        %v1579 = vstv %s1578
        %v1580 = vmul.f32 %v1579, %v1348
        %v1581 = vmul.f32 %v1579, %v1349
        %v1582 = vadd.f32 %v1478, %v1580
        %v1583 = vadd.f32 %v1479, %v1581
        %s1584 = sld [smem:[#allocation8 + $0x72]]
        %v1585 = vstv %s1584
        %v1586 = vmul.f32 %v1585, %v1348
        %v1587 = vmul.f32 %v1585, %v1349
        %v1588 = vadd.f32 %v1516, %v1586
        %v1589 = vadd.f32 %v1517, %v1587
        %s1590 = sld [smem:[#allocation8 + $0x7b]]
        %v1591 = vstv %s1590
        %v1592 = vmul.f32 %v1591, %v1348
        %v1593 = vmul.f32 %v1591, %v1349
        %v1594 = vadd.f32 %v1530, %v1592
        %v1595 = vadd.f32 %v1531, %v1593
        %s1596 = sld [smem:[#allocation8 + $0x84]]
        %v1597 = vstv %s1596
        %v1598 = vmul.f32 %v1597, %v1348
        %v1599 = vmul.f32 %v1597, %v1349
        %v1600 = vadd.f32 %v1544, %v1598
        %v1601 = vadd.f32 %v1545, %v1599
        %s1602 = sld [smem:[#allocation8 + $0x8d]]
        %v1603 = vstv %s1602
        %v1604 = vmul.f32 %v1603, %v1348
        %v1605 = vmul.f32 %v1603, %v1349
        %v1606 = vadd.f32 %v1558, %v1604
        %v1607 = vadd.f32 %v1559, %v1605
        %s1608 = sld [smem:[#allocation8 + $0x74]]
        %v1609 = vstv %s1608
        %v1610 = vmul.f32 %v1609, %v1348
        %v1611 = vmul.f32 %v1609, %v1349
        %1614 = vrot.lane.b32.xlu0 %v1610, 1
        %v1615 = vpop.permute.xlu0 %1614
        %1616 = vrot.lane.b32.xlu0 %v1611, 1
        %v1617 = vpop.permute.xlu0 %1616
        %v1620 = vadd.f32 %v1588, %v1615
        %v1621 = vadd.f32 %v1589, %v1617
        %s1622 = sld [smem:[#allocation8 + $0x7d]]
        %v1623 = vstv %s1622
        %v1624 = vmul.f32 %v1623, %v1348
        %v1625 = vmul.f32 %v1623, %v1349
        %1628 = vrot.lane.b32.xlu0 %v1624, 1
        %v1629 = vpop.permute.xlu0 %1628
        %1630 = vrot.lane.b32.xlu0 %v1625, 1
        %v1631 = vpop.permute.xlu0 %1630
        %v1634 = vadd.f32 %v1594, %v1629
        %v1635 = vadd.f32 %v1595, %v1631
        %s1636 = sld [smem:[#allocation8 + $0x86]]
        %v1637 = vstv %s1636
        %v1638 = vmul.f32 %v1637, %v1348
        %v1639 = vmul.f32 %v1637, %v1349
        %1642 = vrot.lane.b32.xlu0 %v1638, 1
        %v1643 = vpop.permute.xlu0 %1642
        %1644 = vrot.lane.b32.xlu0 %v1639, 1
        %v1645 = vpop.permute.xlu0 %1644
        %v1648 = vadd.f32 %v1600, %v1643
        %v1649 = vadd.f32 %v1601, %v1645
        %s1650 = sld [smem:[#allocation8 + $0x8f]]
        %v1651 = vstv %s1650
        %v1652 = vmul.f32 %v1651, %v1348
        %v1653 = vmul.f32 %v1651, %v1349
        %1656 = vrot.lane.b32.xlu0 %v1652, 1
        %v1657 = vpop.permute.xlu0 %1656
        %1658 = vrot.lane.b32.xlu0 %v1653, 1
        %v1659 = vpop.permute.xlu0 %1658
        %v1662 = vadd.f32 %v1606, %v1657
        %v1663 = vadd.f32 %v1607, %v1659
        %v1664 = vmax.f32 %v1356, 0.0
        %v1665 = vmax.f32 %v1357, 0.0
        %1668 = vrot.lane.b32.xlu0 %v1664, 1
        %v1669 = vpop.permute.xlu0 %1668
        %1670 = vrot.lane.b32.xlu0 %v1665, 1
        %v1671 = vpop.permute.xlu0 %1670
        %vm1674 = vcmask 138248
        %1675 = vst.msk [vmem:[#allocation3 + $0x1] sm:$0xff] %vm1674, %v1669
        %1676 = vst.msk [vmem:[#allocation3 + $0x9] sm:$0xff] %vm1674, %v1671
        %v1677 = vmax.f32 %v1362, 0.0
        %v1678 = vmax.f32 %v1363, 0.0
        %1681 = vrot.lane.b32.xlu0 %v1677, 1
        %v1682 = vpop.permute.xlu0 %1681
        %1683 = vrot.lane.b32.xlu0 %v1678, 1
        %v1684 = vpop.permute.xlu0 %1683
        %s1687 = scalar_lea.vmem [#allocation3], 24
        %1688 = vst.msk [vmem:[%s1687 + $0x1] sm:$0xff] %vm1674, %v1682
        %1689 = vst.msk [vmem:[%s1687 + $0x9] sm:$0xff] %vm1674, %v1684
        %v1690 = vmax.f32 %v1368, 0.0
        %v1691 = vmax.f32 %v1369, 0.0
        %1694 = vrot.lane.b32.xlu0 %v1690, 1
        %v1695 = vpop.permute.xlu0 %1694
        %1696 = vrot.lane.b32.xlu0 %v1691, 1
        %v1697 = vpop.permute.xlu0 %1696
        %s1700 = scalar_lea.vmem [#allocation3], 48
        %1701 = vst.msk [vmem:[%s1700 + $0x1] sm:$0xff] %vm1674, %v1695
        %1702 = vst.msk [vmem:[%s1700 + $0x9] sm:$0xff] %vm1674, %v1697
        %v1703 = vmax.f32 %v1374, 0.0
        %v1704 = vmax.f32 %v1375, 0.0
        %1707 = vrot.lane.b32.xlu0 %v1703, 1
        %v1708 = vpop.permute.xlu0 %1707
        %1709 = vrot.lane.b32.xlu0 %v1704, 1
        %v1710 = vpop.permute.xlu0 %1709
        %s1713 = scalar_lea.vmem [#allocation3], 72
        %1714 = vst.msk [vmem:[%s1713 + $0x1] sm:$0xff] %vm1674, %v1708
        %1715 = vst.msk [vmem:[%s1713 + $0x9] sm:$0xff] %vm1674, %v1710
        %v1716 = vmax.f32 %v1412, 0.0
        %v1717 = vmax.f32 %v1413, 0.0
        %s1718 = scalar_lea.vmem [#allocation3], 96
        %1719 = vst.msk [vmem:[%s1718 + $0x1] sm:$0xff] %vm1674, %v1716
        %1720 = vst.msk [vmem:[%s1718 + $0x9] sm:$0xff] %vm1674, %v1717
        %v1721 = vmax.f32 %v1426, 0.0
        %v1722 = vmax.f32 %v1427, 0.0
        %s1723 = scalar_lea.vmem [#allocation3], 120
        %1724 = vst.msk [vmem:[%s1723 + $0x1] sm:$0xff] %vm1674, %v1721
        %1725 = vst.msk [vmem:[%s1723 + $0x9] sm:$0xff] %vm1674, %v1722
        %v1726 = vmax.f32 %v1440, 0.0
        %v1727 = vmax.f32 %v1441, 0.0
        %s1728 = scalar_lea.vmem [#allocation3], 144
        %1729 = vst.msk [vmem:[%s1728 + $0x1] sm:$0xff] %vm1674, %v1726
        %1730 = vst.msk [vmem:[%s1728 + $0x9] sm:$0xff] %vm1674, %v1727
        %v1731 = vmax.f32 %v1454, 0.0
        %v1732 = vmax.f32 %v1455, 0.0
        %s1733 = scalar_lea.vmem [#allocation3], 168
        %1734 = vst.msk [vmem:[%s1733 + $0x1] sm:$0xff] %vm1674, %v1731
        %1735 = vst.msk [vmem:[%s1733 + $0x9] sm:$0xff] %vm1674, %v1732
        %v1736 = vmax.f32 %v1564, 0.0
        %v1737 = vmax.f32 %v1565, 0.0
        %1740 = vrot.lane.b32.xlu0 %v1736, 1
        %v1741 = vpop.permute.xlu0 %1740
        %1742 = vrot.lane.b32.xlu0 %v1737, 1
        %v1743 = vpop.permute.xlu0 %1742
        %s1746 = scalar_lea.vmem [#allocation3], 192
        %1747 = vst.msk [vmem:[%s1746 + $0x1] sm:$0xff] %vm1674, %v1741
        %1748 = vst.msk [vmem:[%s1746 + $0x9] sm:$0xff] %vm1674, %v1743
        %v1749 = vmax.f32 %v1570, 0.0
        %v1750 = vmax.f32 %v1571, 0.0
        %1753 = vrot.lane.b32.xlu0 %v1749, 1
        %v1754 = vpop.permute.xlu0 %1753
        %1755 = vrot.lane.b32.xlu0 %v1750, 1
        %v1756 = vpop.permute.xlu0 %1755
        %s1759 = scalar_lea.vmem [#allocation3], 216
        %1760 = vst.msk [vmem:[%s1759 + $0x1] sm:$0xff] %vm1674, %v1754
        %1761 = vst.msk [vmem:[%s1759 + $0x9] sm:$0xff] %vm1674, %v1756
        %v1762 = vmax.f32 %v1576, 0.0
        %v1763 = vmax.f32 %v1577, 0.0
        %1766 = vrot.lane.b32.xlu0 %v1762, 1
        %v1767 = vpop.permute.xlu0 %1766
        %1768 = vrot.lane.b32.xlu0 %v1763, 1
        %v1769 = vpop.permute.xlu0 %1768
        %s1772 = scalar_lea.vmem [#allocation3], 240
        %1773 = vst.msk [vmem:[%s1772 + $0x1] sm:$0xff] %vm1674, %v1767
        %1774 = vst.msk [vmem:[%s1772 + $0x9] sm:$0xff] %vm1674, %v1769
        %v1775 = vmax.f32 %v1582, 0.0
        %v1776 = vmax.f32 %v1583, 0.0
        %1779 = vrot.lane.b32.xlu0 %v1775, 1
        %v1780 = vpop.permute.xlu0 %1779
        %1781 = vrot.lane.b32.xlu0 %v1776, 1
        %v1782 = vpop.permute.xlu0 %1781
        %s1785 = scalar_lea.vmem [#allocation3], 264
        %1786 = vst.msk [vmem:[%s1785 + $0x1] sm:$0xff] %vm1674, %v1780
        %1787 = vst.msk [vmem:[%s1785 + $0x9] sm:$0xff] %vm1674, %v1782
        %v1788 = vmax.f32 %v1620, 0.0
        %v1789 = vmax.f32 %v1621, 0.0
        %s1790 = scalar_lea.vmem [#allocation3], 288
        %1791 = vst.msk [vmem:[%s1790 + $0x1] sm:$0xff] %vm1674, %v1788
        %1792 = vst.msk [vmem:[%s1790 + $0x9] sm:$0xff] %vm1674, %v1789
        %v1793 = vmax.f32 %v1634, 0.0
        %v1794 = vmax.f32 %v1635, 0.0
        %s1795 = scalar_lea.vmem [#allocation3], 312
        %1796 = vst.msk [vmem:[%s1795 + $0x1] sm:$0xff] %vm1674, %v1793
        %1797 = vst.msk [vmem:[%s1795 + $0x9] sm:$0xff] %vm1674, %v1794
        %v1798 = vmax.f32 %v1648, 0.0
        %v1799 = vmax.f32 %v1649, 0.0
        %s1800 = scalar_lea.vmem [#allocation3], 336
        %1801 = vst.msk [vmem:[%s1800 + $0x1] sm:$0xff] %vm1674, %v1798
        %1802 = vst.msk [vmem:[%s1800 + $0x9] sm:$0xff] %vm1674, %v1799
        %v1803 = vmax.f32 %v1662, 0.0
        %v1804 = vmax.f32 %v1663, 0.0
        %s1805 = scalar_lea.vmem [#allocation3], 360
        %1806 = vst.msk [vmem:[%s1805 + $0x1] sm:$0xff] %vm1674, %v1803
        %1807 = vst.msk [vmem:[%s1805 + $0x9] sm:$0xff] %vm1674, %v1804
        %v1808 = vld [vmem:[%s1790] sm:$0xff]
        %v1809 = vld [vmem:[%s1790 + $0x8] sm:$0xff]
        %s1810 = sld [smem:[#allocation11]]
        %v1811 = vstv %s1810
        %v1812 = vmul.f32 %v1811, %v1808
        %v1813 = vmul.f32 %v1811, %v1809
        %v1814 = vadd.f32 %v396, %v1812
        %v1815 = vadd.f32 %v396, %v1813
        %s1816 = sld [smem:[#allocation11 + $0x24]]
        %v1817 = vstv %s1816
        %v1818 = vmul.f32 %v1817, %v1808
        %v1819 = vmul.f32 %v1817, %v1809
        %v1820 = vadd.f32 %v399, %v1818
        %v1821 = vadd.f32 %v399, %v1819
        %v1822 = vld [vmem:[%s1746] sm:$0xff]
        %v1823 = vld [vmem:[%s1746 + $0x8] sm:$0xff]
        %s1824 = sld [smem:[#allocation11 + $0x1]]
        %v1825 = vstv %s1824
        %v1826 = vmul.f32 %v1825, %v1822
        %v1827 = vmul.f32 %v1825, %v1823
        %1830 = vrot.lane.b32.xlu0 %v1826, 127
        %v1831 = vpop.permute.xlu0 %1830
        %1832 = vrot.lane.b32.xlu0 %v1827, 127
        %v1833 = vpop.permute.xlu0 %1832
        %v1836 = vadd.f32 %v1814, %v1831
        %v1837 = vadd.f32 %v1815, %v1833
        %s1838 = sld [smem:[#allocation11 + $0x25]]
        %v1839 = vstv %s1838
        %v1840 = vmul.f32 %v1839, %v1822
        %v1841 = vmul.f32 %v1839, %v1823
        %1844 = vrot.lane.b32.xlu0 %v1840, 127
        %v1845 = vpop.permute.xlu0 %1844
        %1846 = vrot.lane.b32.xlu0 %v1841, 127
        %v1847 = vpop.permute.xlu0 %1846
        %v1850 = vadd.f32 %v1820, %v1845
        %v1851 = vadd.f32 %v1821, %v1847
        %v1852 = vmul.f32 %v1811, %v1822
        %v1853 = vmul.f32 %v1811, %v1823
        %v1854 = vadd.f32 %v396, %v1852
        %v1855 = vadd.f32 %v396, %v1853
        %v1856 = vmul.f32 %v1817, %v1822
        %v1857 = vmul.f32 %v1817, %v1823
        %v1858 = vadd.f32 %v399, %v1856
        %v1859 = vadd.f32 %v399, %v1857
        %s1860 = sld [smem:[#allocation11 + $0x2]]
        %v1861 = vstv %s1860
        %v1862 = vmul.f32 %v1861, %v1808
        %v1863 = vmul.f32 %v1861, %v1809
        %1866 = vrot.lane.b32.xlu0 %v1862, 127
        %v1867 = vpop.permute.xlu0 %1866
        %1868 = vrot.lane.b32.xlu0 %v1863, 127
        %v1869 = vpop.permute.xlu0 %1868
        %v1872 = vadd.f32 %v1836, %v1867
        %v1873 = vadd.f32 %v1837, %v1869
        %s1874 = sld [smem:[#allocation11 + $0x26]]
        %v1875 = vstv %s1874
        %v1876 = vmul.f32 %v1875, %v1808
        %v1877 = vmul.f32 %v1875, %v1809
        %1880 = vrot.lane.b32.xlu0 %v1876, 127
        %v1881 = vpop.permute.xlu0 %1880
        %1882 = vrot.lane.b32.xlu0 %v1877, 127
        %v1883 = vpop.permute.xlu0 %1882
        %v1886 = vadd.f32 %v1850, %v1881
        %v1887 = vadd.f32 %v1851, %v1883
        %v1888 = vmul.f32 %v1825, %v1808
        %v1889 = vmul.f32 %v1825, %v1809
        %v1890 = vadd.f32 %v1854, %v1888
        %v1891 = vadd.f32 %v1855, %v1889
        %v1892 = vmul.f32 %v1839, %v1808
        %v1893 = vmul.f32 %v1839, %v1809
        %v1894 = vadd.f32 %v1858, %v1892
        %v1895 = vadd.f32 %v1859, %v1893
        %v1896 = vmul.f32 %v1861, %v1822
        %v1897 = vmul.f32 %v1861, %v1823
        %1900 = vrot.lane.b32.xlu0 %v1896, 127
        %v1901 = vpop.permute.xlu0 %1900
        %1902 = vrot.lane.b32.xlu0 %v1897, 127
        %v1903 = vpop.permute.xlu0 %1902
        %v1906 = vadd.f32 %v1890, %v1901
        %v1907 = vadd.f32 %v1891, %v1903
        %v1908 = vmul.f32 %v1875, %v1822
        %v1909 = vmul.f32 %v1875, %v1823
        %1912 = vrot.lane.b32.xlu0 %v1908, 127
        %v1913 = vpop.permute.xlu0 %1912
        %1914 = vrot.lane.b32.xlu0 %v1909, 127
        %v1915 = vpop.permute.xlu0 %1914
        %v1918 = vadd.f32 %v1894, %v1913
        %v1919 = vadd.f32 %v1895, %v1915
        %v1920 = vld [vmem:[%s1718 + $0x1] sm:$0xff]
        %v1921 = vld [vmem:[%s1718 + $0x9] sm:$0xff]
        %s1922 = sld [smem:[#allocation11 + $0x3]]
        %v1923 = vstv %s1922
        %v1924 = vmul.f32 %v1923, %v1920
        %v1925 = vmul.f32 %v1923, %v1921
        %v1926 = vadd.f32 %v1872, %v1924
        %v1927 = vadd.f32 %v1873, %v1925
        %s1928 = sld [smem:[#allocation11 + $0x27]]
        %v1929 = vstv %s1928
        %v1930 = vmul.f32 %v1929, %v1920
        %v1931 = vmul.f32 %v1929, %v1921
        %v1932 = vadd.f32 %v1886, %v1930
        %v1933 = vadd.f32 %v1887, %v1931
        %v1934 = vmul.f32 %v1811, %v1920
        %v1935 = vmul.f32 %v1811, %v1921
        %v1936 = vadd.f32 %v396, %v1934
        %v1937 = vadd.f32 %v396, %v1935
        %v1938 = vmul.f32 %v1817, %v1920
        %v1939 = vmul.f32 %v1817, %v1921
        %v1940 = vadd.f32 %v399, %v1938
        %v1941 = vadd.f32 %v399, %v1939
        %v1942 = vld [vmem:[#allocation3 + $0x1] sm:$0xff]
        %v1943 = vld [vmem:[#allocation3 + $0x9] sm:$0xff]
        %s1944 = sld [smem:[#allocation11 + $0x4]]
        %v1945 = vstv %s1944
        %v1946 = vmul.f32 %v1945, %v1942
        %v1947 = vmul.f32 %v1945, %v1943
        %1950 = vrot.lane.b32.xlu0 %v1946, 127
        %v1951 = vpop.permute.xlu0 %1950
        %1952 = vrot.lane.b32.xlu0 %v1947, 127
        %v1953 = vpop.permute.xlu0 %1952
        %v1956 = vadd.f32 %v1926, %v1951
        %v1957 = vadd.f32 %v1927, %v1953
        %s1958 = sld [smem:[#allocation11 + $0x28]]
        %v1959 = vstv %s1958
        %v1960 = vmul.f32 %v1959, %v1942
        %v1961 = vmul.f32 %v1959, %v1943
        %1964 = vrot.lane.b32.xlu0 %v1960, 127
        %v1965 = vpop.permute.xlu0 %1964
        %1966 = vrot.lane.b32.xlu0 %v1961, 127
        %v1967 = vpop.permute.xlu0 %1966
        %v1970 = vadd.f32 %v1932, %v1965
        %v1971 = vadd.f32 %v1933, %v1967
        %v1972 = vmul.f32 %v1923, %v1942
        %v1973 = vmul.f32 %v1923, %v1943
        %v1974 = vadd.f32 %v1906, %v1972
        %v1975 = vadd.f32 %v1907, %v1973
        %v1976 = vmul.f32 %v1929, %v1942
        %v1977 = vmul.f32 %v1929, %v1943
        %v1978 = vadd.f32 %v1918, %v1976
        %v1979 = vadd.f32 %v1919, %v1977
        %v1980 = vmul.f32 %v1825, %v1942
        %v1981 = vmul.f32 %v1825, %v1943
        %1984 = vrot.lane.b32.xlu0 %v1980, 127
        %v1985 = vpop.permute.xlu0 %1984
        %1986 = vrot.lane.b32.xlu0 %v1981, 127
        %v1987 = vpop.permute.xlu0 %1986
        %v1990 = vadd.f32 %v1936, %v1985
        %v1991 = vadd.f32 %v1937, %v1987
        %v1992 = vmul.f32 %v1839, %v1942
        %v1993 = vmul.f32 %v1839, %v1943
        %1996 = vrot.lane.b32.xlu0 %v1992, 127
        %v1997 = vpop.permute.xlu0 %1996
        %1998 = vrot.lane.b32.xlu0 %v1993, 127
        %v1999 = vpop.permute.xlu0 %1998
        %v2002 = vadd.f32 %v1940, %v1997
        %v2003 = vadd.f32 %v1941, %v1999
        %v2004 = vmul.f32 %v1811, %v1942
        %v2005 = vmul.f32 %v1811, %v1943
        %v2006 = vadd.f32 %v396, %v2004
        %v2007 = vadd.f32 %v396, %v2005
        %v2008 = vmul.f32 %v1817, %v1942
        %v2009 = vmul.f32 %v1817, %v1943
        %v2010 = vadd.f32 %v399, %v2008
        %v2011 = vadd.f32 %v399, %v2009
        %s2012 = sld [smem:[#allocation11 + $0x5]]
        %v2013 = vstv %s2012
        %v2014 = vmul.f32 %v2013, %v1920
        %v2015 = vmul.f32 %v2013, %v1921
        %2018 = vrot.lane.b32.xlu0 %v2014, 127
        %v2019 = vpop.permute.xlu0 %2018
        %2020 = vrot.lane.b32.xlu0 %v2015, 127
        %v2021 = vpop.permute.xlu0 %2020
        %v2024 = vadd.f32 %v1956, %v2019
        %v2025 = vadd.f32 %v1957, %v2021
        %s2026 = sld [smem:[#allocation11 + $0x29]]
        %v2027 = vstv %s2026
        %v2028 = vmul.f32 %v2027, %v1920
        %v2029 = vmul.f32 %v2027, %v1921
        %2032 = vrot.lane.b32.xlu0 %v2028, 127
        %v2033 = vpop.permute.xlu0 %2032
        %2034 = vrot.lane.b32.xlu0 %v2029, 127
        %v2035 = vpop.permute.xlu0 %2034
        %v2038 = vadd.f32 %v1970, %v2033
        %v2039 = vadd.f32 %v1971, %v2035
        %v2040 = vmul.f32 %v1945, %v1920
        %v2041 = vmul.f32 %v1945, %v1921
        %v2042 = vadd.f32 %v1974, %v2040
        %v2043 = vadd.f32 %v1975, %v2041
        %v2044 = vmul.f32 %v1959, %v1920
        %v2045 = vmul.f32 %v1959, %v1921
        %v2046 = vadd.f32 %v1978, %v2044
        %v2047 = vadd.f32 %v1979, %v2045
        %v2048 = vmul.f32 %v1861, %v1920
        %v2049 = vmul.f32 %v1861, %v1921
        %2052 = vrot.lane.b32.xlu0 %v2048, 127
        %v2053 = vpop.permute.xlu0 %2052
        %2054 = vrot.lane.b32.xlu0 %v2049, 127
        %v2055 = vpop.permute.xlu0 %2054
        %v2058 = vadd.f32 %v1990, %v2053
        %v2059 = vadd.f32 %v1991, %v2055
        %v2060 = vmul.f32 %v1875, %v1920
        %v2061 = vmul.f32 %v1875, %v1921
        %2064 = vrot.lane.b32.xlu0 %v2060, 127
        %v2065 = vpop.permute.xlu0 %2064
        %2066 = vrot.lane.b32.xlu0 %v2061, 127
        %v2067 = vpop.permute.xlu0 %2066
        %v2070 = vadd.f32 %v2002, %v2065
        %v2071 = vadd.f32 %v2003, %v2067
        %v2072 = vmul.f32 %v1825, %v1920
        %v2073 = vmul.f32 %v1825, %v1921
        %v2074 = vadd.f32 %v2006, %v2072
        %v2075 = vadd.f32 %v2007, %v2073
        %v2076 = vmul.f32 %v1839, %v1920
        %v2077 = vmul.f32 %v1839, %v1921
        %v2078 = vadd.f32 %v2010, %v2076
        %v2079 = vadd.f32 %v2011, %v2077
        %v2080 = vmul.f32 %v2013, %v1942
        %v2081 = vmul.f32 %v2013, %v1943
        %2084 = vrot.lane.b32.xlu0 %v2080, 127
        %v2085 = vpop.permute.xlu0 %2084
        %2086 = vrot.lane.b32.xlu0 %v2081, 127
        %v2087 = vpop.permute.xlu0 %2086
        %v2090 = vadd.f32 %v2042, %v2085
        %v2091 = vadd.f32 %v2043, %v2087
        %v2092 = vmul.f32 %v2027, %v1942
        %v2093 = vmul.f32 %v2027, %v1943
        %2096 = vrot.lane.b32.xlu0 %v2092, 127
        %v2097 = vpop.permute.xlu0 %2096
        %2098 = vrot.lane.b32.xlu0 %v2093, 127
        %v2099 = vpop.permute.xlu0 %2098
        %v2102 = vadd.f32 %v2046, %v2097
        %v2103 = vadd.f32 %v2047, %v2099
        %v2104 = vmul.f32 %v1861, %v1942
        %v2105 = vmul.f32 %v1861, %v1943
        %2108 = vrot.lane.b32.xlu0 %v2104, 127
        %v2109 = vpop.permute.xlu0 %2108
        %2110 = vrot.lane.b32.xlu0 %v2105, 127
        %v2111 = vpop.permute.xlu0 %2110
        %v2114 = vadd.f32 %v2074, %v2109
        %v2115 = vadd.f32 %v2075, %v2111
        %v2116 = vmul.f32 %v1875, %v1942
        %v2117 = vmul.f32 %v1875, %v1943
        %2120 = vrot.lane.b32.xlu0 %v2116, 127
        %v2121 = vpop.permute.xlu0 %2120
        %2122 = vrot.lane.b32.xlu0 %v2117, 127
        %v2123 = vpop.permute.xlu0 %2122
        %v2126 = vadd.f32 %v2078, %v2121
        %v2127 = vadd.f32 %v2079, %v2123
        %v2128 = vld [vmem:[%s1790 + $0x1] sm:$0xff]
        %v2129 = vld [vmem:[%s1790 + $0x9] sm:$0xff]
        %s2130 = sld [smem:[#allocation11 + $0x6]]
        %v2131 = vstv %s2130
        %v2132 = vmul.f32 %v2131, %v2128
        %v2133 = vmul.f32 %v2131, %v2129
        %v2134 = vadd.f32 %v2024, %v2132
        %v2135 = vadd.f32 %v2025, %v2133
        %s2136 = sld [smem:[#allocation11 + $0x2a]]
        %v2137 = vstv %s2136
        %v2138 = vmul.f32 %v2137, %v2128
        %v2139 = vmul.f32 %v2137, %v2129
        %v2140 = vadd.f32 %v2038, %v2138
        %v2141 = vadd.f32 %v2039, %v2139
        %v2142 = vmul.f32 %v1923, %v2128
        %v2143 = vmul.f32 %v1923, %v2129
        %v2144 = vadd.f32 %v2058, %v2142
        %v2145 = vadd.f32 %v2059, %v2143
        %v2146 = vmul.f32 %v1929, %v2128
        %v2147 = vmul.f32 %v1929, %v2129
        %v2148 = vadd.f32 %v2070, %v2146
        %v2149 = vadd.f32 %v2071, %v2147
        %v2150 = vld [vmem:[%s1746 + $0x1] sm:$0xff]
        %v2151 = vld [vmem:[%s1746 + $0x9] sm:$0xff]
        %s2152 = sld [smem:[#allocation11 + $0x7]]
        %v2153 = vstv %s2152
        %v2154 = vmul.f32 %v2153, %v2150
        %v2155 = vmul.f32 %v2153, %v2151
        %2158 = vrot.lane.b32.xlu0 %v2154, 127
        %v2159 = vpop.permute.xlu0 %2158
        %2160 = vrot.lane.b32.xlu0 %v2155, 127
        %v2161 = vpop.permute.xlu0 %2160
        %v2164 = vadd.f32 %v2134, %v2159
        %v2165 = vadd.f32 %v2135, %v2161
        %s2166 = sld [smem:[#allocation11 + $0x2b]]
        %v2167 = vstv %s2166
        %v2168 = vmul.f32 %v2167, %v2150
        %v2169 = vmul.f32 %v2167, %v2151
        %2172 = vrot.lane.b32.xlu0 %v2168, 127
        %v2173 = vpop.permute.xlu0 %2172
        %2174 = vrot.lane.b32.xlu0 %v2169, 127
        %v2175 = vpop.permute.xlu0 %2174
        %v2178 = vadd.f32 %v2140, %v2173
        %v2179 = vadd.f32 %v2141, %v2175
        %v2180 = vmul.f32 %v2131, %v2150
        %v2181 = vmul.f32 %v2131, %v2151
        %v2182 = vadd.f32 %v2090, %v2180
        %v2183 = vadd.f32 %v2091, %v2181
        %v2184 = vmul.f32 %v2137, %v2150
        %v2185 = vmul.f32 %v2137, %v2151
        %v2186 = vadd.f32 %v2102, %v2184
        %v2187 = vadd.f32 %v2103, %v2185
        %v2188 = vmul.f32 %v1945, %v2150
        %v2189 = vmul.f32 %v1945, %v2151
        %2192 = vrot.lane.b32.xlu0 %v2188, 127
        %v2193 = vpop.permute.xlu0 %2192
        %2194 = vrot.lane.b32.xlu0 %v2189, 127
        %v2195 = vpop.permute.xlu0 %2194
        %v2198 = vadd.f32 %v2144, %v2193
        %v2199 = vadd.f32 %v2145, %v2195
        %v2200 = vmul.f32 %v1959, %v2150
        %v2201 = vmul.f32 %v1959, %v2151
        %2204 = vrot.lane.b32.xlu0 %v2200, 127
        %v2205 = vpop.permute.xlu0 %2204
        %2206 = vrot.lane.b32.xlu0 %v2201, 127
        %v2207 = vpop.permute.xlu0 %2206
        %v2210 = vadd.f32 %v2148, %v2205
        %v2211 = vadd.f32 %v2149, %v2207
        %v2212 = vmul.f32 %v1923, %v2150
        %v2213 = vmul.f32 %v1923, %v2151
        %v2214 = vadd.f32 %v2114, %v2212
        %v2215 = vadd.f32 %v2115, %v2213
        %v2216 = vmul.f32 %v1929, %v2150
        %v2217 = vmul.f32 %v1929, %v2151
        %v2218 = vadd.f32 %v2126, %v2216
        %v2219 = vadd.f32 %v2127, %v2217
        %s2220 = sld [smem:[#allocation11 + $0x8]]
        %v2221 = vstv %s2220
        %v2222 = vmul.f32 %v2221, %v2128
        %v2223 = vmul.f32 %v2221, %v2129
        %2226 = vrot.lane.b32.xlu0 %v2222, 127
        %v2227 = vpop.permute.xlu0 %2226
        %2228 = vrot.lane.b32.xlu0 %v2223, 127
        %v2229 = vpop.permute.xlu0 %2228
        %v2232 = vadd.f32 %v2164, %v2227
        %v2233 = vadd.f32 %v2165, %v2229
        %s2234 = sld [smem:[#allocation11 + $0x2c]]
        %v2235 = vstv %s2234
        %v2236 = vmul.f32 %v2235, %v2128
        %v2237 = vmul.f32 %v2235, %v2129
        %2240 = vrot.lane.b32.xlu0 %v2236, 127
        %v2241 = vpop.permute.xlu0 %2240
        %2242 = vrot.lane.b32.xlu0 %v2237, 127
        %v2243 = vpop.permute.xlu0 %2242
        %v2246 = vadd.f32 %v2178, %v2241
        %v2247 = vadd.f32 %v2179, %v2243
        %v2248 = vmul.f32 %v2153, %v2128
        %v2249 = vmul.f32 %v2153, %v2129
        %v2250 = vadd.f32 %v2182, %v2248
        %v2251 = vadd.f32 %v2183, %v2249
        %v2252 = vmul.f32 %v2167, %v2128
        %v2253 = vmul.f32 %v2167, %v2129
        %v2254 = vadd.f32 %v2186, %v2252
        %v2255 = vadd.f32 %v2187, %v2253
        %v2256 = vmul.f32 %v2013, %v2128
        %v2257 = vmul.f32 %v2013, %v2129
        %2260 = vrot.lane.b32.xlu0 %v2256, 127
        %v2261 = vpop.permute.xlu0 %2260
        %2262 = vrot.lane.b32.xlu0 %v2257, 127
        %v2263 = vpop.permute.xlu0 %2262
        %v2266 = vadd.f32 %v2198, %v2261
        %v2267 = vadd.f32 %v2199, %v2263
        %v2268 = vmul.f32 %v2027, %v2128
        %v2269 = vmul.f32 %v2027, %v2129
        %2272 = vrot.lane.b32.xlu0 %v2268, 127
        %v2273 = vpop.permute.xlu0 %2272
        %2274 = vrot.lane.b32.xlu0 %v2269, 127
        %v2275 = vpop.permute.xlu0 %2274
        %v2278 = vadd.f32 %v2210, %v2273
        %v2279 = vadd.f32 %v2211, %v2275
        %v2280 = vmul.f32 %v1945, %v2128
        %v2281 = vmul.f32 %v1945, %v2129
        %v2282 = vadd.f32 %v2214, %v2280
        %v2283 = vadd.f32 %v2215, %v2281
        %v2284 = vmul.f32 %v1959, %v2128
        %v2285 = vmul.f32 %v1959, %v2129
        %v2286 = vadd.f32 %v2218, %v2284
        %v2287 = vadd.f32 %v2219, %v2285
        %v2288 = vmul.f32 %v2221, %v2150
        %v2289 = vmul.f32 %v2221, %v2151
        %2292 = vrot.lane.b32.xlu0 %v2288, 127
        %v2293 = vpop.permute.xlu0 %2292
        %2294 = vrot.lane.b32.xlu0 %v2289, 127
        %v2295 = vpop.permute.xlu0 %2294
        %v2298 = vadd.f32 %v2250, %v2293
        %v2299 = vadd.f32 %v2251, %v2295
        %v2300 = vmul.f32 %v2235, %v2150
        %v2301 = vmul.f32 %v2235, %v2151
        %2304 = vrot.lane.b32.xlu0 %v2300, 127
        %v2305 = vpop.permute.xlu0 %2304
        %2306 = vrot.lane.b32.xlu0 %v2301, 127
        %v2307 = vpop.permute.xlu0 %2306
        %v2310 = vadd.f32 %v2254, %v2305
        %v2311 = vadd.f32 %v2255, %v2307
        %v2312 = vmul.f32 %v2013, %v2150
        %v2313 = vmul.f32 %v2013, %v2151
        %2316 = vrot.lane.b32.xlu0 %v2312, 127
        %v2317 = vpop.permute.xlu0 %2316
        %2318 = vrot.lane.b32.xlu0 %v2313, 127
        %v2319 = vpop.permute.xlu0 %2318
        %v2322 = vadd.f32 %v2282, %v2317
        %v2323 = vadd.f32 %v2283, %v2319
        %v2324 = vmul.f32 %v2027, %v2150
        %v2325 = vmul.f32 %v2027, %v2151
        %2328 = vrot.lane.b32.xlu0 %v2324, 127
        %v2329 = vpop.permute.xlu0 %2328
        %2330 = vrot.lane.b32.xlu0 %v2325, 127
        %v2331 = vpop.permute.xlu0 %2330
        %v2334 = vadd.f32 %v2286, %v2329
        %v2335 = vadd.f32 %v2287, %v2331
        %v2336 = vld [vmem:[%s1718 + $0x2] sm:$0xff]
        %v2337 = vld [vmem:[%s1718 + $0xa] sm:$0xff]
        %v2338 = vmul.f32 %v2131, %v2336
        %v2339 = vmul.f32 %v2131, %v2337
        %v2340 = vadd.f32 %v2266, %v2338
        %v2341 = vadd.f32 %v2267, %v2339
        %v2342 = vmul.f32 %v2137, %v2336
        %v2343 = vmul.f32 %v2137, %v2337
        %v2344 = vadd.f32 %v2278, %v2342
        %v2345 = vadd.f32 %v2279, %v2343
        %v2346 = vld [vmem:[#allocation3 + $0x2] sm:$0xff]
        %v2347 = vld [vmem:[#allocation3 + $0xa] sm:$0xff]
        %v2348 = vmul.f32 %v2153, %v2346
        %v2349 = vmul.f32 %v2153, %v2347
        %2352 = vrot.lane.b32.xlu0 %v2348, 127
        %v2353 = vpop.permute.xlu0 %2352
        %2354 = vrot.lane.b32.xlu0 %v2349, 127
        %v2355 = vpop.permute.xlu0 %2354
        %v2358 = vadd.f32 %v2340, %v2353
        %v2359 = vadd.f32 %v2341, %v2355
        %v2360 = vmul.f32 %v2167, %v2346
        %v2361 = vmul.f32 %v2167, %v2347
        %2364 = vrot.lane.b32.xlu0 %v2360, 127
        %v2365 = vpop.permute.xlu0 %2364
        %2366 = vrot.lane.b32.xlu0 %v2361, 127
        %v2367 = vpop.permute.xlu0 %2366
        %v2370 = vadd.f32 %v2344, %v2365
        %v2371 = vadd.f32 %v2345, %v2367
        %v2372 = vmul.f32 %v2131, %v2346
        %v2373 = vmul.f32 %v2131, %v2347
        %v2374 = vadd.f32 %v2322, %v2372
        %v2375 = vadd.f32 %v2323, %v2373
        %v2376 = vmul.f32 %v2137, %v2346
        %v2377 = vmul.f32 %v2137, %v2347
        %v2378 = vadd.f32 %v2334, %v2376
        %v2379 = vadd.f32 %v2335, %v2377
        %v2380 = vmul.f32 %v2221, %v2336
        %v2381 = vmul.f32 %v2221, %v2337
        %2384 = vrot.lane.b32.xlu0 %v2380, 127
        %v2385 = vpop.permute.xlu0 %2384
        %2386 = vrot.lane.b32.xlu0 %v2381, 127
        %v2387 = vpop.permute.xlu0 %2386
        %v2390 = vadd.f32 %v2358, %v2385
        %v2391 = vadd.f32 %v2359, %v2387
        %v2392 = vmul.f32 %v2235, %v2336
        %v2393 = vmul.f32 %v2235, %v2337
        %2396 = vrot.lane.b32.xlu0 %v2392, 127
        %v2397 = vpop.permute.xlu0 %2396
        %2398 = vrot.lane.b32.xlu0 %v2393, 127
        %v2399 = vpop.permute.xlu0 %2398
        %v2402 = vadd.f32 %v2370, %v2397
        %v2403 = vadd.f32 %v2371, %v2399
        %v2404 = vmul.f32 %v2153, %v2336
        %v2405 = vmul.f32 %v2153, %v2337
        %v2406 = vadd.f32 %v2374, %v2404
        %v2407 = vadd.f32 %v2375, %v2405
        %v2408 = vmul.f32 %v2167, %v2336
        %v2409 = vmul.f32 %v2167, %v2337
        %v2410 = vadd.f32 %v2378, %v2408
        %v2411 = vadd.f32 %v2379, %v2409
        %v2412 = vmul.f32 %v2221, %v2346
        %v2413 = vmul.f32 %v2221, %v2347
        %2416 = vrot.lane.b32.xlu0 %v2412, 127
        %v2417 = vpop.permute.xlu0 %2416
        %2418 = vrot.lane.b32.xlu0 %v2413, 127
        %v2419 = vpop.permute.xlu0 %2418
        %v2422 = vadd.f32 %v2406, %v2417
        %v2423 = vadd.f32 %v2407, %v2419
        %v2424 = vmul.f32 %v2235, %v2346
        %v2425 = vmul.f32 %v2235, %v2347
        %2428 = vrot.lane.b32.xlu0 %v2424, 127
        %v2429 = vpop.permute.xlu0 %2428
        %2430 = vrot.lane.b32.xlu0 %v2425, 127
        %v2431 = vpop.permute.xlu0 %2430
        %v2434 = vadd.f32 %v2410, %v2429
        %v2435 = vadd.f32 %v2411, %v2431
        %v2436 = vld [vmem:[%s1795] sm:$0xff]
        %v2437 = vld [vmem:[%s1795 + $0x8] sm:$0xff]
        %s2438 = sld [smem:[#allocation11 + $0x9]]
        %v2439 = vstv %s2438
        %v2440 = vmul.f32 %v2439, %v2436
        %v2441 = vmul.f32 %v2439, %v2437
        %v2442 = vadd.f32 %v2232, %v2440
        %v2443 = vadd.f32 %v2233, %v2441
        %s2444 = sld [smem:[#allocation11 + $0x2d]]
        %v2445 = vstv %s2444
        %v2446 = vmul.f32 %v2445, %v2436
        %v2447 = vmul.f32 %v2445, %v2437
        %v2448 = vadd.f32 %v2246, %v2446
        %v2449 = vadd.f32 %v2247, %v2447
        %v2450 = vld [vmem:[%s1759] sm:$0xff]
        %v2451 = vld [vmem:[%s1759 + $0x8] sm:$0xff]
        %s2452 = sld [smem:[#allocation11 + $0xa]]
        %v2453 = vstv %s2452
        %v2454 = vmul.f32 %v2453, %v2450
        %v2455 = vmul.f32 %v2453, %v2451
        %2458 = vrot.lane.b32.xlu0 %v2454, 127
        %v2459 = vpop.permute.xlu0 %2458
        %2460 = vrot.lane.b32.xlu0 %v2455, 127
        %v2461 = vpop.permute.xlu0 %2460
        %v2464 = vadd.f32 %v2442, %v2459
        %v2465 = vadd.f32 %v2443, %v2461
        %s2466 = sld [smem:[#allocation11 + $0x2e]]
        %v2467 = vstv %s2466
        %v2468 = vmul.f32 %v2467, %v2450
        %v2469 = vmul.f32 %v2467, %v2451
        %2472 = vrot.lane.b32.xlu0 %v2468, 127
        %v2473 = vpop.permute.xlu0 %2472
        %2474 = vrot.lane.b32.xlu0 %v2469, 127
        %v2475 = vpop.permute.xlu0 %2474
        %v2478 = vadd.f32 %v2448, %v2473
        %v2479 = vadd.f32 %v2449, %v2475
        %v2480 = vmul.f32 %v2439, %v2450
        %v2481 = vmul.f32 %v2439, %v2451
        %v2482 = vadd.f32 %v2298, %v2480
        %v2483 = vadd.f32 %v2299, %v2481
        %v2484 = vmul.f32 %v2445, %v2450
        %v2485 = vmul.f32 %v2445, %v2451
        %v2486 = vadd.f32 %v2310, %v2484
        %v2487 = vadd.f32 %v2311, %v2485
        %s2488 = sld [smem:[#allocation11 + $0xb]]
        %v2489 = vstv %s2488
        %v2490 = vmul.f32 %v2489, %v2436
        %v2491 = vmul.f32 %v2489, %v2437
        %2494 = vrot.lane.b32.xlu0 %v2490, 127
        %v2495 = vpop.permute.xlu0 %2494
        %2496 = vrot.lane.b32.xlu0 %v2491, 127
        %v2497 = vpop.permute.xlu0 %2496
        %v2500 = vadd.f32 %v2464, %v2495
        %v2501 = vadd.f32 %v2465, %v2497
        %s2502 = sld [smem:[#allocation11 + $0x2f]]
        %v2503 = vstv %s2502
        %v2504 = vmul.f32 %v2503, %v2436
        %v2505 = vmul.f32 %v2503, %v2437
        %2508 = vrot.lane.b32.xlu0 %v2504, 127
        %v2509 = vpop.permute.xlu0 %2508
        %2510 = vrot.lane.b32.xlu0 %v2505, 127
        %v2511 = vpop.permute.xlu0 %2510
        %v2514 = vadd.f32 %v2478, %v2509
        %v2515 = vadd.f32 %v2479, %v2511
        %v2516 = vmul.f32 %v2453, %v2436
        %v2517 = vmul.f32 %v2453, %v2437
        %v2518 = vadd.f32 %v2482, %v2516
        %v2519 = vadd.f32 %v2483, %v2517
        %v2520 = vmul.f32 %v2467, %v2436
        %v2521 = vmul.f32 %v2467, %v2437
        %v2522 = vadd.f32 %v2486, %v2520
        %v2523 = vadd.f32 %v2487, %v2521
        %v2524 = vmul.f32 %v2489, %v2450
        %v2525 = vmul.f32 %v2489, %v2451
        %2528 = vrot.lane.b32.xlu0 %v2524, 127
        %v2529 = vpop.permute.xlu0 %2528
        %2530 = vrot.lane.b32.xlu0 %v2525, 127
        %v2531 = vpop.permute.xlu0 %2530
        %v2534 = vadd.f32 %v2518, %v2529
        %v2535 = vadd.f32 %v2519, %v2531
        %v2536 = vmul.f32 %v2503, %v2450
        %v2537 = vmul.f32 %v2503, %v2451
        %2540 = vrot.lane.b32.xlu0 %v2536, 127
        %v2541 = vpop.permute.xlu0 %2540
        %2542 = vrot.lane.b32.xlu0 %v2537, 127
        %v2543 = vpop.permute.xlu0 %2542
        %v2546 = vadd.f32 %v2522, %v2541
        %v2547 = vadd.f32 %v2523, %v2543
        %v2548 = vld [vmem:[%s1723 + $0x1] sm:$0xff]
        %v2549 = vld [vmem:[%s1723 + $0x9] sm:$0xff]
        %s2550 = sld [smem:[#allocation11 + $0xc]]
        %v2551 = vstv %s2550
        %v2552 = vmul.f32 %v2551, %v2548
        %v2553 = vmul.f32 %v2551, %v2549
        %v2554 = vadd.f32 %v2500, %v2552
        %v2555 = vadd.f32 %v2501, %v2553
        %s2556 = sld [smem:[#allocation11 + $0x30]]
        %v2557 = vstv %s2556
        %v2558 = vmul.f32 %v2557, %v2548
        %v2559 = vmul.f32 %v2557, %v2549
        %v2560 = vadd.f32 %v2514, %v2558
        %v2561 = vadd.f32 %v2515, %v2559
        %v2562 = vmul.f32 %v2439, %v2548
        %v2563 = vmul.f32 %v2439, %v2549
        %v2564 = vadd.f32 %v2390, %v2562
        %v2565 = vadd.f32 %v2391, %v2563
        %v2566 = vmul.f32 %v2445, %v2548
        %v2567 = vmul.f32 %v2445, %v2549
        %v2568 = vadd.f32 %v2402, %v2566
        %v2569 = vadd.f32 %v2403, %v2567
        %v2570 = vld [vmem:[%s1687 + $0x1] sm:$0xff]
        %v2571 = vld [vmem:[%s1687 + $0x9] sm:$0xff]
        %s2572 = sld [smem:[#allocation11 + $0xd]]
        %v2573 = vstv %s2572
        %v2574 = vmul.f32 %v2573, %v2570
        %v2575 = vmul.f32 %v2573, %v2571
        %2578 = vrot.lane.b32.xlu0 %v2574, 127
        %v2579 = vpop.permute.xlu0 %2578
        %2580 = vrot.lane.b32.xlu0 %v2575, 127
        %v2581 = vpop.permute.xlu0 %2580
        %v2584 = vadd.f32 %v2554, %v2579
        %v2585 = vadd.f32 %v2555, %v2581
        %s2586 = sld [smem:[#allocation11 + $0x31]]
        %v2587 = vstv %s2586
        %v2588 = vmul.f32 %v2587, %v2570
        %v2589 = vmul.f32 %v2587, %v2571
        %2592 = vrot.lane.b32.xlu0 %v2588, 127
        %v2593 = vpop.permute.xlu0 %2592
        %2594 = vrot.lane.b32.xlu0 %v2589, 127
        %v2595 = vpop.permute.xlu0 %2594
        %v2598 = vadd.f32 %v2560, %v2593
        %v2599 = vadd.f32 %v2561, %v2595
        %v2600 = vmul.f32 %v2551, %v2570
        %v2601 = vmul.f32 %v2551, %v2571
        %v2602 = vadd.f32 %v2534, %v2600
        %v2603 = vadd.f32 %v2535, %v2601
        %v2604 = vmul.f32 %v2557, %v2570
        %v2605 = vmul.f32 %v2557, %v2571
        %v2606 = vadd.f32 %v2546, %v2604
        %v2607 = vadd.f32 %v2547, %v2605
        %v2608 = vmul.f32 %v2453, %v2570
        %v2609 = vmul.f32 %v2453, %v2571
        %2612 = vrot.lane.b32.xlu0 %v2608, 127
        %v2613 = vpop.permute.xlu0 %2612
        %2614 = vrot.lane.b32.xlu0 %v2609, 127
        %v2615 = vpop.permute.xlu0 %2614
        %v2618 = vadd.f32 %v2564, %v2613
        %v2619 = vadd.f32 %v2565, %v2615
        %v2620 = vmul.f32 %v2467, %v2570
        %v2621 = vmul.f32 %v2467, %v2571
        %2624 = vrot.lane.b32.xlu0 %v2620, 127
        %v2625 = vpop.permute.xlu0 %2624
        %2626 = vrot.lane.b32.xlu0 %v2621, 127
        %v2627 = vpop.permute.xlu0 %2626
        %v2630 = vadd.f32 %v2568, %v2625
        %v2631 = vadd.f32 %v2569, %v2627
        %v2632 = vmul.f32 %v2439, %v2570
        %v2633 = vmul.f32 %v2439, %v2571
        %v2634 = vadd.f32 %v2422, %v2632
        %v2635 = vadd.f32 %v2423, %v2633
        %v2636 = vmul.f32 %v2445, %v2570
        %v2637 = vmul.f32 %v2445, %v2571
        %v2638 = vadd.f32 %v2434, %v2636
        %v2639 = vadd.f32 %v2435, %v2637
        %s2640 = sld [smem:[#allocation11 + $0xe]]
        %v2641 = vstv %s2640
        %v2642 = vmul.f32 %v2641, %v2548
        %v2643 = vmul.f32 %v2641, %v2549
        %2646 = vrot.lane.b32.xlu0 %v2642, 127
        %v2647 = vpop.permute.xlu0 %2646
        %2648 = vrot.lane.b32.xlu0 %v2643, 127
        %v2649 = vpop.permute.xlu0 %2648
        %v2652 = vadd.f32 %v2584, %v2647
        %v2653 = vadd.f32 %v2585, %v2649
        %s2654 = sld [smem:[#allocation11 + $0x32]]
        %v2655 = vstv %s2654
        %v2656 = vmul.f32 %v2655, %v2548
        %v2657 = vmul.f32 %v2655, %v2549
        %2660 = vrot.lane.b32.xlu0 %v2656, 127
        %v2661 = vpop.permute.xlu0 %2660
        %2662 = vrot.lane.b32.xlu0 %v2657, 127
        %v2663 = vpop.permute.xlu0 %2662
        %v2666 = vadd.f32 %v2598, %v2661
        %v2667 = vadd.f32 %v2599, %v2663
        %v2668 = vmul.f32 %v2573, %v2548
        %v2669 = vmul.f32 %v2573, %v2549
        %v2670 = vadd.f32 %v2602, %v2668
        %v2671 = vadd.f32 %v2603, %v2669
        %v2672 = vmul.f32 %v2587, %v2548
        %v2673 = vmul.f32 %v2587, %v2549
        %v2674 = vadd.f32 %v2606, %v2672
        %v2675 = vadd.f32 %v2607, %v2673
        %v2676 = vmul.f32 %v2489, %v2548
        %v2677 = vmul.f32 %v2489, %v2549
        %2680 = vrot.lane.b32.xlu0 %v2676, 127
        %v2681 = vpop.permute.xlu0 %2680
        %2682 = vrot.lane.b32.xlu0 %v2677, 127
        %v2683 = vpop.permute.xlu0 %2682
        %v2686 = vadd.f32 %v2618, %v2681
        %v2687 = vadd.f32 %v2619, %v2683
        %v2688 = vmul.f32 %v2503, %v2548
        %v2689 = vmul.f32 %v2503, %v2549
        %2692 = vrot.lane.b32.xlu0 %v2688, 127
        %v2693 = vpop.permute.xlu0 %2692
        %2694 = vrot.lane.b32.xlu0 %v2689, 127
        %v2695 = vpop.permute.xlu0 %2694
        %v2698 = vadd.f32 %v2630, %v2693
        %v2699 = vadd.f32 %v2631, %v2695
        %v2700 = vmul.f32 %v2453, %v2548
        %v2701 = vmul.f32 %v2453, %v2549
        %v2702 = vadd.f32 %v2634, %v2700
        %v2703 = vadd.f32 %v2635, %v2701
        %v2704 = vmul.f32 %v2467, %v2548
        %v2705 = vmul.f32 %v2467, %v2549
        %v2706 = vadd.f32 %v2638, %v2704
        %v2707 = vadd.f32 %v2639, %v2705
        %v2708 = vmul.f32 %v2641, %v2570
        %v2709 = vmul.f32 %v2641, %v2571
        %2712 = vrot.lane.b32.xlu0 %v2708, 127
        %v2713 = vpop.permute.xlu0 %2712
        %2714 = vrot.lane.b32.xlu0 %v2709, 127
        %v2715 = vpop.permute.xlu0 %2714
        %v2718 = vadd.f32 %v2670, %v2713
        %v2719 = vadd.f32 %v2671, %v2715
        %v2720 = vmul.f32 %v2655, %v2570
        %v2721 = vmul.f32 %v2655, %v2571
        %2724 = vrot.lane.b32.xlu0 %v2720, 127
        %v2725 = vpop.permute.xlu0 %2724
        %2726 = vrot.lane.b32.xlu0 %v2721, 127
        %v2727 = vpop.permute.xlu0 %2726
        %v2730 = vadd.f32 %v2674, %v2725
        %v2731 = vadd.f32 %v2675, %v2727
        %v2732 = vmul.f32 %v2489, %v2570
        %v2733 = vmul.f32 %v2489, %v2571
        %2736 = vrot.lane.b32.xlu0 %v2732, 127
        %v2737 = vpop.permute.xlu0 %2736
        %2738 = vrot.lane.b32.xlu0 %v2733, 127
        %v2739 = vpop.permute.xlu0 %2738
        %v2742 = vadd.f32 %v2702, %v2737
        %v2743 = vadd.f32 %v2703, %v2739
        %v2744 = vmul.f32 %v2503, %v2570
        %v2745 = vmul.f32 %v2503, %v2571
        %2748 = vrot.lane.b32.xlu0 %v2744, 127
        %v2749 = vpop.permute.xlu0 %2748
        %2750 = vrot.lane.b32.xlu0 %v2745, 127
        %v2751 = vpop.permute.xlu0 %2750
        %v2754 = vadd.f32 %v2706, %v2749
        %v2755 = vadd.f32 %v2707, %v2751
        %v2756 = vld [vmem:[%s1795 + $0x1] sm:$0xff]
        %v2757 = vld [vmem:[%s1795 + $0x9] sm:$0xff]
        %s2758 = sld [smem:[#allocation11 + $0xf]]
        %v2759 = vstv %s2758
        %v2760 = vmul.f32 %v2759, %v2756
        %v2761 = vmul.f32 %v2759, %v2757
        %v2762 = vadd.f32 %v2652, %v2760
        %v2763 = vadd.f32 %v2653, %v2761
        %s2764 = sld [smem:[#allocation11 + $0x33]]
        %v2765 = vstv %s2764
        %v2766 = vmul.f32 %v2765, %v2756
        %v2767 = vmul.f32 %v2765, %v2757
        %v2768 = vadd.f32 %v2666, %v2766
        %v2769 = vadd.f32 %v2667, %v2767
        %v2770 = vmul.f32 %v2551, %v2756
        %v2771 = vmul.f32 %v2551, %v2757
        %v2772 = vadd.f32 %v2686, %v2770
        %v2773 = vadd.f32 %v2687, %v2771
        %v2774 = vmul.f32 %v2557, %v2756
        %v2775 = vmul.f32 %v2557, %v2757
        %v2776 = vadd.f32 %v2698, %v2774
        %v2777 = vadd.f32 %v2699, %v2775
        %v2778 = vld [vmem:[%s1759 + $0x1] sm:$0xff]
        %v2779 = vld [vmem:[%s1759 + $0x9] sm:$0xff]
        %s2780 = sld [smem:[#allocation11 + $0x10]]
        %v2781 = vstv %s2780
        %v2782 = vmul.f32 %v2781, %v2778
        %v2783 = vmul.f32 %v2781, %v2779
        %2786 = vrot.lane.b32.xlu0 %v2782, 127
        %v2787 = vpop.permute.xlu0 %2786
        %2788 = vrot.lane.b32.xlu0 %v2783, 127
        %v2789 = vpop.permute.xlu0 %2788
        %v2792 = vadd.f32 %v2762, %v2787
        %v2793 = vadd.f32 %v2763, %v2789
        %s2794 = sld [smem:[#allocation11 + $0x34]]
        %v2795 = vstv %s2794
        %v2796 = vmul.f32 %v2795, %v2778
        %v2797 = vmul.f32 %v2795, %v2779
        %2800 = vrot.lane.b32.xlu0 %v2796, 127
        %v2801 = vpop.permute.xlu0 %2800
        %2802 = vrot.lane.b32.xlu0 %v2797, 127
        %v2803 = vpop.permute.xlu0 %2802
        %v2806 = vadd.f32 %v2768, %v2801
        %v2807 = vadd.f32 %v2769, %v2803
        %v2808 = vmul.f32 %v2759, %v2778
        %v2809 = vmul.f32 %v2759, %v2779
        %v2810 = vadd.f32 %v2718, %v2808
        %v2811 = vadd.f32 %v2719, %v2809
        %v2812 = vmul.f32 %v2765, %v2778
        %v2813 = vmul.f32 %v2765, %v2779
        %v2814 = vadd.f32 %v2730, %v2812
        %v2815 = vadd.f32 %v2731, %v2813
        %v2816 = vmul.f32 %v2573, %v2778
        %v2817 = vmul.f32 %v2573, %v2779
        %2820 = vrot.lane.b32.xlu0 %v2816, 127
        %v2821 = vpop.permute.xlu0 %2820
        %2822 = vrot.lane.b32.xlu0 %v2817, 127
        %v2823 = vpop.permute.xlu0 %2822
        %v2826 = vadd.f32 %v2772, %v2821
        %v2827 = vadd.f32 %v2773, %v2823
        %v2828 = vmul.f32 %v2587, %v2778
        %v2829 = vmul.f32 %v2587, %v2779
        %2832 = vrot.lane.b32.xlu0 %v2828, 127
        %v2833 = vpop.permute.xlu0 %2832
        %2834 = vrot.lane.b32.xlu0 %v2829, 127
        %v2835 = vpop.permute.xlu0 %2834
        %v2838 = vadd.f32 %v2776, %v2833
        %v2839 = vadd.f32 %v2777, %v2835
        %v2840 = vmul.f32 %v2551, %v2778
        %v2841 = vmul.f32 %v2551, %v2779
        %v2842 = vadd.f32 %v2742, %v2840
        %v2843 = vadd.f32 %v2743, %v2841
        %v2844 = vmul.f32 %v2557, %v2778
        %v2845 = vmul.f32 %v2557, %v2779
        %v2846 = vadd.f32 %v2754, %v2844
        %v2847 = vadd.f32 %v2755, %v2845
        %s2848 = sld [smem:[#allocation11 + $0x11]]
        %v2849 = vstv %s2848
        %v2850 = vmul.f32 %v2849, %v2756
        %v2851 = vmul.f32 %v2849, %v2757
        %2854 = vrot.lane.b32.xlu0 %v2850, 127
        %v2855 = vpop.permute.xlu0 %2854
        %2856 = vrot.lane.b32.xlu0 %v2851, 127
        %v2857 = vpop.permute.xlu0 %2856
        %v2860 = vadd.f32 %v2792, %v2855
        %v2861 = vadd.f32 %v2793, %v2857
        %s2862 = sld [smem:[#allocation11 + $0x35]]
        %v2863 = vstv %s2862
        %v2864 = vmul.f32 %v2863, %v2756
        %v2865 = vmul.f32 %v2863, %v2757
        %2868 = vrot.lane.b32.xlu0 %v2864, 127
        %v2869 = vpop.permute.xlu0 %2868
        %2870 = vrot.lane.b32.xlu0 %v2865, 127
        %v2871 = vpop.permute.xlu0 %2870
        %v2874 = vadd.f32 %v2806, %v2869
        %v2875 = vadd.f32 %v2807, %v2871
        %v2876 = vmul.f32 %v2781, %v2756
        %v2877 = vmul.f32 %v2781, %v2757
        %v2878 = vadd.f32 %v2810, %v2876
        %v2879 = vadd.f32 %v2811, %v2877
        %v2880 = vmul.f32 %v2795, %v2756
        %v2881 = vmul.f32 %v2795, %v2757
        %v2882 = vadd.f32 %v2814, %v2880
        %v2883 = vadd.f32 %v2815, %v2881
        %v2884 = vmul.f32 %v2641, %v2756
        %v2885 = vmul.f32 %v2641, %v2757
        %2888 = vrot.lane.b32.xlu0 %v2884, 127
        %v2889 = vpop.permute.xlu0 %2888
        %2890 = vrot.lane.b32.xlu0 %v2885, 127
        %v2891 = vpop.permute.xlu0 %2890
        %v2894 = vadd.f32 %v2826, %v2889
        %v2895 = vadd.f32 %v2827, %v2891
        %v2896 = vmul.f32 %v2655, %v2756
        %v2897 = vmul.f32 %v2655, %v2757
        %2900 = vrot.lane.b32.xlu0 %v2896, 127
        %v2901 = vpop.permute.xlu0 %2900
        %2902 = vrot.lane.b32.xlu0 %v2897, 127
        %v2903 = vpop.permute.xlu0 %2902
        %v2906 = vadd.f32 %v2838, %v2901
        %v2907 = vadd.f32 %v2839, %v2903
        %v2908 = vmul.f32 %v2573, %v2756
        %v2909 = vmul.f32 %v2573, %v2757
        %v2910 = vadd.f32 %v2842, %v2908
        %v2911 = vadd.f32 %v2843, %v2909
        %v2912 = vmul.f32 %v2587, %v2756
        %v2913 = vmul.f32 %v2587, %v2757
        %v2914 = vadd.f32 %v2846, %v2912
        %v2915 = vadd.f32 %v2847, %v2913
        %v2916 = vmul.f32 %v2849, %v2778
        %v2917 = vmul.f32 %v2849, %v2779
        %2920 = vrot.lane.b32.xlu0 %v2916, 127
        %v2921 = vpop.permute.xlu0 %2920
        %2922 = vrot.lane.b32.xlu0 %v2917, 127
        %v2923 = vpop.permute.xlu0 %2922
        %v2926 = vadd.f32 %v2878, %v2921
        %v2927 = vadd.f32 %v2879, %v2923
        %v2928 = vmul.f32 %v2863, %v2778
        %v2929 = vmul.f32 %v2863, %v2779
        %2932 = vrot.lane.b32.xlu0 %v2928, 127
        %v2933 = vpop.permute.xlu0 %2932
        %2934 = vrot.lane.b32.xlu0 %v2929, 127
        %v2935 = vpop.permute.xlu0 %2934
        %v2938 = vadd.f32 %v2882, %v2933
        %v2939 = vadd.f32 %v2883, %v2935
        %v2940 = vmul.f32 %v2641, %v2778
        %v2941 = vmul.f32 %v2641, %v2779
        %2944 = vrot.lane.b32.xlu0 %v2940, 127
        %v2945 = vpop.permute.xlu0 %2944
        %2946 = vrot.lane.b32.xlu0 %v2941, 127
        %v2947 = vpop.permute.xlu0 %2946
        %v2950 = vadd.f32 %v2910, %v2945
        %v2951 = vadd.f32 %v2911, %v2947
        %v2952 = vmul.f32 %v2655, %v2778
        %v2953 = vmul.f32 %v2655, %v2779
        %2956 = vrot.lane.b32.xlu0 %v2952, 127
        %v2957 = vpop.permute.xlu0 %2956
        %2958 = vrot.lane.b32.xlu0 %v2953, 127
        %v2959 = vpop.permute.xlu0 %2958
        %v2962 = vadd.f32 %v2914, %v2957
        %v2963 = vadd.f32 %v2915, %v2959
        %v2964 = vld [vmem:[%s1723 + $0x2] sm:$0xff]
        %v2965 = vld [vmem:[%s1723 + $0xa] sm:$0xff]
        %v2966 = vmul.f32 %v2759, %v2964
        %v2967 = vmul.f32 %v2759, %v2965
        %v2968 = vadd.f32 %v2894, %v2966
        %v2969 = vadd.f32 %v2895, %v2967
        %v2970 = vmul.f32 %v2765, %v2964
        %v2971 = vmul.f32 %v2765, %v2965
        %v2972 = vadd.f32 %v2906, %v2970
        %v2973 = vadd.f32 %v2907, %v2971
        %v2974 = vld [vmem:[%s1687 + $0x2] sm:$0xff]
        %v2975 = vld [vmem:[%s1687 + $0xa] sm:$0xff]
        %v2976 = vmul.f32 %v2781, %v2974
        %v2977 = vmul.f32 %v2781, %v2975
        %2980 = vrot.lane.b32.xlu0 %v2976, 127
        %v2981 = vpop.permute.xlu0 %2980
        %2982 = vrot.lane.b32.xlu0 %v2977, 127
        %v2983 = vpop.permute.xlu0 %2982
        %v2986 = vadd.f32 %v2968, %v2981
        %v2987 = vadd.f32 %v2969, %v2983
        %v2988 = vmul.f32 %v2795, %v2974
        %v2989 = vmul.f32 %v2795, %v2975
        %2992 = vrot.lane.b32.xlu0 %v2988, 127
        %v2993 = vpop.permute.xlu0 %2992
        %2994 = vrot.lane.b32.xlu0 %v2989, 127
        %v2995 = vpop.permute.xlu0 %2994
        %v2998 = vadd.f32 %v2972, %v2993
        %v2999 = vadd.f32 %v2973, %v2995
        %v3000 = vmul.f32 %v2759, %v2974
        %v3001 = vmul.f32 %v2759, %v2975
        %v3002 = vadd.f32 %v2950, %v3000
        %v3003 = vadd.f32 %v2951, %v3001
        %v3004 = vmul.f32 %v2765, %v2974
        %v3005 = vmul.f32 %v2765, %v2975
        %v3006 = vadd.f32 %v2962, %v3004
        %v3007 = vadd.f32 %v2963, %v3005
        %v3008 = vmul.f32 %v2849, %v2964
        %v3009 = vmul.f32 %v2849, %v2965
        %3012 = vrot.lane.b32.xlu0 %v3008, 127
        %v3013 = vpop.permute.xlu0 %3012
        %3014 = vrot.lane.b32.xlu0 %v3009, 127
        %v3015 = vpop.permute.xlu0 %3014
        %v3018 = vadd.f32 %v2986, %v3013
        %v3019 = vadd.f32 %v2987, %v3015
        %v3020 = vmul.f32 %v2863, %v2964
        %v3021 = vmul.f32 %v2863, %v2965
        %3024 = vrot.lane.b32.xlu0 %v3020, 127
        %v3025 = vpop.permute.xlu0 %3024
        %3026 = vrot.lane.b32.xlu0 %v3021, 127
        %v3027 = vpop.permute.xlu0 %3026
        %v3030 = vadd.f32 %v2998, %v3025
        %v3031 = vadd.f32 %v2999, %v3027
        %v3032 = vmul.f32 %v2781, %v2964
        %v3033 = vmul.f32 %v2781, %v2965
        %v3034 = vadd.f32 %v3002, %v3032
        %v3035 = vadd.f32 %v3003, %v3033
        %v3036 = vmul.f32 %v2795, %v2964
        %v3037 = vmul.f32 %v2795, %v2965
        %v3038 = vadd.f32 %v3006, %v3036
        %v3039 = vadd.f32 %v3007, %v3037
        %v3040 = vmul.f32 %v2849, %v2974
        %v3041 = vmul.f32 %v2849, %v2975
        %3044 = vrot.lane.b32.xlu0 %v3040, 127
        %v3045 = vpop.permute.xlu0 %3044
        %3046 = vrot.lane.b32.xlu0 %v3041, 127
        %v3047 = vpop.permute.xlu0 %3046
        %v3050 = vadd.f32 %v3034, %v3045
        %v3051 = vadd.f32 %v3035, %v3047
        %v3052 = vmul.f32 %v2863, %v2974
        %v3053 = vmul.f32 %v2863, %v2975
        %3056 = vrot.lane.b32.xlu0 %v3052, 127
        %v3057 = vpop.permute.xlu0 %3056
        %3058 = vrot.lane.b32.xlu0 %v3053, 127
        %v3059 = vpop.permute.xlu0 %3058
        %v3062 = vadd.f32 %v3038, %v3057
        %v3063 = vadd.f32 %v3039, %v3059
        %v3064 = vld [vmem:[%s1800] sm:$0xff]
        %v3065 = vld [vmem:[%s1800 + $0x8] sm:$0xff]
        %s3066 = sld [smem:[#allocation11 + $0x12]]
        %v3067 = vstv %s3066
        %v3068 = vmul.f32 %v3067, %v3064
        %v3069 = vmul.f32 %v3067, %v3065
        %v3070 = vadd.f32 %v2860, %v3068
        %v3071 = vadd.f32 %v2861, %v3069
        %s3072 = sld [smem:[#allocation11 + $0x36]]
        %v3073 = vstv %s3072
        %v3074 = vmul.f32 %v3073, %v3064
        %v3075 = vmul.f32 %v3073, %v3065
        %v3076 = vadd.f32 %v2874, %v3074
        %v3077 = vadd.f32 %v2875, %v3075
        %v3078 = vld [vmem:[%s1772] sm:$0xff]
        %v3079 = vld [vmem:[%s1772 + $0x8] sm:$0xff]
        %s3080 = sld [smem:[#allocation11 + $0x13]]
        %v3081 = vstv %s3080
        %v3082 = vmul.f32 %v3081, %v3078
        %v3083 = vmul.f32 %v3081, %v3079
        %3086 = vrot.lane.b32.xlu0 %v3082, 127
        %v3087 = vpop.permute.xlu0 %3086
        %3088 = vrot.lane.b32.xlu0 %v3083, 127
        %v3089 = vpop.permute.xlu0 %3088
        %v3092 = vadd.f32 %v3070, %v3087
        %v3093 = vadd.f32 %v3071, %v3089
        %s3094 = sld [smem:[#allocation11 + $0x37]]
        %v3095 = vstv %s3094
        %v3096 = vmul.f32 %v3095, %v3078
        %v3097 = vmul.f32 %v3095, %v3079
        %3100 = vrot.lane.b32.xlu0 %v3096, 127
        %v3101 = vpop.permute.xlu0 %3100
        %3102 = vrot.lane.b32.xlu0 %v3097, 127
        %v3103 = vpop.permute.xlu0 %3102
        %v3106 = vadd.f32 %v3076, %v3101
        %v3107 = vadd.f32 %v3077, %v3103
        %v3108 = vmul.f32 %v3067, %v3078
        %v3109 = vmul.f32 %v3067, %v3079
        %v3110 = vadd.f32 %v2926, %v3108
        %v3111 = vadd.f32 %v2927, %v3109
        %v3112 = vmul.f32 %v3073, %v3078
        %v3113 = vmul.f32 %v3073, %v3079
        %v3114 = vadd.f32 %v2938, %v3112
        %v3115 = vadd.f32 %v2939, %v3113
        %s3116 = sld [smem:[#allocation11 + $0x14]]
        %v3117 = vstv %s3116
        %v3118 = vmul.f32 %v3117, %v3064
        %v3119 = vmul.f32 %v3117, %v3065
        %3122 = vrot.lane.b32.xlu0 %v3118, 127
        %v3123 = vpop.permute.xlu0 %3122
        %3124 = vrot.lane.b32.xlu0 %v3119, 127
        %v3125 = vpop.permute.xlu0 %3124
        %v3128 = vadd.f32 %v3092, %v3123
        %v3129 = vadd.f32 %v3093, %v3125
        %s3130 = sld [smem:[#allocation11 + $0x38]]
        %v3131 = vstv %s3130
        %v3132 = vmul.f32 %v3131, %v3064
        %v3133 = vmul.f32 %v3131, %v3065
        %3136 = vrot.lane.b32.xlu0 %v3132, 127
        %v3137 = vpop.permute.xlu0 %3136
        %3138 = vrot.lane.b32.xlu0 %v3133, 127
        %v3139 = vpop.permute.xlu0 %3138
        %v3142 = vadd.f32 %v3106, %v3137
        %v3143 = vadd.f32 %v3107, %v3139
        %v3144 = vmul.f32 %v3081, %v3064
        %v3145 = vmul.f32 %v3081, %v3065
        %v3146 = vadd.f32 %v3110, %v3144
        %v3147 = vadd.f32 %v3111, %v3145
        %v3148 = vmul.f32 %v3095, %v3064
        %v3149 = vmul.f32 %v3095, %v3065
        %v3150 = vadd.f32 %v3114, %v3148
        %v3151 = vadd.f32 %v3115, %v3149
        %v3152 = vmul.f32 %v3117, %v3078
        %v3153 = vmul.f32 %v3117, %v3079
        %3156 = vrot.lane.b32.xlu0 %v3152, 127
        %v3157 = vpop.permute.xlu0 %3156
        %3158 = vrot.lane.b32.xlu0 %v3153, 127
        %v3159 = vpop.permute.xlu0 %3158
        %v3162 = vadd.f32 %v3146, %v3157
        %v3163 = vadd.f32 %v3147, %v3159
        %v3164 = vmul.f32 %v3131, %v3078
        %v3165 = vmul.f32 %v3131, %v3079
        %3168 = vrot.lane.b32.xlu0 %v3164, 127
        %v3169 = vpop.permute.xlu0 %3168
        %3170 = vrot.lane.b32.xlu0 %v3165, 127
        %v3171 = vpop.permute.xlu0 %3170
        %v3174 = vadd.f32 %v3150, %v3169
        %v3175 = vadd.f32 %v3151, %v3171
        %v3176 = vld [vmem:[%s1728 + $0x1] sm:$0xff]
        %v3177 = vld [vmem:[%s1728 + $0x9] sm:$0xff]
        %s3178 = sld [smem:[#allocation11 + $0x15]]
        %v3179 = vstv %s3178
        %v3180 = vmul.f32 %v3179, %v3176
        %v3181 = vmul.f32 %v3179, %v3177
        %v3182 = vadd.f32 %v3128, %v3180
        %v3183 = vadd.f32 %v3129, %v3181
        %s3184 = sld [smem:[#allocation11 + $0x39]]
        %v3185 = vstv %s3184
        %v3186 = vmul.f32 %v3185, %v3176
        %v3187 = vmul.f32 %v3185, %v3177
        %v3188 = vadd.f32 %v3142, %v3186
        %v3189 = vadd.f32 %v3143, %v3187
        %v3190 = vmul.f32 %v3067, %v3176
        %v3191 = vmul.f32 %v3067, %v3177
        %v3192 = vadd.f32 %v3018, %v3190
        %v3193 = vadd.f32 %v3019, %v3191
        %v3194 = vmul.f32 %v3073, %v3176
        %v3195 = vmul.f32 %v3073, %v3177
        %v3196 = vadd.f32 %v3030, %v3194
        %v3197 = vadd.f32 %v3031, %v3195
        %v3198 = vld [vmem:[%s1700 + $0x1] sm:$0xff]
        %v3199 = vld [vmem:[%s1700 + $0x9] sm:$0xff]
        %s3200 = sld [smem:[#allocation11 + $0x16]]
        %v3201 = vstv %s3200
        %v3202 = vmul.f32 %v3201, %v3198
        %v3203 = vmul.f32 %v3201, %v3199
        %3206 = vrot.lane.b32.xlu0 %v3202, 127
        %v3207 = vpop.permute.xlu0 %3206
        %3208 = vrot.lane.b32.xlu0 %v3203, 127
        %v3209 = vpop.permute.xlu0 %3208
        %v3212 = vadd.f32 %v3182, %v3207
        %v3213 = vadd.f32 %v3183, %v3209
        %s3214 = sld [smem:[#allocation11 + $0x3a]]
        %v3215 = vstv %s3214
        %v3216 = vmul.f32 %v3215, %v3198
        %v3217 = vmul.f32 %v3215, %v3199
        %3220 = vrot.lane.b32.xlu0 %v3216, 127
        %v3221 = vpop.permute.xlu0 %3220
        %3222 = vrot.lane.b32.xlu0 %v3217, 127
        %v3223 = vpop.permute.xlu0 %3222
        %v3226 = vadd.f32 %v3188, %v3221
        %v3227 = vadd.f32 %v3189, %v3223
        %v3228 = vmul.f32 %v3179, %v3198
        %v3229 = vmul.f32 %v3179, %v3199
        %v3230 = vadd.f32 %v3162, %v3228
        %v3231 = vadd.f32 %v3163, %v3229
        %v3232 = vmul.f32 %v3185, %v3198
        %v3233 = vmul.f32 %v3185, %v3199
        %v3234 = vadd.f32 %v3174, %v3232
        %v3235 = vadd.f32 %v3175, %v3233
        %v3236 = vmul.f32 %v3081, %v3198
        %v3237 = vmul.f32 %v3081, %v3199
        %3240 = vrot.lane.b32.xlu0 %v3236, 127
        %v3241 = vpop.permute.xlu0 %3240
        %3242 = vrot.lane.b32.xlu0 %v3237, 127
        %v3243 = vpop.permute.xlu0 %3242
        %v3246 = vadd.f32 %v3192, %v3241
        %v3247 = vadd.f32 %v3193, %v3243
        %v3248 = vmul.f32 %v3095, %v3198
        %v3249 = vmul.f32 %v3095, %v3199
        %3252 = vrot.lane.b32.xlu0 %v3248, 127
        %v3253 = vpop.permute.xlu0 %3252
        %3254 = vrot.lane.b32.xlu0 %v3249, 127
        %v3255 = vpop.permute.xlu0 %3254
        %v3258 = vadd.f32 %v3196, %v3253
        %v3259 = vadd.f32 %v3197, %v3255
        %v3260 = vmul.f32 %v3067, %v3198
        %v3261 = vmul.f32 %v3067, %v3199
        %v3262 = vadd.f32 %v3050, %v3260
        %v3263 = vadd.f32 %v3051, %v3261
        %v3264 = vmul.f32 %v3073, %v3198
        %v3265 = vmul.f32 %v3073, %v3199
        %v3266 = vadd.f32 %v3062, %v3264
        %v3267 = vadd.f32 %v3063, %v3265
        %s3268 = sld [smem:[#allocation11 + $0x17]]
        %v3269 = vstv %s3268
        %v3270 = vmul.f32 %v3269, %v3176
        %v3271 = vmul.f32 %v3269, %v3177
        %3274 = vrot.lane.b32.xlu0 %v3270, 127
        %v3275 = vpop.permute.xlu0 %3274
        %3276 = vrot.lane.b32.xlu0 %v3271, 127
        %v3277 = vpop.permute.xlu0 %3276
        %v3280 = vadd.f32 %v3212, %v3275
        %v3281 = vadd.f32 %v3213, %v3277
        %s3282 = sld [smem:[#allocation11 + $0x3b]]
        %v3283 = vstv %s3282
        %v3284 = vmul.f32 %v3283, %v3176
        %v3285 = vmul.f32 %v3283, %v3177
        %3288 = vrot.lane.b32.xlu0 %v3284, 127
        %v3289 = vpop.permute.xlu0 %3288
        %3290 = vrot.lane.b32.xlu0 %v3285, 127
        %v3291 = vpop.permute.xlu0 %3290
        %v3294 = vadd.f32 %v3226, %v3289
        %v3295 = vadd.f32 %v3227, %v3291
        %v3296 = vmul.f32 %v3201, %v3176
        %v3297 = vmul.f32 %v3201, %v3177
        %v3298 = vadd.f32 %v3230, %v3296
        %v3299 = vadd.f32 %v3231, %v3297
        %v3300 = vmul.f32 %v3215, %v3176
        %v3301 = vmul.f32 %v3215, %v3177
        %v3302 = vadd.f32 %v3234, %v3300
        %v3303 = vadd.f32 %v3235, %v3301
        %v3304 = vmul.f32 %v3117, %v3176
        %v3305 = vmul.f32 %v3117, %v3177
        %3308 = vrot.lane.b32.xlu0 %v3304, 127
        %v3309 = vpop.permute.xlu0 %3308
        %3310 = vrot.lane.b32.xlu0 %v3305, 127
        %v3311 = vpop.permute.xlu0 %3310
        %v3314 = vadd.f32 %v3246, %v3309
        %v3315 = vadd.f32 %v3247, %v3311
        %v3316 = vmul.f32 %v3131, %v3176
        %v3317 = vmul.f32 %v3131, %v3177
        %3320 = vrot.lane.b32.xlu0 %v3316, 127
        %v3321 = vpop.permute.xlu0 %3320
        %3322 = vrot.lane.b32.xlu0 %v3317, 127
        %v3323 = vpop.permute.xlu0 %3322
        %v3326 = vadd.f32 %v3258, %v3321
        %v3327 = vadd.f32 %v3259, %v3323
        %v3328 = vmul.f32 %v3081, %v3176
        %v3329 = vmul.f32 %v3081, %v3177
        %v3330 = vadd.f32 %v3262, %v3328
        %v3331 = vadd.f32 %v3263, %v3329
        %v3332 = vmul.f32 %v3095, %v3176
        %v3333 = vmul.f32 %v3095, %v3177
        %v3334 = vadd.f32 %v3266, %v3332
        %v3335 = vadd.f32 %v3267, %v3333
        %v3336 = vmul.f32 %v3269, %v3198
        %v3337 = vmul.f32 %v3269, %v3199
        %3340 = vrot.lane.b32.xlu0 %v3336, 127
        %v3341 = vpop.permute.xlu0 %3340
        %3342 = vrot.lane.b32.xlu0 %v3337, 127
        %v3343 = vpop.permute.xlu0 %3342
        %v3346 = vadd.f32 %v3298, %v3341
        %v3347 = vadd.f32 %v3299, %v3343
        %v3348 = vmul.f32 %v3283, %v3198
        %v3349 = vmul.f32 %v3283, %v3199
        %3352 = vrot.lane.b32.xlu0 %v3348, 127
        %v3353 = vpop.permute.xlu0 %3352
        %3354 = vrot.lane.b32.xlu0 %v3349, 127
        %v3355 = vpop.permute.xlu0 %3354
        %v3358 = vadd.f32 %v3302, %v3353
        %v3359 = vadd.f32 %v3303, %v3355
        %v3360 = vmul.f32 %v3117, %v3198
        %v3361 = vmul.f32 %v3117, %v3199
        %3364 = vrot.lane.b32.xlu0 %v3360, 127
        %v3365 = vpop.permute.xlu0 %3364
        %3366 = vrot.lane.b32.xlu0 %v3361, 127
        %v3367 = vpop.permute.xlu0 %3366
        %v3370 = vadd.f32 %v3330, %v3365
        %v3371 = vadd.f32 %v3331, %v3367
        %v3372 = vmul.f32 %v3131, %v3198
        %v3373 = vmul.f32 %v3131, %v3199
        %3376 = vrot.lane.b32.xlu0 %v3372, 127
        %v3377 = vpop.permute.xlu0 %3376
        %3378 = vrot.lane.b32.xlu0 %v3373, 127
        %v3379 = vpop.permute.xlu0 %3378
        %v3382 = vadd.f32 %v3334, %v3377
        %v3383 = vadd.f32 %v3335, %v3379
        %v3384 = vld [vmem:[%s1800 + $0x1] sm:$0xff]
        %v3385 = vld [vmem:[%s1800 + $0x9] sm:$0xff]
        %s3386 = sld [smem:[#allocation11 + $0x18]]
        %v3387 = vstv %s3386
        %v3388 = vmul.f32 %v3387, %v3384
        %v3389 = vmul.f32 %v3387, %v3385
        %v3390 = vadd.f32 %v3280, %v3388
        %v3391 = vadd.f32 %v3281, %v3389
        %s3392 = sld [smem:[#allocation11 + $0x3c]]
        %v3393 = vstv %s3392
        %v3394 = vmul.f32 %v3393, %v3384
        %v3395 = vmul.f32 %v3393, %v3385
        %v3396 = vadd.f32 %v3294, %v3394
        %v3397 = vadd.f32 %v3295, %v3395
        %v3398 = vmul.f32 %v3179, %v3384
        %v3399 = vmul.f32 %v3179, %v3385
        %v3400 = vadd.f32 %v3314, %v3398
        %v3401 = vadd.f32 %v3315, %v3399
        %v3402 = vmul.f32 %v3185, %v3384
        %v3403 = vmul.f32 %v3185, %v3385
        %v3404 = vadd.f32 %v3326, %v3402
        %v3405 = vadd.f32 %v3327, %v3403
        %v3406 = vld [vmem:[%s1772 + $0x1] sm:$0xff]
        %v3407 = vld [vmem:[%s1772 + $0x9] sm:$0xff]
        %s3408 = sld [smem:[#allocation11 + $0x19]]
        %v3409 = vstv %s3408
        %v3410 = vmul.f32 %v3409, %v3406
        %v3411 = vmul.f32 %v3409, %v3407
        %3414 = vrot.lane.b32.xlu0 %v3410, 127
        %v3415 = vpop.permute.xlu0 %3414
        %3416 = vrot.lane.b32.xlu0 %v3411, 127
        %v3417 = vpop.permute.xlu0 %3416
        %v3420 = vadd.f32 %v3390, %v3415
        %v3421 = vadd.f32 %v3391, %v3417
        %s3422 = sld [smem:[#allocation11 + $0x3d]]
        %v3423 = vstv %s3422
        %v3424 = vmul.f32 %v3423, %v3406
        %v3425 = vmul.f32 %v3423, %v3407
        %3428 = vrot.lane.b32.xlu0 %v3424, 127
        %v3429 = vpop.permute.xlu0 %3428
        %3430 = vrot.lane.b32.xlu0 %v3425, 127
        %v3431 = vpop.permute.xlu0 %3430
        %v3434 = vadd.f32 %v3396, %v3429
        %v3435 = vadd.f32 %v3397, %v3431
        %v3436 = vmul.f32 %v3387, %v3406
        %v3437 = vmul.f32 %v3387, %v3407
        %v3438 = vadd.f32 %v3346, %v3436
        %v3439 = vadd.f32 %v3347, %v3437
        %v3440 = vmul.f32 %v3393, %v3406
        %v3441 = vmul.f32 %v3393, %v3407
        %v3442 = vadd.f32 %v3358, %v3440
        %v3443 = vadd.f32 %v3359, %v3441
        %v3444 = vmul.f32 %v3201, %v3406
        %v3445 = vmul.f32 %v3201, %v3407
        %3448 = vrot.lane.b32.xlu0 %v3444, 127
        %v3449 = vpop.permute.xlu0 %3448
        %3450 = vrot.lane.b32.xlu0 %v3445, 127
        %v3451 = vpop.permute.xlu0 %3450
        %v3454 = vadd.f32 %v3400, %v3449
        %v3455 = vadd.f32 %v3401, %v3451
        %v3456 = vmul.f32 %v3215, %v3406
        %v3457 = vmul.f32 %v3215, %v3407
        %3460 = vrot.lane.b32.xlu0 %v3456, 127
        %v3461 = vpop.permute.xlu0 %3460
        %3462 = vrot.lane.b32.xlu0 %v3457, 127
        %v3463 = vpop.permute.xlu0 %3462
        %v3466 = vadd.f32 %v3404, %v3461
        %v3467 = vadd.f32 %v3405, %v3463
        %v3468 = vmul.f32 %v3179, %v3406
        %v3469 = vmul.f32 %v3179, %v3407
        %v3470 = vadd.f32 %v3370, %v3468
        %v3471 = vadd.f32 %v3371, %v3469
        %v3472 = vmul.f32 %v3185, %v3406
        %v3473 = vmul.f32 %v3185, %v3407
        %v3474 = vadd.f32 %v3382, %v3472
        %v3475 = vadd.f32 %v3383, %v3473
        %s3476 = sld [smem:[#allocation11 + $0x1a]]
        %v3477 = vstv %s3476
        %v3478 = vmul.f32 %v3477, %v3384
        %v3479 = vmul.f32 %v3477, %v3385
        %3482 = vrot.lane.b32.xlu0 %v3478, 127
        %v3483 = vpop.permute.xlu0 %3482
        %3484 = vrot.lane.b32.xlu0 %v3479, 127
        %v3485 = vpop.permute.xlu0 %3484
        %v3488 = vadd.f32 %v3420, %v3483
        %v3489 = vadd.f32 %v3421, %v3485
        %s3490 = sld [smem:[#allocation11 + $0x3e]]
        %v3491 = vstv %s3490
        %v3492 = vmul.f32 %v3491, %v3384
        %v3493 = vmul.f32 %v3491, %v3385
        %3496 = vrot.lane.b32.xlu0 %v3492, 127
        %v3497 = vpop.permute.xlu0 %3496
        %3498 = vrot.lane.b32.xlu0 %v3493, 127
        %v3499 = vpop.permute.xlu0 %3498
        %v3502 = vadd.f32 %v3434, %v3497
        %v3503 = vadd.f32 %v3435, %v3499
        %v3504 = vmul.f32 %v3409, %v3384
        %v3505 = vmul.f32 %v3409, %v3385
        %v3506 = vadd.f32 %v3438, %v3504
        %v3507 = vadd.f32 %v3439, %v3505
        %v3508 = vmul.f32 %v3423, %v3384
        %v3509 = vmul.f32 %v3423, %v3385
        %v3510 = vadd.f32 %v3442, %v3508
        %v3511 = vadd.f32 %v3443, %v3509
        %v3512 = vmul.f32 %v3269, %v3384
        %v3513 = vmul.f32 %v3269, %v3385
        %3516 = vrot.lane.b32.xlu0 %v3512, 127
        %v3517 = vpop.permute.xlu0 %3516
        %3518 = vrot.lane.b32.xlu0 %v3513, 127
        %v3519 = vpop.permute.xlu0 %3518
        %v3522 = vadd.f32 %v3454, %v3517
        %v3523 = vadd.f32 %v3455, %v3519
        %v3524 = vmul.f32 %v3283, %v3384
        %v3525 = vmul.f32 %v3283, %v3385
        %3528 = vrot.lane.b32.xlu0 %v3524, 127
        %v3529 = vpop.permute.xlu0 %3528
        %3530 = vrot.lane.b32.xlu0 %v3525, 127
        %v3531 = vpop.permute.xlu0 %3530
        %v3534 = vadd.f32 %v3466, %v3529
        %v3535 = vadd.f32 %v3467, %v3531
        %v3536 = vmul.f32 %v3201, %v3384
        %v3537 = vmul.f32 %v3201, %v3385
        %v3538 = vadd.f32 %v3470, %v3536
        %v3539 = vadd.f32 %v3471, %v3537
        %v3540 = vmul.f32 %v3215, %v3384
        %v3541 = vmul.f32 %v3215, %v3385
        %v3542 = vadd.f32 %v3474, %v3540
        %v3543 = vadd.f32 %v3475, %v3541
        %v3544 = vmul.f32 %v3477, %v3406
        %v3545 = vmul.f32 %v3477, %v3407
        %3548 = vrot.lane.b32.xlu0 %v3544, 127
        %v3549 = vpop.permute.xlu0 %3548
        %3550 = vrot.lane.b32.xlu0 %v3545, 127
        %v3551 = vpop.permute.xlu0 %3550
        %v3554 = vadd.f32 %v3506, %v3549
        %v3555 = vadd.f32 %v3507, %v3551
        %v3556 = vmul.f32 %v3491, %v3406
        %v3557 = vmul.f32 %v3491, %v3407
        %3560 = vrot.lane.b32.xlu0 %v3556, 127
        %v3561 = vpop.permute.xlu0 %3560
        %3562 = vrot.lane.b32.xlu0 %v3557, 127
        %v3563 = vpop.permute.xlu0 %3562
        %v3566 = vadd.f32 %v3510, %v3561
        %v3567 = vadd.f32 %v3511, %v3563
        %v3568 = vmul.f32 %v3269, %v3406
        %v3569 = vmul.f32 %v3269, %v3407
        %3572 = vrot.lane.b32.xlu0 %v3568, 127
        %v3573 = vpop.permute.xlu0 %3572
        %3574 = vrot.lane.b32.xlu0 %v3569, 127
        %v3575 = vpop.permute.xlu0 %3574
        %v3578 = vadd.f32 %v3538, %v3573
        %v3579 = vadd.f32 %v3539, %v3575
        %v3580 = vmul.f32 %v3283, %v3406
        %v3581 = vmul.f32 %v3283, %v3407
        %3584 = vrot.lane.b32.xlu0 %v3580, 127
        %v3585 = vpop.permute.xlu0 %3584
        %3586 = vrot.lane.b32.xlu0 %v3581, 127
        %v3587 = vpop.permute.xlu0 %3586
        %v3590 = vadd.f32 %v3542, %v3585
        %v3591 = vadd.f32 %v3543, %v3587
        %v3592 = vld [vmem:[%s1728 + $0x2] sm:$0xff]
        %v3593 = vld [vmem:[%s1728 + $0xa] sm:$0xff]
        %v3594 = vmul.f32 %v3387, %v3592
        %v3595 = vmul.f32 %v3387, %v3593
        %v3596 = vadd.f32 %v3522, %v3594
        %v3597 = vadd.f32 %v3523, %v3595
        %v3598 = vmul.f32 %v3393, %v3592
        %v3599 = vmul.f32 %v3393, %v3593
        %v3600 = vadd.f32 %v3534, %v3598
        %v3601 = vadd.f32 %v3535, %v3599
        %v3602 = vld [vmem:[%s1700 + $0x2] sm:$0xff]
        %v3603 = vld [vmem:[%s1700 + $0xa] sm:$0xff]
        %v3604 = vmul.f32 %v3409, %v3602
        %v3605 = vmul.f32 %v3409, %v3603
        %3608 = vrot.lane.b32.xlu0 %v3604, 127
        %v3609 = vpop.permute.xlu0 %3608
        %3610 = vrot.lane.b32.xlu0 %v3605, 127
        %v3611 = vpop.permute.xlu0 %3610
        %v3614 = vadd.f32 %v3596, %v3609
        %v3615 = vadd.f32 %v3597, %v3611
        %v3616 = vmul.f32 %v3423, %v3602
        %v3617 = vmul.f32 %v3423, %v3603
        %3620 = vrot.lane.b32.xlu0 %v3616, 127
        %v3621 = vpop.permute.xlu0 %3620
        %3622 = vrot.lane.b32.xlu0 %v3617, 127
        %v3623 = vpop.permute.xlu0 %3622
        %v3626 = vadd.f32 %v3600, %v3621
        %v3627 = vadd.f32 %v3601, %v3623
        %v3628 = vmul.f32 %v3387, %v3602
        %v3629 = vmul.f32 %v3387, %v3603
        %v3630 = vadd.f32 %v3578, %v3628
        %v3631 = vadd.f32 %v3579, %v3629
        %v3632 = vmul.f32 %v3393, %v3602
        %v3633 = vmul.f32 %v3393, %v3603
        %v3634 = vadd.f32 %v3590, %v3632
        %v3635 = vadd.f32 %v3591, %v3633
        %v3636 = vmul.f32 %v3477, %v3592
        %v3637 = vmul.f32 %v3477, %v3593
        %3640 = vrot.lane.b32.xlu0 %v3636, 127
        %v3641 = vpop.permute.xlu0 %3640
        %3642 = vrot.lane.b32.xlu0 %v3637, 127
        %v3643 = vpop.permute.xlu0 %3642
        %v3646 = vadd.f32 %v3614, %v3641
        %v3647 = vadd.f32 %v3615, %v3643
        %v3648 = vmul.f32 %v3491, %v3592
        %v3649 = vmul.f32 %v3491, %v3593
        %3652 = vrot.lane.b32.xlu0 %v3648, 127
        %v3653 = vpop.permute.xlu0 %3652
        %3654 = vrot.lane.b32.xlu0 %v3649, 127
        %v3655 = vpop.permute.xlu0 %3654
        %v3658 = vadd.f32 %v3626, %v3653
        %v3659 = vadd.f32 %v3627, %v3655
        %v3660 = vmul.f32 %v3409, %v3592
        %v3661 = vmul.f32 %v3409, %v3593
        %v3662 = vadd.f32 %v3630, %v3660
        %v3663 = vadd.f32 %v3631, %v3661
        %v3664 = vmul.f32 %v3423, %v3592
        %v3665 = vmul.f32 %v3423, %v3593
        %v3666 = vadd.f32 %v3634, %v3664
        %v3667 = vadd.f32 %v3635, %v3665
        %v3668 = vmul.f32 %v3477, %v3602
        %v3669 = vmul.f32 %v3477, %v3603
        %3672 = vrot.lane.b32.xlu0 %v3668, 127
        %v3673 = vpop.permute.xlu0 %3672
        %3674 = vrot.lane.b32.xlu0 %v3669, 127
        %v3675 = vpop.permute.xlu0 %3674
        %v3678 = vadd.f32 %v3662, %v3673
        %v3679 = vadd.f32 %v3663, %v3675
        %v3680 = vmul.f32 %v3491, %v3602
        %v3681 = vmul.f32 %v3491, %v3603
        %3684 = vrot.lane.b32.xlu0 %v3680, 127
        %v3685 = vpop.permute.xlu0 %3684
        %3686 = vrot.lane.b32.xlu0 %v3681, 127
        %v3687 = vpop.permute.xlu0 %3686
        %v3690 = vadd.f32 %v3666, %v3685
        %v3691 = vadd.f32 %v3667, %v3687
        %v3692 = vld [vmem:[%s1805] sm:$0xff]
        %v3693 = vld [vmem:[%s1805 + $0x8] sm:$0xff]
        %s3694 = sld [smem:[#allocation11 + $0x1b]]
        %v3695 = vstv %s3694
        %v3696 = vmul.f32 %v3695, %v3692
        %v3697 = vmul.f32 %v3695, %v3693
        %v3698 = vadd.f32 %v3488, %v3696
        %v3699 = vadd.f32 %v3489, %v3697
        %s3700 = sld [smem:[#allocation11 + $0x3f]]
        %v3701 = vstv %s3700
        %v3702 = vmul.f32 %v3701, %v3692
        %v3703 = vmul.f32 %v3701, %v3693
        %v3704 = vadd.f32 %v3502, %v3702
        %v3705 = vadd.f32 %v3503, %v3703
        %v3706 = vld [vmem:[%s1785] sm:$0xff]
        %v3707 = vld [vmem:[%s1785 + $0x8] sm:$0xff]
        %s3708 = sld [smem:[#allocation11 + $0x1c]]
        %v3709 = vstv %s3708
        %v3710 = vmul.f32 %v3709, %v3706
        %v3711 = vmul.f32 %v3709, %v3707
        %3714 = vrot.lane.b32.xlu0 %v3710, 127
        %v3715 = vpop.permute.xlu0 %3714
        %3716 = vrot.lane.b32.xlu0 %v3711, 127
        %v3717 = vpop.permute.xlu0 %3716
        %v3720 = vadd.f32 %v3698, %v3715
        %v3721 = vadd.f32 %v3699, %v3717
        %s3722 = sld [smem:[#allocation11 + $0x40]]
        %v3723 = vstv %s3722
        %v3724 = vmul.f32 %v3723, %v3706
        %v3725 = vmul.f32 %v3723, %v3707
        %3728 = vrot.lane.b32.xlu0 %v3724, 127
        %v3729 = vpop.permute.xlu0 %3728
        %3730 = vrot.lane.b32.xlu0 %v3725, 127
        %v3731 = vpop.permute.xlu0 %3730
        %v3734 = vadd.f32 %v3704, %v3729
        %v3735 = vadd.f32 %v3705, %v3731
        %v3736 = vmul.f32 %v3695, %v3706
        %v3737 = vmul.f32 %v3695, %v3707
        %v3738 = vadd.f32 %v3554, %v3736
        %v3739 = vadd.f32 %v3555, %v3737
        %v3740 = vmul.f32 %v3701, %v3706
        %v3741 = vmul.f32 %v3701, %v3707
        %v3742 = vadd.f32 %v3566, %v3740
        %v3743 = vadd.f32 %v3567, %v3741
        %s3744 = sld [smem:[#allocation11 + $0x1d]]
        %v3745 = vstv %s3744
        %v3746 = vmul.f32 %v3745, %v3692
        %v3747 = vmul.f32 %v3745, %v3693
        %3750 = vrot.lane.b32.xlu0 %v3746, 127
        %v3751 = vpop.permute.xlu0 %3750
        %3752 = vrot.lane.b32.xlu0 %v3747, 127
        %v3753 = vpop.permute.xlu0 %3752
        %v3756 = vadd.f32 %v3720, %v3751
        %v3757 = vadd.f32 %v3721, %v3753
        %s3758 = sld [smem:[#allocation11 + $0x41]]
        %v3759 = vstv %s3758
        %v3760 = vmul.f32 %v3759, %v3692
        %v3761 = vmul.f32 %v3759, %v3693
        %3764 = vrot.lane.b32.xlu0 %v3760, 127
        %v3765 = vpop.permute.xlu0 %3764
        %3766 = vrot.lane.b32.xlu0 %v3761, 127
        %v3767 = vpop.permute.xlu0 %3766
        %v3770 = vadd.f32 %v3734, %v3765
        %v3771 = vadd.f32 %v3735, %v3767
        %v3772 = vmul.f32 %v3709, %v3692
        %v3773 = vmul.f32 %v3709, %v3693
        %v3774 = vadd.f32 %v3738, %v3772
        %v3775 = vadd.f32 %v3739, %v3773
        %v3776 = vmul.f32 %v3723, %v3692
        %v3777 = vmul.f32 %v3723, %v3693
        %v3778 = vadd.f32 %v3742, %v3776
        %v3779 = vadd.f32 %v3743, %v3777
        %v3780 = vmul.f32 %v3745, %v3706
        %v3781 = vmul.f32 %v3745, %v3707
        %3784 = vrot.lane.b32.xlu0 %v3780, 127
        %v3785 = vpop.permute.xlu0 %3784
        %3786 = vrot.lane.b32.xlu0 %v3781, 127
        %v3787 = vpop.permute.xlu0 %3786
        %v3790 = vadd.f32 %v3774, %v3785
        %v3791 = vadd.f32 %v3775, %v3787
        %v3792 = vmul.f32 %v3759, %v3706
        %v3793 = vmul.f32 %v3759, %v3707
        %3796 = vrot.lane.b32.xlu0 %v3792, 127
        %v3797 = vpop.permute.xlu0 %3796
        %3798 = vrot.lane.b32.xlu0 %v3793, 127
        %v3799 = vpop.permute.xlu0 %3798
        %v3802 = vadd.f32 %v3778, %v3797
        %v3803 = vadd.f32 %v3779, %v3799
        %v3804 = vld [vmem:[%s1733 + $0x1] sm:$0xff]
        %v3805 = vld [vmem:[%s1733 + $0x9] sm:$0xff]
        %s3806 = sld [smem:[#allocation11 + $0x1e]]
        %v3807 = vstv %s3806
        %v3808 = vmul.f32 %v3807, %v3804
        %v3809 = vmul.f32 %v3807, %v3805
        %v3810 = vadd.f32 %v3756, %v3808
        %v3811 = vadd.f32 %v3757, %v3809
        %s3812 = sld [smem:[#allocation11 + $0x42]]
        %v3813 = vstv %s3812
        %v3814 = vmul.f32 %v3813, %v3804
        %v3815 = vmul.f32 %v3813, %v3805
        %v3816 = vadd.f32 %v3770, %v3814
        %v3817 = vadd.f32 %v3771, %v3815
        %v3818 = vmul.f32 %v3695, %v3804
        %v3819 = vmul.f32 %v3695, %v3805
        %v3820 = vadd.f32 %v3646, %v3818
        %v3821 = vadd.f32 %v3647, %v3819
        %v3822 = vmul.f32 %v3701, %v3804
        %v3823 = vmul.f32 %v3701, %v3805
        %v3824 = vadd.f32 %v3658, %v3822
        %v3825 = vadd.f32 %v3659, %v3823
        %v3826 = vld [vmem:[%s1713 + $0x1] sm:$0xff]
        %v3827 = vld [vmem:[%s1713 + $0x9] sm:$0xff]
        %s3828 = sld [smem:[#allocation11 + $0x1f]]
        %v3829 = vstv %s3828
        %v3830 = vmul.f32 %v3829, %v3826
        %v3831 = vmul.f32 %v3829, %v3827
        %3834 = vrot.lane.b32.xlu0 %v3830, 127
        %v3835 = vpop.permute.xlu0 %3834
        %3836 = vrot.lane.b32.xlu0 %v3831, 127
        %v3837 = vpop.permute.xlu0 %3836
        %v3840 = vadd.f32 %v3810, %v3835
        %v3841 = vadd.f32 %v3811, %v3837
        %s3842 = sld [smem:[#allocation11 + $0x43]]
        %v3843 = vstv %s3842
        %v3844 = vmul.f32 %v3843, %v3826
        %v3845 = vmul.f32 %v3843, %v3827
        %3848 = vrot.lane.b32.xlu0 %v3844, 127
        %v3849 = vpop.permute.xlu0 %3848
        %3850 = vrot.lane.b32.xlu0 %v3845, 127
        %v3851 = vpop.permute.xlu0 %3850
        %v3854 = vadd.f32 %v3816, %v3849
        %v3855 = vadd.f32 %v3817, %v3851
        %v3856 = vmul.f32 %v3807, %v3826
        %v3857 = vmul.f32 %v3807, %v3827
        %v3858 = vadd.f32 %v3790, %v3856
        %v3859 = vadd.f32 %v3791, %v3857
        %v3860 = vmul.f32 %v3813, %v3826
        %v3861 = vmul.f32 %v3813, %v3827
        %v3862 = vadd.f32 %v3802, %v3860
        %v3863 = vadd.f32 %v3803, %v3861
        %v3864 = vmul.f32 %v3709, %v3826
        %v3865 = vmul.f32 %v3709, %v3827
        %3868 = vrot.lane.b32.xlu0 %v3864, 127
        %v3869 = vpop.permute.xlu0 %3868
        %3870 = vrot.lane.b32.xlu0 %v3865, 127
        %v3871 = vpop.permute.xlu0 %3870
        %v3874 = vadd.f32 %v3820, %v3869
        %v3875 = vadd.f32 %v3821, %v3871
        %v3876 = vmul.f32 %v3723, %v3826
        %v3877 = vmul.f32 %v3723, %v3827
        %3880 = vrot.lane.b32.xlu0 %v3876, 127
        %v3881 = vpop.permute.xlu0 %3880
        %3882 = vrot.lane.b32.xlu0 %v3877, 127
        %v3883 = vpop.permute.xlu0 %3882
        %v3886 = vadd.f32 %v3824, %v3881
        %v3887 = vadd.f32 %v3825, %v3883
        %v3888 = vmul.f32 %v3695, %v3826
        %v3889 = vmul.f32 %v3695, %v3827
        %v3890 = vadd.f32 %v3678, %v3888
        %v3891 = vadd.f32 %v3679, %v3889
        %v3892 = vmul.f32 %v3701, %v3826
        %v3893 = vmul.f32 %v3701, %v3827
        %v3894 = vadd.f32 %v3690, %v3892
        %v3895 = vadd.f32 %v3691, %v3893
        %s3896 = sld [smem:[#allocation11 + $0x20]]
        %v3897 = vstv %s3896
        %v3898 = vmul.f32 %v3897, %v3804
        %v3899 = vmul.f32 %v3897, %v3805
        %3902 = vrot.lane.b32.xlu0 %v3898, 127
        %v3903 = vpop.permute.xlu0 %3902
        %3904 = vrot.lane.b32.xlu0 %v3899, 127
        %v3905 = vpop.permute.xlu0 %3904
        %v3908 = vadd.f32 %v3840, %v3903
        %v3909 = vadd.f32 %v3841, %v3905
        %s3910 = sld [smem:[#allocation11 + $0x44]]
        %v3911 = vstv %s3910
        %v3912 = vmul.f32 %v3911, %v3804
        %v3913 = vmul.f32 %v3911, %v3805
        %3916 = vrot.lane.b32.xlu0 %v3912, 127
        %v3917 = vpop.permute.xlu0 %3916
        %3918 = vrot.lane.b32.xlu0 %v3913, 127
        %v3919 = vpop.permute.xlu0 %3918
        %v3922 = vadd.f32 %v3854, %v3917
        %v3923 = vadd.f32 %v3855, %v3919
        %v3924 = vmul.f32 %v3829, %v3804
        %v3925 = vmul.f32 %v3829, %v3805
        %v3926 = vadd.f32 %v3858, %v3924
        %v3927 = vadd.f32 %v3859, %v3925
        %v3928 = vmul.f32 %v3843, %v3804
        %v3929 = vmul.f32 %v3843, %v3805
        %v3930 = vadd.f32 %v3862, %v3928
        %v3931 = vadd.f32 %v3863, %v3929
        %v3932 = vmul.f32 %v3745, %v3804
        %v3933 = vmul.f32 %v3745, %v3805
        %3936 = vrot.lane.b32.xlu0 %v3932, 127
        %v3937 = vpop.permute.xlu0 %3936
        %3938 = vrot.lane.b32.xlu0 %v3933, 127
        %v3939 = vpop.permute.xlu0 %3938
        %v3942 = vadd.f32 %v3874, %v3937
        %v3943 = vadd.f32 %v3875, %v3939
        %v3944 = vmul.f32 %v3759, %v3804
        %v3945 = vmul.f32 %v3759, %v3805
        %3948 = vrot.lane.b32.xlu0 %v3944, 127
        %v3949 = vpop.permute.xlu0 %3948
        %3950 = vrot.lane.b32.xlu0 %v3945, 127
        %v3951 = vpop.permute.xlu0 %3950
        %v3954 = vadd.f32 %v3886, %v3949
        %v3955 = vadd.f32 %v3887, %v3951
        %v3956 = vmul.f32 %v3709, %v3804
        %v3957 = vmul.f32 %v3709, %v3805
        %v3958 = vadd.f32 %v3890, %v3956
        %v3959 = vadd.f32 %v3891, %v3957
        %v3960 = vmul.f32 %v3723, %v3804
        %v3961 = vmul.f32 %v3723, %v3805
        %v3962 = vadd.f32 %v3894, %v3960
        %v3963 = vadd.f32 %v3895, %v3961
        %v3964 = vmul.f32 %v3897, %v3826
        %v3965 = vmul.f32 %v3897, %v3827
        %3968 = vrot.lane.b32.xlu0 %v3964, 127
        %v3969 = vpop.permute.xlu0 %3968
        %3970 = vrot.lane.b32.xlu0 %v3965, 127
        %v3971 = vpop.permute.xlu0 %3970
        %v3974 = vadd.f32 %v3926, %v3969
        %v3975 = vadd.f32 %v3927, %v3971
        %v3976 = vmul.f32 %v3911, %v3826
        %v3977 = vmul.f32 %v3911, %v3827
        %3980 = vrot.lane.b32.xlu0 %v3976, 127
        %v3981 = vpop.permute.xlu0 %3980
        %3982 = vrot.lane.b32.xlu0 %v3977, 127
        %v3983 = vpop.permute.xlu0 %3982
        %v3986 = vadd.f32 %v3930, %v3981
        %v3987 = vadd.f32 %v3931, %v3983
        %v3988 = vmul.f32 %v3745, %v3826
        %v3989 = vmul.f32 %v3745, %v3827
        %3992 = vrot.lane.b32.xlu0 %v3988, 127
        %v3993 = vpop.permute.xlu0 %3992
        %3994 = vrot.lane.b32.xlu0 %v3989, 127
        %v3995 = vpop.permute.xlu0 %3994
        %v3998 = vadd.f32 %v3958, %v3993
        %v3999 = vadd.f32 %v3959, %v3995
        %v4000 = vmul.f32 %v3759, %v3826
        %v4001 = vmul.f32 %v3759, %v3827
        %4004 = vrot.lane.b32.xlu0 %v4000, 127
        %v4005 = vpop.permute.xlu0 %4004
        %4006 = vrot.lane.b32.xlu0 %v4001, 127
        %v4007 = vpop.permute.xlu0 %4006
        %v4010 = vadd.f32 %v3962, %v4005
        %v4011 = vadd.f32 %v3963, %v4007
        %v4012 = vld [vmem:[%s1805 + $0x1] sm:$0xff]
        %v4013 = vld [vmem:[%s1805 + $0x9] sm:$0xff]
        %s4014 = sld [smem:[#allocation11 + $0x21]]
        %v4015 = vstv %s4014
        %v4016 = vmul.f32 %v4015, %v4012
        %v4017 = vmul.f32 %v4015, %v4013
        %v4018 = vadd.f32 %v3908, %v4016
        %v4019 = vadd.f32 %v3909, %v4017
        %s4020 = sld [smem:[#allocation11 + $0x45]]
        %v4021 = vstv %s4020
        %v4022 = vmul.f32 %v4021, %v4012
        %v4023 = vmul.f32 %v4021, %v4013
        %v4024 = vadd.f32 %v3922, %v4022
        %v4025 = vadd.f32 %v3923, %v4023
        %v4026 = vmul.f32 %v3807, %v4012
        %v4027 = vmul.f32 %v3807, %v4013
        %v4028 = vadd.f32 %v3942, %v4026
        %v4029 = vadd.f32 %v3943, %v4027
        %v4030 = vmul.f32 %v3813, %v4012
        %v4031 = vmul.f32 %v3813, %v4013
        %v4032 = vadd.f32 %v3954, %v4030
        %v4033 = vadd.f32 %v3955, %v4031
        %v4034 = vld [vmem:[%s1785 + $0x1] sm:$0xff]
        %v4035 = vld [vmem:[%s1785 + $0x9] sm:$0xff]
        %s4036 = sld [smem:[#allocation11 + $0x22]]
        %v4037 = vstv %s4036
        %v4038 = vmul.f32 %v4037, %v4034
        %v4039 = vmul.f32 %v4037, %v4035
        %4042 = vrot.lane.b32.xlu0 %v4038, 127
        %v4043 = vpop.permute.xlu0 %4042
        %4044 = vrot.lane.b32.xlu0 %v4039, 127
        %v4045 = vpop.permute.xlu0 %4044
        %v4048 = vadd.f32 %v4018, %v4043
        %v4049 = vadd.f32 %v4019, %v4045
        %s4050 = sld [smem:[#allocation11 + $0x46]]
        %v4051 = vstv %s4050
        %v4052 = vmul.f32 %v4051, %v4034
        %v4053 = vmul.f32 %v4051, %v4035
        %4056 = vrot.lane.b32.xlu0 %v4052, 127
        %v4057 = vpop.permute.xlu0 %4056
        %4058 = vrot.lane.b32.xlu0 %v4053, 127
        %v4059 = vpop.permute.xlu0 %4058
        %v4062 = vadd.f32 %v4024, %v4057
        %v4063 = vadd.f32 %v4025, %v4059
        %v4064 = vmul.f32 %v4015, %v4034
        %v4065 = vmul.f32 %v4015, %v4035
        %v4066 = vadd.f32 %v3974, %v4064
        %v4067 = vadd.f32 %v3975, %v4065
        %v4068 = vmul.f32 %v4021, %v4034
        %v4069 = vmul.f32 %v4021, %v4035
        %v4070 = vadd.f32 %v3986, %v4068
        %v4071 = vadd.f32 %v3987, %v4069
        %v4072 = vmul.f32 %v3829, %v4034
        %v4073 = vmul.f32 %v3829, %v4035
        %4076 = vrot.lane.b32.xlu0 %v4072, 127
        %v4077 = vpop.permute.xlu0 %4076
        %4078 = vrot.lane.b32.xlu0 %v4073, 127
        %v4079 = vpop.permute.xlu0 %4078
        %v4082 = vadd.f32 %v4028, %v4077
        %v4083 = vadd.f32 %v4029, %v4079
        %v4084 = vmul.f32 %v3843, %v4034
        %v4085 = vmul.f32 %v3843, %v4035
        %4088 = vrot.lane.b32.xlu0 %v4084, 127
        %v4089 = vpop.permute.xlu0 %4088
        %4090 = vrot.lane.b32.xlu0 %v4085, 127
        %v4091 = vpop.permute.xlu0 %4090
        %v4094 = vadd.f32 %v4032, %v4089
        %v4095 = vadd.f32 %v4033, %v4091
        %v4096 = vmul.f32 %v3807, %v4034
        %v4097 = vmul.f32 %v3807, %v4035
        %v4098 = vadd.f32 %v3998, %v4096
        %v4099 = vadd.f32 %v3999, %v4097
        %v4100 = vmul.f32 %v3813, %v4034
        %v4101 = vmul.f32 %v3813, %v4035
        %v4102 = vadd.f32 %v4010, %v4100
        %v4103 = vadd.f32 %v4011, %v4101
        %s4104 = sld [smem:[#allocation11 + $0x23]]
        %v4105 = vstv %s4104
        %v4106 = vmul.f32 %v4105, %v4012
        %v4107 = vmul.f32 %v4105, %v4013
        %4110 = vrot.lane.b32.xlu0 %v4106, 127
        %v4111 = vpop.permute.xlu0 %4110
        %4112 = vrot.lane.b32.xlu0 %v4107, 127
        %v4113 = vpop.permute.xlu0 %4112
        %v4116 = vadd.f32 %v4048, %v4111
        %v4117 = vadd.f32 %v4049, %v4113
        %s4118 = sld [smem:[#allocation11 + $0x47]]
        %v4119 = vstv %s4118
        %v4120 = vmul.f32 %v4119, %v4012
        %v4121 = vmul.f32 %v4119, %v4013
        %4124 = vrot.lane.b32.xlu0 %v4120, 127
        %v4125 = vpop.permute.xlu0 %4124
        %4126 = vrot.lane.b32.xlu0 %v4121, 127
        %v4127 = vpop.permute.xlu0 %4126
        %v4130 = vadd.f32 %v4062, %v4125
        %v4131 = vadd.f32 %v4063, %v4127
        %v4132 = vmul.f32 %v4037, %v4012
        %v4133 = vmul.f32 %v4037, %v4013
        %v4134 = vadd.f32 %v4066, %v4132
        %v4135 = vadd.f32 %v4067, %v4133
        %v4136 = vmul.f32 %v4051, %v4012
        %v4137 = vmul.f32 %v4051, %v4013
        %v4138 = vadd.f32 %v4070, %v4136
        %v4139 = vadd.f32 %v4071, %v4137
        %v4140 = vmul.f32 %v3897, %v4012
        %v4141 = vmul.f32 %v3897, %v4013
        %4144 = vrot.lane.b32.xlu0 %v4140, 127
        %v4145 = vpop.permute.xlu0 %4144
        %4146 = vrot.lane.b32.xlu0 %v4141, 127
        %v4147 = vpop.permute.xlu0 %4146
        %v4150 = vadd.f32 %v4082, %v4145
        %v4151 = vadd.f32 %v4083, %v4147
        %v4152 = vmul.f32 %v3911, %v4012
        %v4153 = vmul.f32 %v3911, %v4013
        %4156 = vrot.lane.b32.xlu0 %v4152, 127
        %v4157 = vpop.permute.xlu0 %4156
        %4158 = vrot.lane.b32.xlu0 %v4153, 127
        %v4159 = vpop.permute.xlu0 %4158
        %v4162 = vadd.f32 %v4094, %v4157
        %v4163 = vadd.f32 %v4095, %v4159
        %v4164 = vmul.f32 %v3829, %v4012
        %v4165 = vmul.f32 %v3829, %v4013
        %v4166 = vadd.f32 %v4098, %v4164
        %v4167 = vadd.f32 %v4099, %v4165
        %v4168 = vmul.f32 %v3843, %v4012
        %v4169 = vmul.f32 %v3843, %v4013
        %v4170 = vadd.f32 %v4102, %v4168
        %v4171 = vadd.f32 %v4103, %v4169
        %v4172 = vmul.f32 %v4105, %v4034
        %v4173 = vmul.f32 %v4105, %v4035
        %4176 = vrot.lane.b32.xlu0 %v4172, 127
        %v4177 = vpop.permute.xlu0 %4176
        %4178 = vrot.lane.b32.xlu0 %v4173, 127
        %v4179 = vpop.permute.xlu0 %4178
        %v4182 = vadd.f32 %v4134, %v4177
        %v4183 = vadd.f32 %v4135, %v4179
        %v4184 = vmul.f32 %v4119, %v4034
        %v4185 = vmul.f32 %v4119, %v4035
        %4188 = vrot.lane.b32.xlu0 %v4184, 127
        %v4189 = vpop.permute.xlu0 %4188
        %4190 = vrot.lane.b32.xlu0 %v4185, 127
        %v4191 = vpop.permute.xlu0 %4190
        %v4194 = vadd.f32 %v4138, %v4189
        %v4195 = vadd.f32 %v4139, %v4191
        %v4196 = vmul.f32 %v3897, %v4034
        %v4197 = vmul.f32 %v3897, %v4035
        %4200 = vrot.lane.b32.xlu0 %v4196, 127
        %v4201 = vpop.permute.xlu0 %4200
        %4202 = vrot.lane.b32.xlu0 %v4197, 127
        %v4203 = vpop.permute.xlu0 %4202
        %v4206 = vadd.f32 %v4166, %v4201
        %v4207 = vadd.f32 %v4167, %v4203
        %v4208 = vmul.f32 %v3911, %v4034
        %v4209 = vmul.f32 %v3911, %v4035
        %4212 = vrot.lane.b32.xlu0 %v4208, 127
        %v4213 = vpop.permute.xlu0 %4212
        %4214 = vrot.lane.b32.xlu0 %v4209, 127
        %v4215 = vpop.permute.xlu0 %4214
        %v4218 = vadd.f32 %v4170, %v4213
        %v4219 = vadd.f32 %v4171, %v4215
        %v4220 = vld [vmem:[%s1733 + $0x2] sm:$0xff]
        %v4221 = vld [vmem:[%s1733 + $0xa] sm:$0xff]
        %v4222 = vmul.f32 %v4015, %v4220
        %v4223 = vmul.f32 %v4015, %v4221
        %v4224 = vadd.f32 %v4150, %v4222
        %v4225 = vadd.f32 %v4151, %v4223
        %v4226 = vmul.f32 %v4021, %v4220
        %v4227 = vmul.f32 %v4021, %v4221
        %v4228 = vadd.f32 %v4162, %v4226
        %v4229 = vadd.f32 %v4163, %v4227
        %v4230 = vld [vmem:[%s1713 + $0x2] sm:$0xff]
        %v4231 = vld [vmem:[%s1713 + $0xa] sm:$0xff]
        %v4232 = vmul.f32 %v4037, %v4230
        %v4233 = vmul.f32 %v4037, %v4231
        %4236 = vrot.lane.b32.xlu0 %v4232, 127
        %v4237 = vpop.permute.xlu0 %4236
        %4238 = vrot.lane.b32.xlu0 %v4233, 127
        %v4239 = vpop.permute.xlu0 %4238
        %v4242 = vadd.f32 %v4224, %v4237
        %v4243 = vadd.f32 %v4225, %v4239
        %v4244 = vmul.f32 %v4051, %v4230
        %v4245 = vmul.f32 %v4051, %v4231
        %4248 = vrot.lane.b32.xlu0 %v4244, 127
        %v4249 = vpop.permute.xlu0 %4248
        %4250 = vrot.lane.b32.xlu0 %v4245, 127
        %v4251 = vpop.permute.xlu0 %4250
        %v4254 = vadd.f32 %v4228, %v4249
        %v4255 = vadd.f32 %v4229, %v4251
        %v4256 = vmul.f32 %v4015, %v4230
        %v4257 = vmul.f32 %v4015, %v4231
        %v4258 = vadd.f32 %v4206, %v4256
        %v4259 = vadd.f32 %v4207, %v4257
        %v4260 = vmul.f32 %v4021, %v4230
        %v4261 = vmul.f32 %v4021, %v4231
        %v4262 = vadd.f32 %v4218, %v4260
        %v4263 = vadd.f32 %v4219, %v4261
        %v4264 = vmul.f32 %v4105, %v4220
        %v4265 = vmul.f32 %v4105, %v4221
        %4268 = vrot.lane.b32.xlu0 %v4264, 127
        %v4269 = vpop.permute.xlu0 %4268
        %4270 = vrot.lane.b32.xlu0 %v4265, 127
        %v4271 = vpop.permute.xlu0 %4270
        %v4274 = vadd.f32 %v4242, %v4269
        %v4275 = vadd.f32 %v4243, %v4271
        %v4276 = vmul.f32 %v4119, %v4220
        %v4277 = vmul.f32 %v4119, %v4221
        %4280 = vrot.lane.b32.xlu0 %v4276, 127
        %v4281 = vpop.permute.xlu0 %4280
        %4282 = vrot.lane.b32.xlu0 %v4277, 127
        %v4283 = vpop.permute.xlu0 %4282
        %v4286 = vadd.f32 %v4254, %v4281
        %v4287 = vadd.f32 %v4255, %v4283
        %v4288 = vmul.f32 %v4037, %v4220
        %v4289 = vmul.f32 %v4037, %v4221
        %v4290 = vadd.f32 %v4258, %v4288
        %v4291 = vadd.f32 %v4259, %v4289
        %v4292 = vmul.f32 %v4051, %v4220
        %v4293 = vmul.f32 %v4051, %v4221
        %v4294 = vadd.f32 %v4262, %v4292
        %v4295 = vadd.f32 %v4263, %v4293
        %v4296 = vmul.f32 %v4105, %v4230
        %v4297 = vmul.f32 %v4105, %v4231
        %4300 = vrot.lane.b32.xlu0 %v4296, 127
        %v4301 = vpop.permute.xlu0 %4300
        %4302 = vrot.lane.b32.xlu0 %v4297, 127
        %v4303 = vpop.permute.xlu0 %4302
        %v4306 = vadd.f32 %v4290, %v4301
        %v4307 = vadd.f32 %v4291, %v4303
        %v4308 = vmul.f32 %v4119, %v4230
        %v4309 = vmul.f32 %v4119, %v4231
        %4312 = vrot.lane.b32.xlu0 %v4308, 127
        %v4313 = vpop.permute.xlu0 %4312
        %4314 = vrot.lane.b32.xlu0 %v4309, 127
        %v4315 = vpop.permute.xlu0 %4314
        %v4318 = vadd.f32 %v4294, %v4313
        %v4319 = vadd.f32 %v4295, %v4315
        %v4320 = vlaneseq
        %v4321 = vshrl.u32 %v4320, 7
        %v4322 = vadd.s32 %v4321, 8
        %v4323 = vlaneseq
        %v4324 = vand.u32 %v4323, 127
        %v4325 = vmul.u32 %v4321, 2
        %v4326 = vmul.u32 %v4322, 2
        %vm4327 = vcmp.eq.s32.totalorder %v4324, %v4325
        %vm4328 = vcmp.eq.s32.totalorder %v4324, %v4326
        %v4329 = vsel %vm4327, 1, 0
        %v4330 = vsel %vm4328, 1, 0
        %v4331 = vcvt.s32.f32 %v4329
        %v4332 = vcvt.s32.f32 %v4330
        %v4333 = vadd.s32 %v4325, 1
        %v4334 = vadd.s32 %v4326, 1
        %vm4335 = vcmp.eq.s32.totalorder %v4324, %v4333
        %vm4336 = vcmp.eq.s32.totalorder %v4324, %v4334
        %v4337 = vsel %vm4335, 1, 0
        %v4338 = vsel %vm4336, 1, 0
        %v4339 = vcvt.s32.f32 %v4337
        %v4340 = vcvt.s32.f32 %v4338
        %v4341 = vadd.s32 %v4321, 16
        %v4342 = vadd.s32 %v4321, 24
        %v4343 = vmul.u32 %v4324, 2
        %vm4344 = vcmp.eq.s32.totalorder %v4321, %v4343
        %vm4345 = vcmp.eq.s32.totalorder %v4322, %v4343
        %vm4346 = vcmp.eq.s32.totalorder %v4341, %v4343
        %vm4347 = vcmp.eq.s32.totalorder %v4342, %v4343
        %v4348 = vsel %vm4344, 1, 0
        %v4349 = vsel %vm4345, 1, 0
        %v4350 = vsel %vm4346, 1, 0
        %v4351 = vsel %vm4347, 1, 0
        %v4352 = vcvt.s32.f32 %v4348
        %v4353 = vcvt.s32.f32 %v4349
        %v4354 = vcvt.s32.f32 %v4350
        %v4355 = vcvt.s32.f32 %v4351
        %v4356 = vadd.s32 %v4343, 1
        %vm4357 = vcmp.eq.s32.totalorder %v4321, %v4356
        %vm4358 = vcmp.eq.s32.totalorder %v4322, %v4356
        %vm4359 = vcmp.eq.s32.totalorder %v4341, %v4356
        %vm4360 = vcmp.eq.s32.totalorder %v4342, %v4356
        %v4361 = vsel %vm4357, 1, 0
        %v4362 = vsel %vm4358, 1, 0
        %v4363 = vsel %vm4359, 1, 0
        %v4364 = vsel %vm4360, 1, 0
        %v4365 = vcvt.s32.f32 %v4361
        %v4366 = vcvt.s32.f32 %v4362
        %v4367 = vcvt.s32.f32 %v4363
        %v4368 = vcvt.s32.f32 %v4364
        %v4369 = vmax.f32 %v4116, 0.0
        %v4370 = vmax.f32 %v4117, 0.0
        %v4371 = vmax.f32 %v4182, 0.0
        %v4372 = vmax.f32 %v4183, 0.0
        %v4373 = vpack.c.bf16 %v4370, %v4369
        %v4374 = vunpack.c.l.bf16 %v4373
        %v4375 = vunpack.c.h.bf16 %v4373
        %v4376 = vsub.f32 %v4369, %v4374
        %v4377 = vsub.f32 %v4370, %v4375
        %v4379 = vsel %vm311, %v4376, 0
        %v4382 = vsel %vm311, %v4377, 0
        %4384 = vmatprep.subr.mxu0 0.0
        %4385 = vmatpush1.msra.mxu0 %v4331
        %4386 = vmatprep.subr.mxu0 0.0
        %4387 = vmatpush1.msra.mxu0 %v4332
        %4388 = vmatprep.subr.mxu0 0.0
        %4389 = vmatpush1.msra.mxu0 0.0
        %4390 = vmatprep.subr.mxu0 0.0
        %4391 = vmatpush1.msra.mxu0 0.0
        %4392 = vmatprep.subr.mxu0 0.0
        %4393 = vmatpush1.msra.mxu0 0.0
        %4394 = vmatprep.subr.mxu0 0.0
        %4395 = vmatpush1.msra.mxu0 0.0
        %4396 = vmatprep.subr.mxu0 0.0
        %4397 = vmatpush1.msra.mxu0 0.0
        %4398 = vmatprep.subr.mxu0 0.0
        %4399 = vmatpush1.msra.mxu0 0.0
        %4400 = vmatprep.subr.mxu0 0.0
        %4401 = vmatpush1.msra.mxu0 0.0
        %4402 = vmatprep.subr.mxu0 0.0
        %4403 = vmatpush1.msra.mxu0 0.0
        %4404 = vmatprep.subr.mxu0 0.0
        %4405 = vmatpush1.msra.mxu0 0.0
        %4406 = vmatprep.subr.mxu0 0.0
        %4407 = vmatpush1.msra.mxu0 0.0
        %4408 = vmatprep.subr.mxu0 0.0
        %4409 = vmatpush1.msra.mxu0 0.0
        %4410 = vmatprep.subr.mxu0 0.0
        %4411 = vmatpush1.msra.mxu0 0.0
        %4412 = vmatprep.subr.mxu0 0.0
        %4413 = vmatpush1.msra.mxu0 0.0
        %4414 = vmatprep.subr.mxu0 0.0
        %4415 = vmatpush1.msra.mxu0 0.0
        %4416 = vmatprep.subr.mxu0 0.0
        %4417 = vmatpush1.msra.mxu0 0.0
        %4418 = vmatprep.subr.mxu0 0.0
        %4419 = vmatpush1.msra.mxu0 0.0
        %4420 = vmatprep.subr.mxu0 0.0
        %4421 = vmatpush1.msra.mxu0 0.0
        %4422 = vmatprep.subr.mxu0 0.0
        %4423 = vmatpush1.msra.mxu0 0.0
        %4424 = vmatprep.subr.mxu0 0.0
        %4425 = vmatpush1.msra.mxu0 0.0
        %4426 = vmatprep.subr.mxu0 0.0
        %4427 = vmatpush1.msra.mxu0 0.0
        %4428 = vmatprep.subr.mxu0 0.0
        %4429 = vmatpush1.msra.mxu0 0.0
        %4430 = vmatprep.subr.mxu0 0.0
        %4431 = vmatpush1.msra.mxu0 0.0
        %4432 = vmatprep.subr.mxu0 0.0
        %4433 = vmatpush1.msra.mxu0 0.0
        %4434 = vmatprep.subr.mxu0 0.0
        %4435 = vmatpush1.msra.mxu0 0.0
        %4436 = vmatprep.subr.mxu0 0.0
        %4437 = vmatpush1.msra.mxu0 0.0
        %4438 = vmatprep.subr.mxu0 0.0
        %4439 = vmatpush1.msra.mxu0 0.0
        %4440 = vmatprep.subr.mxu0 0.0
        %4441 = vmatpush1.msra.mxu0 0.0
        %4442 = vmatprep.subr.mxu0 0.0
        %4443 = vmatpush1.msra.mxu0 0.0
        %4444 = vmatprep.subr.mxu0 0.0
        %4445 = vmatpush1.msra.mxu0 0.0
        %4446 = vmatprep.subr.mxu0 0.0
        %4447 = vmatpush1.msra.mxu0 0.0
        %4448 = vmatprep.mubr.f32.mxu0 0.0
        %4449 = vmatmul.mubr.f32.gmra.mrb[0].mxu0 %v4379
        %v4450 = vpop.f32.mrb[0].mxu0
        %v4451 = vadd.f32 0.0, %v4450
        %v4452 = vpop.f32.mrb[0].mxu0
        %4453 = vmatprep.mubr.f32.mxu0 0.0
        %4454 = vmatmul.mubr.f32.gmra.mrb[0].mxu0 %v4382
        %v4455 = vpop.f32.mrb[0].mxu0
        %v4456 = vadd.f32 0.0, %v4455
        %v4457 = vpop.f32.mrb[0].mxu0
        %4458 = vdwg.mxu0
        %v4460 = vsel %vm311, %v4374, 0
        %v4463 = vsel %vm311, %v4375, 0
        %4465 = vmatprep.subr.mxu0 0.0
        %4466 = vmatpush1.msra.mxu0 %v4331
        %4467 = vmatprep.subr.mxu0 0.0
        %4468 = vmatpush1.msra.mxu0 %v4332
        %4469 = vmatprep.subr.mxu0 0.0
        %4470 = vmatpush1.msra.mxu0 0.0
        %4471 = vmatprep.subr.mxu0 0.0
        %4472 = vmatpush1.msra.mxu0 0.0
        %4473 = vmatprep.subr.mxu0 0.0
        %4474 = vmatpush1.msra.mxu0 0.0
        %4475 = vmatprep.subr.mxu0 0.0
        %4476 = vmatpush1.msra.mxu0 0.0
        %4477 = vmatprep.subr.mxu0 0.0
        %4478 = vmatpush1.msra.mxu0 0.0
        %4479 = vmatprep.subr.mxu0 0.0
        %4480 = vmatpush1.msra.mxu0 0.0
        %4481 = vmatprep.subr.mxu0 0.0
        %4482 = vmatpush1.msra.mxu0 0.0
        %4483 = vmatprep.subr.mxu0 0.0
        %4484 = vmatpush1.msra.mxu0 0.0
        %4485 = vmatprep.subr.mxu0 0.0
        %4486 = vmatpush1.msra.mxu0 0.0
        %4487 = vmatprep.subr.mxu0 0.0
        %4488 = vmatpush1.msra.mxu0 0.0
        %4489 = vmatprep.subr.mxu0 0.0
        %4490 = vmatpush1.msra.mxu0 0.0
        %4491 = vmatprep.subr.mxu0 0.0
        %4492 = vmatpush1.msra.mxu0 0.0
        %4493 = vmatprep.subr.mxu0 0.0
        %4494 = vmatpush1.msra.mxu0 0.0
        %4495 = vmatprep.subr.mxu0 0.0
        %4496 = vmatpush1.msra.mxu0 0.0
        %4497 = vmatprep.subr.mxu0 0.0
        %4498 = vmatpush1.msra.mxu0 0.0
        %4499 = vmatprep.subr.mxu0 0.0
        %4500 = vmatpush1.msra.mxu0 0.0
        %4501 = vmatprep.subr.mxu0 0.0
        %4502 = vmatpush1.msra.mxu0 0.0
        %4503 = vmatprep.subr.mxu0 0.0
        %4504 = vmatpush1.msra.mxu0 0.0
        %4505 = vmatprep.subr.mxu0 0.0
        %4506 = vmatpush1.msra.mxu0 0.0
        %4507 = vmatprep.subr.mxu0 0.0
        %4508 = vmatpush1.msra.mxu0 0.0
        %4509 = vmatprep.subr.mxu0 0.0
        %4510 = vmatpush1.msra.mxu0 0.0
        %4511 = vmatprep.subr.mxu0 0.0
        %4512 = vmatpush1.msra.mxu0 0.0
        %4513 = vmatprep.subr.mxu0 0.0
        %4514 = vmatpush1.msra.mxu0 0.0
        %4515 = vmatprep.subr.mxu0 0.0
        %4516 = vmatpush1.msra.mxu0 0.0
        %4517 = vmatprep.subr.mxu0 0.0
        %4518 = vmatpush1.msra.mxu0 0.0
        %4519 = vmatprep.subr.mxu0 0.0
        %4520 = vmatpush1.msra.mxu0 0.0
        %4521 = vmatprep.subr.mxu0 0.0
        %4522 = vmatpush1.msra.mxu0 0.0
        %4523 = vmatprep.subr.mxu0 0.0
        %4524 = vmatpush1.msra.mxu0 0.0
        %4525 = vmatprep.subr.mxu0 0.0
        %4526 = vmatpush1.msra.mxu0 0.0
        %4527 = vmatprep.subr.mxu0 0.0
        %4528 = vmatpush1.msra.mxu0 0.0
        %4529 = vmatprep.mubr.f32.mxu0 0.0
        %4530 = vmatmul.mubr.f32.gmra.mrb[0].mxu0 %v4460
        %v4531 = vpop.f32.mrb[0].mxu0
        %v4532 = vadd.f32 %v4451, %v4531
        %v4533 = vpop.f32.mrb[0].mxu0
        %4534 = vmatprep.mubr.f32.mxu0 0.0
        %4535 = vmatmul.mubr.f32.gmra.mrb[0].mxu0 %v4463
        %v4536 = vpop.f32.mrb[0].mxu0
        %v4537 = vadd.f32 %v4456, %v4536
        %v4538 = vpop.f32.mrb[0].mxu0
        %4539 = vdwg.mxu0
        %v4540 = vpack.c.bf16 %v4372, %v4371
        %v4541 = vunpack.c.l.bf16 %v4540
        %v4542 = vunpack.c.h.bf16 %v4540
        %v4543 = vsub.f32 %v4371, %v4541
        %v4544 = vsub.f32 %v4372, %v4542
        %4547 = vrot.lane.b32.xlu0 %v4543, 127
        %v4548 = vpop.permute.xlu0 %4547
        %4549 = vrot.lane.b32.xlu0 %v4544, 127
        %v4550 = vpop.permute.xlu0 %4549
        %v4551 = vsel %vm311, %v4548, 0
        %v4553 = vsel %vm311, %v4550, 0
        %4555 = vmatprep.subr.mxu0 0.0
        %4556 = vmatpush1.msra.mxu0 %v4339
        %4557 = vmatprep.subr.mxu0 0.0
        %4558 = vmatpush1.msra.mxu0 %v4340
        %4559 = vmatprep.subr.mxu0 0.0
        %4560 = vmatpush1.msra.mxu0 0.0
        %4561 = vmatprep.subr.mxu0 0.0
        %4562 = vmatpush1.msra.mxu0 0.0
        %4563 = vmatprep.subr.mxu0 0.0
        %4564 = vmatpush1.msra.mxu0 0.0
        %4565 = vmatprep.subr.mxu0 0.0
        %4566 = vmatpush1.msra.mxu0 0.0
        %4567 = vmatprep.subr.mxu0 0.0
        %4568 = vmatpush1.msra.mxu0 0.0
        %4569 = vmatprep.subr.mxu0 0.0
        %4570 = vmatpush1.msra.mxu0 0.0
        %4571 = vmatprep.subr.mxu0 0.0
        %4572 = vmatpush1.msra.mxu0 0.0
        %4573 = vmatprep.subr.mxu0 0.0
        %4574 = vmatpush1.msra.mxu0 0.0
        %4575 = vmatprep.subr.mxu0 0.0
        %4576 = vmatpush1.msra.mxu0 0.0
        %4577 = vmatprep.subr.mxu0 0.0
        %4578 = vmatpush1.msra.mxu0 0.0
        %4579 = vmatprep.subr.mxu0 0.0
        %4580 = vmatpush1.msra.mxu0 0.0
        %4581 = vmatprep.subr.mxu0 0.0
        %4582 = vmatpush1.msra.mxu0 0.0
        %4583 = vmatprep.subr.mxu0 0.0
        %4584 = vmatpush1.msra.mxu0 0.0
        %4585 = vmatprep.subr.mxu0 0.0
        %4586 = vmatpush1.msra.mxu0 0.0
        %4587 = vmatprep.subr.mxu0 0.0
        %4588 = vmatpush1.msra.mxu0 0.0
        %4589 = vmatprep.subr.mxu0 0.0
        %4590 = vmatpush1.msra.mxu0 0.0
        %4591 = vmatprep.subr.mxu0 0.0
        %4592 = vmatpush1.msra.mxu0 0.0
        %4593 = vmatprep.subr.mxu0 0.0
        %4594 = vmatpush1.msra.mxu0 0.0
        %4595 = vmatprep.subr.mxu0 0.0
        %4596 = vmatpush1.msra.mxu0 0.0
        %4597 = vmatprep.subr.mxu0 0.0
        %4598 = vmatpush1.msra.mxu0 0.0
        %4599 = vmatprep.subr.mxu0 0.0
        %4600 = vmatpush1.msra.mxu0 0.0
        %4601 = vmatprep.subr.mxu0 0.0
        %4602 = vmatpush1.msra.mxu0 0.0
        %4603 = vmatprep.subr.mxu0 0.0
        %4604 = vmatpush1.msra.mxu0 0.0
        %4605 = vmatprep.subr.mxu0 0.0
        %4606 = vmatpush1.msra.mxu0 0.0
        %4607 = vmatprep.subr.mxu0 0.0
        %4608 = vmatpush1.msra.mxu0 0.0
        %4609 = vmatprep.subr.mxu0 0.0
        %4610 = vmatpush1.msra.mxu0 0.0
        %4611 = vmatprep.subr.mxu0 0.0
        %4612 = vmatpush1.msra.mxu0 0.0
        %4613 = vmatprep.subr.mxu0 0.0
        %4614 = vmatpush1.msra.mxu0 0.0
        %4615 = vmatprep.subr.mxu0 0.0
        %4616 = vmatpush1.msra.mxu0 0.0
        %4617 = vmatprep.subr.mxu0 0.0
        %4618 = vmatpush1.msra.mxu0 0.0
        %4619 = vmatprep.mubr.f32.mxu0 0.0
        %4620 = vmatmul.mubr.f32.gmra.mrb[0].mxu0 %v4551
        %v4621 = vpop.f32.mrb[0].mxu0
        %v4622 = vadd.f32 0.0, %v4621
        %v4623 = vpop.f32.mrb[0].mxu0
        %4624 = vmatprep.mubr.f32.mxu0 0.0
        %4625 = vmatmul.mubr.f32.gmra.mrb[0].mxu0 %v4553
        %v4626 = vpop.f32.mrb[0].mxu0
        %v4627 = vadd.f32 0.0, %v4626
        %v4628 = vpop.f32.mrb[0].mxu0
        %4629 = vdwg.mxu0
        %4632 = vrot.lane.b32.xlu0 %v4541, 127
        %v4633 = vpop.permute.xlu0 %4632
        %4634 = vrot.lane.b32.xlu0 %v4542, 127
        %v4635 = vpop.permute.xlu0 %4634
        %v4636 = vsel %vm311, %v4633, 0
        %v4638 = vsel %vm311, %v4635, 0
        %4640 = vmatprep.subr.mxu0 0.0
        %4641 = vmatpush1.msra.mxu0 %v4339
        %4642 = vmatprep.subr.mxu0 0.0
        %4643 = vmatpush1.msra.mxu0 %v4340
        %4644 = vmatprep.subr.mxu0 0.0
        %4645 = vmatpush1.msra.mxu0 0.0
        %4646 = vmatprep.subr.mxu0 0.0
        %4647 = vmatpush1.msra.mxu0 0.0
        %4648 = vmatprep.subr.mxu0 0.0
        %4649 = vmatpush1.msra.mxu0 0.0
        %4650 = vmatprep.subr.mxu0 0.0
        %4651 = vmatpush1.msra.mxu0 0.0
        %4652 = vmatprep.subr.mxu0 0.0
        %4653 = vmatpush1.msra.mxu0 0.0
        %4654 = vmatprep.subr.mxu0 0.0
        %4655 = vmatpush1.msra.mxu0 0.0
        %4656 = vmatprep.subr.mxu0 0.0
        %4657 = vmatpush1.msra.mxu0 0.0
        %4658 = vmatprep.subr.mxu0 0.0
        %4659 = vmatpush1.msra.mxu0 0.0
        %4660 = vmatprep.subr.mxu0 0.0
        %4661 = vmatpush1.msra.mxu0 0.0
        %4662 = vmatprep.subr.mxu0 0.0
        %4663 = vmatpush1.msra.mxu0 0.0
        %4664 = vmatprep.subr.mxu0 0.0
        %4665 = vmatpush1.msra.mxu0 0.0
        %4666 = vmatprep.subr.mxu0 0.0
        %4667 = vmatpush1.msra.mxu0 0.0
        %4668 = vmatprep.subr.mxu0 0.0
        %4669 = vmatpush1.msra.mxu0 0.0
        %4670 = vmatprep.subr.mxu0 0.0
        %4671 = vmatpush1.msra.mxu0 0.0
        %4672 = vmatprep.subr.mxu0 0.0
        %4673 = vmatpush1.msra.mxu0 0.0
        %4674 = vmatprep.subr.mxu0 0.0
        %4675 = vmatpush1.msra.mxu0 0.0
        %4676 = vmatprep.subr.mxu0 0.0
        %4677 = vmatpush1.msra.mxu0 0.0
        %4678 = vmatprep.subr.mxu0 0.0
        %4679 = vmatpush1.msra.mxu0 0.0
        %4680 = vmatprep.subr.mxu0 0.0
        %4681 = vmatpush1.msra.mxu0 0.0
        %4682 = vmatprep.subr.mxu0 0.0
        %4683 = vmatpush1.msra.mxu0 0.0
        %4684 = vmatprep.subr.mxu0 0.0
        %4685 = vmatpush1.msra.mxu0 0.0
        %4686 = vmatprep.subr.mxu0 0.0
        %4687 = vmatpush1.msra.mxu0 0.0
        %4688 = vmatprep.subr.mxu0 0.0
        %4689 = vmatpush1.msra.mxu0 0.0
        %4690 = vmatprep.subr.mxu0 0.0
        %4691 = vmatpush1.msra.mxu0 0.0
        %4692 = vmatprep.subr.mxu0 0.0
        %4693 = vmatpush1.msra.mxu0 0.0
        %4694 = vmatprep.subr.mxu0 0.0
        %4695 = vmatpush1.msra.mxu0 0.0
        %4696 = vmatprep.subr.mxu0 0.0
        %4697 = vmatpush1.msra.mxu0 0.0
        %4698 = vmatprep.subr.mxu0 0.0
        %4699 = vmatpush1.msra.mxu0 0.0
        %4700 = vmatprep.subr.mxu0 0.0
        %4701 = vmatpush1.msra.mxu0 0.0
        %4702 = vmatprep.subr.mxu0 0.0
        %4703 = vmatpush1.msra.mxu0 0.0
        %4704 = vmatprep.mubr.f32.mxu0 0.0
        %4705 = vmatmul.mubr.f32.gmra.mrb[0].mxu0 %v4636
        %v4706 = vpop.f32.mrb[0].mxu0
        %v4707 = vadd.f32 %v4622, %v4706
        %v4708 = vpop.f32.mrb[0].mxu0
        %4709 = vmatprep.mubr.f32.mxu0 0.0
        %4710 = vmatmul.mubr.f32.gmra.mrb[0].mxu0 %v4638
        %v4711 = vpop.f32.mrb[0].mxu0
        %v4712 = vadd.f32 %v4627, %v4711
        %v4713 = vpop.f32.mrb[0].mxu0
        %4714 = vdwg.mxu0
        %v4715 = vadd.f32 %v4532, %v4707
        %v4716 = vadd.f32 %v4537, %v4712
        %v4717 = vmax.f32 %v4274, 0.0
        %v4718 = vmax.f32 %v4275, 0.0
        %v4719 = vmax.f32 %v4306, 0.0
        %v4720 = vmax.f32 %v4307, 0.0
        %v4721 = vpack.c.bf16 %v4718, %v4717
        %v4722 = vunpack.c.l.bf16 %v4721
        %v4723 = vunpack.c.h.bf16 %v4721
        %v4724 = vsub.f32 %v4717, %v4722
        %v4725 = vsub.f32 %v4718, %v4723
        %v4727 = vsel %vm311, %v4724, 0
        %v4730 = vsel %vm311, %v4725, 0
        %4732 = vmatprep.subr.mxu0 0.0
        %4733 = vmatpush1.msra.mxu0 %v4331
        %4734 = vmatprep.subr.mxu0 0.0
        %4735 = vmatpush1.msra.mxu0 %v4332
        %4736 = vmatprep.subr.mxu0 0.0
        %4737 = vmatpush1.msra.mxu0 0.0
        %4738 = vmatprep.subr.mxu0 0.0
        %4739 = vmatpush1.msra.mxu0 0.0
        %4740 = vmatprep.subr.mxu0 0.0
        %4741 = vmatpush1.msra.mxu0 0.0
        %4742 = vmatprep.subr.mxu0 0.0
        %4743 = vmatpush1.msra.mxu0 0.0
        %4744 = vmatprep.subr.mxu0 0.0
        %4745 = vmatpush1.msra.mxu0 0.0
        %4746 = vmatprep.subr.mxu0 0.0
        %4747 = vmatpush1.msra.mxu0 0.0
        %4748 = vmatprep.subr.mxu0 0.0
        %4749 = vmatpush1.msra.mxu0 0.0
        %4750 = vmatprep.subr.mxu0 0.0
        %4751 = vmatpush1.msra.mxu0 0.0
        %4752 = vmatprep.subr.mxu0 0.0
        %4753 = vmatpush1.msra.mxu0 0.0
        %4754 = vmatprep.subr.mxu0 0.0
        %4755 = vmatpush1.msra.mxu0 0.0
        %4756 = vmatprep.subr.mxu0 0.0
        %4757 = vmatpush1.msra.mxu0 0.0
        %4758 = vmatprep.subr.mxu0 0.0
        %4759 = vmatpush1.msra.mxu0 0.0
        %4760 = vmatprep.subr.mxu0 0.0
        %4761 = vmatpush1.msra.mxu0 0.0
        %4762 = vmatprep.subr.mxu0 0.0
        %4763 = vmatpush1.msra.mxu0 0.0
        %4764 = vmatprep.subr.mxu0 0.0
        %4765 = vmatpush1.msra.mxu0 0.0
        %4766 = vmatprep.subr.mxu0 0.0
        %4767 = vmatpush1.msra.mxu0 0.0
        %4768 = vmatprep.subr.mxu0 0.0
        %4769 = vmatpush1.msra.mxu0 0.0
        %4770 = vmatprep.subr.mxu0 0.0
        %4771 = vmatpush1.msra.mxu0 0.0
        %4772 = vmatprep.subr.mxu0 0.0
        %4773 = vmatpush1.msra.mxu0 0.0
        %4774 = vmatprep.subr.mxu0 0.0
        %4775 = vmatpush1.msra.mxu0 0.0
        %4776 = vmatprep.subr.mxu0 0.0
        %4777 = vmatpush1.msra.mxu0 0.0
        %4778 = vmatprep.subr.mxu0 0.0
        %4779 = vmatpush1.msra.mxu0 0.0
        %4780 = vmatprep.subr.mxu0 0.0
        %4781 = vmatpush1.msra.mxu0 0.0
        %4782 = vmatprep.subr.mxu0 0.0
        %4783 = vmatpush1.msra.mxu0 0.0
        %4784 = vmatprep.subr.mxu0 0.0
        %4785 = vmatpush1.msra.mxu0 0.0
        %4786 = vmatprep.subr.mxu0 0.0
        %4787 = vmatpush1.msra.mxu0 0.0
        %4788 = vmatprep.subr.mxu0 0.0
        %4789 = vmatpush1.msra.mxu0 0.0
        %4790 = vmatprep.subr.mxu0 0.0
        %4791 = vmatpush1.msra.mxu0 0.0
        %4792 = vmatprep.subr.mxu0 0.0
        %4793 = vmatpush1.msra.mxu0 0.0
        %4794 = vmatprep.subr.mxu0 0.0
        %4795 = vmatpush1.msra.mxu0 0.0
        %4796 = vmatprep.mubr.f32.mxu0 0.0
        %4797 = vmatmul.mubr.f32.gmra.mrb[0].mxu0 %v4727
        %v4798 = vpop.f32.mrb[0].mxu0
        %v4799 = vadd.f32 0.0, %v4798
        %v4800 = vpop.f32.mrb[0].mxu0
        %4801 = vmatprep.mubr.f32.mxu0 0.0
        %4802 = vmatmul.mubr.f32.gmra.mrb[0].mxu0 %v4730
        %v4803 = vpop.f32.mrb[0].mxu0
        %v4804 = vadd.f32 0.0, %v4803
        %v4805 = vpop.f32.mrb[0].mxu0
        %4806 = vdwg.mxu0
        %v4808 = vsel %vm311, %v4722, 0
        %v4811 = vsel %vm311, %v4723, 0
        %4813 = vmatprep.subr.mxu0 0.0
        %4814 = vmatpush1.msra.mxu0 %v4331
        %4815 = vmatprep.subr.mxu0 0.0
        %4816 = vmatpush1.msra.mxu0 %v4332
        %4817 = vmatprep.subr.mxu0 0.0
        %4818 = vmatpush1.msra.mxu0 0.0
        %4819 = vmatprep.subr.mxu0 0.0
        %4820 = vmatpush1.msra.mxu0 0.0
        %4821 = vmatprep.subr.mxu0 0.0
        %4822 = vmatpush1.msra.mxu0 0.0
        %4823 = vmatprep.subr.mxu0 0.0
        %4824 = vmatpush1.msra.mxu0 0.0
        %4825 = vmatprep.subr.mxu0 0.0
        %4826 = vmatpush1.msra.mxu0 0.0
        %4827 = vmatprep.subr.mxu0 0.0
        %4828 = vmatpush1.msra.mxu0 0.0
        %4829 = vmatprep.subr.mxu0 0.0
        %4830 = vmatpush1.msra.mxu0 0.0
        %4831 = vmatprep.subr.mxu0 0.0
        %4832 = vmatpush1.msra.mxu0 0.0
        %4833 = vmatprep.subr.mxu0 0.0
        %4834 = vmatpush1.msra.mxu0 0.0
        %4835 = vmatprep.subr.mxu0 0.0
        %4836 = vmatpush1.msra.mxu0 0.0
        %4837 = vmatprep.subr.mxu0 0.0
        %4838 = vmatpush1.msra.mxu0 0.0
        %4839 = vmatprep.subr.mxu0 0.0
        %4840 = vmatpush1.msra.mxu0 0.0
        %4841 = vmatprep.subr.mxu0 0.0
        %4842 = vmatpush1.msra.mxu0 0.0
        %4843 = vmatprep.subr.mxu0 0.0
        %4844 = vmatpush1.msra.mxu0 0.0
        %4845 = vmatprep.subr.mxu0 0.0
        %4846 = vmatpush1.msra.mxu0 0.0
        %4847 = vmatprep.subr.mxu0 0.0
        %4848 = vmatpush1.msra.mxu0 0.0
        %4849 = vmatprep.subr.mxu0 0.0
        %4850 = vmatpush1.msra.mxu0 0.0
        %4851 = vmatprep.subr.mxu0 0.0
        %4852 = vmatpush1.msra.mxu0 0.0
        %4853 = vmatprep.subr.mxu0 0.0
        %4854 = vmatpush1.msra.mxu0 0.0
        %4855 = vmatprep.subr.mxu0 0.0
        %4856 = vmatpush1.msra.mxu0 0.0
        %4857 = vmatprep.subr.mxu0 0.0
        %4858 = vmatpush1.msra.mxu0 0.0
        %4859 = vmatprep.subr.mxu0 0.0
        %4860 = vmatpush1.msra.mxu0 0.0
        %4861 = vmatprep.subr.mxu0 0.0
        %4862 = vmatpush1.msra.mxu0 0.0
        %4863 = vmatprep.subr.mxu0 0.0
        %4864 = vmatpush1.msra.mxu0 0.0
        %4865 = vmatprep.subr.mxu0 0.0
        %4866 = vmatpush1.msra.mxu0 0.0
        %4867 = vmatprep.subr.mxu0 0.0
        %4868 = vmatpush1.msra.mxu0 0.0
        %4869 = vmatprep.subr.mxu0 0.0
        %4870 = vmatpush1.msra.mxu0 0.0
        %4871 = vmatprep.subr.mxu0 0.0
        %4872 = vmatpush1.msra.mxu0 0.0
        %4873 = vmatprep.subr.mxu0 0.0
        %4874 = vmatpush1.msra.mxu0 0.0
        %4875 = vmatprep.subr.mxu0 0.0
        %4876 = vmatpush1.msra.mxu0 0.0
        %4877 = vmatprep.mubr.f32.mxu0 0.0
        %4878 = vmatmul.mubr.f32.gmra.mrb[0].mxu0 %v4808
        %v4879 = vpop.f32.mrb[0].mxu0
        %v4880 = vadd.f32 %v4799, %v4879
        %v4881 = vpop.f32.mrb[0].mxu0
        %4882 = vmatprep.mubr.f32.mxu0 0.0
        %4883 = vmatmul.mubr.f32.gmra.mrb[0].mxu0 %v4811
        %v4884 = vpop.f32.mrb[0].mxu0
        %v4885 = vadd.f32 %v4804, %v4884
        %v4886 = vpop.f32.mrb[0].mxu0
        %4887 = vdwg.mxu0
        %v4888 = vpack.c.bf16 %v4720, %v4719
        %v4889 = vunpack.c.l.bf16 %v4888
        %v4890 = vunpack.c.h.bf16 %v4888
        %v4891 = vsub.f32 %v4719, %v4889
        %v4892 = vsub.f32 %v4720, %v4890
        %4895 = vrot.lane.b32.xlu0 %v4891, 127
        %v4896 = vpop.permute.xlu0 %4895
        %4897 = vrot.lane.b32.xlu0 %v4892, 127
        %v4898 = vpop.permute.xlu0 %4897
        %v4899 = vsel %vm311, %v4896, 0
        %v4901 = vsel %vm311, %v4898, 0
        %4903 = vmatprep.subr.mxu0 0.0
        %4904 = vmatpush1.msra.mxu0 %v4339
        %4905 = vmatprep.subr.mxu0 0.0
        %4906 = vmatpush1.msra.mxu0 %v4340
        %4907 = vmatprep.subr.mxu0 0.0
        %4908 = vmatpush1.msra.mxu0 0.0
        %4909 = vmatprep.subr.mxu0 0.0
        %4910 = vmatpush1.msra.mxu0 0.0
        %4911 = vmatprep.subr.mxu0 0.0
        %4912 = vmatpush1.msra.mxu0 0.0
        %4913 = vmatprep.subr.mxu0 0.0
        %4914 = vmatpush1.msra.mxu0 0.0
        %4915 = vmatprep.subr.mxu0 0.0
        %4916 = vmatpush1.msra.mxu0 0.0
        %4917 = vmatprep.subr.mxu0 0.0
        %4918 = vmatpush1.msra.mxu0 0.0
        %4919 = vmatprep.subr.mxu0 0.0
        %4920 = vmatpush1.msra.mxu0 0.0
        %4921 = vmatprep.subr.mxu0 0.0
        %4922 = vmatpush1.msra.mxu0 0.0
        %4923 = vmatprep.subr.mxu0 0.0
        %4924 = vmatpush1.msra.mxu0 0.0
        %4925 = vmatprep.subr.mxu0 0.0
        %4926 = vmatpush1.msra.mxu0 0.0
        %4927 = vmatprep.subr.mxu0 0.0
        %4928 = vmatpush1.msra.mxu0 0.0
        %4929 = vmatprep.subr.mxu0 0.0
        %4930 = vmatpush1.msra.mxu0 0.0
        %4931 = vmatprep.subr.mxu0 0.0
        %4932 = vmatpush1.msra.mxu0 0.0
        %4933 = vmatprep.subr.mxu0 0.0
        %4934 = vmatpush1.msra.mxu0 0.0
        %4935 = vmatprep.subr.mxu0 0.0
        %4936 = vmatpush1.msra.mxu0 0.0
        %4937 = vmatprep.subr.mxu0 0.0
        %4938 = vmatpush1.msra.mxu0 0.0
        %4939 = vmatprep.subr.mxu0 0.0
        %4940 = vmatpush1.msra.mxu0 0.0
        %4941 = vmatprep.subr.mxu0 0.0
        %4942 = vmatpush1.msra.mxu0 0.0
        %4943 = vmatprep.subr.mxu0 0.0
        %4944 = vmatpush1.msra.mxu0 0.0
        %4945 = vmatprep.subr.mxu0 0.0
        %4946 = vmatpush1.msra.mxu0 0.0
        %4947 = vmatprep.subr.mxu0 0.0
        %4948 = vmatpush1.msra.mxu0 0.0
        %4949 = vmatprep.subr.mxu0 0.0
        %4950 = vmatpush1.msra.mxu0 0.0
        %4951 = vmatprep.subr.mxu0 0.0
        %4952 = vmatpush1.msra.mxu0 0.0
        %4953 = vmatprep.subr.mxu0 0.0
        %4954 = vmatpush1.msra.mxu0 0.0
        %4955 = vmatprep.subr.mxu0 0.0
        %4956 = vmatpush1.msra.mxu0 0.0
        %4957 = vmatprep.subr.mxu0 0.0
        %4958 = vmatpush1.msra.mxu0 0.0
        %4959 = vmatprep.subr.mxu0 0.0
        %4960 = vmatpush1.msra.mxu0 0.0
        %4961 = vmatprep.subr.mxu0 0.0
        %4962 = vmatpush1.msra.mxu0 0.0
        %4963 = vmatprep.subr.mxu0 0.0
        %4964 = vmatpush1.msra.mxu0 0.0
        %4965 = vmatprep.subr.mxu0 0.0
        %4966 = vmatpush1.msra.mxu0 0.0
        %4967 = vmatprep.mubr.f32.mxu0 0.0
        %4968 = vmatmul.mubr.f32.gmra.mrb[0].mxu0 %v4899
        %v4969 = vpop.f32.mrb[0].mxu0
        %v4970 = vadd.f32 0.0, %v4969
        %v4971 = vpop.f32.mrb[0].mxu0
        %4972 = vmatprep.mubr.f32.mxu0 0.0
        %4973 = vmatmul.mubr.f32.gmra.mrb[0].mxu0 %v4901
        %v4974 = vpop.f32.mrb[0].mxu0
        %v4975 = vadd.f32 0.0, %v4974
        %v4976 = vpop.f32.mrb[0].mxu0
        %4977 = vdwg.mxu0
        %4980 = vrot.lane.b32.xlu0 %v4889, 127
        %v4981 = vpop.permute.xlu0 %4980
        %4982 = vrot.lane.b32.xlu0 %v4890, 127
        %v4983 = vpop.permute.xlu0 %4982
        %v4984 = vsel %vm311, %v4981, 0
        %v4986 = vsel %vm311, %v4983, 0
        %4988 = vmatprep.subr.mxu0 0.0
        %4989 = vmatpush1.msra.mxu0 %v4339
        %4990 = vmatprep.subr.mxu0 0.0
        %4991 = vmatpush1.msra.mxu0 %v4340
        %4992 = vmatprep.subr.mxu0 0.0
        %4993 = vmatpush1.msra.mxu0 0.0
        %4994 = vmatprep.subr.mxu0 0.0
        %4995 = vmatpush1.msra.mxu0 0.0
        %4996 = vmatprep.subr.mxu0 0.0
        %4997 = vmatpush1.msra.mxu0 0.0
        %4998 = vmatprep.subr.mxu0 0.0
        %4999 = vmatpush1.msra.mxu0 0.0
        %5000 = vmatprep.subr.mxu0 0.0
        %5001 = vmatpush1.msra.mxu0 0.0
        %5002 = vmatprep.subr.mxu0 0.0
        %5003 = vmatpush1.msra.mxu0 0.0
        %5004 = vmatprep.subr.mxu0 0.0
        %5005 = vmatpush1.msra.mxu0 0.0
        %5006 = vmatprep.subr.mxu0 0.0
        %5007 = vmatpush1.msra.mxu0 0.0
        %5008 = vmatprep.subr.mxu0 0.0
        %5009 = vmatpush1.msra.mxu0 0.0
        %5010 = vmatprep.subr.mxu0 0.0
        %5011 = vmatpush1.msra.mxu0 0.0
        %5012 = vmatprep.subr.mxu0 0.0
        %5013 = vmatpush1.msra.mxu0 0.0
        %5014 = vmatprep.subr.mxu0 0.0
        %5015 = vmatpush1.msra.mxu0 0.0
        %5016 = vmatprep.subr.mxu0 0.0
        %5017 = vmatpush1.msra.mxu0 0.0
        %5018 = vmatprep.subr.mxu0 0.0
        %5019 = vmatpush1.msra.mxu0 0.0
        %5020 = vmatprep.subr.mxu0 0.0
        %5021 = vmatpush1.msra.mxu0 0.0
        %5022 = vmatprep.subr.mxu0 0.0
        %5023 = vmatpush1.msra.mxu0 0.0
        %5024 = vmatprep.subr.mxu0 0.0
        %5025 = vmatpush1.msra.mxu0 0.0
        %5026 = vmatprep.subr.mxu0 0.0
        %5027 = vmatpush1.msra.mxu0 0.0
        %5028 = vmatprep.subr.mxu0 0.0
        %5029 = vmatpush1.msra.mxu0 0.0
        %5030 = vmatprep.subr.mxu0 0.0
        %5031 = vmatpush1.msra.mxu0 0.0
        %5032 = vmatprep.subr.mxu0 0.0
        %5033 = vmatpush1.msra.mxu0 0.0
        %5034 = vmatprep.subr.mxu0 0.0
        %5035 = vmatpush1.msra.mxu0 0.0
        %5036 = vmatprep.subr.mxu0 0.0
        %5037 = vmatpush1.msra.mxu0 0.0
        %5038 = vmatprep.subr.mxu0 0.0
        %5039 = vmatpush1.msra.mxu0 0.0
        %5040 = vmatprep.subr.mxu0 0.0
        %5041 = vmatpush1.msra.mxu0 0.0
        %5042 = vmatprep.subr.mxu0 0.0
        %5043 = vmatpush1.msra.mxu0 0.0
        %5044 = vmatprep.subr.mxu0 0.0
        %5045 = vmatpush1.msra.mxu0 0.0
        %5046 = vmatprep.subr.mxu0 0.0
        %5047 = vmatpush1.msra.mxu0 0.0
        %5048 = vmatprep.subr.mxu0 0.0
        %5049 = vmatpush1.msra.mxu0 0.0
        %5050 = vmatprep.subr.mxu0 0.0
        %5051 = vmatpush1.msra.mxu0 0.0
        %5052 = vmatprep.mubr.f32.mxu0 0.0
        %5053 = vmatmul.mubr.f32.gmra.mrb[0].mxu0 %v4984
        %v5054 = vpop.f32.mrb[0].mxu0
        %v5055 = vadd.f32 %v4970, %v5054
        %v5056 = vpop.f32.mrb[0].mxu0
        %5057 = vmatprep.mubr.f32.mxu0 0.0
        %5058 = vmatmul.mubr.f32.gmra.mrb[0].mxu0 %v4986
        %v5059 = vpop.f32.mrb[0].mxu0
        %v5060 = vadd.f32 %v4975, %v5059
        %v5061 = vpop.f32.mrb[0].mxu0
        %5062 = vdwg.mxu0
        %v5063 = vadd.f32 %v4880, %v5055
        %v5064 = vadd.f32 %v4885, %v5060
        %v5065 = vpack.c.bf16 %v4716, %v4715
        %v5066 = vunpack.c.l.bf16 %v5065
        %v5067 = vunpack.c.h.bf16 %v5065
        %v5068 = vsub.f32 %v4715, %v5066
        %v5069 = vsub.f32 %v4716, %v5067
        %v5071 = vsel %vm311, %v4352, 0
        %v5074 = vsel %vm311, %v4353, 0
        %v5077 = vsel %vm311, %v4354, 0
        %v5080 = vsel %vm311, %v4355, 0
        %5082 = vmatprep.subr.mxu0 0.0
        %5083 = vmatpush1.msra.mxu0 %v5068
        %5084 = vmatprep.subr.mxu0 0.0
        %5085 = vmatpush1.msra.mxu0 %v5069
        %5086 = vmatprep.subr.mxu0 0.0
        %5087 = vmatpush1.msra.mxu0 0.0
        %5088 = vmatprep.subr.mxu0 0.0
        %5089 = vmatpush1.msra.mxu0 0.0
        %5090 = vmatprep.subr.mxu0 0.0
        %5091 = vmatpush1.msra.mxu0 0.0
        %5092 = vmatprep.subr.mxu0 0.0
        %5093 = vmatpush1.msra.mxu0 0.0
        %5094 = vmatprep.subr.mxu0 0.0
        %5095 = vmatpush1.msra.mxu0 0.0
        %5096 = vmatprep.subr.mxu0 0.0
        %5097 = vmatpush1.msra.mxu0 0.0
        %5098 = vmatprep.subr.mxu0 0.0
        %5099 = vmatpush1.msra.mxu0 0.0
        %5100 = vmatprep.subr.mxu0 0.0
        %5101 = vmatpush1.msra.mxu0 0.0
        %5102 = vmatprep.subr.mxu0 0.0
        %5103 = vmatpush1.msra.mxu0 0.0
        %5104 = vmatprep.subr.mxu0 0.0
        %5105 = vmatpush1.msra.mxu0 0.0
        %5106 = vmatprep.subr.mxu0 0.0
        %5107 = vmatpush1.msra.mxu0 0.0
        %5108 = vmatprep.subr.mxu0 0.0
        %5109 = vmatpush1.msra.mxu0 0.0
        %5110 = vmatprep.subr.mxu0 0.0
        %5111 = vmatpush1.msra.mxu0 0.0
        %5112 = vmatprep.subr.mxu0 0.0
        %5113 = vmatpush1.msra.mxu0 0.0
        %5114 = vmatprep.subr.mxu0 0.0
        %5115 = vmatpush1.msra.mxu0 0.0
        %5116 = vmatprep.subr.mxu0 0.0
        %5117 = vmatpush1.msra.mxu0 0.0
        %5118 = vmatprep.subr.mxu0 0.0
        %5119 = vmatpush1.msra.mxu0 0.0
        %5120 = vmatprep.subr.mxu0 0.0
        %5121 = vmatpush1.msra.mxu0 0.0
        %5122 = vmatprep.subr.mxu0 0.0
        %5123 = vmatpush1.msra.mxu0 0.0
        %5124 = vmatprep.subr.mxu0 0.0
        %5125 = vmatpush1.msra.mxu0 0.0
        %5126 = vmatprep.subr.mxu0 0.0
        %5127 = vmatpush1.msra.mxu0 0.0
        %5128 = vmatprep.subr.mxu0 0.0
        %5129 = vmatpush1.msra.mxu0 0.0
        %5130 = vmatprep.subr.mxu0 0.0
        %5131 = vmatpush1.msra.mxu0 0.0
        %5132 = vmatprep.subr.mxu0 0.0
        %5133 = vmatpush1.msra.mxu0 0.0
        %5134 = vmatprep.subr.mxu0 0.0
        %5135 = vmatpush1.msra.mxu0 0.0
        %5136 = vmatprep.subr.mxu0 0.0
        %5137 = vmatpush1.msra.mxu0 0.0
        %5138 = vmatprep.subr.mxu0 0.0
        %5139 = vmatpush1.msra.mxu0 0.0
        %5140 = vmatprep.subr.mxu0 0.0
        %5141 = vmatpush1.msra.mxu0 0.0
        %5142 = vmatprep.subr.mxu0 0.0
        %5143 = vmatpush1.msra.mxu0 0.0
        %5144 = vmatprep.subr.mxu0 0.0
        %5145 = vmatpush1.msra.mxu0 0.0
        %5146 = vmatprep.mubr.f32.mxu0 0.0
        %5147 = vmatmul.mubr.f32.gmra.mrb[0].mxu0 %v5071
        %v5148 = vpop.f32.mrb[0].mxu0
        %v5149 = vadd.f32 0.0, %v5148
        %v5150 = vpop.f32.mrb[0].mxu0
        %5151 = vmatprep.mubr.f32.mxu0 0.0
        %5152 = vmatmul.mubr.f32.gmra.mrb[0].mxu0 %v5074
        %v5153 = vpop.f32.mrb[0].mxu0
        %v5154 = vadd.f32 0.0, %v5153
        %v5155 = vpop.f32.mrb[0].mxu0
        %5156 = vmatprep.mubr.f32.mxu0 0.0
        %5157 = vmatmul.mubr.f32.gmra.mrb[0].mxu0 %v5077
        %v5158 = vpop.f32.mrb[0].mxu0
        %v5159 = vadd.f32 0.0, %v5158
        %v5160 = vpop.f32.mrb[0].mxu0
        %5161 = vmatprep.mubr.f32.mxu0 0.0
        %5162 = vmatmul.mubr.f32.gmra.mrb[0].mxu0 %v5080
        %v5163 = vpop.f32.mrb[0].mxu0
        %v5164 = vadd.f32 0.0, %v5163
        %v5165 = vpop.f32.mrb[0].mxu0
        %5166 = vdwg.mxu0
        %5167 = vmatprep.subr.mxu0 0.0
        %5168 = vmatpush1.msra.mxu0 %v5066
        %5169 = vmatprep.subr.mxu0 0.0
        %5170 = vmatpush1.msra.mxu0 %v5067
        %5171 = vmatprep.subr.mxu0 0.0
        %5172 = vmatpush1.msra.mxu0 0.0
        %5173 = vmatprep.subr.mxu0 0.0
        %5174 = vmatpush1.msra.mxu0 0.0
        %5175 = vmatprep.subr.mxu0 0.0
        %5176 = vmatpush1.msra.mxu0 0.0
        %5177 = vmatprep.subr.mxu0 0.0
        %5178 = vmatpush1.msra.mxu0 0.0
        %5179 = vmatprep.subr.mxu0 0.0
        %5180 = vmatpush1.msra.mxu0 0.0
        %5181 = vmatprep.subr.mxu0 0.0
        %5182 = vmatpush1.msra.mxu0 0.0
        %5183 = vmatprep.subr.mxu0 0.0
        %5184 = vmatpush1.msra.mxu0 0.0
        %5185 = vmatprep.subr.mxu0 0.0
        %5186 = vmatpush1.msra.mxu0 0.0
        %5187 = vmatprep.subr.mxu0 0.0
        %5188 = vmatpush1.msra.mxu0 0.0
        %5189 = vmatprep.subr.mxu0 0.0
        %5190 = vmatpush1.msra.mxu0 0.0
        %5191 = vmatprep.subr.mxu0 0.0
        %5192 = vmatpush1.msra.mxu0 0.0
        %5193 = vmatprep.subr.mxu0 0.0
        %5194 = vmatpush1.msra.mxu0 0.0
        %5195 = vmatprep.subr.mxu0 0.0
        %5196 = vmatpush1.msra.mxu0 0.0
        %5197 = vmatprep.subr.mxu0 0.0
        %5198 = vmatpush1.msra.mxu0 0.0
        %5199 = vmatprep.subr.mxu0 0.0
        %5200 = vmatpush1.msra.mxu0 0.0
        %5201 = vmatprep.subr.mxu0 0.0
        %5202 = vmatpush1.msra.mxu0 0.0
        %5203 = vmatprep.subr.mxu0 0.0
        %5204 = vmatpush1.msra.mxu0 0.0
        %5205 = vmatprep.subr.mxu0 0.0
        %5206 = vmatpush1.msra.mxu0 0.0
        %5207 = vmatprep.subr.mxu0 0.0
        %5208 = vmatpush1.msra.mxu0 0.0
        %5209 = vmatprep.subr.mxu0 0.0
        %5210 = vmatpush1.msra.mxu0 0.0
        %5211 = vmatprep.subr.mxu0 0.0
        %5212 = vmatpush1.msra.mxu0 0.0
        %5213 = vmatprep.subr.mxu0 0.0
        %5214 = vmatpush1.msra.mxu0 0.0
        %5215 = vmatprep.subr.mxu0 0.0
        %5216 = vmatpush1.msra.mxu0 0.0
        %5217 = vmatprep.subr.mxu0 0.0
        %5218 = vmatpush1.msra.mxu0 0.0
        %5219 = vmatprep.subr.mxu0 0.0
        %5220 = vmatpush1.msra.mxu0 0.0
        %5221 = vmatprep.subr.mxu0 0.0
        %5222 = vmatpush1.msra.mxu0 0.0
        %5223 = vmatprep.subr.mxu0 0.0
        %5224 = vmatpush1.msra.mxu0 0.0
        %5225 = vmatprep.subr.mxu0 0.0
        %5226 = vmatpush1.msra.mxu0 0.0
        %5227 = vmatprep.subr.mxu0 0.0
        %5228 = vmatpush1.msra.mxu0 0.0
        %5229 = vmatprep.subr.mxu0 0.0
        %5230 = vmatpush1.msra.mxu0 0.0
        %5231 = vmatprep.mubr.f32.mxu0 0.0
        %5232 = vmatmul.mubr.f32.gmra.mrb[0].mxu0 %v5071
        %v5233 = vpop.f32.mrb[0].mxu0
        %v5234 = vadd.f32 %v5149, %v5233
        %v5235 = vpop.f32.mrb[0].mxu0
        %5236 = vmatprep.mubr.f32.mxu0 0.0
        %5237 = vmatmul.mubr.f32.gmra.mrb[0].mxu0 %v5074
        %v5238 = vpop.f32.mrb[0].mxu0
        %v5239 = vadd.f32 %v5154, %v5238
        %v5240 = vpop.f32.mrb[0].mxu0
        %5241 = vmatprep.mubr.f32.mxu0 0.0
        %5242 = vmatmul.mubr.f32.gmra.mrb[0].mxu0 %v5077
        %v5243 = vpop.f32.mrb[0].mxu0
        %v5244 = vadd.f32 %v5159, %v5243
        %v5245 = vpop.f32.mrb[0].mxu0
        %5246 = vmatprep.mubr.f32.mxu0 0.0
        %5247 = vmatmul.mubr.f32.gmra.mrb[0].mxu0 %v5080
        %v5248 = vpop.f32.mrb[0].mxu0
        %v5249 = vadd.f32 %v5164, %v5248
        %v5250 = vpop.f32.mrb[0].mxu0
        %5251 = vdwg.mxu0
        %v5252 = vpack.c.bf16 %v5064, %v5063
        %v5253 = vunpack.c.l.bf16 %v5252
        %v5254 = vunpack.c.h.bf16 %v5252
        %v5255 = vsub.f32 %v5063, %v5253
        %v5256 = vsub.f32 %v5064, %v5254
        %v5258 = vsel %vm311, %v4365, 0
        %v5261 = vsel %vm311, %v4366, 0
        %v5264 = vsel %vm311, %v4367, 0
        %v5267 = vsel %vm311, %v4368, 0
        %5269 = vmatprep.subr.mxu0 0.0
        %5270 = vmatpush1.msra.mxu0 %v5255
        %5271 = vmatprep.subr.mxu0 0.0
        %5272 = vmatpush1.msra.mxu0 %v5256
        %5273 = vmatprep.subr.mxu0 0.0
        %5274 = vmatpush1.msra.mxu0 0.0
        %5275 = vmatprep.subr.mxu0 0.0
        %5276 = vmatpush1.msra.mxu0 0.0
        %5277 = vmatprep.subr.mxu0 0.0
        %5278 = vmatpush1.msra.mxu0 0.0
        %5279 = vmatprep.subr.mxu0 0.0
        %5280 = vmatpush1.msra.mxu0 0.0
        %5281 = vmatprep.subr.mxu0 0.0
        %5282 = vmatpush1.msra.mxu0 0.0
        %5283 = vmatprep.subr.mxu0 0.0
        %5284 = vmatpush1.msra.mxu0 0.0
        %5285 = vmatprep.subr.mxu0 0.0
        %5286 = vmatpush1.msra.mxu0 0.0
        %5287 = vmatprep.subr.mxu0 0.0
        %5288 = vmatpush1.msra.mxu0 0.0
        %5289 = vmatprep.subr.mxu0 0.0
        %5290 = vmatpush1.msra.mxu0 0.0
        %5291 = vmatprep.subr.mxu0 0.0
        %5292 = vmatpush1.msra.mxu0 0.0
        %5293 = vmatprep.subr.mxu0 0.0
        %5294 = vmatpush1.msra.mxu0 0.0
        %5295 = vmatprep.subr.mxu0 0.0
        %5296 = vmatpush1.msra.mxu0 0.0
        %5297 = vmatprep.subr.mxu0 0.0
        %5298 = vmatpush1.msra.mxu0 0.0
        %5299 = vmatprep.subr.mxu0 0.0
        %5300 = vmatpush1.msra.mxu0 0.0
        %5301 = vmatprep.subr.mxu0 0.0
        %5302 = vmatpush1.msra.mxu0 0.0
        %5303 = vmatprep.subr.mxu0 0.0
        %5304 = vmatpush1.msra.mxu0 0.0
        %5305 = vmatprep.subr.mxu0 0.0
        %5306 = vmatpush1.msra.mxu0 0.0
        %5307 = vmatprep.subr.mxu0 0.0
        %5308 = vmatpush1.msra.mxu0 0.0
        %5309 = vmatprep.subr.mxu0 0.0
        %5310 = vmatpush1.msra.mxu0 0.0
        %5311 = vmatprep.subr.mxu0 0.0
        %5312 = vmatpush1.msra.mxu0 0.0
        %5313 = vmatprep.subr.mxu0 0.0
        %5314 = vmatpush1.msra.mxu0 0.0
        %5315 = vmatprep.subr.mxu0 0.0
        %5316 = vmatpush1.msra.mxu0 0.0
        %5317 = vmatprep.subr.mxu0 0.0
        %5318 = vmatpush1.msra.mxu0 0.0
        %5319 = vmatprep.subr.mxu0 0.0
        %5320 = vmatpush1.msra.mxu0 0.0
        %5321 = vmatprep.subr.mxu0 0.0
        %5322 = vmatpush1.msra.mxu0 0.0
        %5323 = vmatprep.subr.mxu0 0.0
        %5324 = vmatpush1.msra.mxu0 0.0
        %5325 = vmatprep.subr.mxu0 0.0
        %5326 = vmatpush1.msra.mxu0 0.0
        %5327 = vmatprep.subr.mxu0 0.0
        %5328 = vmatpush1.msra.mxu0 0.0
        %5329 = vmatprep.subr.mxu0 0.0
        %5330 = vmatpush1.msra.mxu0 0.0
        %5331 = vmatprep.subr.mxu0 0.0
        %5332 = vmatpush1.msra.mxu0 0.0
        %5333 = vmatprep.mubr.f32.mxu0 0.0
        %5334 = vmatmul.mubr.f32.gmra.mrb[0].mxu0 %v5258
        %v5335 = vpop.f32.mrb[0].mxu0
        %v5336 = vadd.f32 0.0, %v5335
        %v5337 = vpop.f32.mrb[0].mxu0
        %5338 = vmatprep.mubr.f32.mxu0 0.0
        %5339 = vmatmul.mubr.f32.gmra.mrb[0].mxu0 %v5261
        %v5340 = vpop.f32.mrb[0].mxu0
        %v5341 = vadd.f32 0.0, %v5340
        %v5342 = vpop.f32.mrb[0].mxu0
        %5343 = vmatprep.mubr.f32.mxu0 0.0
        %5344 = vmatmul.mubr.f32.gmra.mrb[0].mxu0 %v5264
        %v5345 = vpop.f32.mrb[0].mxu0
        %v5346 = vadd.f32 0.0, %v5345
        %v5347 = vpop.f32.mrb[0].mxu0
        %5348 = vmatprep.mubr.f32.mxu0 0.0
        %5349 = vmatmul.mubr.f32.gmra.mrb[0].mxu0 %v5267
        %v5350 = vpop.f32.mrb[0].mxu0
        %v5351 = vadd.f32 0.0, %v5350
        %v5352 = vpop.f32.mrb[0].mxu0
        %5353 = vdwg.mxu0
        %5354 = vmatprep.subr.mxu0 0.0
        %5355 = vmatpush1.msra.mxu0 %v5253
        %5356 = vmatprep.subr.mxu0 0.0
        %5357 = vmatpush1.msra.mxu0 %v5254
        %5358 = vmatprep.subr.mxu0 0.0
        %5359 = vmatpush1.msra.mxu0 0.0
        %5360 = vmatprep.subr.mxu0 0.0
        %5361 = vmatpush1.msra.mxu0 0.0
        %5362 = vmatprep.subr.mxu0 0.0
        %5363 = vmatpush1.msra.mxu0 0.0
        %5364 = vmatprep.subr.mxu0 0.0
        %5365 = vmatpush1.msra.mxu0 0.0
        %5366 = vmatprep.subr.mxu0 0.0
        %5367 = vmatpush1.msra.mxu0 0.0
        %5368 = vmatprep.subr.mxu0 0.0
        %5369 = vmatpush1.msra.mxu0 0.0
        %5370 = vmatprep.subr.mxu0 0.0
        %5371 = vmatpush1.msra.mxu0 0.0
        %5372 = vmatprep.subr.mxu0 0.0
        %5373 = vmatpush1.msra.mxu0 0.0
        %5374 = vmatprep.subr.mxu0 0.0
        %5375 = vmatpush1.msra.mxu0 0.0
        %5376 = vmatprep.subr.mxu0 0.0
        %5377 = vmatpush1.msra.mxu0 0.0
        %5378 = vmatprep.subr.mxu0 0.0
        %5379 = vmatpush1.msra.mxu0 0.0
        %5380 = vmatprep.subr.mxu0 0.0
        %5381 = vmatpush1.msra.mxu0 0.0
        %5382 = vmatprep.subr.mxu0 0.0
        %5383 = vmatpush1.msra.mxu0 0.0
        %5384 = vmatprep.subr.mxu0 0.0
        %5385 = vmatpush1.msra.mxu0 0.0
        %5386 = vmatprep.subr.mxu0 0.0
        %5387 = vmatpush1.msra.mxu0 0.0
        %5388 = vmatprep.subr.mxu0 0.0
        %5389 = vmatpush1.msra.mxu0 0.0
        %5390 = vmatprep.subr.mxu0 0.0
        %5391 = vmatpush1.msra.mxu0 0.0
        %5392 = vmatprep.subr.mxu0 0.0
        %5393 = vmatpush1.msra.mxu0 0.0
        %5394 = vmatprep.subr.mxu0 0.0
        %5395 = vmatpush1.msra.mxu0 0.0
        %5396 = vmatprep.subr.mxu0 0.0
        %5397 = vmatpush1.msra.mxu0 0.0
        %5398 = vmatprep.subr.mxu0 0.0
        %5399 = vmatpush1.msra.mxu0 0.0
        %5400 = vmatprep.subr.mxu0 0.0
        %5401 = vmatpush1.msra.mxu0 0.0
        %5402 = vmatprep.subr.mxu0 0.0
        %5403 = vmatpush1.msra.mxu0 0.0
        %5404 = vmatprep.subr.mxu0 0.0
        %5405 = vmatpush1.msra.mxu0 0.0
        %5406 = vmatprep.subr.mxu0 0.0
        %5407 = vmatpush1.msra.mxu0 0.0
        %5408 = vmatprep.subr.mxu0 0.0
        %5409 = vmatpush1.msra.mxu0 0.0
        %5410 = vmatprep.subr.mxu0 0.0
        %5411 = vmatpush1.msra.mxu0 0.0
        %5412 = vmatprep.subr.mxu0 0.0
        %5413 = vmatpush1.msra.mxu0 0.0
        %5414 = vmatprep.subr.mxu0 0.0
        %5415 = vmatpush1.msra.mxu0 0.0
        %5416 = vmatprep.subr.mxu0 0.0
        %5417 = vmatpush1.msra.mxu0 0.0
        %5418 = vmatprep.mubr.f32.mxu0 0.0
        %5419 = vmatmul.mubr.f32.gmra.mrb[0].mxu0 %v5258
        %v5420 = vpop.f32.mrb[0].mxu0
        %v5421 = vadd.f32 %v5336, %v5420
        %v5422 = vpop.f32.mrb[0].mxu0
        %5423 = vmatprep.mubr.f32.mxu0 0.0
        %5424 = vmatmul.mubr.f32.gmra.mrb[0].mxu0 %v5261
        %v5425 = vpop.f32.mrb[0].mxu0
        %v5426 = vadd.f32 %v5341, %v5425
        %v5427 = vpop.f32.mrb[0].mxu0
        %5428 = vmatprep.mubr.f32.mxu0 0.0
        %5429 = vmatmul.mubr.f32.gmra.mrb[0].mxu0 %v5264
        %v5430 = vpop.f32.mrb[0].mxu0
        %v5431 = vadd.f32 %v5346, %v5430
        %v5432 = vpop.f32.mrb[0].mxu0
        %5433 = vmatprep.mubr.f32.mxu0 0.0
        %5434 = vmatmul.mubr.f32.gmra.mrb[0].mxu0 %v5267
        %v5435 = vpop.f32.mrb[0].mxu0
        %v5436 = vadd.f32 %v5351, %v5435
        %v5437 = vpop.f32.mrb[0].mxu0
        %5438 = vdwg.mxu0
        %v5439 = vadd.f32 %v5234, %v5421
        %v5440 = vadd.f32 %v5239, %v5426
        %v5441 = vadd.f32 %v5244, %v5431
        %v5442 = vadd.f32 %v5249, %v5436
        %vm5443 = vcmask 261120
        %5444 = vst.msk [vmem:[%s294] sm:$0xff] %vm5443, %v5439
        %5445 = vst.msk [vmem:[%s294 + $0x8] sm:$0xff] %vm5443, %v5440
        %5446 = vst.msk [vmem:[%s294 + $0x10] sm:$0xff] %vm5443, %v5441
        %5447 = vst.msk [vmem:[%s294 + $0x18] sm:$0xff] %vm5443, %v5442
        %v5448 = vmax.f32 %v4130, 0.0
        %v5449 = vmax.f32 %v4131, 0.0
        %v5450 = vmax.f32 %v4194, 0.0
        %v5451 = vmax.f32 %v4195, 0.0
        %v5452 = vpack.c.bf16 %v5449, %v5448
        %v5453 = vunpack.c.l.bf16 %v5452
        %v5454 = vunpack.c.h.bf16 %v5452
        %v5455 = vsub.f32 %v5448, %v5453
        %v5456 = vsub.f32 %v5449, %v5454
        %v5458 = vsel %vm311, %v5455, 0
        %v5461 = vsel %vm311, %v5456, 0
        %5463 = vmatprep.subr.mxu0 0.0
        %5464 = vmatpush1.msra.mxu0 %v4331
        %5465 = vmatprep.subr.mxu0 0.0
        %5466 = vmatpush1.msra.mxu0 %v4332
        %5467 = vmatprep.subr.mxu0 0.0
        %5468 = vmatpush1.msra.mxu0 0.0
        %5469 = vmatprep.subr.mxu0 0.0
        %5470 = vmatpush1.msra.mxu0 0.0
        %5471 = vmatprep.subr.mxu0 0.0
        %5472 = vmatpush1.msra.mxu0 0.0
        %5473 = vmatprep.subr.mxu0 0.0
        %5474 = vmatpush1.msra.mxu0 0.0
        %5475 = vmatprep.subr.mxu0 0.0
        %5476 = vmatpush1.msra.mxu0 0.0
        %5477 = vmatprep.subr.mxu0 0.0
        %5478 = vmatpush1.msra.mxu0 0.0
        %5479 = vmatprep.subr.mxu0 0.0
        %5480 = vmatpush1.msra.mxu0 0.0
        %5481 = vmatprep.subr.mxu0 0.0
        %5482 = vmatpush1.msra.mxu0 0.0
        %5483 = vmatprep.subr.mxu0 0.0
        %5484 = vmatpush1.msra.mxu0 0.0
        %5485 = vmatprep.subr.mxu0 0.0
        %5486 = vmatpush1.msra.mxu0 0.0
        %5487 = vmatprep.subr.mxu0 0.0
        %5488 = vmatpush1.msra.mxu0 0.0
        %5489 = vmatprep.subr.mxu0 0.0
        %5490 = vmatpush1.msra.mxu0 0.0
        %5491 = vmatprep.subr.mxu0 0.0
        %5492 = vmatpush1.msra.mxu0 0.0
        %5493 = vmatprep.subr.mxu0 0.0
        %5494 = vmatpush1.msra.mxu0 0.0
        %5495 = vmatprep.subr.mxu0 0.0
        %5496 = vmatpush1.msra.mxu0 0.0
        %5497 = vmatprep.subr.mxu0 0.0
        %5498 = vmatpush1.msra.mxu0 0.0
        %5499 = vmatprep.subr.mxu0 0.0
        %5500 = vmatpush1.msra.mxu0 0.0
        %5501 = vmatprep.subr.mxu0 0.0
        %5502 = vmatpush1.msra.mxu0 0.0
        %5503 = vmatprep.subr.mxu0 0.0
        %5504 = vmatpush1.msra.mxu0 0.0
        %5505 = vmatprep.subr.mxu0 0.0
        %5506 = vmatpush1.msra.mxu0 0.0
        %5507 = vmatprep.subr.mxu0 0.0
        %5508 = vmatpush1.msra.mxu0 0.0
        %5509 = vmatprep.subr.mxu0 0.0
        %5510 = vmatpush1.msra.mxu0 0.0
        %5511 = vmatprep.subr.mxu0 0.0
        %5512 = vmatpush1.msra.mxu0 0.0
        %5513 = vmatprep.subr.mxu0 0.0
        %5514 = vmatpush1.msra.mxu0 0.0
        %5515 = vmatprep.subr.mxu0 0.0
        %5516 = vmatpush1.msra.mxu0 0.0
        %5517 = vmatprep.subr.mxu0 0.0
        %5518 = vmatpush1.msra.mxu0 0.0
        %5519 = vmatprep.subr.mxu0 0.0
        %5520 = vmatpush1.msra.mxu0 0.0
        %5521 = vmatprep.subr.mxu0 0.0
        %5522 = vmatpush1.msra.mxu0 0.0
        %5523 = vmatprep.subr.mxu0 0.0
        %5524 = vmatpush1.msra.mxu0 0.0
        %5525 = vmatprep.subr.mxu0 0.0
        %5526 = vmatpush1.msra.mxu0 0.0
        %5527 = vmatprep.mubr.f32.mxu0 0.0
        %5528 = vmatmul.mubr.f32.gmra.mrb[0].mxu0 %v5458
        %v5529 = vpop.f32.mrb[0].mxu0
        %v5530 = vadd.f32 0.0, %v5529
        %v5531 = vpop.f32.mrb[0].mxu0
        %5532 = vmatprep.mubr.f32.mxu0 0.0
        %5533 = vmatmul.mubr.f32.gmra.mrb[0].mxu0 %v5461
        %v5534 = vpop.f32.mrb[0].mxu0
        %v5535 = vadd.f32 0.0, %v5534
        %v5536 = vpop.f32.mrb[0].mxu0
        %5537 = vdwg.mxu0
        %v5539 = vsel %vm311, %v5453, 0
        %v5542 = vsel %vm311, %v5454, 0
        %5544 = vmatprep.subr.mxu0 0.0
        %5545 = vmatpush1.msra.mxu0 %v4331
        %5546 = vmatprep.subr.mxu0 0.0
        %5547 = vmatpush1.msra.mxu0 %v4332
        %5548 = vmatprep.subr.mxu0 0.0
        %5549 = vmatpush1.msra.mxu0 0.0
        %5550 = vmatprep.subr.mxu0 0.0
        %5551 = vmatpush1.msra.mxu0 0.0
        %5552 = vmatprep.subr.mxu0 0.0
        %5553 = vmatpush1.msra.mxu0 0.0
        %5554 = vmatprep.subr.mxu0 0.0
        %5555 = vmatpush1.msra.mxu0 0.0
        %5556 = vmatprep.subr.mxu0 0.0
        %5557 = vmatpush1.msra.mxu0 0.0
        %5558 = vmatprep.subr.mxu0 0.0
        %5559 = vmatpush1.msra.mxu0 0.0
        %5560 = vmatprep.subr.mxu0 0.0
        %5561 = vmatpush1.msra.mxu0 0.0
        %5562 = vmatprep.subr.mxu0 0.0
        %5563 = vmatpush1.msra.mxu0 0.0
        %5564 = vmatprep.subr.mxu0 0.0
        %5565 = vmatpush1.msra.mxu0 0.0
        %5566 = vmatprep.subr.mxu0 0.0
        %5567 = vmatpush1.msra.mxu0 0.0
        %5568 = vmatprep.subr.mxu0 0.0
        %5569 = vmatpush1.msra.mxu0 0.0
        %5570 = vmatprep.subr.mxu0 0.0
        %5571 = vmatpush1.msra.mxu0 0.0
        %5572 = vmatprep.subr.mxu0 0.0
        %5573 = vmatpush1.msra.mxu0 0.0
        %5574 = vmatprep.subr.mxu0 0.0
        %5575 = vmatpush1.msra.mxu0 0.0
        %5576 = vmatprep.subr.mxu0 0.0
        %5577 = vmatpush1.msra.mxu0 0.0
        %5578 = vmatprep.subr.mxu0 0.0
        %5579 = vmatpush1.msra.mxu0 0.0
        %5580 = vmatprep.subr.mxu0 0.0
        %5581 = vmatpush1.msra.mxu0 0.0
        %5582 = vmatprep.subr.mxu0 0.0
        %5583 = vmatpush1.msra.mxu0 0.0
        %5584 = vmatprep.subr.mxu0 0.0
        %5585 = vmatpush1.msra.mxu0 0.0
        %5586 = vmatprep.subr.mxu0 0.0
        %5587 = vmatpush1.msra.mxu0 0.0
        %5588 = vmatprep.subr.mxu0 0.0
        %5589 = vmatpush1.msra.mxu0 0.0
        %5590 = vmatprep.subr.mxu0 0.0
        %5591 = vmatpush1.msra.mxu0 0.0
        %5592 = vmatprep.subr.mxu0 0.0
        %5593 = vmatpush1.msra.mxu0 0.0
        %5594 = vmatprep.subr.mxu0 0.0
        %5595 = vmatpush1.msra.mxu0 0.0
        %5596 = vmatprep.subr.mxu0 0.0
        %5597 = vmatpush1.msra.mxu0 0.0
        %5598 = vmatprep.subr.mxu0 0.0
        %5599 = vmatpush1.msra.mxu0 0.0
        %5600 = vmatprep.subr.mxu0 0.0
        %5601 = vmatpush1.msra.mxu0 0.0
        %5602 = vmatprep.subr.mxu0 0.0
        %5603 = vmatpush1.msra.mxu0 0.0
        %5604 = vmatprep.subr.mxu0 0.0
        %5605 = vmatpush1.msra.mxu0 0.0
        %5606 = vmatprep.subr.mxu0 0.0
        %5607 = vmatpush1.msra.mxu0 0.0
        %5608 = vmatprep.mubr.f32.mxu0 0.0
        %5609 = vmatmul.mubr.f32.gmra.mrb[0].mxu0 %v5539
        %v5610 = vpop.f32.mrb[0].mxu0
        %v5611 = vadd.f32 %v5530, %v5610
        %v5612 = vpop.f32.mrb[0].mxu0
        %5613 = vmatprep.mubr.f32.mxu0 0.0
        %5614 = vmatmul.mubr.f32.gmra.mrb[0].mxu0 %v5542
        %v5615 = vpop.f32.mrb[0].mxu0
        %v5616 = vadd.f32 %v5535, %v5615
        %v5617 = vpop.f32.mrb[0].mxu0
        %5618 = vdwg.mxu0
        %v5619 = vpack.c.bf16 %v5451, %v5450
        %v5620 = vunpack.c.l.bf16 %v5619
        %v5621 = vunpack.c.h.bf16 %v5619
        %v5622 = vsub.f32 %v5450, %v5620
        %v5623 = vsub.f32 %v5451, %v5621
        %5626 = vrot.lane.b32.xlu0 %v5622, 127
        %v5627 = vpop.permute.xlu0 %5626
        %5628 = vrot.lane.b32.xlu0 %v5623, 127
        %v5629 = vpop.permute.xlu0 %5628
        %v5630 = vsel %vm311, %v5627, 0
        %v5632 = vsel %vm311, %v5629, 0
        %5634 = vmatprep.subr.mxu0 0.0
        %5635 = vmatpush1.msra.mxu0 %v4339
        %5636 = vmatprep.subr.mxu0 0.0
        %5637 = vmatpush1.msra.mxu0 %v4340
        %5638 = vmatprep.subr.mxu0 0.0
        %5639 = vmatpush1.msra.mxu0 0.0
        %5640 = vmatprep.subr.mxu0 0.0
        %5641 = vmatpush1.msra.mxu0 0.0
        %5642 = vmatprep.subr.mxu0 0.0
        %5643 = vmatpush1.msra.mxu0 0.0
        %5644 = vmatprep.subr.mxu0 0.0
        %5645 = vmatpush1.msra.mxu0 0.0
        %5646 = vmatprep.subr.mxu0 0.0
        %5647 = vmatpush1.msra.mxu0 0.0
        %5648 = vmatprep.subr.mxu0 0.0
        %5649 = vmatpush1.msra.mxu0 0.0
        %5650 = vmatprep.subr.mxu0 0.0
        %5651 = vmatpush1.msra.mxu0 0.0
        %5652 = vmatprep.subr.mxu0 0.0
        %5653 = vmatpush1.msra.mxu0 0.0
        %5654 = vmatprep.subr.mxu0 0.0
        %5655 = vmatpush1.msra.mxu0 0.0
        %5656 = vmatprep.subr.mxu0 0.0
        %5657 = vmatpush1.msra.mxu0 0.0
        %5658 = vmatprep.subr.mxu0 0.0
        %5659 = vmatpush1.msra.mxu0 0.0
        %5660 = vmatprep.subr.mxu0 0.0
        %5661 = vmatpush1.msra.mxu0 0.0
        %5662 = vmatprep.subr.mxu0 0.0
        %5663 = vmatpush1.msra.mxu0 0.0
        %5664 = vmatprep.subr.mxu0 0.0
        %5665 = vmatpush1.msra.mxu0 0.0
        %5666 = vmatprep.subr.mxu0 0.0
        %5667 = vmatpush1.msra.mxu0 0.0
        %5668 = vmatprep.subr.mxu0 0.0
        %5669 = vmatpush1.msra.mxu0 0.0
        %5670 = vmatprep.subr.mxu0 0.0
        %5671 = vmatpush1.msra.mxu0 0.0
        %5672 = vmatprep.subr.mxu0 0.0
        %5673 = vmatpush1.msra.mxu0 0.0
        %5674 = vmatprep.subr.mxu0 0.0
        %5675 = vmatpush1.msra.mxu0 0.0
        %5676 = vmatprep.subr.mxu0 0.0
        %5677 = vmatpush1.msra.mxu0 0.0
        %5678 = vmatprep.subr.mxu0 0.0
        %5679 = vmatpush1.msra.mxu0 0.0
        %5680 = vmatprep.subr.mxu0 0.0
        %5681 = vmatpush1.msra.mxu0 0.0
        %5682 = vmatprep.subr.mxu0 0.0
        %5683 = vmatpush1.msra.mxu0 0.0
        %5684 = vmatprep.subr.mxu0 0.0
        %5685 = vmatpush1.msra.mxu0 0.0
        %5686 = vmatprep.subr.mxu0 0.0
        %5687 = vmatpush1.msra.mxu0 0.0
        %5688 = vmatprep.subr.mxu0 0.0
        %5689 = vmatpush1.msra.mxu0 0.0
        %5690 = vmatprep.subr.mxu0 0.0
        %5691 = vmatpush1.msra.mxu0 0.0
        %5692 = vmatprep.subr.mxu0 0.0
        %5693 = vmatpush1.msra.mxu0 0.0
        %5694 = vmatprep.subr.mxu0 0.0
        %5695 = vmatpush1.msra.mxu0 0.0
        %5696 = vmatprep.subr.mxu0 0.0
        %5697 = vmatpush1.msra.mxu0 0.0
        %5698 = vmatprep.mubr.f32.mxu0 0.0
        %5699 = vmatmul.mubr.f32.gmra.mrb[0].mxu0 %v5630
        %v5700 = vpop.f32.mrb[0].mxu0
        %v5701 = vadd.f32 0.0, %v5700
        %v5702 = vpop.f32.mrb[0].mxu0
        %5703 = vmatprep.mubr.f32.mxu0 0.0
        %5704 = vmatmul.mubr.f32.gmra.mrb[0].mxu0 %v5632
        %v5705 = vpop.f32.mrb[0].mxu0
        %v5706 = vadd.f32 0.0, %v5705
        %v5707 = vpop.f32.mrb[0].mxu0
        %5708 = vdwg.mxu0
        %5711 = vrot.lane.b32.xlu0 %v5620, 127
        %v5712 = vpop.permute.xlu0 %5711
        %5713 = vrot.lane.b32.xlu0 %v5621, 127
        %v5714 = vpop.permute.xlu0 %5713
        %v5715 = vsel %vm311, %v5712, 0
        %v5717 = vsel %vm311, %v5714, 0
        %5719 = vmatprep.subr.mxu0 0.0
        %5720 = vmatpush1.msra.mxu0 %v4339
        %5721 = vmatprep.subr.mxu0 0.0
        %5722 = vmatpush1.msra.mxu0 %v4340
        %5723 = vmatprep.subr.mxu0 0.0
        %5724 = vmatpush1.msra.mxu0 0.0
        %5725 = vmatprep.subr.mxu0 0.0
        %5726 = vmatpush1.msra.mxu0 0.0
        %5727 = vmatprep.subr.mxu0 0.0
        %5728 = vmatpush1.msra.mxu0 0.0
        %5729 = vmatprep.subr.mxu0 0.0
        %5730 = vmatpush1.msra.mxu0 0.0
        %5731 = vmatprep.subr.mxu0 0.0
        %5732 = vmatpush1.msra.mxu0 0.0
        %5733 = vmatprep.subr.mxu0 0.0
        %5734 = vmatpush1.msra.mxu0 0.0
        %5735 = vmatprep.subr.mxu0 0.0
        %5736 = vmatpush1.msra.mxu0 0.0
        %5737 = vmatprep.subr.mxu0 0.0
        %5738 = vmatpush1.msra.mxu0 0.0
        %5739 = vmatprep.subr.mxu0 0.0
        %5740 = vmatpush1.msra.mxu0 0.0
        %5741 = vmatprep.subr.mxu0 0.0
        %5742 = vmatpush1.msra.mxu0 0.0
        %5743 = vmatprep.subr.mxu0 0.0
        %5744 = vmatpush1.msra.mxu0 0.0
        %5745 = vmatprep.subr.mxu0 0.0
        %5746 = vmatpush1.msra.mxu0 0.0
        %5747 = vmatprep.subr.mxu0 0.0
        %5748 = vmatpush1.msra.mxu0 0.0
        %5749 = vmatprep.subr.mxu0 0.0
        %5750 = vmatpush1.msra.mxu0 0.0
        %5751 = vmatprep.subr.mxu0 0.0
        %5752 = vmatpush1.msra.mxu0 0.0
        %5753 = vmatprep.subr.mxu0 0.0
        %5754 = vmatpush1.msra.mxu0 0.0
        %5755 = vmatprep.subr.mxu0 0.0
        %5756 = vmatpush1.msra.mxu0 0.0
        %5757 = vmatprep.subr.mxu0 0.0
        %5758 = vmatpush1.msra.mxu0 0.0
        %5759 = vmatprep.subr.mxu0 0.0
        %5760 = vmatpush1.msra.mxu0 0.0
        %5761 = vmatprep.subr.mxu0 0.0
        %5762 = vmatpush1.msra.mxu0 0.0
        %5763 = vmatprep.subr.mxu0 0.0
        %5764 = vmatpush1.msra.mxu0 0.0
        %5765 = vmatprep.subr.mxu0 0.0
        %5766 = vmatpush1.msra.mxu0 0.0
        %5767 = vmatprep.subr.mxu0 0.0
        %5768 = vmatpush1.msra.mxu0 0.0
        %5769 = vmatprep.subr.mxu0 0.0
        %5770 = vmatpush1.msra.mxu0 0.0
        %5771 = vmatprep.subr.mxu0 0.0
        %5772 = vmatpush1.msra.mxu0 0.0
        %5773 = vmatprep.subr.mxu0 0.0
        %5774 = vmatpush1.msra.mxu0 0.0
        %5775 = vmatprep.subr.mxu0 0.0
        %5776 = vmatpush1.msra.mxu0 0.0
        %5777 = vmatprep.subr.mxu0 0.0
        %5778 = vmatpush1.msra.mxu0 0.0
        %5779 = vmatprep.subr.mxu0 0.0
        %5780 = vmatpush1.msra.mxu0 0.0
        %5781 = vmatprep.subr.mxu0 0.0
        %5782 = vmatpush1.msra.mxu0 0.0
        %5783 = vmatprep.mubr.f32.mxu0 0.0
        %5784 = vmatmul.mubr.f32.gmra.mrb[0].mxu0 %v5715
        %v5785 = vpop.f32.mrb[0].mxu0
        %v5786 = vadd.f32 %v5701, %v5785
        %v5787 = vpop.f32.mrb[0].mxu0
        %5788 = vmatprep.mubr.f32.mxu0 0.0
        %5789 = vmatmul.mubr.f32.gmra.mrb[0].mxu0 %v5717
        %v5790 = vpop.f32.mrb[0].mxu0
        %v5791 = vadd.f32 %v5706, %v5790
        %v5792 = vpop.f32.mrb[0].mxu0
        %5793 = vdwg.mxu0
        %v5794 = vadd.f32 %v5611, %v5786
        %v5795 = vadd.f32 %v5616, %v5791
        %v5796 = vmax.f32 %v4286, 0.0
        %v5797 = vmax.f32 %v4287, 0.0
        %v5798 = vmax.f32 %v4318, 0.0
        %v5799 = vmax.f32 %v4319, 0.0
        %v5800 = vpack.c.bf16 %v5797, %v5796
        %v5801 = vunpack.c.l.bf16 %v5800
        %v5802 = vunpack.c.h.bf16 %v5800
        %v5803 = vsub.f32 %v5796, %v5801
        %v5804 = vsub.f32 %v5797, %v5802
        %v5806 = vsel %vm311, %v5803, 0
        %v5809 = vsel %vm311, %v5804, 0
        %5811 = vmatprep.subr.mxu0 0.0
        %5812 = vmatpush1.msra.mxu0 %v4331
        %5813 = vmatprep.subr.mxu0 0.0
        %5814 = vmatpush1.msra.mxu0 %v4332
        %5815 = vmatprep.subr.mxu0 0.0
        %5816 = vmatpush1.msra.mxu0 0.0
        %5817 = vmatprep.subr.mxu0 0.0
        %5818 = vmatpush1.msra.mxu0 0.0
        %5819 = vmatprep.subr.mxu0 0.0
        %5820 = vmatpush1.msra.mxu0 0.0
        %5821 = vmatprep.subr.mxu0 0.0
        %5822 = vmatpush1.msra.mxu0 0.0
        %5823 = vmatprep.subr.mxu0 0.0
        %5824 = vmatpush1.msra.mxu0 0.0
        %5825 = vmatprep.subr.mxu0 0.0
        %5826 = vmatpush1.msra.mxu0 0.0
        %5827 = vmatprep.subr.mxu0 0.0
        %5828 = vmatpush1.msra.mxu0 0.0
        %5829 = vmatprep.subr.mxu0 0.0
        %5830 = vmatpush1.msra.mxu0 0.0
        %5831 = vmatprep.subr.mxu0 0.0
        %5832 = vmatpush1.msra.mxu0 0.0
        %5833 = vmatprep.subr.mxu0 0.0
        %5834 = vmatpush1.msra.mxu0 0.0
        %5835 = vmatprep.subr.mxu0 0.0
        %5836 = vmatpush1.msra.mxu0 0.0
        %5837 = vmatprep.subr.mxu0 0.0
        %5838 = vmatpush1.msra.mxu0 0.0
        %5839 = vmatprep.subr.mxu0 0.0
        %5840 = vmatpush1.msra.mxu0 0.0
        %5841 = vmatprep.subr.mxu0 0.0
        %5842 = vmatpush1.msra.mxu0 0.0
        %5843 = vmatprep.subr.mxu0 0.0
        %5844 = vmatpush1.msra.mxu0 0.0
        %5845 = vmatprep.subr.mxu0 0.0
        %5846 = vmatpush1.msra.mxu0 0.0
        %5847 = vmatprep.subr.mxu0 0.0
        %5848 = vmatpush1.msra.mxu0 0.0
        %5849 = vmatprep.subr.mxu0 0.0
        %5850 = vmatpush1.msra.mxu0 0.0
        %5851 = vmatprep.subr.mxu0 0.0
        %5852 = vmatpush1.msra.mxu0 0.0
        %5853 = vmatprep.subr.mxu0 0.0
        %5854 = vmatpush1.msra.mxu0 0.0
        %5855 = vmatprep.subr.mxu0 0.0
        %5856 = vmatpush1.msra.mxu0 0.0
        %5857 = vmatprep.subr.mxu0 0.0
        %5858 = vmatpush1.msra.mxu0 0.0
        %5859 = vmatprep.subr.mxu0 0.0
        %5860 = vmatpush1.msra.mxu0 0.0
        %5861 = vmatprep.subr.mxu0 0.0
        %5862 = vmatpush1.msra.mxu0 0.0
        %5863 = vmatprep.subr.mxu0 0.0
        %5864 = vmatpush1.msra.mxu0 0.0
        %5865 = vmatprep.subr.mxu0 0.0
        %5866 = vmatpush1.msra.mxu0 0.0
        %5867 = vmatprep.subr.mxu0 0.0
        %5868 = vmatpush1.msra.mxu0 0.0
        %5869 = vmatprep.subr.mxu0 0.0
        %5870 = vmatpush1.msra.mxu0 0.0
        %5871 = vmatprep.subr.mxu0 0.0
        %5872 = vmatpush1.msra.mxu0 0.0
        %5873 = vmatprep.subr.mxu0 0.0
        %5874 = vmatpush1.msra.mxu0 0.0
        %5875 = vmatprep.mubr.f32.mxu0 0.0
        %5876 = vmatmul.mubr.f32.gmra.mrb[0].mxu0 %v5806
        %v5877 = vpop.f32.mrb[0].mxu0
        %v5878 = vadd.f32 0.0, %v5877
        %v5879 = vpop.f32.mrb[0].mxu0
        %5880 = vmatprep.mubr.f32.mxu0 0.0
        %5881 = vmatmul.mubr.f32.gmra.mrb[0].mxu0 %v5809
        %v5882 = vpop.f32.mrb[0].mxu0
        %v5883 = vadd.f32 0.0, %v5882
        %v5884 = vpop.f32.mrb[0].mxu0
        %5885 = vdwg.mxu0
        %v5887 = vsel %vm311, %v5801, 0
        %v5890 = vsel %vm311, %v5802, 0
        %5892 = vmatprep.subr.mxu0 0.0
        %5893 = vmatpush1.msra.mxu0 %v4331
        %5894 = vmatprep.subr.mxu0 0.0
        %5895 = vmatpush1.msra.mxu0 %v4332
        %5896 = vmatprep.subr.mxu0 0.0
        %5897 = vmatpush1.msra.mxu0 0.0
        %5898 = vmatprep.subr.mxu0 0.0
        %5899 = vmatpush1.msra.mxu0 0.0
        %5900 = vmatprep.subr.mxu0 0.0
        %5901 = vmatpush1.msra.mxu0 0.0
        %5902 = vmatprep.subr.mxu0 0.0
        %5903 = vmatpush1.msra.mxu0 0.0
        %5904 = vmatprep.subr.mxu0 0.0
        %5905 = vmatpush1.msra.mxu0 0.0
        %5906 = vmatprep.subr.mxu0 0.0
        %5907 = vmatpush1.msra.mxu0 0.0
        %5908 = vmatprep.subr.mxu0 0.0
        %5909 = vmatpush1.msra.mxu0 0.0
        %5910 = vmatprep.subr.mxu0 0.0
        %5911 = vmatpush1.msra.mxu0 0.0
        %5912 = vmatprep.subr.mxu0 0.0
        %5913 = vmatpush1.msra.mxu0 0.0
        %5914 = vmatprep.subr.mxu0 0.0
        %5915 = vmatpush1.msra.mxu0 0.0
        %5916 = vmatprep.subr.mxu0 0.0
        %5917 = vmatpush1.msra.mxu0 0.0
        %5918 = vmatprep.subr.mxu0 0.0
        %5919 = vmatpush1.msra.mxu0 0.0
        %5920 = vmatprep.subr.mxu0 0.0
        %5921 = vmatpush1.msra.mxu0 0.0
        %5922 = vmatprep.subr.mxu0 0.0
        %5923 = vmatpush1.msra.mxu0 0.0
        %5924 = vmatprep.subr.mxu0 0.0
        %5925 = vmatpush1.msra.mxu0 0.0
        %5926 = vmatprep.subr.mxu0 0.0
        %5927 = vmatpush1.msra.mxu0 0.0
        %5928 = vmatprep.subr.mxu0 0.0
        %5929 = vmatpush1.msra.mxu0 0.0
        %5930 = vmatprep.subr.mxu0 0.0
        %5931 = vmatpush1.msra.mxu0 0.0
        %5932 = vmatprep.subr.mxu0 0.0
        %5933 = vmatpush1.msra.mxu0 0.0
        %5934 = vmatprep.subr.mxu0 0.0
        %5935 = vmatpush1.msra.mxu0 0.0
        %5936 = vmatprep.subr.mxu0 0.0
        %5937 = vmatpush1.msra.mxu0 0.0
        %5938 = vmatprep.subr.mxu0 0.0
        %5939 = vmatpush1.msra.mxu0 0.0
        %5940 = vmatprep.subr.mxu0 0.0
        %5941 = vmatpush1.msra.mxu0 0.0
        %5942 = vmatprep.subr.mxu0 0.0
        %5943 = vmatpush1.msra.mxu0 0.0
        %5944 = vmatprep.subr.mxu0 0.0
        %5945 = vmatpush1.msra.mxu0 0.0
        %5946 = vmatprep.subr.mxu0 0.0
        %5947 = vmatpush1.msra.mxu0 0.0
        %5948 = vmatprep.subr.mxu0 0.0
        %5949 = vmatpush1.msra.mxu0 0.0
        %5950 = vmatprep.subr.mxu0 0.0
        %5951 = vmatpush1.msra.mxu0 0.0
        %5952 = vmatprep.subr.mxu0 0.0
        %5953 = vmatpush1.msra.mxu0 0.0
        %5954 = vmatprep.subr.mxu0 0.0
        %5955 = vmatpush1.msra.mxu0 0.0
        %5956 = vmatprep.mubr.f32.mxu0 0.0
        %5957 = vmatmul.mubr.f32.gmra.mrb[0].mxu0 %v5887
        %v5958 = vpop.f32.mrb[0].mxu0
        %v5959 = vadd.f32 %v5878, %v5958
        %v5960 = vpop.f32.mrb[0].mxu0
        %5961 = vmatprep.mubr.f32.mxu0 0.0
        %5962 = vmatmul.mubr.f32.gmra.mrb[0].mxu0 %v5890
        %v5963 = vpop.f32.mrb[0].mxu0
        %v5964 = vadd.f32 %v5883, %v5963
        %v5965 = vpop.f32.mrb[0].mxu0
        %5966 = vdwg.mxu0
        %v5967 = vpack.c.bf16 %v5799, %v5798
        %v5968 = vunpack.c.l.bf16 %v5967
        %v5969 = vunpack.c.h.bf16 %v5967
        %v5970 = vsub.f32 %v5798, %v5968
        %v5971 = vsub.f32 %v5799, %v5969
        %5974 = vrot.lane.b32.xlu0 %v5970, 127
        %v5975 = vpop.permute.xlu0 %5974
        %5976 = vrot.lane.b32.xlu0 %v5971, 127
        %v5977 = vpop.permute.xlu0 %5976
        %v5978 = vsel %vm311, %v5975, 0
        %v5980 = vsel %vm311, %v5977, 0
        %5982 = vmatprep.subr.mxu0 0.0
        %5983 = vmatpush1.msra.mxu0 %v4339
        %5984 = vmatprep.subr.mxu0 0.0
        %5985 = vmatpush1.msra.mxu0 %v4340
        %5986 = vmatprep.subr.mxu0 0.0
        %5987 = vmatpush1.msra.mxu0 0.0
        %5988 = vmatprep.subr.mxu0 0.0
        %5989 = vmatpush1.msra.mxu0 0.0
        %5990 = vmatprep.subr.mxu0 0.0
        %5991 = vmatpush1.msra.mxu0 0.0
        %5992 = vmatprep.subr.mxu0 0.0
        %5993 = vmatpush1.msra.mxu0 0.0
        %5994 = vmatprep.subr.mxu0 0.0
        %5995 = vmatpush1.msra.mxu0 0.0
        %5996 = vmatprep.subr.mxu0 0.0
        %5997 = vmatpush1.msra.mxu0 0.0
        %5998 = vmatprep.subr.mxu0 0.0
        %5999 = vmatpush1.msra.mxu0 0.0
        %6000 = vmatprep.subr.mxu0 0.0
        %6001 = vmatpush1.msra.mxu0 0.0
        %6002 = vmatprep.subr.mxu0 0.0
        %6003 = vmatpush1.msra.mxu0 0.0
        %6004 = vmatprep.subr.mxu0 0.0
        %6005 = vmatpush1.msra.mxu0 0.0
        %6006 = vmatprep.subr.mxu0 0.0
        %6007 = vmatpush1.msra.mxu0 0.0
        %6008 = vmatprep.subr.mxu0 0.0
        %6009 = vmatpush1.msra.mxu0 0.0
        %6010 = vmatprep.subr.mxu0 0.0
        %6011 = vmatpush1.msra.mxu0 0.0
        %6012 = vmatprep.subr.mxu0 0.0
        %6013 = vmatpush1.msra.mxu0 0.0
        %6014 = vmatprep.subr.mxu0 0.0
        %6015 = vmatpush1.msra.mxu0 0.0
        %6016 = vmatprep.subr.mxu0 0.0
        %6017 = vmatpush1.msra.mxu0 0.0
        %6018 = vmatprep.subr.mxu0 0.0
        %6019 = vmatpush1.msra.mxu0 0.0
        %6020 = vmatprep.subr.mxu0 0.0
        %6021 = vmatpush1.msra.mxu0 0.0
        %6022 = vmatprep.subr.mxu0 0.0
        %6023 = vmatpush1.msra.mxu0 0.0
        %6024 = vmatprep.subr.mxu0 0.0
        %6025 = vmatpush1.msra.mxu0 0.0
        %6026 = vmatprep.subr.mxu0 0.0
        %6027 = vmatpush1.msra.mxu0 0.0
        %6028 = vmatprep.subr.mxu0 0.0
        %6029 = vmatpush1.msra.mxu0 0.0
        %6030 = vmatprep.subr.mxu0 0.0
        %6031 = vmatpush1.msra.mxu0 0.0
        %6032 = vmatprep.subr.mxu0 0.0
        %6033 = vmatpush1.msra.mxu0 0.0
        %6034 = vmatprep.subr.mxu0 0.0
        %6035 = vmatpush1.msra.mxu0 0.0
        %6036 = vmatprep.subr.mxu0 0.0
        %6037 = vmatpush1.msra.mxu0 0.0
        %6038 = vmatprep.subr.mxu0 0.0
        %6039 = vmatpush1.msra.mxu0 0.0
        %6040 = vmatprep.subr.mxu0 0.0
        %6041 = vmatpush1.msra.mxu0 0.0
        %6042 = vmatprep.subr.mxu0 0.0
        %6043 = vmatpush1.msra.mxu0 0.0
        %6044 = vmatprep.subr.mxu0 0.0
        %6045 = vmatpush1.msra.mxu0 0.0
        %6046 = vmatprep.mubr.f32.mxu0 0.0
        %6047 = vmatmul.mubr.f32.gmra.mrb[0].mxu0 %v5978
        %v6048 = vpop.f32.mrb[0].mxu0
        %v6049 = vadd.f32 0.0, %v6048
        %v6050 = vpop.f32.mrb[0].mxu0
        %6051 = vmatprep.mubr.f32.mxu0 0.0
        %6052 = vmatmul.mubr.f32.gmra.mrb[0].mxu0 %v5980
        %v6053 = vpop.f32.mrb[0].mxu0
        %v6054 = vadd.f32 0.0, %v6053
        %v6055 = vpop.f32.mrb[0].mxu0
        %6056 = vdwg.mxu0
        %6059 = vrot.lane.b32.xlu0 %v5968, 127
        %v6060 = vpop.permute.xlu0 %6059
        %6061 = vrot.lane.b32.xlu0 %v5969, 127
        %v6062 = vpop.permute.xlu0 %6061
        %v6063 = vsel %vm311, %v6060, 0
        %v6065 = vsel %vm311, %v6062, 0
        %6067 = vmatprep.subr.mxu0 0.0
        %6068 = vmatpush1.msra.mxu0 %v4339
        %6069 = vmatprep.subr.mxu0 0.0
        %6070 = vmatpush1.msra.mxu0 %v4340
        %6071 = vmatprep.subr.mxu0 0.0
        %6072 = vmatpush1.msra.mxu0 0.0
        %6073 = vmatprep.subr.mxu0 0.0
        %6074 = vmatpush1.msra.mxu0 0.0
        %6075 = vmatprep.subr.mxu0 0.0
        %6076 = vmatpush1.msra.mxu0 0.0
        %6077 = vmatprep.subr.mxu0 0.0
        %6078 = vmatpush1.msra.mxu0 0.0
        %6079 = vmatprep.subr.mxu0 0.0
        %6080 = vmatpush1.msra.mxu0 0.0
        %6081 = vmatprep.subr.mxu0 0.0
        %6082 = vmatpush1.msra.mxu0 0.0
        %6083 = vmatprep.subr.mxu0 0.0
        %6084 = vmatpush1.msra.mxu0 0.0
        %6085 = vmatprep.subr.mxu0 0.0
        %6086 = vmatpush1.msra.mxu0 0.0
        %6087 = vmatprep.subr.mxu0 0.0
        %6088 = vmatpush1.msra.mxu0 0.0
        %6089 = vmatprep.subr.mxu0 0.0
        %6090 = vmatpush1.msra.mxu0 0.0
        %6091 = vmatprep.subr.mxu0 0.0
        %6092 = vmatpush1.msra.mxu0 0.0
        %6093 = vmatprep.subr.mxu0 0.0
        %6094 = vmatpush1.msra.mxu0 0.0
        %6095 = vmatprep.subr.mxu0 0.0
        %6096 = vmatpush1.msra.mxu0 0.0
        %6097 = vmatprep.subr.mxu0 0.0
        %6098 = vmatpush1.msra.mxu0 0.0
        %6099 = vmatprep.subr.mxu0 0.0
        %6100 = vmatpush1.msra.mxu0 0.0
        %6101 = vmatprep.subr.mxu0 0.0
        %6102 = vmatpush1.msra.mxu0 0.0
        %6103 = vmatprep.subr.mxu0 0.0
        %6104 = vmatpush1.msra.mxu0 0.0
        %6105 = vmatprep.subr.mxu0 0.0
        %6106 = vmatpush1.msra.mxu0 0.0
        %6107 = vmatprep.subr.mxu0 0.0
        %6108 = vmatpush1.msra.mxu0 0.0
        %6109 = vmatprep.subr.mxu0 0.0
        %6110 = vmatpush1.msra.mxu0 0.0
        %6111 = vmatprep.subr.mxu0 0.0
        %6112 = vmatpush1.msra.mxu0 0.0
        %6113 = vmatprep.subr.mxu0 0.0
        %6114 = vmatpush1.msra.mxu0 0.0
        %6115 = vmatprep.subr.mxu0 0.0
        %6116 = vmatpush1.msra.mxu0 0.0
        %6117 = vmatprep.subr.mxu0 0.0
        %6118 = vmatpush1.msra.mxu0 0.0
        %6119 = vmatprep.subr.mxu0 0.0
        %6120 = vmatpush1.msra.mxu0 0.0
        %6121 = vmatprep.subr.mxu0 0.0
        %6122 = vmatpush1.msra.mxu0 0.0
        %6123 = vmatprep.subr.mxu0 0.0
        %6124 = vmatpush1.msra.mxu0 0.0
        %6125 = vmatprep.subr.mxu0 0.0
        %6126 = vmatpush1.msra.mxu0 0.0
        %6127 = vmatprep.subr.mxu0 0.0
        %6128 = vmatpush1.msra.mxu0 0.0
        %6129 = vmatprep.subr.mxu0 0.0
        %6130 = vmatpush1.msra.mxu0 0.0
        %6131 = vmatprep.mubr.f32.mxu0 0.0
        %6132 = vmatmul.mubr.f32.gmra.mrb[0].mxu0 %v6063
        %v6133 = vpop.f32.mrb[0].mxu0
        %v6134 = vadd.f32 %v6049, %v6133
        %v6135 = vpop.f32.mrb[0].mxu0
        %6136 = vmatprep.mubr.f32.mxu0 0.0
        %6137 = vmatmul.mubr.f32.gmra.mrb[0].mxu0 %v6065
        %v6138 = vpop.f32.mrb[0].mxu0
        %v6139 = vadd.f32 %v6054, %v6138
        %v6140 = vpop.f32.mrb[0].mxu0
        %6141 = vdwg.mxu0
        %v6142 = vadd.f32 %v5959, %v6134
        %v6143 = vadd.f32 %v5964, %v6139
        %v6144 = vpack.c.bf16 %v5795, %v5794
        %v6145 = vunpack.c.l.bf16 %v6144
        %v6146 = vunpack.c.h.bf16 %v6144
        %v6147 = vsub.f32 %v5794, %v6145
        %v6148 = vsub.f32 %v5795, %v6146
        %6149 = vmatprep.subr.mxu0 0.0
        %6150 = vmatpush1.msra.mxu0 %v6147
        %6151 = vmatprep.subr.mxu0 0.0
        %6152 = vmatpush1.msra.mxu0 %v6148
        %6153 = vmatprep.subr.mxu0 0.0
        %6154 = vmatpush1.msra.mxu0 0.0
        %6155 = vmatprep.subr.mxu0 0.0
        %6156 = vmatpush1.msra.mxu0 0.0
        %6157 = vmatprep.subr.mxu0 0.0
        %6158 = vmatpush1.msra.mxu0 0.0
        %6159 = vmatprep.subr.mxu0 0.0
        %6160 = vmatpush1.msra.mxu0 0.0
        %6161 = vmatprep.subr.mxu0 0.0
        %6162 = vmatpush1.msra.mxu0 0.0
        %6163 = vmatprep.subr.mxu0 0.0
        %6164 = vmatpush1.msra.mxu0 0.0
        %6165 = vmatprep.subr.mxu0 0.0
        %6166 = vmatpush1.msra.mxu0 0.0
        %6167 = vmatprep.subr.mxu0 0.0
        %6168 = vmatpush1.msra.mxu0 0.0
        %6169 = vmatprep.subr.mxu0 0.0
        %6170 = vmatpush1.msra.mxu0 0.0
        %6171 = vmatprep.subr.mxu0 0.0
        %6172 = vmatpush1.msra.mxu0 0.0
        %6173 = vmatprep.subr.mxu0 0.0
        %6174 = vmatpush1.msra.mxu0 0.0
        %6175 = vmatprep.subr.mxu0 0.0
        %6176 = vmatpush1.msra.mxu0 0.0
        %6177 = vmatprep.subr.mxu0 0.0
        %6178 = vmatpush1.msra.mxu0 0.0
        %6179 = vmatprep.subr.mxu0 0.0
        %6180 = vmatpush1.msra.mxu0 0.0
        %6181 = vmatprep.subr.mxu0 0.0
        %6182 = vmatpush1.msra.mxu0 0.0
        %6183 = vmatprep.subr.mxu0 0.0
        %6184 = vmatpush1.msra.mxu0 0.0
        %6185 = vmatprep.subr.mxu0 0.0
        %6186 = vmatpush1.msra.mxu0 0.0
        %6187 = vmatprep.subr.mxu0 0.0
        %6188 = vmatpush1.msra.mxu0 0.0
        %6189 = vmatprep.subr.mxu0 0.0
        %6190 = vmatpush1.msra.mxu0 0.0
        %6191 = vmatprep.subr.mxu0 0.0
        %6192 = vmatpush1.msra.mxu0 0.0
        %6193 = vmatprep.subr.mxu0 0.0
        %6194 = vmatpush1.msra.mxu0 0.0
        %6195 = vmatprep.subr.mxu0 0.0
        %6196 = vmatpush1.msra.mxu0 0.0
        %6197 = vmatprep.subr.mxu0 0.0
        %6198 = vmatpush1.msra.mxu0 0.0
        %6199 = vmatprep.subr.mxu0 0.0
        %6200 = vmatpush1.msra.mxu0 0.0
        %6201 = vmatprep.subr.mxu0 0.0
        %6202 = vmatpush1.msra.mxu0 0.0
        %6203 = vmatprep.subr.mxu0 0.0
        %6204 = vmatpush1.msra.mxu0 0.0
        %6205 = vmatprep.subr.mxu0 0.0
        %6206 = vmatpush1.msra.mxu0 0.0
        %6207 = vmatprep.subr.mxu0 0.0
        %6208 = vmatpush1.msra.mxu0 0.0
        %6209 = vmatprep.subr.mxu0 0.0
        %6210 = vmatpush1.msra.mxu0 0.0
        %6211 = vmatprep.subr.mxu0 0.0
        %6212 = vmatpush1.msra.mxu0 0.0
        %6213 = vmatprep.mubr.f32.mxu0 0.0
        %6214 = vmatmul.mubr.f32.gmra.mrb[0].mxu0 %v5071
        %v6215 = vpop.f32.mrb[0].mxu0
        %v6216 = vadd.f32 0.0, %v6215
        %v6217 = vpop.f32.mrb[0].mxu0
        %6218 = vmatprep.mubr.f32.mxu0 0.0
        %6219 = vmatmul.mubr.f32.gmra.mrb[0].mxu0 %v5074
        %v6220 = vpop.f32.mrb[0].mxu0
        %v6221 = vadd.f32 0.0, %v6220
        %v6222 = vpop.f32.mrb[0].mxu0
        %6223 = vmatprep.mubr.f32.mxu0 0.0
        %6224 = vmatmul.mubr.f32.gmra.mrb[0].mxu0 %v5077
        %v6225 = vpop.f32.mrb[0].mxu0
        %v6226 = vadd.f32 0.0, %v6225
        %v6227 = vpop.f32.mrb[0].mxu0
        %6228 = vmatprep.mubr.f32.mxu0 0.0
        %6229 = vmatmul.mubr.f32.gmra.mrb[0].mxu0 %v5080
        %v6230 = vpop.f32.mrb[0].mxu0
        %v6231 = vadd.f32 0.0, %v6230
        %v6232 = vpop.f32.mrb[0].mxu0
        %6233 = vdwg.mxu0
        %6234 = vmatprep.subr.mxu0 0.0
        %6235 = vmatpush1.msra.mxu0 %v6145
        %6236 = vmatprep.subr.mxu0 0.0
        %6237 = vmatpush1.msra.mxu0 %v6146
        %6238 = vmatprep.subr.mxu0 0.0
        %6239 = vmatpush1.msra.mxu0 0.0
        %6240 = vmatprep.subr.mxu0 0.0
        %6241 = vmatpush1.msra.mxu0 0.0
        %6242 = vmatprep.subr.mxu0 0.0
        %6243 = vmatpush1.msra.mxu0 0.0
        %6244 = vmatprep.subr.mxu0 0.0
        %6245 = vmatpush1.msra.mxu0 0.0
        %6246 = vmatprep.subr.mxu0 0.0
        %6247 = vmatpush1.msra.mxu0 0.0
        %6248 = vmatprep.subr.mxu0 0.0
        %6249 = vmatpush1.msra.mxu0 0.0
        %6250 = vmatprep.subr.mxu0 0.0
        %6251 = vmatpush1.msra.mxu0 0.0
        %6252 = vmatprep.subr.mxu0 0.0
        %6253 = vmatpush1.msra.mxu0 0.0
        %6254 = vmatprep.subr.mxu0 0.0
        %6255 = vmatpush1.msra.mxu0 0.0
        %6256 = vmatprep.subr.mxu0 0.0
        %6257 = vmatpush1.msra.mxu0 0.0
        %6258 = vmatprep.subr.mxu0 0.0
        %6259 = vmatpush1.msra.mxu0 0.0
        %6260 = vmatprep.subr.mxu0 0.0
        %6261 = vmatpush1.msra.mxu0 0.0
        %6262 = vmatprep.subr.mxu0 0.0
        %6263 = vmatpush1.msra.mxu0 0.0
        %6264 = vmatprep.subr.mxu0 0.0
        %6265 = vmatpush1.msra.mxu0 0.0
        %6266 = vmatprep.subr.mxu0 0.0
        %6267 = vmatpush1.msra.mxu0 0.0
        %6268 = vmatprep.subr.mxu0 0.0
        %6269 = vmatpush1.msra.mxu0 0.0
        %6270 = vmatprep.subr.mxu0 0.0
        %6271 = vmatpush1.msra.mxu0 0.0
        %6272 = vmatprep.subr.mxu0 0.0
        %6273 = vmatpush1.msra.mxu0 0.0
        %6274 = vmatprep.subr.mxu0 0.0
        %6275 = vmatpush1.msra.mxu0 0.0
        %6276 = vmatprep.subr.mxu0 0.0
        %6277 = vmatpush1.msra.mxu0 0.0
        %6278 = vmatprep.subr.mxu0 0.0
        %6279 = vmatpush1.msra.mxu0 0.0
        %6280 = vmatprep.subr.mxu0 0.0
        %6281 = vmatpush1.msra.mxu0 0.0
        %6282 = vmatprep.subr.mxu0 0.0
        %6283 = vmatpush1.msra.mxu0 0.0
        %6284 = vmatprep.subr.mxu0 0.0
        %6285 = vmatpush1.msra.mxu0 0.0
        %6286 = vmatprep.subr.mxu0 0.0
        %6287 = vmatpush1.msra.mxu0 0.0
        %6288 = vmatprep.subr.mxu0 0.0
        %6289 = vmatpush1.msra.mxu0 0.0
        %6290 = vmatprep.subr.mxu0 0.0
        %6291 = vmatpush1.msra.mxu0 0.0
        %6292 = vmatprep.subr.mxu0 0.0
        %6293 = vmatpush1.msra.mxu0 0.0
        %6294 = vmatprep.subr.mxu0 0.0
        %6295 = vmatpush1.msra.mxu0 0.0
        %6296 = vmatprep.subr.mxu0 0.0
        %6297 = vmatpush1.msra.mxu0 0.0
        %6298 = vmatprep.mubr.f32.mxu0 0.0
        %6299 = vmatmul.mubr.f32.gmra.mrb[0].mxu0 %v5071
        %v6300 = vpop.f32.mrb[0].mxu0
        %v6301 = vadd.f32 %v6216, %v6300
        %v6302 = vpop.f32.mrb[0].mxu0
        %6303 = vmatprep.mubr.f32.mxu0 0.0
        %6304 = vmatmul.mubr.f32.gmra.mrb[0].mxu0 %v5074
        %v6305 = vpop.f32.mrb[0].mxu0
        %v6306 = vadd.f32 %v6221, %v6305
        %v6307 = vpop.f32.mrb[0].mxu0
        %6308 = vmatprep.mubr.f32.mxu0 0.0
        %6309 = vmatmul.mubr.f32.gmra.mrb[0].mxu0 %v5077
        %v6310 = vpop.f32.mrb[0].mxu0
        %v6311 = vadd.f32 %v6226, %v6310
        %v6312 = vpop.f32.mrb[0].mxu0
        %6313 = vmatprep.mubr.f32.mxu0 0.0
        %6314 = vmatmul.mubr.f32.gmra.mrb[0].mxu0 %v5080
        %v6315 = vpop.f32.mrb[0].mxu0
        %v6316 = vadd.f32 %v6231, %v6315
        %v6317 = vpop.f32.mrb[0].mxu0
        %6318 = vdwg.mxu0
        %v6319 = vpack.c.bf16 %v6143, %v6142
        %v6320 = vunpack.c.l.bf16 %v6319
        %v6321 = vunpack.c.h.bf16 %v6319
        %v6322 = vsub.f32 %v6142, %v6320
        %v6323 = vsub.f32 %v6143, %v6321
        %6324 = vmatprep.subr.mxu0 0.0
        %6325 = vmatpush1.msra.mxu0 %v6322
        %6326 = vmatprep.subr.mxu0 0.0
        %6327 = vmatpush1.msra.mxu0 %v6323
        %6328 = vmatprep.subr.mxu0 0.0
        %6329 = vmatpush1.msra.mxu0 0.0
        %6330 = vmatprep.subr.mxu0 0.0
        %6331 = vmatpush1.msra.mxu0 0.0
        %6332 = vmatprep.subr.mxu0 0.0
        %6333 = vmatpush1.msra.mxu0 0.0
        %6334 = vmatprep.subr.mxu0 0.0
        %6335 = vmatpush1.msra.mxu0 0.0
        %6336 = vmatprep.subr.mxu0 0.0
        %6337 = vmatpush1.msra.mxu0 0.0
        %6338 = vmatprep.subr.mxu0 0.0
        %6339 = vmatpush1.msra.mxu0 0.0
        %6340 = vmatprep.subr.mxu0 0.0
        %6341 = vmatpush1.msra.mxu0 0.0
        %6342 = vmatprep.subr.mxu0 0.0
        %6343 = vmatpush1.msra.mxu0 0.0
        %6344 = vmatprep.subr.mxu0 0.0
        %6345 = vmatpush1.msra.mxu0 0.0
        %6346 = vmatprep.subr.mxu0 0.0
        %6347 = vmatpush1.msra.mxu0 0.0
        %6348 = vmatprep.subr.mxu0 0.0
        %6349 = vmatpush1.msra.mxu0 0.0
        %6350 = vmatprep.subr.mxu0 0.0
        %6351 = vmatpush1.msra.mxu0 0.0
        %6352 = vmatprep.subr.mxu0 0.0
        %6353 = vmatpush1.msra.mxu0 0.0
        %6354 = vmatprep.subr.mxu0 0.0
        %6355 = vmatpush1.msra.mxu0 0.0
        %6356 = vmatprep.subr.mxu0 0.0
        %6357 = vmatpush1.msra.mxu0 0.0
        %6358 = vmatprep.subr.mxu0 0.0
        %6359 = vmatpush1.msra.mxu0 0.0
        %6360 = vmatprep.subr.mxu0 0.0
        %6361 = vmatpush1.msra.mxu0 0.0
        %6362 = vmatprep.subr.mxu0 0.0
        %6363 = vmatpush1.msra.mxu0 0.0
        %6364 = vmatprep.subr.mxu0 0.0
        %6365 = vmatpush1.msra.mxu0 0.0
        %6366 = vmatprep.subr.mxu0 0.0
        %6367 = vmatpush1.msra.mxu0 0.0
        %6368 = vmatprep.subr.mxu0 0.0
        %6369 = vmatpush1.msra.mxu0 0.0
        %6370 = vmatprep.subr.mxu0 0.0
        %6371 = vmatpush1.msra.mxu0 0.0
        %6372 = vmatprep.subr.mxu0 0.0
        %6373 = vmatpush1.msra.mxu0 0.0
        %6374 = vmatprep.subr.mxu0 0.0
        %6375 = vmatpush1.msra.mxu0 0.0
        %6376 = vmatprep.subr.mxu0 0.0
        %6377 = vmatpush1.msra.mxu0 0.0
        %6378 = vmatprep.subr.mxu0 0.0
        %6379 = vmatpush1.msra.mxu0 0.0
        %6380 = vmatprep.subr.mxu0 0.0
        %6381 = vmatpush1.msra.mxu0 0.0
        %6382 = vmatprep.subr.mxu0 0.0
        %6383 = vmatpush1.msra.mxu0 0.0
        %6384 = vmatprep.subr.mxu0 0.0
        %6385 = vmatpush1.msra.mxu0 0.0
        %6386 = vmatprep.subr.mxu0 0.0
        %6387 = vmatpush1.msra.mxu0 0.0
        %6388 = vmatprep.mubr.f32.mxu0 0.0
        %6389 = vmatmul.mubr.f32.gmra.mrb[0].mxu0 %v5258
        %v6390 = vpop.f32.mrb[0].mxu0
        %v6391 = vadd.f32 0.0, %v6390
        %v6392 = vpop.f32.mrb[0].mxu0
        %6393 = vmatprep.mubr.f32.mxu0 0.0
        %6394 = vmatmul.mubr.f32.gmra.mrb[0].mxu0 %v5261
        %v6395 = vpop.f32.mrb[0].mxu0
        %v6396 = vadd.f32 0.0, %v6395
        %v6397 = vpop.f32.mrb[0].mxu0
        %6398 = vmatprep.mubr.f32.mxu0 0.0
        %6399 = vmatmul.mubr.f32.gmra.mrb[0].mxu0 %v5264
        %v6400 = vpop.f32.mrb[0].mxu0
        %v6401 = vadd.f32 0.0, %v6400
        %v6402 = vpop.f32.mrb[0].mxu0
        %6403 = vmatprep.mubr.f32.mxu0 0.0
        %6404 = vmatmul.mubr.f32.gmra.mrb[0].mxu0 %v5267
        %v6405 = vpop.f32.mrb[0].mxu0
        %v6406 = vadd.f32 0.0, %v6405
        %v6407 = vpop.f32.mrb[0].mxu0
        %6408 = vdwg.mxu0
        %6409 = vmatprep.subr.mxu0 0.0
        %6410 = vmatpush1.msra.mxu0 %v6320
        %6411 = vmatprep.subr.mxu0 0.0
        %6412 = vmatpush1.msra.mxu0 %v6321
        %6413 = vmatprep.subr.mxu0 0.0
        %6414 = vmatpush1.msra.mxu0 0.0
        %6415 = vmatprep.subr.mxu0 0.0
        %6416 = vmatpush1.msra.mxu0 0.0
        %6417 = vmatprep.subr.mxu0 0.0
        %6418 = vmatpush1.msra.mxu0 0.0
        %6419 = vmatprep.subr.mxu0 0.0
        %6420 = vmatpush1.msra.mxu0 0.0
        %6421 = vmatprep.subr.mxu0 0.0
        %6422 = vmatpush1.msra.mxu0 0.0
        %6423 = vmatprep.subr.mxu0 0.0
        %6424 = vmatpush1.msra.mxu0 0.0
        %6425 = vmatprep.subr.mxu0 0.0
        %6426 = vmatpush1.msra.mxu0 0.0
        %6427 = vmatprep.subr.mxu0 0.0
        %6428 = vmatpush1.msra.mxu0 0.0
        %6429 = vmatprep.subr.mxu0 0.0
        %6430 = vmatpush1.msra.mxu0 0.0
        %6431 = vmatprep.subr.mxu0 0.0
        %6432 = vmatpush1.msra.mxu0 0.0
        %6433 = vmatprep.subr.mxu0 0.0
        %6434 = vmatpush1.msra.mxu0 0.0
        %6435 = vmatprep.subr.mxu0 0.0
        %6436 = vmatpush1.msra.mxu0 0.0
        %6437 = vmatprep.subr.mxu0 0.0
        %6438 = vmatpush1.msra.mxu0 0.0
        %6439 = vmatprep.subr.mxu0 0.0
        %6440 = vmatpush1.msra.mxu0 0.0
        %6441 = vmatprep.subr.mxu0 0.0
        %6442 = vmatpush1.msra.mxu0 0.0
        %6443 = vmatprep.subr.mxu0 0.0
        %6444 = vmatpush1.msra.mxu0 0.0
        %6445 = vmatprep.subr.mxu0 0.0
        %6446 = vmatpush1.msra.mxu0 0.0
        %6447 = vmatprep.subr.mxu0 0.0
        %6448 = vmatpush1.msra.mxu0 0.0
        %6449 = vmatprep.subr.mxu0 0.0
        %6450 = vmatpush1.msra.mxu0 0.0
        %6451 = vmatprep.subr.mxu0 0.0
        %6452 = vmatpush1.msra.mxu0 0.0
        %6453 = vmatprep.subr.mxu0 0.0
        %6454 = vmatpush1.msra.mxu0 0.0
        %6455 = vmatprep.subr.mxu0 0.0
        %6456 = vmatpush1.msra.mxu0 0.0
        %6457 = vmatprep.subr.mxu0 0.0
        %6458 = vmatpush1.msra.mxu0 0.0
        %6459 = vmatprep.subr.mxu0 0.0
        %6460 = vmatpush1.msra.mxu0 0.0
        %6461 = vmatprep.subr.mxu0 0.0
        %6462 = vmatpush1.msra.mxu0 0.0
        %6463 = vmatprep.subr.mxu0 0.0
        %6464 = vmatpush1.msra.mxu0 0.0
        %6465 = vmatprep.subr.mxu0 0.0
        %6466 = vmatpush1.msra.mxu0 0.0
        %6467 = vmatprep.subr.mxu0 0.0
        %6468 = vmatpush1.msra.mxu0 0.0
        %6469 = vmatprep.subr.mxu0 0.0
        %6470 = vmatpush1.msra.mxu0 0.0
        %6471 = vmatprep.subr.mxu0 0.0
        %6472 = vmatpush1.msra.mxu0 0.0
        %6473 = vmatprep.mubr.f32.mxu0 0.0
        %6474 = vmatmul.mubr.f32.gmra.mrb[0].mxu0 %v5258
        %v6475 = vpop.f32.mrb[0].mxu0
        %v6476 = vadd.f32 %v6391, %v6475
        %v6477 = vpop.f32.mrb[0].mxu0
        %6478 = vmatprep.mubr.f32.mxu0 0.0
        %6479 = vmatmul.mubr.f32.gmra.mrb[0].mxu0 %v5261
        %v6480 = vpop.f32.mrb[0].mxu0
        %v6481 = vadd.f32 %v6396, %v6480
        %v6482 = vpop.f32.mrb[0].mxu0
        %6483 = vmatprep.mubr.f32.mxu0 0.0
        %6484 = vmatmul.mubr.f32.gmra.mrb[0].mxu0 %v5264
        %v6485 = vpop.f32.mrb[0].mxu0
        %v6486 = vadd.f32 %v6401, %v6485
        %v6487 = vpop.f32.mrb[0].mxu0
        %6488 = vmatprep.mubr.f32.mxu0 0.0
        %6489 = vmatmul.mubr.f32.gmra.mrb[0].mxu0 %v5267
        %v6490 = vpop.f32.mrb[0].mxu0
        %v6491 = vadd.f32 %v6406, %v6490
        %v6492 = vpop.f32.mrb[0].mxu0
        %6493 = vdwg.mxu0
        %v6494 = vadd.f32 %v6301, %v6476
        %v6495 = vadd.f32 %v6306, %v6481
        %v6496 = vadd.f32 %v6311, %v6486
        %v6497 = vadd.f32 %v6316, %v6491
        %s6498 = scalar_lea.vmem %s294, 32 [#allocation14]
        %6499 = vst.msk [vmem:[%s6498] sm:$0xff] %vm5443, %v6494
        %6500 = vst.msk [vmem:[%s6498 + $0x8] sm:$0xff] %vm5443, %v6495
        %6501 = vst.msk [vmem:[%s6498 + $0x10] sm:$0xff] %vm5443, %v6496
        %6502 = vst.msk [vmem:[%s6498 + $0x18] sm:$0xff] %vm5443, %v6497
        %s6503 = sand.u32 %s143, 1
        %s6504 = scalar_lea.sflag [#allocation6], %s6503
        %s6505 = sand.u32 %s143, 1
        %s6506 = smul.addr %s6505, 64
        %s6507 = scalar_lea.vmem [#allocation14], %s6506
        // Predicated region
        $region61: #{tpu_custom_call.1} parent=39 // pred_check
          %p6508 = pneg %p153
        $region62: #{tpu_custom_call.1} parent=39 // pred_check_branch
          %6510 = sbr.rel (%p6508) target = $region64
        $region63: #{tpu_custom_call.1} parent=39 // pred_region
          %s6512 = ssub.s32 1024, 1024
          %6513 = vsyncadd %s6504, %s6512
          %s6514 = smul.addr %s25, 8
          %s6515 = smul.addr %s6514, 128
          %s6516 = scalar_lea.hbm %s5, %s6515
          %s6517 = sshll.u32 %s6507, 4
          %s6518 = int_to_ptr.vmem [resolvable:$true] %s6517
          %6523 = dma.vmem_to_hbm [thread:$0]  %s6518, 1024, %s6516, %s6504, 128, 128, 8
        $region64: #{tpu_custom_call.1} parent=39 // pred_fallthru
          _
      $region40: #{tpu_custom_call.1} parent=5 // pred_fallthru
        _
      %p6524 = scmp.le.s32.totalorder 2, %s20
      // Predicated region
      $region65: #{tpu_custom_call.1} parent=5 // pred_check
        %p6525 = pneg %p6524
      $region66: #{tpu_custom_call.1} parent=5 // pred_check_branch
        %6527 = sbr.rel (%p6525) target = $region68
      $region67: #{tpu_custom_call.1} parent=5 // pred_region
        %s6528 = ssub.s32 %s20, 2
        // Predicated region
        $region69: #{tpu_custom_call.1} parent=67 // pred_check
          %p6529 = pneg %p159
        $region70: #{tpu_custom_call.1} parent=67 // pred_check_branch
          %6531 = sbr.rel (%p6529) target = $region72
        $region71: #{tpu_custom_call.1} parent=67 // pred_region
          %s6532 = sand.u32 %s144, 1
          %s6533 = scalar_lea.sflag [#allocation6], %s6532
          %s6534 = sand.u32 %s144, 1
          %s6535 = smul.addr %s6534, 64
          %s6536 = scalar_lea.vmem [#allocation14], %s6535
          %6537 = dma.done %s6533, 1024
        $region72: #{tpu_custom_call.1} parent=67 // pred_fallthru
          _
      $region68: #{tpu_custom_call.1} parent=5 // pred_fallthru
        _
    $region6: #{tpu_custom_call.1} parent=1 // loop_footer
      %s24 = sadd.s32 1, %s20
    $region7: #{tpu_custom_call.1} parent=1 // loop_footer_branch
      %19 = sbr.rel target = $region3
    $region8: #{tpu_custom_call.1} parent=1 // loop_exit
      _
    %6538 = vsyncpa [#allocation5], 1
    %s6539 = scalar_lea.sflag [#allocation5], 1
    %6540 = vsyncpa %s6539, 1
    %6541 = vsyncpa [#allocation6], 1
    %s6542 = scalar_lea.sflag [#allocation6], 1
    %6543 = vsyncpa %s6542, 1
    %6544 = vsyncpa [#allocation7], 1
    %s6545 = scalar_lea.sflag [#allocation7], 1
    %6546 = vsyncpa %s6545, 1
    %6547 = vsyncpa [#allocation10], 1
    %6548 = vsyncpa [#allocation13], 1

</llo_original>
